<compile_context>
chip_gen: v6e
topology: v6e:2x2x1
jax: 0.10.0
libtpu: 0.0.40
codegen_flags: <defaults>
</compile_context>

<pallas_src>
import functools
import math

import jax
import jax.numpy as jnp
from jax.experimental import pallas as pl
from jax.experimental.pallas import tpu as pltpu


# --------------------------- per-chip tiling budget ---------------------------

def _chip_defaults():
    """(row-tile cap, scoped-VMEM limit) chosen per TPU generation."""
    try:
        kind = jax.devices()[0].device_kind.lower()
    except Exception:  # pragma: no cover - defensive
        kind = ""
    if "v6" in kind:          # v6e: 128 MiB VMEM -> big tiles + raised limit
        return 1024, 64 * 1024 * 1024
    if "v5" in kind:          # v5e: 16 MiB default scoped limit -> small tiles
        return 256, 32 * 1024 * 1024
    return 512, 32 * 1024 * 1024   # v7x (64 MiB VMEM) and others


_TM_CAP, _VMEM_LIMIT = _chip_defaults()


def _pick_tm(M):
    """Row tile: single step for small M, otherwise >=2 grid steps (megacore)."""
    if M <= 256:
        return M
    half = (((M + 1) // 2) + 7) // 8 * 8      # cdiv(M,2) rounded up to sublane
    return max(256, min(_TM_CAP, half))


# ------------------------------ Pallas kernels ------------------------------

def _fused_matmul_kernel(x_ref, *rest, ln, act, residual, eps):
    """[optional LayerNorm] -> (M,K)@(K,N) on MXU -> +bias -> [GELU] -> [+skip]."""
    idx = 0
    if ln:
        g_ref, b_ref = rest[idx], rest[idx + 1]
        idx += 2
    w_ref, bias_ref = rest[idx], rest[idx + 1]
    idx += 2
    if residual:
        r_ref = rest[idx]
        idx += 1
    o_ref = rest[idx]

    x = x_ref[...].astype(jnp.float32)
    if ln:
        mu = jnp.mean(x, axis=-1, keepdims=True)
        xc = x - mu
        var = jnp.mean(xc * xc, axis=-1, keepdims=True)
        x = (xc * jax.lax.rsqrt(var + eps)) * g_ref[...] + b_ref[...]

    # bf16 operands on the MXU, f32 accumulation.
    y = jnp.dot(x.astype(jnp.bfloat16), w_ref[...],
                preferred_element_type=jnp.float32)
    y = y + bias_ref[...]
    if act == "gelu":
        y = jax.nn.gelu(y, approximate=True)
    if residual:
        y = y + r_ref[...].astype(jnp.float32)
    o_ref[...] = y.astype(o_ref.dtype)


def fused_matmul(x, w, bias, *, gamma=None, beta=None, act=None,
                 residual=None, out_dtype=jnp.bfloat16):
    """y = [gelu]( LN_opt(x) @ w + bias ) [+ residual], tiled over rows of x."""
    M, K = x.shape
    N = w.shape[1]
    tm = _pick_tm(M)
    grid = (pl.cdiv(M, tm),)
    ln = gamma is not None

    def row_spec(n_cols):
        return pl.BlockSpec((tm, n_cols), lambda i: (i, 0))

    def const_spec(shape):
        # constant index map -> single-buffered resident operand (weights etc.)
        return pl.BlockSpec(shape, lambda i: (0,) * len(shape),
                            pipeline_mode=pl.Buffered(1))

    in_arrays = [x]
    in_specs = [row_spec(K)]
    if ln:
        in_arrays += [gamma.reshape(1, K), beta.reshape(1, K)]
        in_specs += [const_spec((1, K)), const_spec((1, K))]
    in_arrays += [w, bias.reshape(1, N)]
    in_specs += [const_spec((K, N)), const_spec((1, N))]
    if residual is not None:
        in_arrays.append(residual)
        in_specs.append(row_spec(N))

    cost = pl.CostEstimate(
        flops=2 * M * K * N,
        transcendentals=M * N if act == "gelu" else 0,
        bytes_accessed=(2 * M * K + 2 * K * N + 2 * M * N
                        + (2 * M * N if residual is not None else 0)))

    return pl.pallas_call(
        functools.partial(_fused_matmul_kernel, ln=ln, act=act,
                          residual=residual is not None, eps=1e-6),
        grid=grid,
        in_specs=in_specs,
        out_specs=row_spec(N),
        out_shape=jax.ShapeDtypeStruct((M, N), out_dtype),
        compiler_params=pltpu.CompilerParams(
            dimension_semantics=("parallel",),
            vmem_limit_bytes=_VMEM_LIMIT),
        cost_estimate=cost,
    )(*in_arrays)


def _attention_kernel(q_ref, k_ref, v_ref, o_ref, *, scale, heads):
    """All heads for one batch element; q/k/v are [1, T, D] windows of qkv."""
    D = q_ref.shape[-1]
    hd = D // heads
    # Fold the softmax scale into q once (cheaper than scaling the [T,T] scores).
    q = q_ref[0].astype(jnp.float32) * scale          # [T, D] f32
    k = k_ref[0]                                      # [T, D] bf16
    v = v_ref[0]                                      # [T, D] bf16
    outs = []
    for h in range(heads):                            # static unrolled loop
        sl = slice(h * hd, (h + 1) * hd)
        qh = q[:, sl].astype(jnp.bfloat16)
        kh = k[:, sl]
        vh = v[:, sl]
        s = jax.lax.dot_general(qh, kh, (((1,), (1,)), ((), ())),
                                preferred_element_type=jnp.float32)  # [T, T]
        s = s - jnp.max(s, axis=-1, keepdims=True)
        p = jnp.exp(s)
        p = p * pl.reciprocal(jnp.sum(p, axis=-1, keepdims=True), approx=True)
        outs.append(jnp.dot(p.astype(jnp.bfloat16), vh,
                            preferred_element_type=jnp.float32))     # [T, hd]
    # Lane-dense [T, D] store, already in token-major layout (no transpose).
    o_ref[0] = jnp.concatenate(outs, axis=-1).astype(o_ref.dtype)


def multihead_attention(qkv, heads, scale):
    """qkv: [B, T, 3*D] (fused projection output) -> attention output [B, T, D]."""
    B, T, D3 = qkv.shape
    D = D3 // 3
    hd = D // heads
    # q / k / v are three index-mapped windows of the same qkv buffer.
    q_spec = pl.BlockSpec((1, T, D), lambda b: (b, 0, 0))
    k_spec = pl.BlockSpec((1, T, D), lambda b: (b, 0, 1))
    v_spec = pl.BlockSpec((1, T, D), lambda b: (b, 0, 2))
    out_spec = pl.BlockSpec((1, T, D), lambda b: (b, 0, 0))
    cost = pl.CostEstimate(
        flops=4 * B * heads * T * T * hd,
        transcendentals=B * heads * T * T,
        bytes_accessed=2 * (3 * B * T * D + B * T * D))
    return pl.pallas_call(
        functools.partial(_attention_kernel, scale=scale, heads=heads),
        grid=(B,),
        in_specs=[q_spec, k_spec, v_spec],
        out_specs=out_spec,
        out_shape=jax.ShapeDtypeStruct((B, T, D), jnp.bfloat16),
        compiler_params=pltpu.CompilerParams(
            dimension_semantics=("parallel",),
            vmem_limit_bytes=_VMEM_LIMIT),
        cost_estimate=cost,
    )(qkv, qkv, qkv)


# ------------------------------- forward pass -------------------------------

def vit_forward(x_nchw, params, cfg):
    B = x_nchw.shape[0]
    P, D, H = cfg["patch"], cfg["dim"], cfg["heads"]
    hd = D // H

    # NCHW -> NHWC; non-overlapping 16x16/stride-16 patch-embed conv == reshape+matmul.
    x = jnp.transpose(x_nchw, (0, 2, 3, 1)).astype(jnp.float32)
    _, Hh, Ww, C = x.shape
    gh, gw = Hh // P, Ww // P
    patches = x.reshape(B, gh, P, gw, P, C).transpose(0, 1, 3, 2, 4, 5)
    patches = patches.reshape(B * gh * gw, P * P * C).astype(jnp.bfloat16)
    tok = fused_matmul(patches, params["patch_w"], params["patch_b"])
    tok = tok.reshape(B, gh * gw, D)

    cls = jnp.broadcast_to(params["cls_token"], (B, 1, D))
    x = (jnp.concatenate([cls, tok.astype(jnp.float32)], axis=1)
         + params["pos_embed"]).astype(jnp.bfloat16)
    T = x.shape[1]

    for blk in params["blocks"]:
        xf = x.reshape(B * T, D)                                   # bf16
        # LN1 + qkv projection (fused).
        qkv = fused_matmul(xf, blk["qkv_w"], blk["qkv_b"],
                           gamma=blk["ln1_g"], beta=blk["ln1_b"])  # [B*T, 3D] bf16
        # Attention: copy-free reshape, heads batched per grid step, no transposes.
        attn = multihead_attention(qkv.reshape(B, T, 3 * D), H,
                                   1.0 / math.sqrt(hd))            # [B, T, D] bf16
        # Output projection + residual (fused epilogue).
        x1 = fused_matmul(attn.reshape(B * T, D), blk["proj_w"], blk["proj_b"],
                          residual=xf)
        # LN2 + MLP fc1 + GELU (fused).
        h1 = fused_matmul(x1, blk["fc1_w"], blk["fc1_b"],
                          gamma=blk["ln2_g"], beta=blk["ln2_b"], act="gelu")
        # MLP fc2 + residual (fused epilogue).
        x2 = fused_matmul(h1, blk["fc2_w"], blk["fc2_b"], residual=x1)
        x = x2.reshape(B, T, D)

    # Final LayerNorm (per-token, so cls-first is equivalent) + classifier head.
    cls_tok = x[:, 0, :]
    logits = fused_matmul(cls_tok, params["head_w"], params["head_b"],
                          gamma=params["ln_f_g"], beta=params["ln_f_b"],
                          out_dtype=jnp.float32)
    return logits


# ------------------------------ parameter init ------------------------------

def init_vit(key, cfg):
    D, H, depth = cfg["dim"], cfg["heads"], cfg["depth"]
    P, C, mlp = cfg["patch"], cfg["in_chans"], cfg["mlp"]
    T, nc = cfg["tokens"], cfg["num_classes"]
    keys = iter(jax.random.split(key, 8 + 8 * depth))

    def w_init(k, shape, fan_in):
        w = jax.random.normal(k, shape, dtype=jnp.float32) / math.sqrt(fan_in)
        return w.astype(jnp.bfloat16)           # weights stored bf16 (MXU native)

    params = {
        "patch_w": w_init(next(keys), (P * P * C, D), P * P * C),
        "patch_b": jnp.zeros((D,), jnp.float32),
        "cls_token": 0.02 * jax.random.normal(next(keys), (1, 1, D), jnp.float32),
        "pos_embed": 0.02 * jax.random.normal(next(keys), (1, T, D), jnp.float32),
        "ln_f_g": jnp.ones((D,), jnp.float32),
        "ln_f_b": jnp.zeros((D,), jnp.float32),
        "head_w": w_init(next(keys), (D, nc), D),
        "head_b": jnp.zeros((nc,), jnp.float32),
    }
    blocks = []
    for _ in range(depth):
        blocks.append({
            "ln1_g": jnp.ones((D,), jnp.float32),
            "ln1_b": jnp.zeros((D,), jnp.float32),
            "qkv_w": w_init(next(keys), (D, 3 * D), D),
            "qkv_b": jnp.zeros((3 * D,), jnp.float32),
            "proj_w": w_init(next(keys), (D, D), D),
            "proj_b": jnp.zeros((D,), jnp.float32),
            "ln2_g": jnp.ones((D,), jnp.float32),
            "ln2_b": jnp.zeros((D,), jnp.float32),
            "fc1_w": w_init(next(keys), (D, mlp), D),
            "fc1_b": jnp.zeros((mlp,), jnp.float32),
            "fc2_w": w_init(next(keys), (mlp, D), mlp),
            "fc2_b": jnp.zeros((D,), jnp.float32),
        })
    params["blocks"] = blocks
    return params


# ------------------------------------ main ------------------------------------

if __name__ == "__main__":
    num_classes = 10
    img, patch = 64, 16
    cfg = dict(
        patch=patch, in_chans=3, dim=256, heads=4, depth=4, mlp=1024,
        tokens=1 + (img // patch) ** 2, num_classes=num_classes,
    )

    key = jax.random.PRNGKey(0)
    kx, kp = jax.random.split(key)

    # NCHW input, like the PyTorch module (native ViT-Base res is 224; reduced here).
    x = jax.random.normal(kx, (2, 3, img, img), dtype=jnp.float32)
    params = init_vit(kp, cfg)

    fwd = jax.jit(lambda inp, prm: vit_forward(inp, prm, cfg))
    logits = fwd(x, params)
    logits = jax.block_until_ready(logits)

    assert logits.shape == (2, num_classes), logits.shape
    assert bool(jnp.all(jnp.isfinite(logits)))
    print("KERNEL_OK")
</pallas_src>

<mosaic_0001>
module attributes {stable_mosaic.version = 11 : i64} {
  func.func @_fused_matmul_kernel(%arg0: i32, %arg1: memref<32x768xbf16, #tpu.memory_space<vmem>>, %arg2: memref<768x256xbf16, #tpu.memory_space<vmem>>, %arg3: memref<1x256xf32, #tpu.memory_space<vmem>>, %arg4: memref<32x256xbf16, #tpu.memory_space<vmem>>) attributes {dimension_semantics = [#tpu.dimension_semantics<parallel>], iteration_bounds = array<i64: 1>, scalar_prefetch = 0 : i64, scratch_operands = 0 : i64, tpu.core_type = #tpu.core_type<tc>, window_params = [{transform_indices = @transform_0, window_bounds = array<i64: 32, 768>}, {pipeline_mode = #tpu.pipeline_mode<synchronous>, transform_indices = @transform_1, window_bounds = array<i64: 768, 256>}, {pipeline_mode = #tpu.pipeline_mode<synchronous>, transform_indices = @transform_2, window_bounds = array<i64: 1, 256>}, {transform_indices = @transform_3, window_bounds = array<i64: 32, 256>}]} {
    %c0 = arith.constant 0 : index
    %c0_0 = arith.constant 0 : index
    %0 = vector.load %arg1[%c0, %c0_0] : memref<32x768xbf16, #tpu.memory_space<vmem>>, vector<32x768xbf16>
    %1 = arith.extf %0 : vector<32x768xbf16> to vector<32x768xf32>
    %2 = arith.truncf %1 : vector<32x768xf32> to vector<32x768xbf16>
    %c0_1 = arith.constant 0 : index
    %c0_2 = arith.constant 0 : index
    %3 = vector.load %arg2[%c0_1, %c0_2] : memref<768x256xbf16, #tpu.memory_space<vmem>>, vector<768x256xbf16>
    %cst = arith.constant dense<0.000000e+00> : vector<32x256xf32>
    %4 = tpu.matmul %2, %3, %cst {dimension_numbers = #tpu.dot_dimension_numbers<[1], [0], [0], [1], [0, 0, 1, 1], [], []>} : vector<32x768xbf16>, vector<768x256xbf16>, vector<32x256xf32> -> vector<32x256xf32>
    %c0_3 = arith.constant 0 : index
    %c0_4 = arith.constant 0 : index
    %5 = vector.load %arg3[%c0_3, %c0_4] : memref<1x256xf32, #tpu.memory_space<vmem>>, vector<1x256xf32>
    %6 = vector.broadcast %5 : vector<1x256xf32> to vector<32x256xf32>
    %7 = arith.addf %4, %6 : vector<32x256xf32>
    %8 = arith.truncf %7 : vector<32x256xf32> to vector<32x256xbf16>
    %c0_5 = arith.constant 0 : index
    %c0_6 = arith.constant 0 : index
    %9 = vector.load %arg4[%c0_5, %c0_6] : memref<32x256xbf16, #tpu.memory_space<vmem>>, vector<32x256xbf16>
    tpu.vector_store %arg4[%c0_5, %c0_6], %8 {strides = array<i32>} : memref<32x256xbf16, #tpu.memory_space<vmem>>, vector<32x256xbf16>,
    return
  }
  func.func @transform_0(%arg0: i32) -> (i32, i32) {
    %c0_i32 = arith.constant 0 : i32
    %c0_i32_0 = arith.constant 0 : i32
    return %arg0, %c0_i32 : i32, i32
  }
  func.func @transform_1(%arg0: i32) -> (i32, i32) {
    %c0_i32 = arith.constant 0 : i32
    %c0_i32_0 = arith.constant 0 : i32
    %c0_i32_1 = arith.constant 0 : i32
    return %c0_i32, %c0_i32_0 : i32, i32
  }
  func.func @transform_2(%arg0: i32) -> (i32, i32) {
    %c0_i32 = arith.constant 0 : i32
    %c0_i32_0 = arith.constant 0 : i32
    %c0_i32_1 = arith.constant 0 : i32
    return %c0_i32, %c0_i32_0 : i32, i32
  }
  func.func @transform_3(%arg0: i32) -> (i32, i32) {
    %c0_i32 = arith.constant 0 : i32
    %c0_i32_0 = arith.constant 0 : i32
    return %arg0, %c0_i32 : i32, i32
  }
}

module attributes {stable_mosaic.version = 11 : i64} {
  func.func @_fused_matmul_kernel(%arg0: i32, %arg1: memref<34x256xbf16, #tpu.memory_space<vmem>>, %arg2: memref<1x256xf32, #tpu.memory_space<vmem>>, %arg3: memref<1x256xf32, #tpu.memory_space<vmem>>, %arg4: memref<256x768xbf16, #tpu.memory_space<vmem>>, %arg5: memref<1x768xf32, #tpu.memory_space<vmem>>, %arg6: memref<34x768xbf16, #tpu.memory_space<vmem>>) attributes {dimension_semantics = [#tpu.dimension_semantics<parallel>], iteration_bounds = array<i64: 1>, scalar_prefetch = 0 : i64, scratch_operands = 0 : i64, tpu.core_type = #tpu.core_type<tc>, window_params = [{transform_indices = @transform_0, window_bounds = array<i64: 34, 256>}, {pipeline_mode = #tpu.pipeline_mode<synchronous>, transform_indices = @transform_1, window_bounds = array<i64: 1, 256>}, {pipeline_mode = #tpu.pipeline_mode<synchronous>, transform_indices = @transform_2, window_bounds = array<i64: 1, 256>}, {pipeline_mode = #tpu.pipeline_mode<synchronous>, transform_indices = @transform_3, window_bounds = array<i64: 256, 768>}, {pipeline_mode = #tpu.pipeline_mode<synchronous>, transform_indices = @transform_4, window_bounds = array<i64: 1, 768>}, {transform_indices = @transform_5, window_bounds = array<i64: 34, 768>}]} {
    %c0 = arith.constant 0 : index
    %c0_0 = arith.constant 0 : index
    %0 = vector.load %arg1[%c0, %c0_0] : memref<34x256xbf16, #tpu.memory_space<vmem>>, vector<34x256xbf16>
    %1 = arith.extf %0 : vector<34x256xbf16> to vector<34x256xf32>
    %cst = arith.constant dense<0.000000e+00> : vector<34xf32>
    %2 = vector.multi_reduction <add>, %1, %cst [1] : vector<34x256xf32> to vector<34xf32>
    %3 = vector.shape_cast %2 : vector<34xf32> to vector<34x1xf32>
    %cst_1 = arith.constant 2.560000e+02 : f32
    %4 = vector.broadcast %cst_1 : f32 to vector<34x1xf32>
    %5 = arith.divf %3, %4 : vector<34x1xf32>
    %6 = vector.broadcast %5 : vector<34x1xf32> to vector<34x256xf32>
    %7 = arith.subf %1, %6 : vector<34x256xf32>
    %8 = arith.mulf %7, %7 : vector<34x256xf32>
    %cst_2 = arith.constant dense<0.000000e+00> : vector<34xf32>
    %9 = vector.multi_reduction <add>, %8, %cst_2 [1] : vector<34x256xf32> to vector<34xf32>
    %10 = vector.shape_cast %9 : vector<34xf32> to vector<34x1xf32>
    %cst_3 = arith.constant 2.560000e+02 : f32
    %11 = vector.broadcast %cst_3 : f32 to vector<34x1xf32>
    %12 = arith.divf %10, %11 : vector<34x1xf32>
    %cst_4 = arith.constant 9.99999997E-7 : f32
    %13 = vector.broadcast %cst_4 : f32 to vector<34x1xf32>
    %14 = arith.addf %12, %13 : vector<34x1xf32>
    %15 = math.rsqrt %14 : vector<34x1xf32>
    %16 = vector.broadcast %15 : vector<34x1xf32> to vector<34x256xf32>
    %17 = arith.mulf %7, %16 : vector<34x256xf32>
    %c0_5 = arith.constant 0 : index
    %c0_6 = arith.constant 0 : index
    %18 = vector.load %arg2[%c0_5, %c0_6] : memref<1x256xf32, #tpu.memory_space<vmem>>, vector<1x256xf32>
    %19 = vector.broadcast %18 : vector<1x256xf32> to vector<34x256xf32>
    %20 = arith.mulf %17, %19 : vector<34x256xf32>
    %c0_7 = arith.constant 0 : index
    %c0_8 = arith.constant 0 : index
    %21 = vector.load %arg3[%c0_7, %c0_8] : memref<1x256xf32, #tpu.memory_space<vmem>>, vector<1x256xf32>
    %22 = vector.broadcast %21 : vector<1x256xf32> to vector<34x256xf32>
    %23 = arith.addf %20, %22 : vector<34x256xf32>
    %24 = arith.truncf %23 : vector<34x256xf32> to vector<34x256xbf16>
    %c0_9 = arith.constant 0 : index
    %c0_10 = arith.constant 0 : index
    %25 = vector.load %arg4[%c0_9, %c0_10] : memref<256x768xbf16, #tpu.memory_space<vmem>>, vector<256x768xbf16>
    %cst_11 = arith.constant dense<0.000000e+00> : vector<34x768xf32>
    %26 = tpu.matmul %24, %25, %cst_11 {dimension_numbers = #tpu.dot_dimension_numbers<[1], [0], [0], [1], [0, 0, 1, 1], [], []>} : vector<34x256xbf16>, vector<256x768xbf16>, vector<34x768xf32> -> vector<34x768xf32>
    %c0_12 = arith.constant 0 : index
    %c0_13 = arith.constant 0 : index
    %27 = vector.load %arg5[%c0_12, %c0_13] : memref<1x768xf32, #tpu.memory_space<vmem>>, vector<1x768xf32>
    %28 = vector.broadcast %27 : vector<1x768xf32> to vector<34x768xf32>
    %29 = arith.addf %26, %28 : vector<34x768xf32>
    %30 = arith.truncf %29 : vector<34x768xf32> to vector<34x768xbf16>
    %c0_14 = arith.constant 0 : index
    %c0_15 = arith.constant 0 : index
    %31 = vector.load %arg6[%c0_14, %c0_15] : memref<34x768xbf16, #tpu.memory_space<vmem>>, vector<34x768xbf16>
    tpu.vector_store %arg6[%c0_14, %c0_15], %30 {strides = array<i32>} : memref<34x768xbf16, #tpu.memory_space<vmem>>, vector<34x768xbf16>,
    return
  }
  func.func @transform_0(%arg0: i32) -> (i32, i32) {
    %c0_i32 = arith.constant 0 : i32
    %c0_i32_0 = arith.constant 0 : i32
    return %arg0, %c0_i32 : i32, i32
  }
  func.func @transform_1(%arg0: i32) -> (i32, i32) {
    %c0_i32 = arith.constant 0 : i32
    %c0_i32_0 = arith.constant 0 : i32
    %c0_i32_1 = arith.constant 0 : i32
    return %c0_i32, %c0_i32_0 : i32, i32
  }
  func.func @transform_2(%arg0: i32) -> (i32, i32) {
    %c0_i32 = arith.constant 0 : i32
    %c0_i32_0 = arith.constant 0 : i32
    %c0_i32_1 = arith.constant 0 : i32
    return %c0_i32, %c0_i32_0 : i32, i32
  }
  func.func @transform_3(%arg0: i32) -> (i32, i32) {
    %c0_i32 = arith.constant 0 : i32
    %c0_i32_0 = arith.constant 0 : i32
    %c0_i32_1 = arith.constant 0 : i32
    return %c0_i32, %c0_i32_0 : i32, i32
  }
  func.func @transform_4(%arg0: i32) -> (i32, i32) {
    %c0_i32 = arith.constant 0 : i32
    %c0_i32_0 = arith.constant 0 : i32
    %c0_i32_1 = arith.constant 0 : i32
    return %c0_i32, %c0_i32_0 : i32, i32
  }
  func.func @transform_5(%arg0: i32) -> (i32, i32) {
    %c0_i32 = arith.constant 0 : i32
    %c0_i32_0 = arith.constant 0 : i32
    return %arg0, %c0_i32 : i32, i32
  }
}

module attributes {stable_mosaic.version = 11 : i64} {
  func.func @_attention_kernel(%arg0: i32, %arg1: memref<1x17x256xbf16, #tpu.memory_space<vmem>>, %arg2: memref<1x17x256xbf16, #tpu.memory_space<vmem>>, %arg3: memref<1x17x256xbf16, #tpu.memory_space<vmem>>, %arg4: memref<1x17x256xbf16, #tpu.memory_space<vmem>>) attributes {dimension_semantics = [#tpu.dimension_semantics<parallel>], iteration_bounds = array<i64: 2>, scalar_prefetch = 0 : i64, scratch_operands = 0 : i64, tpu.core_type = #tpu.core_type<tc>, window_params = [{transform_indices = @transform_0, window_bounds = array<i64: 1, 17, 256>}, {transform_indices = @transform_1, window_bounds = array<i64: 1, 17, 256>}, {transform_indices = @transform_2, window_bounds = array<i64: 1, 17, 256>}, {transform_indices = @transform_3, window_bounds = array<i64: 1, 17, 256>}]} {
    %c0 = arith.constant 0 : index
    %c0_0 = arith.constant 0 : index
    %c0_1 = arith.constant 0 : index
    %0 = vector.load %arg1[%c0, %c0_0, %c0_1] : memref<1x17x256xbf16, #tpu.memory_space<vmem>>, vector<1x17x256xbf16>
    %1 = vector.shape_cast %0 : vector<1x17x256xbf16> to vector<17x256xbf16>
    %2 = arith.extf %1 : vector<17x256xbf16> to vector<17x256xf32>
    %cst = arith.constant 1.250000e-01 : f32
    %3 = vector.broadcast %cst : f32 to vector<17x256xf32>
    %4 = arith.mulf %2, %3 : vector<17x256xf32>
    %c0_2 = arith.constant 0 : index
    %c0_3 = arith.constant 0 : index
    %c0_4 = arith.constant 0 : index
    %5 = vector.load %arg2[%c0_2, %c0_3, %c0_4] : memref<1x17x256xbf16, #tpu.memory_space<vmem>>, vector<1x17x256xbf16>
    %6 = vector.shape_cast %5 : vector<1x17x256xbf16> to vector<17x256xbf16>
    %c0_5 = arith.constant 0 : index
    %c0_6 = arith.constant 0 : index
    %c0_7 = arith.constant 0 : index
    %7 = vector.load %arg3[%c0_5, %c0_6, %c0_7] : memref<1x17x256xbf16, #tpu.memory_space<vmem>>, vector<1x17x256xbf16>
    %8 = vector.shape_cast %7 : vector<1x17x256xbf16> to vector<17x256xbf16>
    %9 = vector.extract_strided_slice %4 {offsets = [0, 0], sizes = [17, 64], strides = [1, 1]} : vector<17x256xf32> to vector<17x64xf32>
    %10 = arith.truncf %9 : vector<17x64xf32> to vector<17x64xbf16>
    %11 = vector.extract_strided_slice %6 {offsets = [0, 0], sizes = [17, 64], strides = [1, 1]} : vector<17x256xbf16> to vector<17x64xbf16>
    %12 = vector.extract_strided_slice %8 {offsets = [0, 0], sizes = [17, 64], strides = [1, 1]} : vector<17x256xbf16> to vector<17x64xbf16>
    %cst_8 = arith.constant dense<0.000000e+00> : vector<17x17xf32>
    %13 = tpu.matmul %10, %11, %cst_8 {dimension_numbers = #tpu.dot_dimension_numbers<[1], [1], [0], [0], [0, 0, 1, 0], [], []>} : vector<17x64xbf16>, vector<17x64xbf16>, vector<17x17xf32> -> vector<17x17xf32>
    %cst_9 = arith.constant dense<0xFF800000> : vector<17xf32>
    %14 = vector.multi_reduction <maximumf>, %13, %cst_9 [1] : vector<17x17xf32> to vector<17xf32>
    %15 = vector.shape_cast %14 : vector<17xf32> to vector<17x1xf32>
    %16 = vector.broadcast %15 : vector<17x1xf32> to vector<17x17xf32>
    %17 = arith.subf %13, %16 : vector<17x17xf32>
    %18 = math.exp %17 : vector<17x17xf32>
    %cst_10 = arith.constant dense<0.000000e+00> : vector<17xf32>
    %19 = vector.multi_reduction <add>, %18, %cst_10 [1] : vector<17x17xf32> to vector<17xf32>
    %20 = vector.shape_cast %19 : vector<17xf32> to vector<17x1xf32>
    %21 = tpu.reciprocal %20 {approx = true} : vector<17x1xf32> -> vector<17x1xf32>
    %22 = vector.broadcast %21 : vector<17x1xf32> to vector<17x17xf32>
    %23 = arith.mulf %18, %22 : vector<17x17xf32>
    %24 = arith.truncf %23 : vector<17x17xf32> to vector<17x17xbf16>
    %cst_11 = arith.constant dense<0.000000e+00> : vector<17x64xf32>
    %25 = tpu.matmul %24, %12, %cst_11 {dimension_numbers = #tpu.dot_dimension_numbers<[1], [0], [0], [1], [0, 0, 1, 1], [], []>} : vector<17x17xbf16>, vector<17x64xbf16>, vector<17x64xf32> -> vector<17x64xf32>
    %26 = vector.extract_strided_slice %4 {offsets = [0, 64], sizes = [17, 64], strides = [1, 1]} : vector<17x256xf32> to vector<17x64xf32>
    %27 = arith.truncf %26 : vector<17x64xf32> to vector<17x64xbf16>
    %28 = vector.extract_strided_slice %6 {offsets = [0, 64], sizes = [17, 64], strides = [1, 1]} : vector<17x256xbf16> to vector<17x64xbf16>
    %29 = vector.extract_strided_slice %8 {offsets = [0, 64], sizes = [17, 64], strides = [1, 1]} : vector<17x256xbf16> to vector<17x64xbf16>
    %cst_12 = arith.constant dense<0.000000e+00> : vector<17x17xf32>
    %30 = tpu.matmul %27, %28, %cst_12 {dimension_numbers = #tpu.dot_dimension_numbers<[1], [1], [0], [0], [0, 0, 1, 0], [], []>} : vector<17x64xbf16>, vector<17x64xbf16>, vector<17x17xf32> -> vector<17x17xf32>
    %cst_13 = arith.constant dense<0xFF800000> : vector<17xf32>
    %31 = vector.multi_reduction <maximumf>, %30, %cst_13 [1] : vector<17x17xf32> to vector<17xf32>
    %32 = vector.shape_cast %31 : vector<17xf32> to vector<17x1xf32>
    %33 = vector.broadcast %32 : vector<17x1xf32> to vector<17x17xf32>
    %34 = arith.subf %30, %33 : vector<17x17xf32>
    %35 = math.exp %34 : vector<17x17xf32>
    %cst_14 = arith.constant dense<0.000000e+00> : vector<17xf32>
    %36 = vector.multi_reduction <add>, %35, %cst_14 [1] : vector<17x17xf32> to vector<17xf32>
    %37 = vector.shape_cast %36 : vector<17xf32> to vector<17x1xf32>
    %38 = tpu.reciprocal %37 {approx = true} : vector<17x1xf32> -> vector<17x1xf32>
    %39 = vector.broadcast %38 : vector<17x1xf32> to vector<17x17xf32>
    %40 = arith.mulf %35, %39 : vector<17x17xf32>
    %41 = arith.truncf %40 : vector<17x17xf32> to vector<17x17xbf16>
    %cst_15 = arith.constant dense<0.000000e+00> : vector<17x64xf32>
    %42 = tpu.matmul %41, %29, %cst_15 {dimension_numbers = #tpu.dot_dimension_numbers<[1], [0], [0], [1], [0, 0, 1, 1], [], []>} : vector<17x17xbf16>, vector<17x64xbf16>, vector<17x64xf32> -> vector<17x64xf32>
    %43 = vector.extract_strided_slice %4 {offsets = [0, 128], sizes = [17, 64], strides = [1, 1]} : vector<17x256xf32> to vector<17x64xf32>
    %44 = arith.truncf %43 : vector<17x64xf32> to vector<17x64xbf16>
    %45 = vector.extract_strided_slice %6 {offsets = [0, 128], sizes = [17, 64], strides = [1, 1]} : vector<17x256xbf16> to vector<17x64xbf16>
    %46 = vector.extract_strided_slice %8 {offsets = [0, 128], sizes = [17, 64], strides = [1, 1]} : vector<17x256xbf16> to vector<17x64xbf16>
    %cst_16 = arith.constant dense<0.000000e+00> : vector<17x17xf32>
    %47 = tpu.matmul %44, %45, %cst_16 {dimension_numbers = #tpu.dot_dimension_numbers<[1], [1], [0], [0], [0, 0, 1, 0], [], []>} : vector<17x64xbf16>, vector<17x64xbf16>, vector<17x17xf32> -> vector<17x17xf32>
    %cst_17 = arith.constant dense<0xFF800000> : vector<17xf32>
    %48 = vector.multi_reduction <maximumf>, %47, %cst_17 [1] : vector<17x17xf32> to vector<17xf32>
    %49 = vector.shape_cast %48 : vector<17xf32> to vector<17x1xf32>
    %50 = vector.broadcast %49 : vector<17x1xf32> to vector<17x17xf32>
    %51 = arith.subf %47, %50 : vector<17x17xf32>
    %52 = math.exp %51 : vector<17x17xf32>
    %cst_18 = arith.constant dense<0.000000e+00> : vector<17xf32>
    %53 = vector.multi_reduction <add>, %52, %cst_18 [1] : vector<17x17xf32> to vector<17xf32>
    %54 = vector.shape_cast %53 : vector<17xf32> to vector<17x1xf32>
    %55 = tpu.reciprocal %54 {approx = true} : vector<17x1xf32> -> vector<17x1xf32>
    %56 = vector.broadcast %55 : vector<17x1xf32> to vector<17x17xf32>
    %57 = arith.mulf %52, %56 : vector<17x17xf32>
    %58 = arith.truncf %57 : vector<17x17xf32> to vector<17x17xbf16>
    %cst_19 = arith.constant dense<0.000000e+00> : vector<17x64xf32>
    %59 = tpu.matmul %58, %46, %cst_19 {dimension_numbers = #tpu.dot_dimension_numbers<[1], [0], [0], [1], [0, 0, 1, 1], [], []>} : vector<17x17xbf16>, vector<17x64xbf16>, vector<17x64xf32> -> vector<17x64xf32>
    %60 = vector.extract_strided_slice %4 {offsets = [0, 192], sizes = [17, 64], strides = [1, 1]} : vector<17x256xf32> to vector<17x64xf32>
    %61 = arith.truncf %60 : vector<17x64xf32> to vector<17x64xbf16>
    %62 = vector.extract_strided_slice %6 {offsets = [0, 192], sizes = [17, 64], strides = [1, 1]} : vector<17x256xbf16> to vector<17x64xbf16>
    %63 = vector.extract_strided_slice %8 {offsets = [0, 192], sizes = [17, 64], strides = [1, 1]} : vector<17x256xbf16> to vector<17x64xbf16>
    %cst_20 = arith.constant dense<0.000000e+00> : vector<17x17xf32>
    %64 = tpu.matmul %61, %62, %cst_20 {dimension_numbers = #tpu.dot_dimension_numbers<[1], [1], [0], [0], [0, 0, 1, 0], [], []>} : vector<17x64xbf16>, vector<17x64xbf16>, vector<17x17xf32> -> vector<17x17xf32>
    %cst_21 = arith.constant dense<0xFF800000> : vector<17xf32>
    %65 = vector.multi_reduction <maximumf>, %64, %cst_21 [1] : vector<17x17xf32> to vector<17xf32>
    %66 = vector.shape_cast %65 : vector<17xf32> to vector<17x1xf32>
    %67 = vector.broadcast %66 : vector<17x1xf32> to vector<17x17xf32>
    %68 = arith.subf %64, %67 : vector<17x17xf32>
    %69 = math.exp %68 : vector<17x17xf32>
    %cst_22 = arith.constant dense<0.000000e+00> : vector<17xf32>
    %70 = vector.multi_reduction <add>, %69, %cst_22 [1] : vector<17x17xf32> to vector<17xf32>
    %71 = vector.shape_cast %70 : vector<17xf32> to vector<17x1xf32>
    %72 = tpu.reciprocal %71 {approx = true} : vector<17x1xf32> -> vector<17x1xf32>
    %73 = vector.broadcast %72 : vector<17x1xf32> to vector<17x17xf32>
    %74 = arith.mulf %69, %73 : vector<17x17xf32>
    %75 = arith.truncf %74 : vector<17x17xf32> to vector<17x17xbf16>
    %cst_23 = arith.constant dense<0.000000e+00> : vector<17x64xf32>
    %76 = tpu.matmul %75, %63, %cst_23 {dimension_numbers = #tpu.dot_dimension_numbers<[1], [0], [0], [1], [0, 0, 1, 1], [], []>} : vector<17x17xbf16>, vector<17x64xbf16>, vector<17x64xf32> -> vector<17x64xf32>
    %77 = tpu.concatenate %25, %42, %59, %76 in 1 : vector<17x64xf32>, vector<17x64xf32>, vector<17x64xf32>, vector<17x64xf32> -> vector<17x256xf32>
    %78 = arith.truncf %77 : vector<17x256xf32> to vector<17x256xbf16>
    %c0_24 = arith.constant 0 : index
    %c0_25 = arith.constant 0 : index
    %c0_26 = arith.constant 0 : index
    %79 = vector.load %arg4[%c0_24, %c0_25, %c0_26] : memref<1x17x256xbf16, #tpu.memory_space<vmem>>, vector<1x17x256xbf16>
    %80 = vector.shape_cast %79 : vector<1x17x256xbf16> to vector<17x256xbf16>
    %81 = vector.shape_cast %78 : vector<17x256xbf16> to vector<1x17x256xbf16>
    tpu.vector_store %arg4[%c0_24, %c0_25, %c0_26], %81 {strides = array<i32>} : memref<1x17x256xbf16, #tpu.memory_space<vmem>>, vector<1x17x256xbf16>,
    return
  }
  func.func @transform_0(%arg0: i32) -> (i32, i32, i32) {
    %c0_i32 = arith.constant 0 : i32
    %c0_i32_0 = arith.constant 0 : i32
    %c0_i32_1 = arith.constant 0 : i32
    return %arg0, %c0_i32, %c0_i32_0 : i32, i32, i32
  }
  func.func @transform_1(%arg0: i32) -> (i32, i32, i32) {
    %c0_i32 = arith.constant 0 : i32
    %c1_i32 = arith.constant 1 : i32
    %c0_i32_0 = arith.constant 0 : i32
    return %arg0, %c0_i32, %c1_i32 : i32, i32, i32
  }
  func.func @transform_2(%arg0: i32) -> (i32, i32, i32) {
    %c0_i32 = arith.constant 0 : i32
    %c2_i32 = arith.constant 2 : i32
    %c0_i32_0 = arith.constant 0 : i32
    return %arg0, %c0_i32, %c2_i32 : i32, i32, i32
  }
  func.func @transform_3(%arg0: i32) -> (i32, i32, i32) {
    %c0_i32 = arith.constant 0 : i32
    %c0_i32_0 = arith.constant 0 : i32
    %c0_i32_1 = arith.constant 0 : i32
    return %arg0, %c0_i32, %c0_i32_0 : i32, i32, i32
  }
}

module attributes {stable_mosaic.version = 11 : i64} {
  func.func @_fused_matmul_kernel(%arg0: i32, %arg1: memref<34x256xbf16, #tpu.memory_space<vmem>>, %arg2: memref<256x256xbf16, #tpu.memory_space<vmem>>, %arg3: memref<1x256xf32, #tpu.memory_space<vmem>>, %arg4: memref<34x256xbf16, #tpu.memory_space<vmem>>, %arg5: memref<34x256xbf16, #tpu.memory_space<vmem>>) attributes {dimension_semantics = [#tpu.dimension_semantics<parallel>], iteration_bounds = array<i64: 1>, scalar_prefetch = 0 : i64, scratch_operands = 0 : i64, tpu.core_type = #tpu.core_type<tc>, window_params = [{transform_indices = @transform_0, window_bounds = array<i64: 34, 256>}, {pipeline_mode = #tpu.pipeline_mode<synchronous>, transform_indices = @transform_1, window_bounds = array<i64: 256, 256>}, {pipeline_mode = #tpu.pipeline_mode<synchronous>, transform_indices = @transform_2, window_bounds = array<i64: 1, 256>}, {transform_indices = @transform_3, window_bounds = array<i64: 34, 256>}, {transform_indices = @transform_4, window_bounds = array<i64: 34, 256>}]} {
    %c0 = arith.constant 0 : index
    %c0_0 = arith.constant 0 : index
    %0 = vector.load %arg1[%c0, %c0_0] : memref<34x256xbf16, #tpu.memory_space<vmem>>, vector<34x256xbf16>
    %1 = arith.extf %0 : vector<34x256xbf16> to vector<34x256xf32>
    %2 = arith.truncf %1 : vector<34x256xf32> to vector<34x256xbf16>
    %c0_1 = arith.constant 0 : index
    %c0_2 = arith.constant 0 : index
    %3 = vector.load %arg2[%c0_1, %c0_2] : memref<256x256xbf16, #tpu.memory_space<vmem>>, vector<256x256xbf16>
    %cst = arith.constant dense<0.000000e+00> : vector<34x256xf32>
    %4 = tpu.matmul %2, %3, %cst {dimension_numbers = #tpu.dot_dimension_numbers<[1], [0], [0], [1], [0, 0, 1, 1], [], []>} : vector<34x256xbf16>, vector<256x256xbf16>, vector<34x256xf32> -> vector<34x256xf32>
    %c0_3 = arith.constant 0 : index
    %c0_4 = arith.constant 0 : index
    %5 = vector.load %arg3[%c0_3, %c0_4] : memref<1x256xf32, #tpu.memory_space<vmem>>, vector<1x256xf32>
    %6 = vector.broadcast %5 : vector<1x256xf32> to vector<34x256xf32>
    %7 = arith.addf %4, %6 : vector<34x256xf32>
    %c0_5 = arith.constant 0 : index
    %c0_6 = arith.constant 0 : index
    %8 = vector.load %arg4[%c0_5, %c0_6] : memref<34x256xbf16, #tpu.memory_space<vmem>>, vector<34x256xbf16>
    %9 = arith.extf %8 : vector<34x256xbf16> to vector<34x256xf32>
    %10 = arith.addf %7, %9 : vector<34x256xf32>
    %11 = arith.truncf %10 : vector<34x256xf32> to vector<34x256xbf16>
    %c0_7 = arith.constant 0 : index
    %c0_8 = arith.constant 0 : index
    %12 = vector.load %arg5[%c0_7, %c0_8] : memref<34x256xbf16, #tpu.memory_space<vmem>>, vector<34x256xbf16>
    tpu.vector_store %arg5[%c0_7, %c0_8], %11 {strides = array<i32>} : memref<34x256xbf16, #tpu.memory_space<vmem>>, vector<34x256xbf16>,
    return
  }
  func.func @transform_0(%arg0: i32) -> (i32, i32) {
    %c0_i32 = arith.constant 0 : i32
    %c0_i32_0 = arith.constant 0 : i32
    return %arg0, %c0_i32 : i32, i32
  }
  func.func @transform_1(%arg0: i32) -> (i32, i32) {
    %c0_i32 = arith.constant 0 : i32
    %c0_i32_0 = arith.constant 0 : i32
    %c0_i32_1 = arith.constant 0 : i32
    return %c0_i32, %c0_i32_0 : i32, i32
  }
  func.func @transform_2(%arg0: i32) -> (i32, i32) {
    %c0_i32 = arith.constant 0 : i32
    %c0_i32_0 = arith.constant 0 : i32
    %c0_i32_1 = arith.constant 0 : i32
    return %c0_i32, %c0_i32_0 : i32, i32
  }
  func.func @transform_3(%arg0: i32) -> (i32, i32) {
    %c0_i32 = arith.constant 0 : i32
    %c0_i32_0 = arith.constant 0 : i32
    return %arg0, %c0_i32 : i32, i32
  }
  func.func @transform_4(%arg0: i32) -> (i32, i32) {
    %c0_i32 = arith.constant 0 : i32
    %c0_i32_0 = arith.constant 0 : i32
    return %arg0, %c0_i32 : i32, i32
  }
}

module attributes {stable_mosaic.version = 11 : i64} {
  func.func @_fused_matmul_kernel(%arg0: i32, %arg1: memref<34x256xbf16, #tpu.memory_space<vmem>>, %arg2: memref<1x256xf32, #tpu.memory_space<vmem>>, %arg3: memref<1x256xf32, #tpu.memory_space<vmem>>, %arg4: memref<256x1024xbf16, #tpu.memory_space<vmem>>, %arg5: memref<1x1024xf32, #tpu.memory_space<vmem>>, %arg6: memref<34x1024xbf16, #tpu.memory_space<vmem>>) attributes {dimension_semantics = [#tpu.dimension_semantics<parallel>], iteration_bounds = array<i64: 1>, scalar_prefetch = 0 : i64, scratch_operands = 0 : i64, tpu.core_type = #tpu.core_type<tc>, window_params = [{transform_indices = @transform_0, window_bounds = array<i64: 34, 256>}, {pipeline_mode = #tpu.pipeline_mode<synchronous>, transform_indices = @transform_1, window_bounds = array<i64: 1, 256>}, {pipeline_mode = #tpu.pipeline_mode<synchronous>, transform_indices = @transform_2, window_bounds = array<i64: 1, 256>}, {pipeline_mode = #tpu.pipeline_mode<synchronous>, transform_indices = @transform_3, window_bounds = array<i64: 256, 1024>}, {pipeline_mode = #tpu.pipeline_mode<synchronous>, transform_indices = @transform_4, window_bounds = array<i64: 1, 1024>}, {transform_indices = @transform_5, window_bounds = array<i64: 34, 1024>}]} {
    %c0 = arith.constant 0 : index
    %c0_0 = arith.constant 0 : index
    %0 = vector.load %arg1[%c0, %c0_0] : memref<34x256xbf16, #tpu.memory_space<vmem>>, vector<34x256xbf16>
    %1 = arith.extf %0 : vector<34x256xbf16> to vector<34x256xf32>
    %cst = arith.constant dense<0.000000e+00> : vector<34xf32>
    %2 = vector.multi_reduction <add>, %1, %cst [1] : vector<34x256xf32> to vector<34xf32>
    %3 = vector.shape_cast %2 : vector<34xf32> to vector<34x1xf32>
    %cst_1 = arith.constant 2.560000e+02 : f32
    %4 = vector.broadcast %cst_1 : f32 to vector<34x1xf32>
    %5 = arith.divf %3, %4 : vector<34x1xf32>
    %6 = vector.broadcast %5 : vector<34x1xf32> to vector<34x256xf32>
    %7 = arith.subf %1, %6 : vector<34x256xf32>
    %8 = arith.mulf %7, %7 : vector<34x256xf32>
    %cst_2 = arith.constant dense<0.000000e+00> : vector<34xf32>
    %9 = vector.multi_reduction <add>, %8, %cst_2 [1] : vector<34x256xf32> to vector<34xf32>
    %10 = vector.shape_cast %9 : vector<34xf32> to vector<34x1xf32>
    %cst_3 = arith.constant 2.560000e+02 : f32
    %11 = vector.broadcast %cst_3 : f32 to vector<34x1xf32>
    %12 = arith.divf %10, %11 : vector<34x1xf32>
    %cst_4 = arith.constant 9.99999997E-7 : f32
    %13 = vector.broadcast %cst_4 : f32 to vector<34x1xf32>
    %14 = arith.addf %12, %13 : vector<34x1xf32>
    %15 = math.rsqrt %14 : vector<34x1xf32>
    %16 = vector.broadcast %15 : vector<34x1xf32> to vector<34x256xf32>
    %17 = arith.mulf %7, %16 : vector<34x256xf32>
    %c0_5 = arith.constant 0 : index
    %c0_6 = arith.constant 0 : index
    %18 = vector.load %arg2[%c0_5, %c0_6] : memref<1x256xf32, #tpu.memory_space<vmem>>, vector<1x256xf32>
    %19 = vector.broadcast %18 : vector<1x256xf32> to vector<34x256xf32>
    %20 = arith.mulf %17, %19 : vector<34x256xf32>
    %c0_7 = arith.constant 0 : index
    %c0_8 = arith.constant 0 : index
    %21 = vector.load %arg3[%c0_7, %c0_8] : memref<1x256xf32, #tpu.memory_space<vmem>>, vector<1x256xf32>
    %22 = vector.broadcast %21 : vector<1x256xf32> to vector<34x256xf32>
    %23 = arith.addf %20, %22 : vector<34x256xf32>
    %24 = arith.truncf %23 : vector<34x256xf32> to vector<34x256xbf16>
    %c0_9 = arith.constant 0 : index
    %c0_10 = arith.constant 0 : index
    %25 = vector.load %arg4[%c0_9, %c0_10] : memref<256x1024xbf16, #tpu.memory_space<vmem>>, vector<256x1024xbf16>
    %cst_11 = arith.constant dense<0.000000e+00> : vector<34x1024xf32>
    %26 = tpu.matmul %24, %25, %cst_11 {dimension_numbers = #tpu.dot_dimension_numbers<[1], [0], [0], [1], [0, 0, 1, 1], [], []>} : vector<34x256xbf16>, vector<256x1024xbf16>, vector<34x1024xf32> -> vector<34x1024xf32>
    %c0_12 = arith.constant 0 : index
    %c0_13 = arith.constant 0 : index
    %27 = vector.load %arg5[%c0_12, %c0_13] : memref<1x1024xf32, #tpu.memory_space<vmem>>, vector<1x1024xf32>
    %28 = vector.broadcast %27 : vector<1x1024xf32> to vector<34x1024xf32>
    %29 = arith.addf %26, %28 : vector<34x1024xf32>
    %30 = arith.mulf %29, %29 : vector<34x1024xf32>
    %31 = arith.mulf %29, %30 : vector<34x1024xf32>
    %cst_14 = arith.constant 4.471500e-02 : f32
    %32 = vector.broadcast %cst_14 : f32 to vector<34x1024xf32>
    %33 = arith.mulf %32, %31 : vector<34x1024xf32>
    %34 = arith.addf %29, %33 : vector<34x1024xf32>
    %cst_15 = arith.constant 0.797884583 : f32
    %35 = vector.broadcast %cst_15 : f32 to vector<34x1024xf32>
    %36 = arith.mulf %35, %34 : vector<34x1024xf32>
    %37 = math.tanh %36 : vector<34x1024xf32>
    %cst_16 = arith.constant 1.000000e+00 : f32
    %38 = vector.broadcast %cst_16 : f32 to vector<34x1024xf32>
    %39 = arith.addf %38, %37 : vector<34x1024xf32>
    %cst_17 = arith.constant 5.000000e-01 : f32
    %40 = vector.broadcast %cst_17 : f32 to vector<34x1024xf32>
    %41 = arith.mulf %40, %39 : vector<34x1024xf32>
    %42 = arith.mulf %29, %41 : vector<34x1024xf32>
    %43 = arith.truncf %42 : vector<34x1024xf32> to vector<34x1024xbf16>
    %c0_18 = arith.constant 0 : index
    %c0_19 = arith.constant 0 : index
    %44 = vector.load %arg6[%c0_18, %c0_19] : memref<34x1024xbf16, #tpu.memory_space<vmem>>, vector<34x1024xbf16>
    tpu.vector_store %arg6[%c0_18, %c0_19], %43 {strides = array<i32>} : memref<34x1024xbf16, #tpu.memory_space<vmem>>, vector<34x1024xbf16>,
    return
  }
  func.func @transform_0(%arg0: i32) -> (i32, i32) {
    %c0_i32 = arith.constant 0 : i32
    %c0_i32_0 = arith.constant 0 : i32
    return %arg0, %c0_i32 : i32, i32
  }
  func.func @transform_1(%arg0: i32) -> (i32, i32) {
    %c0_i32 = arith.constant 0 : i32
    %c0_i32_0 = arith.constant 0 : i32
    %c0_i32_1 = arith.constant 0 : i32
    return %c0_i32, %c0_i32_0 : i32, i32
  }
  func.func @transform_2(%arg0: i32) -> (i32, i32) {
    %c0_i32 = arith.constant 0 : i32
    %c0_i32_0 = arith.constant 0 : i32
    %c0_i32_1 = arith.constant 0 : i32
    return %c0_i32, %c0_i32_0 : i32, i32
  }
  func.func @transform_3(%arg0: i32) -> (i32, i32) {
    %c0_i32 = arith.constant 0 : i32
    %c0_i32_0 = arith.constant 0 : i32
    %c0_i32_1 = arith.constant 0 : i32
    return %c0_i32, %c0_i32_0 : i32, i32
  }
  func.func @transform_4(%arg0: i32) -> (i32, i32) {
    %c0_i32 = arith.constant 0 : i32
    %c0_i32_0 = arith.constant 0 : i32
    %c0_i32_1 = arith.constant 0 : i32
    return %c0_i32, %c0_i32_0 : i32, i32
  }
  func.func @transform_5(%arg0: i32) -> (i32, i32) {
    %c0_i32 = arith.constant 0 : i32
    %c0_i32_0 = arith.constant 0 : i32
    return %arg0, %c0_i32 : i32, i32
  }
}

module attributes {stable_mosaic.version = 11 : i64} {
  func.func @_fused_matmul_kernel(%arg0: i32, %arg1: memref<34x1024xbf16, #tpu.memory_space<vmem>>, %arg2: memref<1024x256xbf16, #tpu.memory_space<vmem>>, %arg3: memref<1x256xf32, #tpu.memory_space<vmem>>, %arg4: memref<34x256xbf16, #tpu.memory_space<vmem>>, %arg5: memref<34x256xbf16, #tpu.memory_space<vmem>>) attributes {dimension_semantics = [#tpu.dimension_semantics<parallel>], iteration_bounds = array<i64: 1>, scalar_prefetch = 0 : i64, scratch_operands = 0 : i64, tpu.core_type = #tpu.core_type<tc>, window_params = [{transform_indices = @transform_0, window_bounds = array<i64: 34, 1024>}, {pipeline_mode = #tpu.pipeline_mode<synchronous>, transform_indices = @transform_1, window_bounds = array<i64: 1024, 256>}, {pipeline_mode = #tpu.pipeline_mode<synchronous>, transform_indices = @transform_2, window_bounds = array<i64: 1, 256>}, {transform_indices = @transform_3, window_bounds = array<i64: 34, 256>}, {transform_indices = @transform_4, window_bounds = array<i64: 34, 256>}]} {
    %c0 = arith.constant 0 : index
    %c0_0 = arith.constant 0 : index
    %0 = vector.load %arg1[%c0, %c0_0] : memref<34x1024xbf16, #tpu.memory_space<vmem>>, vector<34x1024xbf16>
    %1 = arith.extf %0 : vector<34x1024xbf16> to vector<34x1024xf32>
    %2 = arith.truncf %1 : vector<34x1024xf32> to vector<34x1024xbf16>
    %c0_1 = arith.constant 0 : index
    %c0_2 = arith.constant 0 : index
    %3 = vector.load %arg2[%c0_1, %c0_2] : memref<1024x256xbf16, #tpu.memory_space<vmem>>, vector<1024x256xbf16>
    %cst = arith.constant dense<0.000000e+00> : vector<34x256xf32>
    %4 = tpu.matmul %2, %3, %cst {dimension_numbers = #tpu.dot_dimension_numbers<[1], [0], [0], [1], [0, 0, 1, 1], [], []>} : vector<34x1024xbf16>, vector<1024x256xbf16>, vector<34x256xf32> -> vector<34x256xf32>
    %c0_3 = arith.constant 0 : index
    %c0_4 = arith.constant 0 : index
    %5 = vector.load %arg3[%c0_3, %c0_4] : memref<1x256xf32, #tpu.memory_space<vmem>>, vector<1x256xf32>
    %6 = vector.broadcast %5 : vector<1x256xf32> to vector<34x256xf32>
    %7 = arith.addf %4, %6 : vector<34x256xf32>
    %c0_5 = arith.constant 0 : index
    %c0_6 = arith.constant 0 : index
    %8 = vector.load %arg4[%c0_5, %c0_6] : memref<34x256xbf16, #tpu.memory_space<vmem>>, vector<34x256xbf16>
    %9 = arith.extf %8 : vector<34x256xbf16> to vector<34x256xf32>
    %10 = arith.addf %7, %9 : vector<34x256xf32>
    %11 = arith.truncf %10 : vector<34x256xf32> to vector<34x256xbf16>
    %c0_7 = arith.constant 0 : index
    %c0_8 = arith.constant 0 : index
    %12 = vector.load %arg5[%c0_7, %c0_8] : memref<34x256xbf16, #tpu.memory_space<vmem>>, vector<34x256xbf16>
    tpu.vector_store %arg5[%c0_7, %c0_8], %11 {strides = array<i32>} : memref<34x256xbf16, #tpu.memory_space<vmem>>, vector<34x256xbf16>,
    return
  }
  func.func @transform_0(%arg0: i32) -> (i32, i32) {
    %c0_i32 = arith.constant 0 : i32
    %c0_i32_0 = arith.constant 0 : i32
    return %arg0, %c0_i32 : i32, i32
  }
  func.func @transform_1(%arg0: i32) -> (i32, i32) {
    %c0_i32 = arith.constant 0 : i32
    %c0_i32_0 = arith.constant 0 : i32
    %c0_i32_1 = arith.constant 0 : i32
    return %c0_i32, %c0_i32_0 : i32, i32
  }
  func.func @transform_2(%arg0: i32) -> (i32, i32) {
    %c0_i32 = arith.constant 0 : i32
    %c0_i32_0 = arith.constant 0 : i32
    %c0_i32_1 = arith.constant 0 : i32
    return %c0_i32, %c0_i32_0 : i32, i32
  }
  func.func @transform_3(%arg0: i32) -> (i32, i32) {
    %c0_i32 = arith.constant 0 : i32
    %c0_i32_0 = arith.constant 0 : i32
    return %arg0, %c0_i32 : i32, i32
  }
  func.func @transform_4(%arg0: i32) -> (i32, i32) {
    %c0_i32 = arith.constant 0 : i32
    %c0_i32_0 = arith.constant 0 : i32
    return %arg0, %c0_i32 : i32, i32
  }
}

module attributes {stable_mosaic.version = 11 : i64} {
  func.func @_fused_matmul_kernel(%arg0: i32, %arg1: memref<2x256xbf16, #tpu.memory_space<vmem>>, %arg2: memref<1x256xf32, #tpu.memory_space<vmem>>, %arg3: memref<1x256xf32, #tpu.memory_space<vmem>>, %arg4: memref<256x10xbf16, #tpu.memory_space<vmem>>, %arg5: memref<1x10xf32, #tpu.memory_space<vmem>>, %arg6: memref<2x10xf32, #tpu.memory_space<vmem>>) attributes {dimension_semantics = [#tpu.dimension_semantics<parallel>], iteration_bounds = array<i64: 1>, scalar_prefetch = 0 : i64, scratch_operands = 0 : i64, tpu.core_type = #tpu.core_type<tc>, window_params = [{transform_indices = @transform_0, window_bounds = array<i64: 2, 256>}, {pipeline_mode = #tpu.pipeline_mode<synchronous>, transform_indices = @transform_1, window_bounds = array<i64: 1, 256>}, {pipeline_mode = #tpu.pipeline_mode<synchronous>, transform_indices = @transform_2, window_bounds = array<i64: 1, 256>}, {pipeline_mode = #tpu.pipeline_mode<synchronous>, transform_indices = @transform_3, window_bounds = array<i64: 256, 10>}, {pipeline_mode = #tpu.pipeline_mode<synchronous>, transform_indices = @transform_4, window_bounds = array<i64: 1, 10>}, {transform_indices = @transform_5, window_bounds = array<i64: 2, 10>}]} {
    %c0 = arith.constant 0 : index
    %c0_0 = arith.constant 0 : index
    %0 = vector.load %arg1[%c0, %c0_0] : memref<2x256xbf16, #tpu.memory_space<vmem>>, vector<2x256xbf16>
    %1 = arith.extf %0 : vector<2x256xbf16> to vector<2x256xf32>
    %cst = arith.constant dense<0.000000e+00> : vector<2xf32>
    %2 = vector.multi_reduction <add>, %1, %cst [1] : vector<2x256xf32> to vector<2xf32>
    %3 = vector.shape_cast %2 : vector<2xf32> to vector<2x1xf32>
    %cst_1 = arith.constant 2.560000e+02 : f32
    %4 = vector.broadcast %cst_1 : f32 to vector<2x1xf32>
    %5 = arith.divf %3, %4 : vector<2x1xf32>
    %6 = vector.broadcast %5 : vector<2x1xf32> to vector<2x256xf32>
    %7 = arith.subf %1, %6 : vector<2x256xf32>
    %8 = arith.mulf %7, %7 : vector<2x256xf32>
    %cst_2 = arith.constant dense<0.000000e+00> : vector<2xf32>
    %9 = vector.multi_reduction <add>, %8, %cst_2 [1] : vector<2x256xf32> to vector<2xf32>
    %10 = vector.shape_cast %9 : vector<2xf32> to vector<2x1xf32>
    %cst_3 = arith.constant 2.560000e+02 : f32
    %11 = vector.broadcast %cst_3 : f32 to vector<2x1xf32>
    %12 = arith.divf %10, %11 : vector<2x1xf32>
    %cst_4 = arith.constant 9.99999997E-7 : f32
    %13 = vector.broadcast %cst_4 : f32 to vector<2x1xf32>
    %14 = arith.addf %12, %13 : vector<2x1xf32>
    %15 = math.rsqrt %14 : vector<2x1xf32>
    %16 = vector.broadcast %15 : vector<2x1xf32> to vector<2x256xf32>
    %17 = arith.mulf %7, %16 : vector<2x256xf32>
    %c0_5 = arith.constant 0 : index
    %c0_6 = arith.constant 0 : index
    %18 = vector.load %arg2[%c0_5, %c0_6] : memref<1x256xf32, #tpu.memory_space<vmem>>, vector<1x256xf32>
    %19 = vector.broadcast %18 : vector<1x256xf32> to vector<2x256xf32>
    %20 = arith.mulf %17, %19 : vector<2x256xf32>
    %c0_7 = arith.constant 0 : index
    %c0_8 = arith.constant 0 : index
    %21 = vector.load %arg3[%c0_7, %c0_8] : memref<1x256xf32, #tpu.memory_space<vmem>>, vector<1x256xf32>
    %22 = vector.broadcast %21 : vector<1x256xf32> to vector<2x256xf32>
    %23 = arith.addf %20, %22 : vector<2x256xf32>
    %24 = arith.truncf %23 : vector<2x256xf32> to vector<2x256xbf16>
    %c0_9 = arith.constant 0 : index
    %c0_10 = arith.constant 0 : index
    %25 = vector.load %arg4[%c0_9, %c0_10] : memref<256x10xbf16, #tpu.memory_space<vmem>>, vector<256x10xbf16>
    %cst_11 = arith.constant dense<0.000000e+00> : vector<2x10xf32>
    %26 = tpu.matmul %24, %25, %cst_11 {dimension_numbers = #tpu.dot_dimension_numbers<[1], [0], [0], [1], [0, 0, 1, 1], [], []>} : vector<2x256xbf16>, vector<256x10xbf16>, vector<2x10xf32> -> vector<2x10xf32>
    %c0_12 = arith.constant 0 : index
    %c0_13 = arith.constant 0 : index
    %27 = vector.load %arg5[%c0_12, %c0_13] : memref<1x10xf32, #tpu.memory_space<vmem>>, vector<1x10xf32>
    %28 = vector.broadcast %27 : vector<1x10xf32> to vector<2x10xf32>
    %29 = arith.addf %26, %28 : vector<2x10xf32>
    %c0_14 = arith.constant 0 : index
    %c0_15 = arith.constant 0 : index
    %30 = vector.load %arg6[%c0_14, %c0_15] : memref<2x10xf32, #tpu.memory_space<vmem>>, vector<2x10xf32>
    tpu.vector_store %arg6[%c0_14, %c0_15], %29 {strides = array<i32>} : memref<2x10xf32, #tpu.memory_space<vmem>>, vector<2x10xf32>,
    return
  }
  func.func @transform_0(%arg0: i32) -> (i32, i32) {
    %c0_i32 = arith.constant 0 : i32
    %c0_i32_0 = arith.constant 0 : i32
    return %arg0, %c0_i32 : i32, i32
  }
  func.func @transform_1(%arg0: i32) -> (i32, i32) {
    %c0_i32 = arith.constant 0 : i32
    %c0_i32_0 = arith.constant 0 : i32
    %c0_i32_1 = arith.constant 0 : i32
    return %c0_i32, %c0_i32_0 : i32, i32
  }
  func.func @transform_2(%arg0: i32) -> (i32, i32) {
    %c0_i32 = arith.constant 0 : i32
    %c0_i32_0 = arith.constant 0 : i32
    %c0_i32_1 = arith.constant 0 : i32
    return %c0_i32, %c0_i32_0 : i32, i32
  }
  func.func @transform_3(%arg0: i32) -> (i32, i32) {
    %c0_i32 = arith.constant 0 : i32
    %c0_i32_0 = arith.constant 0 : i32
    %c0_i32_1 = arith.constant 0 : i32
    return %c0_i32, %c0_i32_0 : i32, i32
  }
  func.func @transform_4(%arg0: i32) -> (i32, i32) {
    %c0_i32 = arith.constant 0 : i32
    %c0_i32_0 = arith.constant 0 : i32
    %c0_i32_1 = arith.constant 0 : i32
    return %c0_i32, %c0_i32_0 : i32, i32
  }
  func.func @transform_5(%arg0: i32) -> (i32, i32) {
    %c0_i32 = arith.constant 0 : i32
    %c0_i32_0 = arith.constant 0 : i32
    return %arg0, %c0_i32 : i32, i32
  }
}

</mosaic_0001>

<llo_original>
// kernel: _lambda_.22
$region0: #{_lambda_.22}
  #allocation0 [shape = 'u32[]', space=smem, size = 0x4, offset = 0x4, fixed_abs, tag = 'smem constant byte address 0x4 - core index']
  #allocation1 [shape = 'u32[144,128]{1,0:T(1,128)}', space=vmem, size = 0x12000, scoped, tag = 'internal scratch']
  %s0 = inlined_call_operand.vmem [shape: bf16[32,768], index: 0, kind: input, shape index: {}]
  %s1 = inlined_call_operand.vmem [shape: bf16[768,256], index: 1, kind: input, shape index: {}]
  %s2 = inlined_call_operand.vmem [shape: f32[1,256], index: 2, kind: input, shape index: {}]
  %s3 = inlined_call_operand.vmem [shape: bf16[32,256], index: 3, kind: output, shape index: {}]
  %s4 = sld [smem:[#allocation0]]
  $region22: #{_lambda_.22} parent=0
    _
  %s6 = ssub.s32 1, %s4
  %s7 = scalar_select 0, %s6, %s4
  // Predicated region
  $region2: #{_lambda_.22} parent=0 // pred_check
    _
  $region3: #{_lambda_.22} parent=0 // pred_check_branch
    %9 = sbr.rel (0) target = $region5
  $region4: #{_lambda_.22} parent=0 // pred_region
    _
  $region5: #{_lambda_.22} parent=0 // pred_fallthru
    _
  // Predicated region
  $region6: #{_lambda_.22} parent=0 // pred_check
    _
  $region7: #{_lambda_.22} parent=0 // pred_check_branch
    %11 = sbr.rel (0) target = $region9
  $region8: #{_lambda_.22} parent=0 // pred_region
    _
  $region9: #{_lambda_.22} parent=0 // pred_fallthru
    _
  // Predicated region
  $region10: #{_lambda_.22} parent=0 // pred_check
    _
  $region11: #{_lambda_.22} parent=0 // pred_check_branch
    %13 = sbr.rel (0) target = $region13
  $region12: #{_lambda_.22} parent=0 // pred_region
    _
  $region13: #{_lambda_.22} parent=0 // pred_fallthru
    _
  %v14 = vld [vmem:[%s0] sm:$0xff]
  %v15 = vld [vmem:[%s0 + $0x8] sm:$0xff]
  %v16 = vld [vmem:[%s0 + $0x10] sm:$0xff]
  %v17 = vld [vmem:[%s0 + $0x18] sm:$0xff]
  %v18 = vld [vmem:[%s0 + $0x20] sm:$0xff]
  %v19 = vld [vmem:[%s0 + $0x28] sm:$0xff]
  %v20 = vld [vmem:[%s0 + $0x30] sm:$0xff]
  %v21 = vld [vmem:[%s0 + $0x38] sm:$0xff]
  %v22 = vld [vmem:[%s0 + $0x40] sm:$0xff]
  %v23 = vld [vmem:[%s0 + $0x48] sm:$0xff]
  %v24 = vld [vmem:[%s0 + $0x50] sm:$0xff]
  %v25 = vld [vmem:[%s0 + $0x58] sm:$0xff]
  %v26 = vld [vmem:[%s1] sm:$0xff]
  %v27 = vld [vmem:[%s1 + $0x8] sm:$0xff]
  %v28 = vld [vmem:[%s1 + $0x10] sm:$0xff]
  %v29 = vld [vmem:[%s1 + $0x18] sm:$0xff]
  %v30 = vld [vmem:[%s1 + $0x20] sm:$0xff]
  %v31 = vld [vmem:[%s1 + $0x28] sm:$0xff]
  %v32 = vld [vmem:[%s1 + $0x30] sm:$0xff]
  %v33 = vld [vmem:[%s1 + $0x38] sm:$0xff]
  %v34 = vld [vmem:[%s1 + $0x40] sm:$0xff]
  %v35 = vld [vmem:[%s1 + $0x48] sm:$0xff]
  %v36 = vld [vmem:[%s1 + $0x50] sm:$0xff]
  %v37 = vld [vmem:[%s1 + $0x58] sm:$0xff]
  %v38 = vld [vmem:[%s1 + $0x60] sm:$0xff]
  %v39 = vld [vmem:[%s1 + $0x68] sm:$0xff]
  %v40 = vld [vmem:[%s1 + $0x70] sm:$0xff]
  %v41 = vld [vmem:[%s1 + $0x78] sm:$0xff]
  %v42 = vld [vmem:[%s1 + $0x80] sm:$0xff]
  %v43 = vld [vmem:[%s1 + $0x88] sm:$0xff]
  %v44 = vld [vmem:[%s1 + $0x90] sm:$0xff]
  %v45 = vld [vmem:[%s1 + $0x98] sm:$0xff]
  %v46 = vld [vmem:[%s1 + $0xa0] sm:$0xff]
  %v47 = vld [vmem:[%s1 + $0xa8] sm:$0xff]
  %v48 = vld [vmem:[%s1 + $0xb0] sm:$0xff]
  %v49 = vld [vmem:[%s1 + $0xb8] sm:$0xff]
  %v50 = vld [vmem:[%s1 + $0xc0] sm:$0xff]
  %v51 = vld [vmem:[%s1 + $0xc8] sm:$0xff]
  %v52 = vld [vmem:[%s1 + $0xd0] sm:$0xff]
  %v53 = vld [vmem:[%s1 + $0xd8] sm:$0xff]
  %v54 = vld [vmem:[%s1 + $0xe0] sm:$0xff]
  %v55 = vld [vmem:[%s1 + $0xe8] sm:$0xff]
  %v56 = vld [vmem:[%s1 + $0xf0] sm:$0xff]
  %v57 = vld [vmem:[%s1 + $0xf8] sm:$0xff]
  %v58 = vld [vmem:[%s1 + $0x100] sm:$0xff]
  %v59 = vld [vmem:[%s1 + $0x108] sm:$0xff]
  %v60 = vld [vmem:[%s1 + $0x110] sm:$0xff]
  %v61 = vld [vmem:[%s1 + $0x118] sm:$0xff]
  %v62 = vld [vmem:[%s1 + $0x120] sm:$0xff]
  %v63 = vld [vmem:[%s1 + $0x128] sm:$0xff]
  %v64 = vld [vmem:[%s1 + $0x130] sm:$0xff]
  %v65 = vld [vmem:[%s1 + $0x138] sm:$0xff]
  %v66 = vld [vmem:[%s1 + $0x140] sm:$0xff]
  %v67 = vld [vmem:[%s1 + $0x148] sm:$0xff]
  %v68 = vld [vmem:[%s1 + $0x150] sm:$0xff]
  %v69 = vld [vmem:[%s1 + $0x158] sm:$0xff]
  %v70 = vld [vmem:[%s1 + $0x160] sm:$0xff]
  %v71 = vld [vmem:[%s1 + $0x168] sm:$0xff]
  %v72 = vld [vmem:[%s1 + $0x170] sm:$0xff]
  %v73 = vld [vmem:[%s1 + $0x178] sm:$0xff]
  %v74 = vld [vmem:[%s1 + $0x180] sm:$0xff]
  %v75 = vld [vmem:[%s1 + $0x188] sm:$0xff]
  %v76 = vld [vmem:[%s1 + $0x190] sm:$0xff]
  %v77 = vld [vmem:[%s1 + $0x198] sm:$0xff]
  %v78 = vld [vmem:[%s1 + $0x1a0] sm:$0xff]
  %v79 = vld [vmem:[%s1 + $0x1a8] sm:$0xff]
  %v80 = vld [vmem:[%s1 + $0x1b0] sm:$0xff]
  %v81 = vld [vmem:[%s1 + $0x1b8] sm:$0xff]
  %v82 = vld [vmem:[%s1 + $0x1c0] sm:$0xff]
  %v83 = vld [vmem:[%s1 + $0x1c8] sm:$0xff]
  %v84 = vld [vmem:[%s1 + $0x1d0] sm:$0xff]
  %v85 = vld [vmem:[%s1 + $0x1d8] sm:$0xff]
  %v86 = vld [vmem:[%s1 + $0x1e0] sm:$0xff]
  %v87 = vld [vmem:[%s1 + $0x1e8] sm:$0xff]
  %v88 = vld [vmem:[%s1 + $0x1f0] sm:$0xff]
  %v89 = vld [vmem:[%s1 + $0x1f8] sm:$0xff]
  %v90 = vld [vmem:[%s1 + $0x200] sm:$0xff]
  %v91 = vld [vmem:[%s1 + $0x208] sm:$0xff]
  %v92 = vld [vmem:[%s1 + $0x210] sm:$0xff]
  %v93 = vld [vmem:[%s1 + $0x218] sm:$0xff]
  %v94 = vld [vmem:[%s1 + $0x220] sm:$0xff]
  %v95 = vld [vmem:[%s1 + $0x228] sm:$0xff]
  %v96 = vld [vmem:[%s1 + $0x230] sm:$0xff]
  %v97 = vld [vmem:[%s1 + $0x238] sm:$0xff]
  %v98 = vld [vmem:[%s1 + $0x240] sm:$0xff]
  %v99 = vld [vmem:[%s1 + $0x248] sm:$0xff]
  %v100 = vld [vmem:[%s1 + $0x250] sm:$0xff]
  %v101 = vld [vmem:[%s1 + $0x258] sm:$0xff]
  %v102 = vld [vmem:[%s1 + $0x260] sm:$0xff]
  %v103 = vld [vmem:[%s1 + $0x268] sm:$0xff]
  %v104 = vld [vmem:[%s1 + $0x270] sm:$0xff]
  %v105 = vld [vmem:[%s1 + $0x278] sm:$0xff]
  %v106 = vld [vmem:[%s1 + $0x280] sm:$0xff]
  %v107 = vld [vmem:[%s1 + $0x288] sm:$0xff]
  %v108 = vld [vmem:[%s1 + $0x290] sm:$0xff]
  %v109 = vld [vmem:[%s1 + $0x298] sm:$0xff]
  %v110 = vld [vmem:[%s1 + $0x2a0] sm:$0xff]
  %v111 = vld [vmem:[%s1 + $0x2a8] sm:$0xff]
  %v112 = vld [vmem:[%s1 + $0x2b0] sm:$0xff]
  %v113 = vld [vmem:[%s1 + $0x2b8] sm:$0xff]
  %v114 = vld [vmem:[%s1 + $0x2c0] sm:$0xff]
  %v115 = vld [vmem:[%s1 + $0x2c8] sm:$0xff]
  %v116 = vld [vmem:[%s1 + $0x2d0] sm:$0xff]
  %v117 = vld [vmem:[%s1 + $0x2d8] sm:$0xff]
  %v118 = vld [vmem:[%s1 + $0x2e0] sm:$0xff]
  %v119 = vld [vmem:[%s1 + $0x2e8] sm:$0xff]
  %v120 = vld [vmem:[%s1 + $0x2f0] sm:$0xff]
  %v121 = vld [vmem:[%s1 + $0x2f8] sm:$0xff]
  %v122 = vld [vmem:[%s2] sm:$0x3]
  %v124 = vlaneseq
  %v125 = vshrl.u32 %v124, 7
  %v126 = vsub.s32 0, %v125
  %v127 = vrot.slane %v122, %v126
  %v128 = vlaneseq
  %v129 = vshrl.u32 %v128, 7
  %v130 = vsub.s32 1, %v129
  %v131 = vrot.slane %v122, %v130
  %v146 = vunpack.c.l.b16 %v14
  %v147 = vunpack.c.h.b16 %v14
  %v148 = vunpack.c.l.b16 %v15
  %v149 = vunpack.c.h.b16 %v15
  %v150 = vunpack.c.l.b16 %v16
  %v151 = vunpack.c.h.b16 %v16
  %v152 = vunpack.c.l.b16 %v17
  %v153 = vunpack.c.h.b16 %v17
  %v154 = vunpack.c.l.b16 %v18
  %v155 = vunpack.c.h.b16 %v18
  %v156 = vunpack.c.l.b16 %v19
  %v157 = vunpack.c.h.b16 %v19
  %v158 = vunpack.c.l.b16 %v20
  %v159 = vunpack.c.h.b16 %v20
  %v160 = vunpack.c.l.b16 %v21
  %v161 = vunpack.c.h.b16 %v21
  %v162 = vunpack.c.l.b16 %v22
  %v163 = vunpack.c.h.b16 %v22
  %v164 = vunpack.c.l.b16 %v23
  %v165 = vunpack.c.h.b16 %v23
  %v166 = vunpack.c.l.b16 %v24
  %v167 = vunpack.c.h.b16 %v24
  %v168 = vunpack.c.l.b16 %v25
  %v169 = vunpack.c.h.b16 %v25
  %v170 = vpack.c.b16 %v152, %v146
  %v171 = vpack.c.b16 %v153, %v147
  %v172 = vpack.c.b16 %v154, %v148
  %v173 = vpack.c.b16 %v155, %v149
  %v174 = vpack.c.b16 %v156, %v150
  %v175 = vpack.c.b16 %v157, %v151
  %v176 = vpack.c.b16 %v164, %v158
  %v177 = vpack.c.b16 %v165, %v159
  %v178 = vpack.c.b16 %v166, %v160
  %v179 = vpack.c.b16 %v167, %v161
  %v180 = vpack.c.b16 %v168, %v162
  %v181 = vpack.c.b16 %v169, %v163
  %v290 = vunpack.c.l.b16 %v26
  %v291 = vunpack.c.h.b16 %v26
  %v292 = vunpack.c.l.b16 %v27
  %v293 = vunpack.c.h.b16 %v27
  %v294 = vunpack.c.l.b16 %v28
  %v295 = vunpack.c.h.b16 %v28
  %v296 = vunpack.c.l.b16 %v29
  %v297 = vunpack.c.h.b16 %v29
  %v298 = vunpack.c.l.b16 %v30
  %v299 = vunpack.c.h.b16 %v30
  %v300 = vunpack.c.l.b16 %v31
  %v301 = vunpack.c.h.b16 %v31
  %v302 = vunpack.c.l.b16 %v32
  %v303 = vunpack.c.h.b16 %v32
  %v304 = vunpack.c.l.b16 %v33
  %v305 = vunpack.c.h.b16 %v33
  %v306 = vunpack.c.l.b16 %v34
  %v307 = vunpack.c.h.b16 %v34
  %v308 = vunpack.c.l.b16 %v35
  %v309 = vunpack.c.h.b16 %v35
  %v310 = vunpack.c.l.b16 %v36
  %v311 = vunpack.c.h.b16 %v36
  %v312 = vunpack.c.l.b16 %v37
  %v313 = vunpack.c.h.b16 %v37
  %v314 = vunpack.c.l.b16 %v38
  %v315 = vunpack.c.h.b16 %v38
  %v316 = vunpack.c.l.b16 %v39
  %v317 = vunpack.c.h.b16 %v39
  %v318 = vunpack.c.l.b16 %v40
  %v319 = vunpack.c.h.b16 %v40
  %v320 = vunpack.c.l.b16 %v41
  %v321 = vunpack.c.h.b16 %v41
  %v322 = vunpack.c.l.b16 %v42
  %v323 = vunpack.c.h.b16 %v42
  %v324 = vunpack.c.l.b16 %v43
  %v325 = vunpack.c.h.b16 %v43
  %v326 = vunpack.c.l.b16 %v44
  %v327 = vunpack.c.h.b16 %v44
  %v328 = vunpack.c.l.b16 %v45
  %v329 = vunpack.c.h.b16 %v45
  %v330 = vunpack.c.l.b16 %v46
  %v331 = vunpack.c.h.b16 %v46
  %v332 = vunpack.c.l.b16 %v47
  %v333 = vunpack.c.h.b16 %v47
  %v334 = vunpack.c.l.b16 %v48
  %v335 = vunpack.c.h.b16 %v48
  %v336 = vunpack.c.l.b16 %v49
  %v337 = vunpack.c.h.b16 %v49
  %v338 = vunpack.c.l.b16 %v50
  %v339 = vunpack.c.h.b16 %v50
  %v340 = vunpack.c.l.b16 %v51
  %v341 = vunpack.c.h.b16 %v51
  %v342 = vunpack.c.l.b16 %v52
  %v343 = vunpack.c.h.b16 %v52
  %v344 = vunpack.c.l.b16 %v53
  %v345 = vunpack.c.h.b16 %v53
  %v346 = vunpack.c.l.b16 %v54
  %v347 = vunpack.c.h.b16 %v54
  %v348 = vunpack.c.l.b16 %v55
  %v349 = vunpack.c.h.b16 %v55
  %v350 = vunpack.c.l.b16 %v56
  %v351 = vunpack.c.h.b16 %v56
  %v352 = vunpack.c.l.b16 %v57
  %v353 = vunpack.c.h.b16 %v57
  %v354 = vunpack.c.l.b16 %v58
  %v355 = vunpack.c.h.b16 %v58
  %v356 = vunpack.c.l.b16 %v59
  %v357 = vunpack.c.h.b16 %v59
  %v358 = vunpack.c.l.b16 %v60
  %v359 = vunpack.c.h.b16 %v60
  %v360 = vunpack.c.l.b16 %v61
  %v361 = vunpack.c.h.b16 %v61
  %v362 = vunpack.c.l.b16 %v62
  %v363 = vunpack.c.h.b16 %v62
  %v364 = vunpack.c.l.b16 %v63
  %v365 = vunpack.c.h.b16 %v63
  %v366 = vunpack.c.l.b16 %v64
  %v367 = vunpack.c.h.b16 %v64
  %v368 = vunpack.c.l.b16 %v65
  %v369 = vunpack.c.h.b16 %v65
  %v370 = vunpack.c.l.b16 %v66
  %v371 = vunpack.c.h.b16 %v66
  %v372 = vunpack.c.l.b16 %v67
  %v373 = vunpack.c.h.b16 %v67
  %v374 = vunpack.c.l.b16 %v68
  %v375 = vunpack.c.h.b16 %v68
  %v376 = vunpack.c.l.b16 %v69
  %v377 = vunpack.c.h.b16 %v69
  %v378 = vunpack.c.l.b16 %v70
  %v379 = vunpack.c.h.b16 %v70
  %v380 = vunpack.c.l.b16 %v71
  %v381 = vunpack.c.h.b16 %v71
  %v382 = vunpack.c.l.b16 %v72
  %v383 = vunpack.c.h.b16 %v72
  %v384 = vunpack.c.l.b16 %v73
  %v385 = vunpack.c.h.b16 %v73
  %v386 = vunpack.c.l.b16 %v74
  %v387 = vunpack.c.h.b16 %v74
  %v388 = vunpack.c.l.b16 %v75
  %v389 = vunpack.c.h.b16 %v75
  %v390 = vunpack.c.l.b16 %v76
  %v391 = vunpack.c.h.b16 %v76
  %v392 = vunpack.c.l.b16 %v77
  %v393 = vunpack.c.h.b16 %v77
  %v394 = vunpack.c.l.b16 %v78
  %v395 = vunpack.c.h.b16 %v78
  %v396 = vunpack.c.l.b16 %v79
  %v397 = vunpack.c.h.b16 %v79
  %v398 = vunpack.c.l.b16 %v80
  %v399 = vunpack.c.h.b16 %v80
  %v400 = vunpack.c.l.b16 %v81
  %v401 = vunpack.c.h.b16 %v81
  %v402 = vunpack.c.l.b16 %v82
  %v403 = vunpack.c.h.b16 %v82
  %v404 = vunpack.c.l.b16 %v83
  %v405 = vunpack.c.h.b16 %v83
  %v406 = vunpack.c.l.b16 %v84
  %v407 = vunpack.c.h.b16 %v84
  %v408 = vunpack.c.l.b16 %v85
  %v409 = vunpack.c.h.b16 %v85
  %v410 = vunpack.c.l.b16 %v86
  %v411 = vunpack.c.h.b16 %v86
  %v412 = vunpack.c.l.b16 %v87
  %v413 = vunpack.c.h.b16 %v87
  %v414 = vunpack.c.l.b16 %v88
  %v415 = vunpack.c.h.b16 %v88
  %v416 = vunpack.c.l.b16 %v89
  %v417 = vunpack.c.h.b16 %v89
  %v418 = vunpack.c.l.b16 %v90
  %v419 = vunpack.c.h.b16 %v90
  %v420 = vunpack.c.l.b16 %v91
  %v421 = vunpack.c.h.b16 %v91
  %v422 = vunpack.c.l.b16 %v92
  %v423 = vunpack.c.h.b16 %v92
  %v424 = vunpack.c.l.b16 %v93
  %v425 = vunpack.c.h.b16 %v93
  %v426 = vunpack.c.l.b16 %v94
  %v427 = vunpack.c.h.b16 %v94
  %v428 = vunpack.c.l.b16 %v95
  %v429 = vunpack.c.h.b16 %v95
  %v430 = vunpack.c.l.b16 %v96
  %v431 = vunpack.c.h.b16 %v96
  %v432 = vunpack.c.l.b16 %v97
  %v433 = vunpack.c.h.b16 %v97
  %v434 = vunpack.c.l.b16 %v98
  %v435 = vunpack.c.h.b16 %v98
  %v436 = vunpack.c.l.b16 %v99
  %v437 = vunpack.c.h.b16 %v99
  %v438 = vunpack.c.l.b16 %v100
  %v439 = vunpack.c.h.b16 %v100
  %v440 = vunpack.c.l.b16 %v101
  %v441 = vunpack.c.h.b16 %v101
  %v442 = vunpack.c.l.b16 %v102
  %v443 = vunpack.c.h.b16 %v102
  %v444 = vunpack.c.l.b16 %v103
  %v445 = vunpack.c.h.b16 %v103
  %v446 = vunpack.c.l.b16 %v104
  %v447 = vunpack.c.h.b16 %v104
  %v448 = vunpack.c.l.b16 %v105
  %v449 = vunpack.c.h.b16 %v105
  %v450 = vunpack.c.l.b16 %v106
  %v451 = vunpack.c.h.b16 %v106
  %v452 = vunpack.c.l.b16 %v107
  %v453 = vunpack.c.h.b16 %v107
  %v454 = vunpack.c.l.b16 %v108
  %v455 = vunpack.c.h.b16 %v108
  %v456 = vunpack.c.l.b16 %v109
  %v457 = vunpack.c.h.b16 %v109
  %v458 = vunpack.c.l.b16 %v110
  %v459 = vunpack.c.h.b16 %v110
  %v460 = vunpack.c.l.b16 %v111
  %v461 = vunpack.c.h.b16 %v111
  %v462 = vunpack.c.l.b16 %v112
  %v463 = vunpack.c.h.b16 %v112
  %v464 = vunpack.c.l.b16 %v113
  %v465 = vunpack.c.h.b16 %v113
  %v466 = vunpack.c.l.b16 %v114
  %v467 = vunpack.c.h.b16 %v114
  %v468 = vunpack.c.l.b16 %v115
  %v469 = vunpack.c.h.b16 %v115
  %v470 = vunpack.c.l.b16 %v116
  %v471 = vunpack.c.h.b16 %v116
  %v472 = vunpack.c.l.b16 %v117
  %v473 = vunpack.c.h.b16 %v117
  %v474 = vunpack.c.l.b16 %v118
  %v475 = vunpack.c.h.b16 %v118
  %v476 = vunpack.c.l.b16 %v119
  %v477 = vunpack.c.h.b16 %v119
  %v478 = vunpack.c.l.b16 %v120
  %v479 = vunpack.c.h.b16 %v120
  %v480 = vunpack.c.l.b16 %v121
  %v481 = vunpack.c.h.b16 %v121
  %v482 = vpack.c.b16 %v292, %v290
  %v483 = vpack.c.b16 %v293, %v291
  %v484 = vpack.c.b16 %v296, %v294
  %v485 = vpack.c.b16 %v297, %v295
  %v486 = vpack.c.b16 %v300, %v298
  %v487 = vpack.c.b16 %v301, %v299
  %v488 = vpack.c.b16 %v304, %v302
  %v489 = vpack.c.b16 %v305, %v303
  %v490 = vpack.c.b16 %v308, %v306
  %v491 = vpack.c.b16 %v309, %v307
  %v492 = vpack.c.b16 %v312, %v310
  %v493 = vpack.c.b16 %v313, %v311
  %v494 = vpack.c.b16 %v316, %v314
  %v495 = vpack.c.b16 %v317, %v315
  %v496 = vpack.c.b16 %v320, %v318
  %v497 = vpack.c.b16 %v321, %v319
  %v498 = vpack.c.b16 %v324, %v322
  %v499 = vpack.c.b16 %v325, %v323
  %v500 = vpack.c.b16 %v328, %v326
  %v501 = vpack.c.b16 %v329, %v327
  %v502 = vpack.c.b16 %v332, %v330
  %v503 = vpack.c.b16 %v333, %v331
  %v504 = vpack.c.b16 %v336, %v334
  %v505 = vpack.c.b16 %v337, %v335
  %v506 = vpack.c.b16 %v340, %v338
  %v507 = vpack.c.b16 %v341, %v339
  %v508 = vpack.c.b16 %v344, %v342
  %v509 = vpack.c.b16 %v345, %v343
  %v510 = vpack.c.b16 %v348, %v346
  %v511 = vpack.c.b16 %v349, %v347
  %v512 = vpack.c.b16 %v352, %v350
  %v513 = vpack.c.b16 %v353, %v351
  %v514 = vpack.c.b16 %v356, %v354
  %v515 = vpack.c.b16 %v357, %v355
  %v516 = vpack.c.b16 %v360, %v358
  %v517 = vpack.c.b16 %v361, %v359
  %v518 = vpack.c.b16 %v364, %v362
  %v519 = vpack.c.b16 %v365, %v363
  %v520 = vpack.c.b16 %v368, %v366
  %v521 = vpack.c.b16 %v369, %v367
  %v522 = vpack.c.b16 %v372, %v370
  %v523 = vpack.c.b16 %v373, %v371
  %v524 = vpack.c.b16 %v376, %v374
  %v525 = vpack.c.b16 %v377, %v375
  %v526 = vpack.c.b16 %v380, %v378
  %v527 = vpack.c.b16 %v381, %v379
  %v528 = vpack.c.b16 %v384, %v382
  %v529 = vpack.c.b16 %v385, %v383
  %v530 = vpack.c.b16 %v388, %v386
  %v531 = vpack.c.b16 %v389, %v387
  %v532 = vpack.c.b16 %v392, %v390
  %v533 = vpack.c.b16 %v393, %v391
  %v534 = vpack.c.b16 %v396, %v394
  %v535 = vpack.c.b16 %v397, %v395
  %v536 = vpack.c.b16 %v400, %v398
  %v537 = vpack.c.b16 %v401, %v399
  %v538 = vpack.c.b16 %v404, %v402
  %v539 = vpack.c.b16 %v405, %v403
  %v540 = vpack.c.b16 %v408, %v406
  %v541 = vpack.c.b16 %v409, %v407
  %v542 = vpack.c.b16 %v412, %v410
  %v543 = vpack.c.b16 %v413, %v411
  %v544 = vpack.c.b16 %v416, %v414
  %v545 = vpack.c.b16 %v417, %v415
  %v546 = vpack.c.b16 %v420, %v418
  %v547 = vpack.c.b16 %v421, %v419
  %v548 = vpack.c.b16 %v424, %v422
  %v549 = vpack.c.b16 %v425, %v423
  %v550 = vpack.c.b16 %v428, %v426
  %v551 = vpack.c.b16 %v429, %v427
  %v552 = vpack.c.b16 %v432, %v430
  %v553 = vpack.c.b16 %v433, %v431
  %v554 = vpack.c.b16 %v436, %v434
  %v555 = vpack.c.b16 %v437, %v435
  %v556 = vpack.c.b16 %v440, %v438
  %v557 = vpack.c.b16 %v441, %v439
  %v558 = vpack.c.b16 %v444, %v442
  %v559 = vpack.c.b16 %v445, %v443
  %v560 = vpack.c.b16 %v448, %v446
  %v561 = vpack.c.b16 %v449, %v447
  %v562 = vpack.c.b16 %v452, %v450
  %v563 = vpack.c.b16 %v453, %v451
  %v564 = vpack.c.b16 %v456, %v454
  %v565 = vpack.c.b16 %v457, %v455
  %v566 = vpack.c.b16 %v460, %v458
  %v567 = vpack.c.b16 %v461, %v459
  %v568 = vpack.c.b16 %v464, %v462
  %v569 = vpack.c.b16 %v465, %v463
  %v570 = vpack.c.b16 %v468, %v466
  %v571 = vpack.c.b16 %v469, %v467
  %v572 = vpack.c.b16 %v472, %v470
  %v573 = vpack.c.b16 %v473, %v471
  %v574 = vpack.c.b16 %v476, %v474
  %v575 = vpack.c.b16 %v477, %v475
  %v576 = vpack.c.b16 %v480, %v478
  %v577 = vpack.c.b16 %v481, %v479
  %674 = vmatprep.subr.bf16.mxu0 %v497
  %675 = vmatpush1.bf16.msra.mxu0 %v496
  %676 = vmatprep.subr.bf16.mxu0 %v495
  %677 = vmatpush1.bf16.msra.mxu0 %v494
  %678 = vmatprep.subr.bf16.mxu0 %v493
  %679 = vmatpush1.bf16.msra.mxu0 %v492
  %680 = vmatprep.subr.bf16.mxu0 %v491
  %681 = vmatpush1.bf16.msra.mxu0 %v490
  %682 = vmatprep.subr.bf16.mxu0 %v489
  %683 = vmatpush1.bf16.msra.mxu0 %v488
  %684 = vmatprep.subr.bf16.mxu0 %v487
  %685 = vmatpush1.bf16.msra.mxu0 %v486
  %686 = vmatprep.subr.bf16.mxu0 %v485
  %687 = vmatpush1.bf16.msra.mxu0 %v484
  %688 = vmatprep.subr.bf16.mxu0 %v483
  %689 = vmatpush1.bf16.msra.mxu0 %v482
  %690 = vmatprep.subr.bf16.mxu0 %v513
  %691 = vmatpush2.bf16.msra.mxu0 %v512
  %692 = vmatprep.subr.bf16.mxu0 %v511
  %693 = vmatpush2.bf16.msra.mxu0 %v510
  %694 = vmatprep.subr.bf16.mxu0 %v509
  %695 = vmatpush2.bf16.msra.mxu0 %v508
  %696 = vmatprep.subr.bf16.mxu0 %v507
  %697 = vmatpush2.bf16.msra.mxu0 %v506
  %698 = vmatprep.subr.bf16.mxu0 %v505
  %699 = vmatpush2.bf16.msra.mxu0 %v504
  %700 = vmatprep.subr.bf16.mxu0 %v503
  %701 = vmatpush2.bf16.msra.mxu0 %v502
  %702 = vmatprep.subr.bf16.mxu0 %v501
  %703 = vmatpush2.bf16.msra.mxu0 %v500
  %704 = vmatprep.subr.bf16.mxu0 %v499
  %705 = vmatpush2.bf16.msra.mxu0 %v498
  %706 = vmatprep.mubr.bf16.mxu0 %v171
  %707 = vmatmul.mubr.bf16.gmra.mxu0 %v170
  %v708 = vpop.f32.mrf.mxu0
  %v709 = vadd.f32 %v127, %v708
  %v710 = vpop.f32.mrf.mxu0
  %v711 = vadd.f32 %v131, %v710
  %v712 = vpop.f32.mrf.mxu0
  %v713 = vadd.f32 %v127, %v712
  %v714 = vpop.f32.mrf.mxu0
  %v715 = vadd.f32 %v131, %v714
  %716 = vmatprep.mubr.bf16.mxu0 %v177
  %717 = vmatmul.mubr.bf16.gmra.mxu0 %v176
  %v718 = vpop.f32.mrf.mxu0
  %v719 = vadd.f32 %v127, %v718
  %v720 = vpop.f32.mrf.mxu0
  %v721 = vadd.f32 %v131, %v720
  %v722 = vpop.f32.mrf.mxu0
  %v723 = vadd.f32 %v127, %v722
  %v724 = vpop.f32.mrf.mxu0
  %v725 = vadd.f32 %v131, %v724
  %726 = vdwg.mxu0
  %727 = vmatprep.subr.bf16.mxu0 %v529
  %728 = vmatpush1.bf16.msra.mxu0 %v528
  %729 = vmatprep.subr.bf16.mxu0 %v527
  %730 = vmatpush1.bf16.msra.mxu0 %v526
  %731 = vmatprep.subr.bf16.mxu0 %v525
  %732 = vmatpush1.bf16.msra.mxu0 %v524
  %733 = vmatprep.subr.bf16.mxu0 %v523
  %734 = vmatpush1.bf16.msra.mxu0 %v522
  %735 = vmatprep.subr.bf16.mxu0 %v521
  %736 = vmatpush1.bf16.msra.mxu0 %v520
  %737 = vmatprep.subr.bf16.mxu0 %v519
  %738 = vmatpush1.bf16.msra.mxu0 %v518
  %739 = vmatprep.subr.bf16.mxu0 %v517
  %740 = vmatpush1.bf16.msra.mxu0 %v516
  %741 = vmatprep.subr.bf16.mxu0 %v515
  %742 = vmatpush1.bf16.msra.mxu0 %v514
  %743 = vmatprep.subr.bf16.mxu0 %v545
  %744 = vmatpush2.bf16.msra.mxu0 %v544
  %745 = vmatprep.subr.bf16.mxu0 %v543
  %746 = vmatpush2.bf16.msra.mxu0 %v542
  %747 = vmatprep.subr.bf16.mxu0 %v541
  %748 = vmatpush2.bf16.msra.mxu0 %v540
  %749 = vmatprep.subr.bf16.mxu0 %v539
  %750 = vmatpush2.bf16.msra.mxu0 %v538
  %751 = vmatprep.subr.bf16.mxu0 %v537
  %752 = vmatpush2.bf16.msra.mxu0 %v536
  %753 = vmatprep.subr.bf16.mxu0 %v535
  %754 = vmatpush2.bf16.msra.mxu0 %v534
  %755 = vmatprep.subr.bf16.mxu0 %v533
  %756 = vmatpush2.bf16.msra.mxu0 %v532
  %757 = vmatprep.subr.bf16.mxu0 %v531
  %758 = vmatpush2.bf16.msra.mxu0 %v530
  %759 = vmatprep.mubr.bf16.mxu0 %v173
  %760 = vmatmul.mubr.bf16.gmra.mxu0 %v172
  %v761 = vpop.f32.mrf.mxu0
  %v762 = vadd.f32 %v709, %v761
  %v763 = vpop.f32.mrf.mxu0
  %v764 = vadd.f32 %v711, %v763
  %v765 = vpop.f32.mrf.mxu0
  %v766 = vadd.f32 %v713, %v765
  %v767 = vpop.f32.mrf.mxu0
  %v768 = vadd.f32 %v715, %v767
  %769 = vmatprep.mubr.bf16.mxu0 %v179
  %770 = vmatmul.mubr.bf16.gmra.mxu0 %v178
  %v771 = vpop.f32.mrf.mxu0
  %v772 = vadd.f32 %v719, %v771
  %v773 = vpop.f32.mrf.mxu0
  %v774 = vadd.f32 %v721, %v773
  %v775 = vpop.f32.mrf.mxu0
  %v776 = vadd.f32 %v723, %v775
  %v777 = vpop.f32.mrf.mxu0
  %v778 = vadd.f32 %v725, %v777
  %779 = vdwg.mxu0
  %780 = vmatprep.subr.bf16.mxu0 %v561
  %781 = vmatpush1.bf16.msra.mxu0 %v560
  %782 = vmatprep.subr.bf16.mxu0 %v559
  %783 = vmatpush1.bf16.msra.mxu0 %v558
  %784 = vmatprep.subr.bf16.mxu0 %v557
  %785 = vmatpush1.bf16.msra.mxu0 %v556
  %786 = vmatprep.subr.bf16.mxu0 %v555
  %787 = vmatpush1.bf16.msra.mxu0 %v554
  %788 = vmatprep.subr.bf16.mxu0 %v553
  %789 = vmatpush1.bf16.msra.mxu0 %v552
  %790 = vmatprep.subr.bf16.mxu0 %v551
  %791 = vmatpush1.bf16.msra.mxu0 %v550
  %792 = vmatprep.subr.bf16.mxu0 %v549
  %793 = vmatpush1.bf16.msra.mxu0 %v548
  %794 = vmatprep.subr.bf16.mxu0 %v547
  %795 = vmatpush1.bf16.msra.mxu0 %v546
  %796 = vmatprep.subr.bf16.mxu0 %v577
  %797 = vmatpush2.bf16.msra.mxu0 %v576
  %798 = vmatprep.subr.bf16.mxu0 %v575
  %799 = vmatpush2.bf16.msra.mxu0 %v574
  %800 = vmatprep.subr.bf16.mxu0 %v573
  %801 = vmatpush2.bf16.msra.mxu0 %v572
  %802 = vmatprep.subr.bf16.mxu0 %v571
  %803 = vmatpush2.bf16.msra.mxu0 %v570
  %804 = vmatprep.subr.bf16.mxu0 %v569
  %805 = vmatpush2.bf16.msra.mxu0 %v568
  %806 = vmatprep.subr.bf16.mxu0 %v567
  %807 = vmatpush2.bf16.msra.mxu0 %v566
  %808 = vmatprep.subr.bf16.mxu0 %v565
  %809 = vmatpush2.bf16.msra.mxu0 %v564
  %810 = vmatprep.subr.bf16.mxu0 %v563
  %811 = vmatpush2.bf16.msra.mxu0 %v562
  %812 = vmatprep.mubr.bf16.mxu0 %v175
  %813 = vmatmul.mubr.bf16.gmra.mxu0 %v174
  %v814 = vpop.f32.mrf.mxu0
  %v815 = vadd.f32 %v762, %v814
  %v816 = vpop.f32.mrf.mxu0
  %v817 = vadd.f32 %v764, %v816
  %v818 = vpop.f32.mrf.mxu0
  %v819 = vadd.f32 %v766, %v818
  %v820 = vpop.f32.mrf.mxu0
  %v821 = vadd.f32 %v768, %v820
  %822 = vmatprep.mubr.bf16.mxu0 %v181
  %823 = vmatmul.mubr.bf16.gmra.mxu0 %v180
  %v824 = vpop.f32.mrf.mxu0
  %v825 = vadd.f32 %v772, %v824
  %v826 = vpop.f32.mrf.mxu0
  %v827 = vadd.f32 %v774, %v826
  %v828 = vpop.f32.mrf.mxu0
  %v829 = vadd.f32 %v776, %v828
  %v830 = vpop.f32.mrf.mxu0
  %v831 = vadd.f32 %v778, %v830
  %832 = vdwg.mxu0
  %v833 = vpack.c.bf16 %v819, %v815
  %v834 = vpack.c.bf16 %v821, %v817
  %v835 = vpack.c.bf16 %v829, %v825
  %v836 = vpack.c.bf16 %v831, %v827
  %v841 = vunpack.c.l.b16 %v833
  %v842 = vunpack.c.l.b16 %v834
  %v843 = vunpack.c.h.b16 %v833
  %v844 = vunpack.c.h.b16 %v834
  %v845 = vunpack.c.l.b16 %v835
  %v846 = vunpack.c.l.b16 %v836
  %v847 = vunpack.c.h.b16 %v835
  %v848 = vunpack.c.h.b16 %v836
  %v849 = vpack.c.b16 %v842, %v841
  %v850 = vpack.c.b16 %v844, %v843
  %v851 = vpack.c.b16 %v846, %v845
  %v852 = vpack.c.b16 %v848, %v847
  %857 = vst [vmem:[%s3] sm:$0xff] %v849
  %858 = vst [vmem:[%s3 + $0x8] sm:$0xff] %v850
  %859 = vst [vmem:[%s3 + $0x10] sm:$0xff] %v851
  %860 = vst [vmem:[%s3 + $0x18] sm:$0xff] %v852
  // Predicated region
  $region14: #{_lambda_.22} parent=0 // pred_check
    _
  $region15: #{_lambda_.22} parent=0 // pred_check_branch
    %862 = sbr.rel (0) target = $region17
  $region16: #{_lambda_.22} parent=0 // pred_region
    _
  $region17: #{_lambda_.22} parent=0 // pred_fallthru
    _
  // Predicated region
  $region18: #{_lambda_.22} parent=0 // pred_check
    _
  $region19: #{_lambda_.22} parent=0 // pred_check_branch
    %864 = sbr.rel (0) target = $region21
  $region20: #{_lambda_.22} parent=0 // pred_region
    _
  $region21: #{_lambda_.22} parent=0 // pred_fallthru
    _

// kernel: _lambda_.24
$region0: #{_lambda_.24}
  #allocation0 [shape = 'u32[]', space=smem, size = 0x4, offset = 0x4, fixed_abs, tag = 'smem constant byte address 0x4 - core index']
  #allocation1 [shape = 'u32[144,128]{1,0:T(1,128)}', space=vmem, size = 0x12000, scoped, tag = 'internal scratch']
  %s0 = inlined_call_operand.vmem [shape: bf16[2,17,768], index: 0, kind: input, shape index: {}, may-alias: {0,1,2}]
  %s1 = inlined_call_operand.vmem [shape: bf16[2,17,768], index: 1, kind: input, shape index: {}, may-alias: {0,1,2}]
  %s2 = inlined_call_operand.vmem [shape: bf16[2,17,768], index: 2, kind: input, shape index: {}, may-alias: {0,1,2}]
  %s3 = inlined_call_operand.vmem [shape: bf16[2,17,256], index: 3, kind: output, shape index: {}]
  %s4 = sld [smem:[#allocation0]]
  $region159: #{_lambda_.24} parent=0
    _
  %s6 = ssub.s32 1, %s4
  %s7 = scalar_select 0, %s6, %s4
  $region1: #{_lambda_.24} parent=0
    #allocation2 [shape = 'u8[24576]{0}', space=vmem, size = 0x6000, scoped, tag = 'input window, operand 0']
    #allocation3 [shape = 'u8[24576]{0}', space=vmem, size = 0x6000, scoped, tag = 'input window, operand 1']
    #allocation4 [shape = 'u8[24576]{0}', space=vmem, size = 0x6000, scoped, tag = 'input window, operand 2']
    loop: start=0, step=1, limit=4
    $region2: #{_lambda_.24} parent=1 // loop_pre_header
      _
    $region3: #{_lambda_.24} parent=1 // loop_header
      %s9 = sphi 0, %s13
      %p10 = scmp.ge.s32.totalorder %s9, 4
      %s19 = sphi 0, %s21
      %s22 = sphi 0, %s19
      %s23 = sphi 0, %s22
      %s39 = sphi 0, %s23
      %s45 = sphi 0, %s47
      %s48 = sphi 0, %s45
      %s49 = sphi 0, %s48
      %s65 = sphi 0, %s49
      %s71 = sphi 0, %s73
      %s74 = sphi 0, %s71
      %s75 = sphi 0, %s74
      %s91 = sphi 0, %s75
      %s97 = sphi 0, %s99
      %s100 = sphi 0, %s97
      %s101 = sphi 0, %s100
      %s117 = sphi 0, %s101
    $region4: #{_lambda_.24} parent=1 // loop_header_branch
      %12 = sbr.rel (%p10) target = $region8
    $region5: #{_lambda_.24} parent=1 // loop_body
      %s14 = ssub.s32 %s9, 1
      %s15 = ssub.s32 %s9, 2
      %s16 = sadd.s32 %s9, 1
      %s17 = ssub.s32 %s9, %s16
      %p18 = scmp.eq.s32.totalorder %s17, 0
      %s20 = sadd.s32 %s19, 1
      %s21 = scalar_select %p18, %s19, %s20
      %p24 = pneg %p18
      %p25 = scmp.eq.s32.totalorder %s9, 1
      %p26 = por %p24, %p25
      %p27 = scmp.ne.s32.totalorder %s19, %s22
      %p28 = scmp.eq.s32.totalorder %s9, 0
      %p29 = por %p27, %p28
      %p30 = scmp.ne.s32.totalorder %s19, %s22
      %p31 = scmp.eq.s32.totalorder %s14, 1
      %p32 = por %p30, %p31
      %p33 = scmp.ne.s32.totalorder %s22, %s23
      %p34 = scmp.eq.s32.totalorder %s14, 0
      %p35 = por %p33, %p34
      %p36 = scmp.ne.s32.totalorder %s22, %s23
      %p37 = scmp.eq.s32.totalorder %s15, 1
      %p38 = por %p36, %p37
      %p40 = scmp.ne.s32.totalorder %s23, %s39
      %p41 = scmp.eq.s32.totalorder %s15, 0
      %p42 = por %p40, %p41
      %s43 = ssub.s32 %s9, %s16
      %p44 = scmp.eq.s32.totalorder %s43, 0
      %s46 = sadd.s32 %s45, 1
      %s47 = scalar_select %p44, %s45, %s46
      %p50 = pneg %p44
      %p51 = scmp.eq.s32.totalorder %s9, 1
      %p52 = por %p50, %p51
      %p53 = scmp.ne.s32.totalorder %s45, %s48
      %p54 = scmp.eq.s32.totalorder %s9, 0
      %p55 = por %p53, %p54
      %p56 = scmp.ne.s32.totalorder %s45, %s48
      %p57 = scmp.eq.s32.totalorder %s14, 1
      %p58 = por %p56, %p57
      %p59 = scmp.ne.s32.totalorder %s48, %s49
      %p60 = scmp.eq.s32.totalorder %s14, 0
      %p61 = por %p59, %p60
      %p62 = scmp.ne.s32.totalorder %s48, %s49
      %p63 = scmp.eq.s32.totalorder %s15, 1
      %p64 = por %p62, %p63
      %p66 = scmp.ne.s32.totalorder %s49, %s65
      %p67 = scmp.eq.s32.totalorder %s15, 0
      %p68 = por %p66, %p67
      %s69 = ssub.s32 %s9, %s16
      %p70 = scmp.eq.s32.totalorder %s69, 0
      %s72 = sadd.s32 %s71, 1
      %s73 = scalar_select %p70, %s71, %s72
      %p76 = pneg %p70
      %p77 = scmp.eq.s32.totalorder %s9, 1
      %p78 = por %p76, %p77
      %p79 = scmp.ne.s32.totalorder %s71, %s74
      %p80 = scmp.eq.s32.totalorder %s9, 0
      %p81 = por %p79, %p80
      %p82 = scmp.ne.s32.totalorder %s71, %s74
      %p83 = scmp.eq.s32.totalorder %s14, 1
      %p84 = por %p82, %p83
      %p85 = scmp.ne.s32.totalorder %s74, %s75
      %p86 = scmp.eq.s32.totalorder %s14, 0
      %p87 = por %p85, %p86
      %p88 = scmp.ne.s32.totalorder %s74, %s75
      %p89 = scmp.eq.s32.totalorder %s15, 1
      %p90 = por %p88, %p89
      %p92 = scmp.ne.s32.totalorder %s75, %s91
      %p93 = scmp.eq.s32.totalorder %s15, 0
      %p94 = por %p92, %p93
      %s95 = ssub.s32 %s9, %s16
      %p96 = scmp.eq.s32.totalorder %s95, 0
      %s98 = sadd.s32 %s97, 1
      %s99 = scalar_select %p96, %s97, %s98
      %p102 = pneg %p96
      %p103 = scmp.eq.s32.totalorder %s9, 1
      %p104 = por %p102, %p103
      %p105 = scmp.ne.s32.totalorder %s97, %s100
      %p106 = scmp.eq.s32.totalorder %s9, 0
      %p107 = por %p105, %p106
      %p108 = scmp.ne.s32.totalorder %s97, %s100
      %p109 = scmp.eq.s32.totalorder %s14, 1
      %p110 = por %p108, %p109
      %p111 = scmp.ne.s32.totalorder %s100, %s101
      %p112 = scmp.eq.s32.totalorder %s14, 0
      %p113 = por %p111, %p112
      %p114 = scmp.ne.s32.totalorder %s100, %s101
      %p115 = scmp.eq.s32.totalorder %s15, 1
      %p116 = por %p114, %p115
      %p118 = scmp.ne.s32.totalorder %s101, %s117
      %p119 = scmp.eq.s32.totalorder %s15, 0
      %p120 = por %p118, %p119
      %p121 = scmp.le.s32.totalorder 1, %s9
      %p122 = scmp.lt.s32.totalorder %s9, 3
      %p123 = pnand %p121, %p122
      %p124 = pneg %p123
      // Predicated region
      $region9: #{_lambda_.24} parent=5 // pred_check
        _
      $region10: #{_lambda_.24} parent=5 // pred_check_branch
        %126 = sbr.rel (%p123) target = $region12
      $region11: #{_lambda_.24} parent=5 // pred_region
        %s127 = ssub.s32 %s9, 1
      $region12: #{_lambda_.24} parent=5 // pred_fallthru
        _
      %p128 = scmp.lt.s32.totalorder %s9, 2
      // Predicated region
      $region13: #{_lambda_.24} parent=5 // pred_check
        %p129 = pneg %p128
      $region14: #{_lambda_.24} parent=5 // pred_check_branch
        %131 = sbr.rel (%p129) target = $region16
      $region15: #{_lambda_.24} parent=5 // pred_region
        // Predicated region
        $region17: #{_lambda_.24} parent=15 // pred_check
          %p132 = pneg %p29
        $region18: #{_lambda_.24} parent=15 // pred_check_branch
          %134 = sbr.rel (%p132) target = $region20
        $region19: #{_lambda_.24} parent=15 // pred_region
          %s135 = sand.u32 %s19, 1
          %s136 = sand.u32 %s19, 1
          %s137 = smul.addr %s136, 24
          %s138 = scalar_lea.vmem [#allocation2], %s137
          %s139 = smul.addr %s9, 18
          %s140 = smul.addr %s139, 4
          %s141 = scalar_lea.vmem %s0, %s140
          // Predicated region
          $region21: #{_lambda_.24} parent=19 // pred_check
            _
          $region22: #{_lambda_.24} parent=19 // pred_check_branch
            %143 = sbr.rel (0) target = $region24
          $region23: #{_lambda_.24} parent=19 // pred_region
            // Predicated region
            $region25: #{_lambda_.24} parent=23 // pred_check
              _
            $region26: #{_lambda_.24} parent=23 // pred_check_branch
              %145 = sbr.rel (0) target = $region28
            $region27: #{_lambda_.24} parent=23 // pred_region
              // Predicated region
              $region40: #{_lambda_.24} parent=27 // pred_check
                _
              $region41: #{_lambda_.24} parent=27 // pred_check_branch
                %165 = sbr.rel (0) target = $region43
              $region42: #{_lambda_.24} parent=27 // pred_region
                loop: start=0, step=1, limit=1
                $region44: #{_lambda_.24} parent=42 // loop_pre_header
                  _
                $region45: #{_lambda_.24} parent=42 // loop_header
                  %s167 = sphi 0, %s171
                  %p168 = scmp.ge.s32.totalorder %s167, 1
                  %s172 = sphi %s141, %s141
                  %s173 = sphi %s138, %s138
                $region46: #{_lambda_.24} parent=42 // loop_header_branch
                  %170 = sbr.rel (%p168) target = $region50
                $region47: #{_lambda_.24} parent=42 // loop_body
                  %v174 = vld [vmem:[%s172] sm:$0xff]
                  %175 = vst [vmem:[%s173] sm:$0xff] %v174
                  %v176 = vld [vmem:[%s172 + $0x18] sm:$0xff]
                  %177 = vst [vmem:[%s173 + $0x8] sm:$0xff] %v176
                  %v178 = vld [vmem:[%s172 + $0x30] sm:$0xff]
                  %179 = vst [vmem:[%s173 + $0x10] sm:$0xff] %v178
                $region48: #{_lambda_.24} parent=42 // loop_footer
                  %s171 = sadd.s32 1, %s167
                $region49: #{_lambda_.24} parent=42 // loop_footer_branch
                  %166 = sbr.rel target = $region45
                $region50: #{_lambda_.24} parent=42 // loop_exit
                  _
              $region43: #{_lambda_.24} parent=27 // pred_fallthru
                _
              // Predicated region
              $region51: #{_lambda_.24} parent=27 // pred_check
                _
              $region52: #{_lambda_.24} parent=27 // pred_check_branch
                %181 = sbr.rel target = $region54
              $region53: #{_lambda_.24} parent=27 // pred_region
                _
              $region54: #{_lambda_.24} parent=27 // pred_fallthru
                _
            $region28: #{_lambda_.24} parent=23 // pred_fallthru
              _
            // Predicated region
            $region29: #{_lambda_.24} parent=23 // pred_check
              _
            $region30: #{_lambda_.24} parent=23 // pred_check_branch
              %147 = sbr.rel target = $region32
            $region31: #{_lambda_.24} parent=23 // pred_region
              %s149 = ssub.s32 256, 1
              loop: start=0, step=1, limit=1
              $region33: #{_lambda_.24} parent=31 // loop_pre_header
                _
              $region34: #{_lambda_.24} parent=31 // loop_header
                %s151 = sphi 0, %s155
                %p152 = scmp.ge.s32.totalorder %s151, 1
                %s156 = sphi %s141, %s141
                %s157 = sphi %s138, %s138
              $region35: #{_lambda_.24} parent=31 // loop_header_branch
                %154 = sbr.rel (%p152) target = $region39
              $region36: #{_lambda_.24} parent=31 // loop_body
                %v158 = vld [vmem:[%s156] sm:%s149]
                %159 = vst [vmem:[%s157] sm:%s149] %v158
                %v160 = vld [vmem:[%s156 + $0x18] sm:%s149]
                %161 = vst [vmem:[%s157 + $0x8] sm:%s149] %v160
                %v162 = vld [vmem:[%s156 + $0x30] sm:%s149]
                %163 = vst [vmem:[%s157 + $0x10] sm:%s149] %v162
              $region37: #{_lambda_.24} parent=31 // loop_footer
                %s155 = sadd.s32 1, %s151
              $region38: #{_lambda_.24} parent=31 // loop_footer_branch
                %150 = sbr.rel target = $region34
              $region39: #{_lambda_.24} parent=31 // loop_exit
                _
            $region32: #{_lambda_.24} parent=23 // pred_fallthru
              _
          $region24: #{_lambda_.24} parent=19 // pred_fallthru
            _
          %182 = vnop
        $region20: #{_lambda_.24} parent=15 // pred_fallthru
          _
        // Predicated region
        $region55: #{_lambda_.24} parent=15 // pred_check
          %p183 = pneg %p55
        $region56: #{_lambda_.24} parent=15 // pred_check_branch
          %185 = sbr.rel (%p183) target = $region58
        $region57: #{_lambda_.24} parent=15 // pred_region
          %s186 = sand.u32 %s45, 1
          %s187 = sand.u32 %s45, 1
          %s188 = smul.addr %s187, 24
          %s189 = scalar_lea.vmem [#allocation3], %s188
          %s190 = smul.addr %s9, 18
          %s191 = sadd.s32 2, %s190
          %s192 = smul.addr %s191, 4
          %s193 = scalar_lea.vmem %s1, %s192
          // Predicated region
          $region59: #{_lambda_.24} parent=57 // pred_check
            _
          $region60: #{_lambda_.24} parent=57 // pred_check_branch
            %195 = sbr.rel (0) target = $region62
          $region61: #{_lambda_.24} parent=57 // pred_region
            // Predicated region
            $region63: #{_lambda_.24} parent=61 // pred_check
              _
            $region64: #{_lambda_.24} parent=61 // pred_check_branch
              %197 = sbr.rel (0) target = $region66
            $region65: #{_lambda_.24} parent=61 // pred_region
              // Predicated region
              $region78: #{_lambda_.24} parent=65 // pred_check
                _
              $region79: #{_lambda_.24} parent=65 // pred_check_branch
                %217 = sbr.rel (0) target = $region81
              $region80: #{_lambda_.24} parent=65 // pred_region
                loop: start=0, step=1, limit=1
                $region82: #{_lambda_.24} parent=80 // loop_pre_header
                  _
                $region83: #{_lambda_.24} parent=80 // loop_header
                  %s219 = sphi 0, %s223
                  %p220 = scmp.ge.s32.totalorder %s219, 1
                  %s224 = sphi %s193, %s193
                  %s225 = sphi %s189, %s189
                $region84: #{_lambda_.24} parent=80 // loop_header_branch
                  %222 = sbr.rel (%p220) target = $region88
                $region85: #{_lambda_.24} parent=80 // loop_body
                  %v226 = vld [vmem:[%s224] sm:$0xff]
                  %227 = vst [vmem:[%s225] sm:$0xff] %v226
                  %v228 = vld [vmem:[%s224 + $0x18] sm:$0xff]
                  %229 = vst [vmem:[%s225 + $0x8] sm:$0xff] %v228
                  %v230 = vld [vmem:[%s224 + $0x30] sm:$0xff]
                  %231 = vst [vmem:[%s225 + $0x10] sm:$0xff] %v230
                $region86: #{_lambda_.24} parent=80 // loop_footer
                  %s223 = sadd.s32 1, %s219
                $region87: #{_lambda_.24} parent=80 // loop_footer_branch
                  %218 = sbr.rel target = $region83
                $region88: #{_lambda_.24} parent=80 // loop_exit
                  _
              $region81: #{_lambda_.24} parent=65 // pred_fallthru
                _
              // Predicated region
              $region89: #{_lambda_.24} parent=65 // pred_check
                _
              $region90: #{_lambda_.24} parent=65 // pred_check_branch
                %233 = sbr.rel target = $region92
              $region91: #{_lambda_.24} parent=65 // pred_region
                _
              $region92: #{_lambda_.24} parent=65 // pred_fallthru
                _
            $region66: #{_lambda_.24} parent=61 // pred_fallthru
              _
            // Predicated region
            $region67: #{_lambda_.24} parent=61 // pred_check
              _
            $region68: #{_lambda_.24} parent=61 // pred_check_branch
              %199 = sbr.rel target = $region70
            $region69: #{_lambda_.24} parent=61 // pred_region
              %s201 = ssub.s32 256, 1
              loop: start=0, step=1, limit=1
              $region71: #{_lambda_.24} parent=69 // loop_pre_header
                _
              $region72: #{_lambda_.24} parent=69 // loop_header
                %s203 = sphi 0, %s207
                %p204 = scmp.ge.s32.totalorder %s203, 1
                %s208 = sphi %s193, %s193
                %s209 = sphi %s189, %s189
              $region73: #{_lambda_.24} parent=69 // loop_header_branch
                %206 = sbr.rel (%p204) target = $region77
              $region74: #{_lambda_.24} parent=69 // loop_body
                %v210 = vld [vmem:[%s208] sm:%s201]
                %211 = vst [vmem:[%s209] sm:%s201] %v210
                %v212 = vld [vmem:[%s208 + $0x18] sm:%s201]
                %213 = vst [vmem:[%s209 + $0x8] sm:%s201] %v212
                %v214 = vld [vmem:[%s208 + $0x30] sm:%s201]
                %215 = vst [vmem:[%s209 + $0x10] sm:%s201] %v214
              $region75: #{_lambda_.24} parent=69 // loop_footer
                %s207 = sadd.s32 1, %s203
              $region76: #{_lambda_.24} parent=69 // loop_footer_branch
                %202 = sbr.rel target = $region72
              $region77: #{_lambda_.24} parent=69 // loop_exit
                _
            $region70: #{_lambda_.24} parent=61 // pred_fallthru
              _
          $region62: #{_lambda_.24} parent=57 // pred_fallthru
            _
          %234 = vnop
        $region58: #{_lambda_.24} parent=15 // pred_fallthru
          _
        // Predicated region
        $region93: #{_lambda_.24} parent=15 // pred_check
          %p235 = pneg %p81
        $region94: #{_lambda_.24} parent=15 // pred_check_branch
          %237 = sbr.rel (%p235) target = $region96
        $region95: #{_lambda_.24} parent=15 // pred_region
          %s238 = sand.u32 %s71, 1
          %s239 = sand.u32 %s71, 1
          %s240 = smul.addr %s239, 24
          %s241 = scalar_lea.vmem [#allocation4], %s240
          %s242 = smul.addr %s9, 18
          %s243 = sadd.s32 4, %s242
          %s244 = smul.addr %s243, 4
          %s245 = scalar_lea.vmem %s2, %s244
          // Predicated region
          $region97: #{_lambda_.24} parent=95 // pred_check
            _
          $region98: #{_lambda_.24} parent=95 // pred_check_branch
            %247 = sbr.rel (0) target = $region100
          $region99: #{_lambda_.24} parent=95 // pred_region
            // Predicated region
            $region101: #{_lambda_.24} parent=99 // pred_check
              _
            $region102: #{_lambda_.24} parent=99 // pred_check_branch
              %249 = sbr.rel (0) target = $region104
            $region103: #{_lambda_.24} parent=99 // pred_region
              // Predicated region
              $region116: #{_lambda_.24} parent=103 // pred_check
                _
              $region117: #{_lambda_.24} parent=103 // pred_check_branch
                %269 = sbr.rel (0) target = $region119
              $region118: #{_lambda_.24} parent=103 // pred_region
                loop: start=0, step=1, limit=1
                $region120: #{_lambda_.24} parent=118 // loop_pre_header
                  _
                $region121: #{_lambda_.24} parent=118 // loop_header
                  %s271 = sphi 0, %s275
                  %p272 = scmp.ge.s32.totalorder %s271, 1
                  %s276 = sphi %s245, %s245
                  %s277 = sphi %s241, %s241
                $region122: #{_lambda_.24} parent=118 // loop_header_branch
                  %274 = sbr.rel (%p272) target = $region126
                $region123: #{_lambda_.24} parent=118 // loop_body
                  %v278 = vld [vmem:[%s276] sm:$0xff]
                  %279 = vst [vmem:[%s277] sm:$0xff] %v278
                  %v280 = vld [vmem:[%s276 + $0x18] sm:$0xff]
                  %281 = vst [vmem:[%s277 + $0x8] sm:$0xff] %v280
                  %v282 = vld [vmem:[%s276 + $0x30] sm:$0xff]
                  %283 = vst [vmem:[%s277 + $0x10] sm:$0xff] %v282
                $region124: #{_lambda_.24} parent=118 // loop_footer
                  %s275 = sadd.s32 1, %s271
                $region125: #{_lambda_.24} parent=118 // loop_footer_branch
                  %270 = sbr.rel target = $region121
                $region126: #{_lambda_.24} parent=118 // loop_exit
                  _
              $region119: #{_lambda_.24} parent=103 // pred_fallthru
                _
              // Predicated region
              $region127: #{_lambda_.24} parent=103 // pred_check
                _
              $region128: #{_lambda_.24} parent=103 // pred_check_branch
                %285 = sbr.rel target = $region130
              $region129: #{_lambda_.24} parent=103 // pred_region
                _
              $region130: #{_lambda_.24} parent=103 // pred_fallthru
                _
            $region104: #{_lambda_.24} parent=99 // pred_fallthru
              _
            // Predicated region
            $region105: #{_lambda_.24} parent=99 // pred_check
              _
            $region106: #{_lambda_.24} parent=99 // pred_check_branch
              %251 = sbr.rel target = $region108
            $region107: #{_lambda_.24} parent=99 // pred_region
              %s253 = ssub.s32 256, 1
              loop: start=0, step=1, limit=1
              $region109: #{_lambda_.24} parent=107 // loop_pre_header
                _
              $region110: #{_lambda_.24} parent=107 // loop_header
                %s255 = sphi 0, %s259
                %p256 = scmp.ge.s32.totalorder %s255, 1
                %s260 = sphi %s245, %s245
                %s261 = sphi %s241, %s241
              $region111: #{_lambda_.24} parent=107 // loop_header_branch
                %258 = sbr.rel (%p256) target = $region115
              $region112: #{_lambda_.24} parent=107 // loop_body
                %v262 = vld [vmem:[%s260] sm:%s253]
                %263 = vst [vmem:[%s261] sm:%s253] %v262
                %v264 = vld [vmem:[%s260 + $0x18] sm:%s253]
                %265 = vst [vmem:[%s261 + $0x8] sm:%s253] %v264
                %v266 = vld [vmem:[%s260 + $0x30] sm:%s253]
                %267 = vst [vmem:[%s261 + $0x10] sm:%s253] %v266
              $region113: #{_lambda_.24} parent=107 // loop_footer
                %s259 = sadd.s32 1, %s255
              $region114: #{_lambda_.24} parent=107 // loop_footer_branch
                %254 = sbr.rel target = $region110
              $region115: #{_lambda_.24} parent=107 // loop_exit
                _
            $region108: #{_lambda_.24} parent=99 // pred_fallthru
              _
          $region100: #{_lambda_.24} parent=95 // pred_fallthru
            _
          %286 = vnop
        $region96: #{_lambda_.24} parent=15 // pred_fallthru
          _
      $region16: #{_lambda_.24} parent=5 // pred_fallthru
        _
      %p287 = scmp.le.s32.totalorder 1, %s9
      %p288 = scmp.lt.s32.totalorder %s9, 3
      %p289 = pnand %p287, %p288
      %p290 = pneg %p289
      // Predicated region
      $region131: #{_lambda_.24} parent=5 // pred_check
        _
      $region132: #{_lambda_.24} parent=5 // pred_check_branch
        %292 = sbr.rel (%p289) target = $region134
      $region133: #{_lambda_.24} parent=5 // pred_region
        %s293 = ssub.s32 %s9, 1
        %s294 = sand.u32 %s22, 1
        %s295 = sand.u32 %s22, 1
        %s296 = smul.addr %s295, 24
        %s297 = scalar_lea.vmem [#allocation2], %s296
        // Predicated region
        $region135: #{_lambda_.24} parent=133 // pred_check
          %p298 = pneg %p35
        $region136: #{_lambda_.24} parent=133 // pred_check_branch
          %300 = sbr.rel (%p298) target = $region138
        $region137: #{_lambda_.24} parent=133 // pred_region
          _
        $region138: #{_lambda_.24} parent=133 // pred_fallthru
          _
        %s301 = sand.u32 %s48, 1
        %s302 = sand.u32 %s48, 1
        %s303 = smul.addr %s302, 24
        %s304 = scalar_lea.vmem [#allocation3], %s303
        // Predicated region
        $region139: #{_lambda_.24} parent=133 // pred_check
          %p305 = pneg %p61
        $region140: #{_lambda_.24} parent=133 // pred_check_branch
          %307 = sbr.rel (%p305) target = $region142
        $region141: #{_lambda_.24} parent=133 // pred_region
          _
        $region142: #{_lambda_.24} parent=133 // pred_fallthru
          _
        %s308 = sand.u32 %s74, 1
        %s309 = sand.u32 %s74, 1
        %s310 = smul.addr %s309, 24
        %s311 = scalar_lea.vmem [#allocation4], %s310
        // Predicated region
        $region143: #{_lambda_.24} parent=133 // pred_check
          %p312 = pneg %p87
        $region144: #{_lambda_.24} parent=133 // pred_check_branch
          %314 = sbr.rel (%p312) target = $region146
        $region145: #{_lambda_.24} parent=133 // pred_region
          _
        $region146: #{_lambda_.24} parent=133 // pred_fallthru
          _
        %s315 = sand.u32 %s22, 1
        %s316 = sand.u32 %s22, 1
        %s317 = smul.addr %s316, 24
        %s318 = scalar_lea.vmem [#allocation2], %s317
        %p319 = pneg %p35
        %p320 = pneg %p32
        %s321 = sand.u32 %s48, 1
        %s322 = sand.u32 %s48, 1
        %s323 = smul.addr %s322, 24
        %s324 = scalar_lea.vmem [#allocation3], %s323
        %p325 = pneg %p61
        %p326 = pneg %p58
        %s327 = sand.u32 %s74, 1
        %s328 = sand.u32 %s74, 1
        %s329 = smul.addr %s328, 24
        %s330 = scalar_lea.vmem [#allocation4], %s329
        %p331 = pneg %p87
        %p332 = pneg %p84
        %p333 = pneg %p113
        %p334 = pneg %p110
        %p335 = scmp.lt.s32.totalorder %s14, 1
        %s336 = scalar_select %p335, %s14, 1
        %s337 = smul.addr %s336, 6
        %s338 = smul.addr %s337, 4
        %s339 = scalar_lea.vmem %s3, %s338
        %p340 = scmp.lt.s32.totalorder %s14, 1
        %s341 = scalar_select %p340, %s14, 1
        %s342 = smul.addr %s341, 6
        %s343 = smul.addr %s342, 4
        %s344 = scalar_lea.vmem %s3, %s343
        %v346 = vld [vmem:[%s297] sm:$0xff]
        %v347 = vld [vmem:[%s297 + $0x8] sm:$0xff]
        %v348 = vld [vmem:[%s297 + $0x10] sm:$0x11]
        %v349 = vunpack.c.l.bf16 %v346
        %v350 = vunpack.c.h.bf16 %v346
        %v351 = vunpack.c.l.bf16 %v347
        %v352 = vunpack.c.h.bf16 %v347
        %v353 = vunpack.c.l.bf16 %v348
        %v354 = vunpack.c.h.bf16 %v348
        %v355 = vmul.f32 %v349, 0.125
        %v356 = vmul.f32 %v350, 0.125
        %v357 = vmul.f32 %v351, 0.125
        %v358 = vmul.f32 %v352, 0.125
        %v359 = vmul.f32 %v353, 0.125
        %v360 = vmul.f32 %v354, 0.125
        %v361 = vld [vmem:[%s304] sm:$0xff]
        %v362 = vld [vmem:[%s304 + $0x8] sm:$0xff]
        %v363 = vld [vmem:[%s304 + $0x10] sm:$0x11]
        %v364 = vld [vmem:[%s311] sm:$0xff]
        %v365 = vld [vmem:[%s311 + $0x8] sm:$0xff]
        %v366 = vld [vmem:[%s311 + $0x10] sm:$0x11]
        %v367 = vpack.c.bf16 %v357, %v355
        %v368 = vpack.c.bf16 %v359, %v359
        %v372 = vunpack.c.l.b16 %v361
        %v373 = vunpack.c.l.b16 %v362
        %v374 = vunpack.c.l.b16 %v363
        %v375 = vpack.c.b16 %v373, %v372
        %v376 = vpack.c.b16 %v374, %v374
        %vm377 = vcmask 523264
        %v379 = vsel %vm377, %v367, 0
        %v382 = vsel %vm377, %v368, 0
        %v385 = vsel %vm377, %v375, 0
        %v388 = vsel %vm377, %v376, 0
        %390 = vmatprep.subr.bf16.mxu0 0
        %391 = vmatpush1.bf16.xpose.msra.mxu0 0
        %392 = vmatprep.subr.bf16.mxu0 0
        %393 = vmatpush1.bf16.xpose.msra.mxu0 0
        %394 = vmatprep.subr.bf16.mxu0 0
        %395 = vmatpush1.bf16.xpose.msra.mxu0 0
        %396 = vmatprep.subr.bf16.mxu0 0
        %397 = vmatpush1.bf16.xpose.msra.mxu0 0
        %398 = vmatprep.subr.bf16.mxu0 0
        %399 = vmatpush1.bf16.xpose.msra.mxu0 0
        %400 = vmatprep.subr.bf16.mxu0 0
        %401 = vmatpush1.bf16.xpose.msra.mxu0 0
        %402 = vmatprep.subr.bf16.mxu0 0
        %403 = vmatpush1.bf16.xpose.msra.mxu0 %v388
        %404 = vmatprep.subr.bf16.mxu0 0
        %405 = vmatpush1.bf16.xpose.msra.mxu0 %v385
        %406 = vmatprep.subr.bf16.mxu0 0
        %407 = vmatpush2.bf16.xpose.msra.mxu0 0
        %408 = vmatprep.subr.bf16.mxu0 0
        %409 = vmatpush2.bf16.xpose.msra.mxu0 0
        %410 = vmatprep.subr.bf16.mxu0 0
        %411 = vmatpush2.bf16.xpose.msra.mxu0 0
        %412 = vmatprep.subr.bf16.mxu0 0
        %413 = vmatpush2.bf16.xpose.msra.mxu0 0
        %414 = vmatprep.subr.bf16.mxu0 0
        %415 = vmatpush2.bf16.xpose.msra.mxu0 0
        %416 = vmatprep.subr.bf16.mxu0 0
        %417 = vmatpush2.bf16.xpose.msra.mxu0 0
        %418 = vmatprep.subr.bf16.mxu0 0
        %419 = vmatpush2.bf16.xpose.msra.mxu0 0
        %420 = vmatprep.subr.bf16.mxu0 0
        %421 = vmatpush2.bf16.xpose.msra.mxu0 0
        %422 = vmatprep.mubr.bf16.mxu0 0
        %423 = vmatmul.mubr.bf16.gmra.mxu0 %v379
        %v424 = vpop.f32.mrf.mxu0
        %v425 = vadd.f32 0.0, %v424
        %v426 = vpop.f32.mrf.mxu0
        %v427 = vpop.f32.mrf.mxu0
        %v428 = vadd.f32 0.0, %v427
        %v429 = vpop.f32.mrf.mxu0
        %430 = vmatprep.mubr.bf16.mxu0 0
        %431 = vmatmul.mubr.bf16.gmra.mxu0 %v382
        %v432 = vpop.f32.mrf.mxu0
        %v433 = vadd.f32 0.0, %v432
        %v434 = vpop.f32.mrf.mxu0
        %v435 = vpop.f32.mrf.mxu0
        %v436 = vpop.f32.mrf.mxu0
        %437 = vdwg.mxu0
        %vm438 = vcmask 138240
        %v439 = vsel %vm438, %v425, -inf
        %440 = vmax.xlane.f32.xlu0 %v439
        %v441 = vpop.xlane.xlu0 %440
        %v442 = vsel %vm438, %v428, -inf
        %443 = vmax.xlane.f32.xlu0 %v442
        %v444 = vpop.xlane.xlu0 %443
        %vm445 = vcmask 131072
        %v446 = vsel %vm445, %v433, -inf
        %447 = vmax.xlane.f32.xlu0 %v446
        %v448 = vpop.xlane.xlu0 %447
        %v449 = vsub.f32 %v425, %v441
        %v450 = vsub.f32 %v428, %v444
        %v451 = vsub.f32 %v433, %v448
        %v452 = vmul.f32 %v449, 1.442695
        %v453 = vpow.pop %v452
        %v454 = vmul.f32 %v450, 1.442695
        %v455 = vpow.pop %v454
        %v456 = vmul.f32 %v451, 1.442695
        %v457 = vpow.pop %v456
        %v458 = vsel %vm438, %v453, 0.0
        %459 = vadd.xlane.f32.xlu0 %v458
        %v460 = vpop.xlane.xlu0 %459
        %v461 = vsel %vm438, %v455, 0.0
        %462 = vadd.xlane.f32.xlu0 %v461
        %v463 = vpop.xlane.xlu0 %462
        %v464 = vsel %vm445, %v457, 0.0
        %465 = vadd.xlane.f32.xlu0 %v464
        %v466 = vpop.xlane.xlu0 %465
        %v467 = vrcp.pop %v460
        %v468 = vrcp.pop %v463
        %v469 = vrcp.pop %v466
        %v470 = vmul.f32 %v453, %v467
        %v471 = vmul.f32 %v455, %v468
        %v472 = vmul.f32 %v457, %v469
        %v473 = vpack.c.bf16 %v471, %v470
        %v474 = vpack.c.bf16 %v472, %v472
        %v478 = vunpack.c.l.b16 %v364
        %v479 = vunpack.c.l.b16 %v365
        %v480 = vunpack.c.l.b16 %v366
        %v481 = vpack.c.b16 %v479, %v478
        %v482 = vpack.c.b16 %v480, %v480
        %v485 = vsel %vm438, %v473, 0
        %v488 = vsel %vm438, %v474, 0
        %vm490 = vcmask 1040384
        %v491 = vsel 0, 4294967295, 65535
        %v492 = vsel %vm490, %v491, 0
        %v494 = vand.u32 %v482, %v492
        %496 = vmatprep.subr.bf16.mxu0 0
        %497 = vmatpush1.bf16.msra.mxu0 0
        %498 = vmatprep.subr.bf16.mxu0 0
        %499 = vmatpush1.bf16.msra.mxu0 0
        %500 = vmatprep.subr.bf16.mxu0 0
        %501 = vmatpush1.bf16.msra.mxu0 0
        %502 = vmatprep.subr.bf16.mxu0 0
        %503 = vmatpush1.bf16.msra.mxu0 0
        %504 = vmatprep.subr.bf16.mxu0 0
        %505 = vmatpush1.bf16.msra.mxu0 0
        %506 = vmatprep.subr.bf16.mxu0 0
        %507 = vmatpush1.bf16.msra.mxu0 0
        %508 = vmatprep.subr.bf16.mxu0 0
        %509 = vmatpush1.bf16.msra.mxu0 %v494
        %510 = vmatprep.subr.bf16.mxu0 0
        %511 = vmatpush1.bf16.msra.mxu0 %v481
        %512 = vmatprep.subr.bf16.mxu0 0
        %513 = vmatpush2.bf16.msra.mxu0 0
        %514 = vmatprep.subr.bf16.mxu0 0
        %515 = vmatpush2.bf16.msra.mxu0 0
        %516 = vmatprep.subr.bf16.mxu0 0
        %517 = vmatpush2.bf16.msra.mxu0 0
        %518 = vmatprep.subr.bf16.mxu0 0
        %519 = vmatpush2.bf16.msra.mxu0 0
        %520 = vmatprep.subr.bf16.mxu0 0
        %521 = vmatpush2.bf16.msra.mxu0 0
        %522 = vmatprep.subr.bf16.mxu0 0
        %523 = vmatpush2.bf16.msra.mxu0 0
        %524 = vmatprep.subr.bf16.mxu0 0
        %525 = vmatpush2.bf16.msra.mxu0 0
        %526 = vmatprep.subr.bf16.mxu0 0
        %527 = vmatpush2.bf16.msra.mxu0 0
        %528 = vmatprep.mubr.bf16.mxu0 0
        %529 = vmatmul.mubr.bf16.gmra.mxu0 %v485
        %v530 = vpop.f32.mrf.mxu0
        %v531 = vadd.f32 0.0, %v530
        %v532 = vpop.f32.mrf.mxu0
        %v533 = vpop.f32.mrf.mxu0
        %v534 = vadd.f32 0.0, %v533
        %v535 = vpop.f32.mrf.mxu0
        %536 = vmatprep.mubr.bf16.mxu0 0
        %537 = vmatmul.mubr.bf16.gmra.mxu0 %v488
        %v538 = vpop.f32.mrf.mxu0
        %v539 = vadd.f32 0.0, %v538
        %v540 = vpop.f32.mrf.mxu0
        %v541 = vpop.f32.mrf.mxu0
        %v542 = vpop.f32.mrf.mxu0
        %543 = vdwg.mxu0
        %546 = vrot.lane.b32.xlu0 %v367, 64
        %v547 = vpop.permute.xlu0 %546
        %548 = vrot.lane.b32.xlu0 %v368, 64
        %v549 = vpop.permute.xlu0 %548
        %550 = vrot.lane.b32.xlu0 %v375, 64
        %v551 = vpop.permute.xlu0 %550
        %552 = vrot.lane.b32.xlu0 %v376, 64
        %v553 = vpop.permute.xlu0 %552
        %v555 = vsel %vm377, %v547, 0
        %v558 = vsel %vm377, %v549, 0
        %v561 = vsel %vm377, %v551, 0
        %v564 = vsel %vm377, %v553, 0
        %566 = vmatprep.subr.bf16.mxu0 0
        %567 = vmatpush1.bf16.xpose.msra.mxu0 0
        %568 = vmatprep.subr.bf16.mxu0 0
        %569 = vmatpush1.bf16.xpose.msra.mxu0 0
        %570 = vmatprep.subr.bf16.mxu0 0
        %571 = vmatpush1.bf16.xpose.msra.mxu0 0
        %572 = vmatprep.subr.bf16.mxu0 0
        %573 = vmatpush1.bf16.xpose.msra.mxu0 0
        %574 = vmatprep.subr.bf16.mxu0 0
        %575 = vmatpush1.bf16.xpose.msra.mxu0 0
        %576 = vmatprep.subr.bf16.mxu0 0
        %577 = vmatpush1.bf16.xpose.msra.mxu0 0
        %578 = vmatprep.subr.bf16.mxu0 0
        %579 = vmatpush1.bf16.xpose.msra.mxu0 %v564
        %580 = vmatprep.subr.bf16.mxu0 0
        %581 = vmatpush1.bf16.xpose.msra.mxu0 %v561
        %582 = vmatprep.subr.bf16.mxu0 0
        %583 = vmatpush2.bf16.xpose.msra.mxu0 0
        %584 = vmatprep.subr.bf16.mxu0 0
        %585 = vmatpush2.bf16.xpose.msra.mxu0 0
        %586 = vmatprep.subr.bf16.mxu0 0
        %587 = vmatpush2.bf16.xpose.msra.mxu0 0
        %588 = vmatprep.subr.bf16.mxu0 0
        %589 = vmatpush2.bf16.xpose.msra.mxu0 0
        %590 = vmatprep.subr.bf16.mxu0 0
        %591 = vmatpush2.bf16.xpose.msra.mxu0 0
        %592 = vmatprep.subr.bf16.mxu0 0
        %593 = vmatpush2.bf16.xpose.msra.mxu0 0
        %594 = vmatprep.subr.bf16.mxu0 0
        %595 = vmatpush2.bf16.xpose.msra.mxu0 0
        %596 = vmatprep.subr.bf16.mxu0 0
        %597 = vmatpush2.bf16.xpose.msra.mxu0 0
        %598 = vmatprep.mubr.bf16.mxu0 0
        %599 = vmatmul.mubr.bf16.gmra.mxu0 %v555
        %v600 = vpop.f32.mrf.mxu0
        %v601 = vadd.f32 0.0, %v600
        %v602 = vpop.f32.mrf.mxu0
        %v603 = vpop.f32.mrf.mxu0
        %v604 = vadd.f32 0.0, %v603
        %v605 = vpop.f32.mrf.mxu0
        %606 = vmatprep.mubr.bf16.mxu0 0
        %607 = vmatmul.mubr.bf16.gmra.mxu0 %v558
        %v608 = vpop.f32.mrf.mxu0
        %v609 = vadd.f32 0.0, %v608
        %v610 = vpop.f32.mrf.mxu0
        %v611 = vpop.f32.mrf.mxu0
        %v612 = vpop.f32.mrf.mxu0
        %613 = vdwg.mxu0
        %v614 = vsel %vm438, %v601, -inf
        %615 = vmax.xlane.f32.xlu0 %v614
        %v616 = vpop.xlane.xlu0 %615
        %v617 = vsel %vm438, %v604, -inf
        %618 = vmax.xlane.f32.xlu0 %v617
        %v619 = vpop.xlane.xlu0 %618
        %v620 = vsel %vm445, %v609, -inf
        %621 = vmax.xlane.f32.xlu0 %v620
        %v622 = vpop.xlane.xlu0 %621
        %v623 = vsub.f32 %v601, %v616
        %v624 = vsub.f32 %v604, %v619
        %v625 = vsub.f32 %v609, %v622
        %v626 = vmul.f32 %v623, 1.442695
        %v627 = vpow.pop %v626
        %v628 = vmul.f32 %v624, 1.442695
        %v629 = vpow.pop %v628
        %v630 = vmul.f32 %v625, 1.442695
        %v631 = vpow.pop %v630
        %v632 = vsel %vm438, %v627, 0.0
        %633 = vadd.xlane.f32.xlu0 %v632
        %v634 = vpop.xlane.xlu0 %633
        %v635 = vsel %vm438, %v629, 0.0
        %636 = vadd.xlane.f32.xlu0 %v635
        %v637 = vpop.xlane.xlu0 %636
        %v638 = vsel %vm445, %v631, 0.0
        %639 = vadd.xlane.f32.xlu0 %v638
        %v640 = vpop.xlane.xlu0 %639
        %v641 = vrcp.pop %v634
        %v642 = vrcp.pop %v637
        %v643 = vrcp.pop %v640
        %v644 = vmul.f32 %v627, %v641
        %v645 = vmul.f32 %v629, %v642
        %v646 = vmul.f32 %v631, %v643
        %v647 = vpack.c.bf16 %v645, %v644
        %v648 = vpack.c.bf16 %v646, %v646
        %649 = vrot.lane.b32.xlu0 %v481, 64
        %v650 = vpop.permute.xlu0 %649
        %651 = vrot.lane.b32.xlu0 %v482, 64
        %v652 = vpop.permute.xlu0 %651
        %v655 = vsel %vm438, %v647, 0
        %v658 = vsel %vm438, %v648, 0
        %v661 = vand.u32 %v652, %v492
        %663 = vmatprep.subr.bf16.mxu0 0
        %664 = vmatpush1.bf16.msra.mxu0 0
        %665 = vmatprep.subr.bf16.mxu0 0
        %666 = vmatpush1.bf16.msra.mxu0 0
        %667 = vmatprep.subr.bf16.mxu0 0
        %668 = vmatpush1.bf16.msra.mxu0 0
        %669 = vmatprep.subr.bf16.mxu0 0
        %670 = vmatpush1.bf16.msra.mxu0 0
        %671 = vmatprep.subr.bf16.mxu0 0
        %672 = vmatpush1.bf16.msra.mxu0 0
        %673 = vmatprep.subr.bf16.mxu0 0
        %674 = vmatpush1.bf16.msra.mxu0 0
        %675 = vmatprep.subr.bf16.mxu0 0
        %676 = vmatpush1.bf16.msra.mxu0 %v661
        %677 = vmatprep.subr.bf16.mxu0 0
        %678 = vmatpush1.bf16.msra.mxu0 %v650
        %679 = vmatprep.subr.bf16.mxu0 0
        %680 = vmatpush2.bf16.msra.mxu0 0
        %681 = vmatprep.subr.bf16.mxu0 0
        %682 = vmatpush2.bf16.msra.mxu0 0
        %683 = vmatprep.subr.bf16.mxu0 0
        %684 = vmatpush2.bf16.msra.mxu0 0
        %685 = vmatprep.subr.bf16.mxu0 0
        %686 = vmatpush2.bf16.msra.mxu0 0
        %687 = vmatprep.subr.bf16.mxu0 0
        %688 = vmatpush2.bf16.msra.mxu0 0
        %689 = vmatprep.subr.bf16.mxu0 0
        %690 = vmatpush2.bf16.msra.mxu0 0
        %691 = vmatprep.subr.bf16.mxu0 0
        %692 = vmatpush2.bf16.msra.mxu0 0
        %693 = vmatprep.subr.bf16.mxu0 0
        %694 = vmatpush2.bf16.msra.mxu0 0
        %695 = vmatprep.mubr.bf16.mxu0 0
        %696 = vmatmul.mubr.bf16.gmra.mxu0 %v655
        %v697 = vpop.f32.mrf.mxu0
        %v698 = vadd.f32 0.0, %v697
        %v699 = vpop.f32.mrf.mxu0
        %v700 = vpop.f32.mrf.mxu0
        %v701 = vadd.f32 0.0, %v700
        %v702 = vpop.f32.mrf.mxu0
        %703 = vmatprep.mubr.bf16.mxu0 0
        %704 = vmatmul.mubr.bf16.gmra.mxu0 %v658
        %v705 = vpop.f32.mrf.mxu0
        %v706 = vadd.f32 0.0, %v705
        %v707 = vpop.f32.mrf.mxu0
        %v708 = vpop.f32.mrf.mxu0
        %v709 = vpop.f32.mrf.mxu0
        %710 = vdwg.mxu0
        %v711 = vpack.c.bf16 %v358, %v356
        %v712 = vpack.c.bf16 %v360, %v360
        %v713 = vunpack.c.h.b16 %v361
        %v714 = vunpack.c.h.b16 %v362
        %v715 = vunpack.c.h.b16 %v363
        %v716 = vpack.c.b16 %v714, %v713
        %v717 = vpack.c.b16 %v715, %v715
        %v719 = vsel %vm377, %v711, 0
        %v722 = vsel %vm377, %v712, 0
        %v725 = vsel %vm377, %v716, 0
        %v728 = vsel %vm377, %v717, 0
        %730 = vmatprep.subr.bf16.mxu0 0
        %731 = vmatpush1.bf16.xpose.msra.mxu0 0
        %732 = vmatprep.subr.bf16.mxu0 0
        %733 = vmatpush1.bf16.xpose.msra.mxu0 0
        %734 = vmatprep.subr.bf16.mxu0 0
        %735 = vmatpush1.bf16.xpose.msra.mxu0 0
        %736 = vmatprep.subr.bf16.mxu0 0
        %737 = vmatpush1.bf16.xpose.msra.mxu0 0
        %738 = vmatprep.subr.bf16.mxu0 0
        %739 = vmatpush1.bf16.xpose.msra.mxu0 0
        %740 = vmatprep.subr.bf16.mxu0 0
        %741 = vmatpush1.bf16.xpose.msra.mxu0 0
        %742 = vmatprep.subr.bf16.mxu0 0
        %743 = vmatpush1.bf16.xpose.msra.mxu0 %v728
        %744 = vmatprep.subr.bf16.mxu0 0
        %745 = vmatpush1.bf16.xpose.msra.mxu0 %v725
        %746 = vmatprep.subr.bf16.mxu0 0
        %747 = vmatpush2.bf16.xpose.msra.mxu0 0
        %748 = vmatprep.subr.bf16.mxu0 0
        %749 = vmatpush2.bf16.xpose.msra.mxu0 0
        %750 = vmatprep.subr.bf16.mxu0 0
        %751 = vmatpush2.bf16.xpose.msra.mxu0 0
        %752 = vmatprep.subr.bf16.mxu0 0
        %753 = vmatpush2.bf16.xpose.msra.mxu0 0
        %754 = vmatprep.subr.bf16.mxu0 0
        %755 = vmatpush2.bf16.xpose.msra.mxu0 0
        %756 = vmatprep.subr.bf16.mxu0 0
        %757 = vmatpush2.bf16.xpose.msra.mxu0 0
        %758 = vmatprep.subr.bf16.mxu0 0
        %759 = vmatpush2.bf16.xpose.msra.mxu0 0
        %760 = vmatprep.subr.bf16.mxu0 0
        %761 = vmatpush2.bf16.xpose.msra.mxu0 0
        %762 = vmatprep.mubr.bf16.mxu0 0
        %763 = vmatmul.mubr.bf16.gmra.mxu0 %v719
        %v764 = vpop.f32.mrf.mxu0
        %v765 = vadd.f32 0.0, %v764
        %v766 = vpop.f32.mrf.mxu0
        %v767 = vpop.f32.mrf.mxu0
        %v768 = vadd.f32 0.0, %v767
        %v769 = vpop.f32.mrf.mxu0
        %770 = vmatprep.mubr.bf16.mxu0 0
        %771 = vmatmul.mubr.bf16.gmra.mxu0 %v722
        %v772 = vpop.f32.mrf.mxu0
        %v773 = vadd.f32 0.0, %v772
        %v774 = vpop.f32.mrf.mxu0
        %v775 = vpop.f32.mrf.mxu0
        %v776 = vpop.f32.mrf.mxu0
        %777 = vdwg.mxu0
        %v778 = vsel %vm438, %v765, -inf
        %779 = vmax.xlane.f32.xlu0 %v778
        %v780 = vpop.xlane.xlu0 %779
        %v781 = vsel %vm438, %v768, -inf
        %782 = vmax.xlane.f32.xlu0 %v781
        %v783 = vpop.xlane.xlu0 %782
        %v784 = vsel %vm445, %v773, -inf
        %785 = vmax.xlane.f32.xlu0 %v784
        %v786 = vpop.xlane.xlu0 %785
        %v787 = vsub.f32 %v765, %v780
        %v788 = vsub.f32 %v768, %v783
        %v789 = vsub.f32 %v773, %v786
        %v790 = vmul.f32 %v787, 1.442695
        %v791 = vpow.pop %v790
        %v792 = vmul.f32 %v788, 1.442695
        %v793 = vpow.pop %v792
        %v794 = vmul.f32 %v789, 1.442695
        %v795 = vpow.pop %v794
        %v796 = vsel %vm438, %v791, 0.0
        %797 = vadd.xlane.f32.xlu0 %v796
        %v798 = vpop.xlane.xlu0 %797
        %v799 = vsel %vm438, %v793, 0.0
        %800 = vadd.xlane.f32.xlu0 %v799
        %v801 = vpop.xlane.xlu0 %800
        %v802 = vsel %vm445, %v795, 0.0
        %803 = vadd.xlane.f32.xlu0 %v802
        %v804 = vpop.xlane.xlu0 %803
        %v805 = vrcp.pop %v798
        %v806 = vrcp.pop %v801
        %v807 = vrcp.pop %v804
        %v808 = vmul.f32 %v791, %v805
        %v809 = vmul.f32 %v793, %v806
        %v810 = vmul.f32 %v795, %v807
        %v811 = vpack.c.bf16 %v809, %v808
        %v812 = vpack.c.bf16 %v810, %v810
        %v813 = vunpack.c.h.b16 %v364
        %v814 = vunpack.c.h.b16 %v365
        %v815 = vunpack.c.h.b16 %v366
        %v816 = vpack.c.b16 %v814, %v813
        %v817 = vpack.c.b16 %v815, %v815
        %v820 = vsel %vm438, %v811, 0
        %v823 = vsel %vm438, %v812, 0
        %v826 = vand.u32 %v817, %v492
        %828 = vmatprep.subr.bf16.mxu0 0
        %829 = vmatpush1.bf16.msra.mxu0 0
        %830 = vmatprep.subr.bf16.mxu0 0
        %831 = vmatpush1.bf16.msra.mxu0 0
        %832 = vmatprep.subr.bf16.mxu0 0
        %833 = vmatpush1.bf16.msra.mxu0 0
        %834 = vmatprep.subr.bf16.mxu0 0
        %835 = vmatpush1.bf16.msra.mxu0 0
        %836 = vmatprep.subr.bf16.mxu0 0
        %837 = vmatpush1.bf16.msra.mxu0 0
        %838 = vmatprep.subr.bf16.mxu0 0
        %839 = vmatpush1.bf16.msra.mxu0 0
        %840 = vmatprep.subr.bf16.mxu0 0
        %841 = vmatpush1.bf16.msra.mxu0 %v826
        %842 = vmatprep.subr.bf16.mxu0 0
        %843 = vmatpush1.bf16.msra.mxu0 %v816
        %844 = vmatprep.subr.bf16.mxu0 0
        %845 = vmatpush2.bf16.msra.mxu0 0
        %846 = vmatprep.subr.bf16.mxu0 0
        %847 = vmatpush2.bf16.msra.mxu0 0
        %848 = vmatprep.subr.bf16.mxu0 0
        %849 = vmatpush2.bf16.msra.mxu0 0
        %850 = vmatprep.subr.bf16.mxu0 0
        %851 = vmatpush2.bf16.msra.mxu0 0
        %852 = vmatprep.subr.bf16.mxu0 0
        %853 = vmatpush2.bf16.msra.mxu0 0
        %854 = vmatprep.subr.bf16.mxu0 0
        %855 = vmatpush2.bf16.msra.mxu0 0
        %856 = vmatprep.subr.bf16.mxu0 0
        %857 = vmatpush2.bf16.msra.mxu0 0
        %858 = vmatprep.subr.bf16.mxu0 0
        %859 = vmatpush2.bf16.msra.mxu0 0
        %860 = vmatprep.mubr.bf16.mxu0 0
        %861 = vmatmul.mubr.bf16.gmra.mxu0 %v820
        %v862 = vpop.f32.mrf.mxu0
        %v863 = vadd.f32 0.0, %v862
        %v864 = vpop.f32.mrf.mxu0
        %v865 = vpop.f32.mrf.mxu0
        %v866 = vadd.f32 0.0, %v865
        %v867 = vpop.f32.mrf.mxu0
        %868 = vmatprep.mubr.bf16.mxu0 0
        %869 = vmatmul.mubr.bf16.gmra.mxu0 %v823
        %v870 = vpop.f32.mrf.mxu0
        %v871 = vadd.f32 0.0, %v870
        %v872 = vpop.f32.mrf.mxu0
        %v873 = vpop.f32.mrf.mxu0
        %v874 = vpop.f32.mrf.mxu0
        %875 = vdwg.mxu0
        %878 = vrot.lane.b32.xlu0 %v711, 64
        %v879 = vpop.permute.xlu0 %878
        %880 = vrot.lane.b32.xlu0 %v712, 64
        %v881 = vpop.permute.xlu0 %880
        %882 = vrot.lane.b32.xlu0 %v716, 64
        %v883 = vpop.permute.xlu0 %882
        %884 = vrot.lane.b32.xlu0 %v717, 64
        %v885 = vpop.permute.xlu0 %884
        %v887 = vsel %vm377, %v879, 0
        %v890 = vsel %vm377, %v881, 0
        %v893 = vsel %vm377, %v883, 0
        %v896 = vsel %vm377, %v885, 0
        %898 = vmatprep.subr.bf16.mxu0 0
        %899 = vmatpush1.bf16.xpose.msra.mxu0 0
        %900 = vmatprep.subr.bf16.mxu0 0
        %901 = vmatpush1.bf16.xpose.msra.mxu0 0
        %902 = vmatprep.subr.bf16.mxu0 0
        %903 = vmatpush1.bf16.xpose.msra.mxu0 0
        %904 = vmatprep.subr.bf16.mxu0 0
        %905 = vmatpush1.bf16.xpose.msra.mxu0 0
        %906 = vmatprep.subr.bf16.mxu0 0
        %907 = vmatpush1.bf16.xpose.msra.mxu0 0
        %908 = vmatprep.subr.bf16.mxu0 0
        %909 = vmatpush1.bf16.xpose.msra.mxu0 0
        %910 = vmatprep.subr.bf16.mxu0 0
        %911 = vmatpush1.bf16.xpose.msra.mxu0 %v896
        %912 = vmatprep.subr.bf16.mxu0 0
        %913 = vmatpush1.bf16.xpose.msra.mxu0 %v893
        %914 = vmatprep.subr.bf16.mxu0 0
        %915 = vmatpush2.bf16.xpose.msra.mxu0 0
        %916 = vmatprep.subr.bf16.mxu0 0
        %917 = vmatpush2.bf16.xpose.msra.mxu0 0
        %918 = vmatprep.subr.bf16.mxu0 0
        %919 = vmatpush2.bf16.xpose.msra.mxu0 0
        %920 = vmatprep.subr.bf16.mxu0 0
        %921 = vmatpush2.bf16.xpose.msra.mxu0 0
        %922 = vmatprep.subr.bf16.mxu0 0
        %923 = vmatpush2.bf16.xpose.msra.mxu0 0
        %924 = vmatprep.subr.bf16.mxu0 0
        %925 = vmatpush2.bf16.xpose.msra.mxu0 0
        %926 = vmatprep.subr.bf16.mxu0 0
        %927 = vmatpush2.bf16.xpose.msra.mxu0 0
        %928 = vmatprep.subr.bf16.mxu0 0
        %929 = vmatpush2.bf16.xpose.msra.mxu0 0
        %930 = vmatprep.mubr.bf16.mxu0 0
        %931 = vmatmul.mubr.bf16.gmra.mxu0 %v887
        %v932 = vpop.f32.mrf.mxu0
        %v933 = vadd.f32 0.0, %v932
        %v934 = vpop.f32.mrf.mxu0
        %v935 = vpop.f32.mrf.mxu0
        %v936 = vadd.f32 0.0, %v935
        %v937 = vpop.f32.mrf.mxu0
        %938 = vmatprep.mubr.bf16.mxu0 0
        %939 = vmatmul.mubr.bf16.gmra.mxu0 %v890
        %v940 = vpop.f32.mrf.mxu0
        %v941 = vadd.f32 0.0, %v940
        %v942 = vpop.f32.mrf.mxu0
        %v943 = vpop.f32.mrf.mxu0
        %v944 = vpop.f32.mrf.mxu0
        %945 = vdwg.mxu0
        %v946 = vsel %vm438, %v933, -inf
        %947 = vmax.xlane.f32.xlu0 %v946
        %v948 = vpop.xlane.xlu0 %947
        %v949 = vsel %vm438, %v936, -inf
        %950 = vmax.xlane.f32.xlu0 %v949
        %v951 = vpop.xlane.xlu0 %950
        %v952 = vsel %vm445, %v941, -inf
        %953 = vmax.xlane.f32.xlu0 %v952
        %v954 = vpop.xlane.xlu0 %953
        %v955 = vsub.f32 %v933, %v948
        %v956 = vsub.f32 %v936, %v951
        %v957 = vsub.f32 %v941, %v954
        %v958 = vmul.f32 %v955, 1.442695
        %v959 = vpow.pop %v958
        %v960 = vmul.f32 %v956, 1.442695
        %v961 = vpow.pop %v960
        %v962 = vmul.f32 %v957, 1.442695
        %v963 = vpow.pop %v962
        %v964 = vsel %vm438, %v959, 0.0
        %965 = vadd.xlane.f32.xlu0 %v964
        %v966 = vpop.xlane.xlu0 %965
        %v967 = vsel %vm438, %v961, 0.0
        %968 = vadd.xlane.f32.xlu0 %v967
        %v969 = vpop.xlane.xlu0 %968
        %v970 = vsel %vm445, %v963, 0.0
        %971 = vadd.xlane.f32.xlu0 %v970
        %v972 = vpop.xlane.xlu0 %971
        %v973 = vrcp.pop %v966
        %v974 = vrcp.pop %v969
        %v975 = vrcp.pop %v972
        %v976 = vmul.f32 %v959, %v973
        %v977 = vmul.f32 %v961, %v974
        %v978 = vmul.f32 %v963, %v975
        %v979 = vpack.c.bf16 %v977, %v976
        %v980 = vpack.c.bf16 %v978, %v978
        %981 = vrot.lane.b32.xlu0 %v816, 64
        %v982 = vpop.permute.xlu0 %981
        %983 = vrot.lane.b32.xlu0 %v817, 64
        %v984 = vpop.permute.xlu0 %983
        %v987 = vsel %vm438, %v979, 0
        %v990 = vsel %vm438, %v980, 0
        %v993 = vand.u32 %v984, %v492
        %995 = vmatprep.subr.bf16.mxu0 0
        %996 = vmatpush1.bf16.msra.mxu0 0
        %997 = vmatprep.subr.bf16.mxu0 0
        %998 = vmatpush1.bf16.msra.mxu0 0
        %999 = vmatprep.subr.bf16.mxu0 0
        %1000 = vmatpush1.bf16.msra.mxu0 0
        %1001 = vmatprep.subr.bf16.mxu0 0
        %1002 = vmatpush1.bf16.msra.mxu0 0
        %1003 = vmatprep.subr.bf16.mxu0 0
        %1004 = vmatpush1.bf16.msra.mxu0 0
        %1005 = vmatprep.subr.bf16.mxu0 0
        %1006 = vmatpush1.bf16.msra.mxu0 0
        %1007 = vmatprep.subr.bf16.mxu0 0
        %1008 = vmatpush1.bf16.msra.mxu0 %v993
        %1009 = vmatprep.subr.bf16.mxu0 0
        %1010 = vmatpush1.bf16.msra.mxu0 %v982
        %1011 = vmatprep.subr.bf16.mxu0 0
        %1012 = vmatpush2.bf16.msra.mxu0 0
        %1013 = vmatprep.subr.bf16.mxu0 0
        %1014 = vmatpush2.bf16.msra.mxu0 0
        %1015 = vmatprep.subr.bf16.mxu0 0
        %1016 = vmatpush2.bf16.msra.mxu0 0
        %1017 = vmatprep.subr.bf16.mxu0 0
        %1018 = vmatpush2.bf16.msra.mxu0 0
        %1019 = vmatprep.subr.bf16.mxu0 0
        %1020 = vmatpush2.bf16.msra.mxu0 0
        %1021 = vmatprep.subr.bf16.mxu0 0
        %1022 = vmatpush2.bf16.msra.mxu0 0
        %1023 = vmatprep.subr.bf16.mxu0 0
        %1024 = vmatpush2.bf16.msra.mxu0 0
        %1025 = vmatprep.subr.bf16.mxu0 0
        %1026 = vmatpush2.bf16.msra.mxu0 0
        %1027 = vmatprep.mubr.bf16.mxu0 0
        %1028 = vmatmul.mubr.bf16.gmra.mxu0 %v987
        %v1029 = vpop.f32.mrf.mxu0
        %v1030 = vadd.f32 0.0, %v1029
        %v1031 = vpop.f32.mrf.mxu0
        %v1032 = vpop.f32.mrf.mxu0
        %v1033 = vadd.f32 0.0, %v1032
        %v1034 = vpop.f32.mrf.mxu0
        %1035 = vmatprep.mubr.bf16.mxu0 0
        %1036 = vmatmul.mubr.bf16.gmra.mxu0 %v990
        %v1037 = vpop.f32.mrf.mxu0
        %v1038 = vadd.f32 0.0, %v1037
        %v1039 = vpop.f32.mrf.mxu0
        %v1040 = vpop.f32.mrf.mxu0
        %v1041 = vpop.f32.mrf.mxu0
        %1042 = vdwg.mxu0
        %1046 = vrot.lane.b32.xlu0 %v698, 64
        %v1047 = vpop.permute.xlu0 %1046
        %1048 = vrot.lane.b32.xlu0 %v701, 64
        %v1049 = vpop.permute.xlu0 %1048
        %1050 = vrot.lane.b32.xlu0 %v706, 64
        %v1051 = vpop.permute.xlu0 %1050
        %1058 = vrot.lane.b32.xlu0 %v1030, 64
        %v1059 = vpop.permute.xlu0 %1058
        %1060 = vrot.lane.b32.xlu0 %v1033, 64
        %v1061 = vpop.permute.xlu0 %1060
        %1062 = vrot.lane.b32.xlu0 %v1038, 64
        %v1063 = vpop.permute.xlu0 %1062
        %v1067 = vsel %vm377, %v531, %v1047
        %v1068 = vsel %vm377, %v534, %v1049
        %v1069 = vsel %vm377, %v539, %v1051
        %v1070 = vsel %vm377, %v863, %v1059
        %v1071 = vsel %vm377, %v866, %v1061
        %v1072 = vsel %vm377, %v871, %v1063
        %v1073 = vpack.c.bf16 %v1068, %v1067
        %v1074 = vpack.c.bf16 %v1071, %v1070
        %v1075 = vpack.c.bf16 %v1069, %v1069
        %v1076 = vpack.c.bf16 %v1072, %v1072
        %v1081 = vunpack.c.l.b16 %v1073
        %v1082 = vunpack.c.l.b16 %v1074
        %v1083 = vunpack.c.h.b16 %v1073
        %v1084 = vunpack.c.h.b16 %v1074
        %v1085 = vunpack.c.l.b16 %v1075
        %v1086 = vunpack.c.l.b16 %v1076
        %v1087 = vpack.c.b16 %v1082, %v1081
        %v1088 = vpack.c.b16 %v1084, %v1083
        %v1089 = vpack.c.b16 %v1086, %v1085
        %1093 = vst [vmem:[%s344] sm:$0xff] %v1087
        %1094 = vst [vmem:[%s344 + $0x8] sm:$0xff] %v1088
        %vm1095 = vcmask 1040384
        %vm1096 = vsmask.f32 256
        %vm1097 = vmand %vm1095, %vm1096
        %vm1098 = vcmask 1044484
        %vm1099 = vsmask.f32 4352
        %vm1100 = vmand %vm1098, %vm1099
        %vm1101 = vmor %vm1100, %vm1097
        %v1102 = vld [vmem:[%s344 + $0x10] sm:$0x11]
        %v1103 = vsel %vm1101, %v1089, %v1102
        %1104 = vst [vmem:[%s344 + $0x10] sm:$0x11] %v1103
        %p1105 = scmp.lt.s32.totalorder %s14, 1
        %s1106 = scalar_select %p1105, %s14, 1
        %s1107 = smul.addr %s1106, 6
        %s1108 = smul.addr %s1107, 4
        %s1109 = scalar_lea.vmem %s3, %s1108
        // Predicated region
        $region147: #{_lambda_.24} parent=133 // pred_check
          %p1110 = pneg %p110
        $region148: #{_lambda_.24} parent=133 // pred_check_branch
          %1112 = sbr.rel (%p1110) target = $region150
        $region149: #{_lambda_.24} parent=133 // pred_region
          _
        $region150: #{_lambda_.24} parent=133 // pred_fallthru
          _
      $region134: #{_lambda_.24} parent=5 // pred_fallthru
        _
      %p1113 = scmp.le.s32.totalorder 2, %s9
      // Predicated region
      $region151: #{_lambda_.24} parent=5 // pred_check
        %p1114 = pneg %p1113
      $region152: #{_lambda_.24} parent=5 // pred_check_branch
        %1116 = sbr.rel (%p1114) target = $region154
      $region153: #{_lambda_.24} parent=5 // pred_region
        %s1117 = ssub.s32 %s9, 2
        // Predicated region
        $region155: #{_lambda_.24} parent=153 // pred_check
          %p1118 = pneg %p116
        $region156: #{_lambda_.24} parent=153 // pred_check_branch
          %1120 = sbr.rel (%p1118) target = $region158
        $region157: #{_lambda_.24} parent=153 // pred_region
          %p1121 = scmp.lt.s32.totalorder %s15, 1
          %s1122 = scalar_select %p1121, %s15, 1
          %s1123 = smul.addr %s1122, 6
          %s1124 = smul.addr %s1123, 4
          %s1125 = scalar_lea.vmem %s3, %s1124
        $region158: #{_lambda_.24} parent=153 // pred_fallthru
          _
      $region154: #{_lambda_.24} parent=5 // pred_fallthru
        _
    $region6: #{_lambda_.24} parent=1 // loop_footer
      %s13 = sadd.s32 1, %s9
    $region7: #{_lambda_.24} parent=1 // loop_footer_branch
      %8 = sbr.rel target = $region3
    $region8: #{_lambda_.24} parent=1 // loop_exit
      _

// kernel: _lambda_.23
$region0: #{_lambda_.23}
  #allocation0 [shape = 'u32[]', space=smem, size = 0x4, offset = 0x4, fixed_abs, tag = 'smem constant byte address 0x4 - core index']
  #allocation1 [shape = 'u32[144,128]{1,0:T(1,128)}', space=vmem, size = 0x12000, scoped, tag = 'internal scratch']
  %s0 = inlined_call_operand.vmem [shape: bf16[34,256], index: 0, kind: input, shape index: {}]
  %s1 = inlined_call_operand.vmem [shape: f32[1,256], index: 1, kind: input, shape index: {}]
  %s2 = inlined_call_operand.vmem [shape: f32[1,256], index: 2, kind: input, shape index: {}]
  %s3 = inlined_call_operand.vmem [shape: bf16[256,768], index: 3, kind: input, shape index: {}]
  %s4 = inlined_call_operand.vmem [shape: f32[1,768], index: 4, kind: input, shape index: {}]
  %s5 = inlined_call_operand.vmem [shape: bf16[34,768], index: 5, kind: output, shape index: {}]
  %s6 = sld [smem:[#allocation0]]
  $region30: #{_lambda_.23} parent=0
    _
  %s8 = ssub.s32 1, %s6
  %s9 = scalar_select 0, %s8, %s6
  // Predicated region
  $region2: #{_lambda_.23} parent=0 // pred_check
    _
  $region3: #{_lambda_.23} parent=0 // pred_check_branch
    %11 = sbr.rel (0) target = $region5
  $region4: #{_lambda_.23} parent=0 // pred_region
    _
  $region5: #{_lambda_.23} parent=0 // pred_fallthru
    _
  // Predicated region
  $region6: #{_lambda_.23} parent=0 // pred_check
    _
  $region7: #{_lambda_.23} parent=0 // pred_check_branch
    %13 = sbr.rel (0) target = $region9
  $region8: #{_lambda_.23} parent=0 // pred_region
    _
  $region9: #{_lambda_.23} parent=0 // pred_fallthru
    _
  // Predicated region
  $region10: #{_lambda_.23} parent=0 // pred_check
    _
  $region11: #{_lambda_.23} parent=0 // pred_check_branch
    %15 = sbr.rel (0) target = $region13
  $region12: #{_lambda_.23} parent=0 // pred_region
    _
  $region13: #{_lambda_.23} parent=0 // pred_fallthru
    _
  // Predicated region
  $region14: #{_lambda_.23} parent=0 // pred_check
    _
  $region15: #{_lambda_.23} parent=0 // pred_check_branch
    %17 = sbr.rel (0) target = $region17
  $region16: #{_lambda_.23} parent=0 // pred_region
    _
  $region17: #{_lambda_.23} parent=0 // pred_fallthru
    _
  // Predicated region
  $region18: #{_lambda_.23} parent=0 // pred_check
    _
  $region19: #{_lambda_.23} parent=0 // pred_check_branch
    %19 = sbr.rel (0) target = $region21
  $region20: #{_lambda_.23} parent=0 // pred_region
    _
  $region21: #{_lambda_.23} parent=0 // pred_fallthru
    _
  %v20 = vld [vmem:[%s0] sm:$0xff]
  %v21 = vld [vmem:[%s0 + $0x8] sm:$0xff]
  %v22 = vld [vmem:[%s0 + $0x10] sm:$0xff]
  %v23 = vld [vmem:[%s0 + $0x18] sm:$0xff]
  %v24 = vld [vmem:[%s0 + $0x20] sm:$0x11]
  %v25 = vunpack.c.l.bf16 %v20
  %v26 = vunpack.c.h.bf16 %v20
  %v27 = vunpack.c.l.bf16 %v21
  %v28 = vunpack.c.h.bf16 %v21
  %v29 = vunpack.c.l.bf16 %v22
  %v30 = vunpack.c.h.bf16 %v22
  %v31 = vunpack.c.l.bf16 %v23
  %v32 = vunpack.c.h.bf16 %v23
  %v33 = vunpack.c.l.bf16 %v24
  %v34 = vunpack.c.h.bf16 %v24
  %v35 = vadd.f32 %v25, %v26
  %36 = vadd.xlane.f32.xlu0 %v35
  %v37 = vpop.xlane.xlu0 %36
  %v38 = vadd.f32 %v27, %v28
  %39 = vadd.xlane.f32.xlu0 %v38
  %v40 = vpop.xlane.xlu0 %39
  %v41 = vadd.f32 %v29, %v30
  %42 = vadd.xlane.f32.xlu0 %v41
  %v43 = vpop.xlane.xlu0 %42
  %v44 = vadd.f32 %v31, %v32
  %45 = vadd.xlane.f32.xlu0 %v44
  %v46 = vpop.xlane.xlu0 %45
  %vm47 = vcmask 1041408
  %v48 = vsel %vm47, %v33, 0.0
  %v49 = vsel %vm47, %v34, 0.0
  %v50 = vadd.f32 %v48, %v49
  %51 = vadd.xlane.f32.xlu0 %v50
  %v52 = vpop.xlane.xlu0 %51
  %v53 = vrcp.pop 256.0
  %v54 = vmul.f32 %v37, %v53
  %v55 = vmul.f32 %v40, %v53
  %v56 = vmul.f32 %v43, %v53
  %v57 = vmul.f32 %v46, %v53
  %v58 = vmul.f32 %v52, %v53
  %v59 = vsub.f32 %v25, %v54
  %v60 = vsub.f32 %v26, %v54
  %v61 = vsub.f32 %v27, %v55
  %v62 = vsub.f32 %v28, %v55
  %v63 = vsub.f32 %v29, %v56
  %v64 = vsub.f32 %v30, %v56
  %v65 = vsub.f32 %v31, %v57
  %v66 = vsub.f32 %v32, %v57
  %v67 = vsub.f32 %v33, %v58
  %v68 = vsub.f32 %v34, %v58
  %v69 = vmul.f32 %v59, %v59
  %v70 = vmul.f32 %v60, %v60
  %v71 = vmul.f32 %v61, %v61
  %v72 = vmul.f32 %v62, %v62
  %v73 = vmul.f32 %v63, %v63
  %v74 = vmul.f32 %v64, %v64
  %v75 = vmul.f32 %v65, %v65
  %v76 = vmul.f32 %v66, %v66
  %v77 = vmul.f32 %v67, %v67
  %v78 = vmul.f32 %v68, %v68
  %v79 = vadd.f32 %v69, %v70
  %80 = vadd.xlane.f32.xlu0 %v79
  %v81 = vpop.xlane.xlu0 %80
  %v82 = vadd.f32 %v71, %v72
  %83 = vadd.xlane.f32.xlu0 %v82
  %v84 = vpop.xlane.xlu0 %83
  %v85 = vadd.f32 %v73, %v74
  %86 = vadd.xlane.f32.xlu0 %v85
  %v87 = vpop.xlane.xlu0 %86
  %v88 = vadd.f32 %v75, %v76
  %89 = vadd.xlane.f32.xlu0 %v88
  %v90 = vpop.xlane.xlu0 %89
  %v91 = vsel %vm47, %v77, 0.0
  %v92 = vsel %vm47, %v78, 0.0
  %v93 = vadd.f32 %v91, %v92
  %94 = vadd.xlane.f32.xlu0 %v93
  %v95 = vpop.xlane.xlu0 %94
  %v96 = vmul.f32 %v81, %v53
  %v97 = vmul.f32 %v84, %v53
  %v98 = vmul.f32 %v87, %v53
  %v99 = vmul.f32 %v90, %v53
  %v100 = vmul.f32 %v95, %v53
  %v101 = vadd.f32 %v96, 1e-06
  %v102 = vadd.f32 %v97, 1e-06
  %v103 = vadd.f32 %v98, 1e-06
  %v104 = vadd.f32 %v99, 1e-06
  %v105 = vadd.f32 %v100, 1e-06
  %v106 = vrsqrt.pop %v101
  %v107 = vrsqrt.pop %v102
  %v108 = vrsqrt.pop %v103
  %v109 = vrsqrt.pop %v104
  %v110 = vrsqrt.pop %v105
  %v111 = vmul.f32 %v59, %v106
  %v112 = vmul.f32 %v60, %v106
  %v113 = vmul.f32 %v61, %v107
  %v114 = vmul.f32 %v62, %v107
  %v115 = vmul.f32 %v63, %v108
  %v116 = vmul.f32 %v64, %v108
  %v117 = vmul.f32 %v65, %v109
  %v118 = vmul.f32 %v66, %v109
  %v119 = vmul.f32 %v67, %v110
  %v120 = vmul.f32 %v68, %v110
  %v121 = vld [vmem:[%s1] sm:$0x3]
  %v123 = vlaneseq
  %v124 = vshrl.u32 %v123, 7
  %v125 = vsub.s32 0, %v124
  %v126 = vrot.slane %v121, %v125
  %v127 = vlaneseq
  %v128 = vshrl.u32 %v127, 7
  %v129 = vsub.s32 1, %v128
  %v130 = vrot.slane %v121, %v129
  %v133 = vmul.f32 %v111, %v126
  %v134 = vmul.f32 %v112, %v130
  %v135 = vmul.f32 %v113, %v126
  %v136 = vmul.f32 %v114, %v130
  %v137 = vmul.f32 %v115, %v126
  %v138 = vmul.f32 %v116, %v130
  %v139 = vmul.f32 %v117, %v126
  %v140 = vmul.f32 %v118, %v130
  %v141 = vmul.f32 %v119, %v126
  %v142 = vmul.f32 %v120, %v130
  %v143 = vld [vmem:[%s2] sm:$0x3]
  %v145 = vlaneseq
  %v146 = vshrl.u32 %v145, 7
  %v147 = vsub.s32 0, %v146
  %v148 = vrot.slane %v143, %v147
  %v149 = vlaneseq
  %v150 = vshrl.u32 %v149, 7
  %v151 = vsub.s32 1, %v150
  %v152 = vrot.slane %v143, %v151
  %v155 = vadd.f32 %v133, %v148
  %v156 = vadd.f32 %v134, %v152
  %v157 = vadd.f32 %v135, %v148
  %v158 = vadd.f32 %v136, %v152
  %v159 = vadd.f32 %v137, %v148
  %v160 = vadd.f32 %v138, %v152
  %v161 = vadd.f32 %v139, %v148
  %v162 = vadd.f32 %v140, %v152
  %v163 = vadd.f32 %v141, %v148
  %v164 = vadd.f32 %v142, %v152
  %v165 = vpack.c.bf16 %v157, %v155
  %v166 = vpack.c.bf16 %v158, %v156
  %v167 = vpack.c.bf16 %v161, %v159
  %v168 = vpack.c.bf16 %v162, %v160
  %v169 = vpack.c.bf16 %v163, %v163
  %v170 = vpack.c.bf16 %v164, %v164
  %v171 = vld [vmem:[%s3] sm:$0xff]
  %v172 = vld [vmem:[%s3 + $0x8] sm:$0xff]
  %v173 = vld [vmem:[%s3 + $0x10] sm:$0xff]
  %v174 = vld [vmem:[%s3 + $0x18] sm:$0xff]
  %v175 = vld [vmem:[%s3 + $0x20] sm:$0xff]
  %v176 = vld [vmem:[%s3 + $0x28] sm:$0xff]
  %v177 = vld [vmem:[%s3 + $0x30] sm:$0xff]
  %v178 = vld [vmem:[%s3 + $0x38] sm:$0xff]
  %v179 = vld [vmem:[%s3 + $0x40] sm:$0xff]
  %v180 = vld [vmem:[%s3 + $0x48] sm:$0xff]
  %v181 = vld [vmem:[%s3 + $0x50] sm:$0xff]
  %v182 = vld [vmem:[%s3 + $0x58] sm:$0xff]
  %v183 = vld [vmem:[%s3 + $0x60] sm:$0xff]
  %v184 = vld [vmem:[%s3 + $0x68] sm:$0xff]
  %v185 = vld [vmem:[%s3 + $0x70] sm:$0xff]
  %v186 = vld [vmem:[%s3 + $0x78] sm:$0xff]
  %v187 = vld [vmem:[%s3 + $0x80] sm:$0xff]
  %v188 = vld [vmem:[%s3 + $0x88] sm:$0xff]
  %v189 = vld [vmem:[%s3 + $0x90] sm:$0xff]
  %v190 = vld [vmem:[%s3 + $0x98] sm:$0xff]
  %v191 = vld [vmem:[%s3 + $0xa0] sm:$0xff]
  %v192 = vld [vmem:[%s3 + $0xa8] sm:$0xff]
  %v193 = vld [vmem:[%s3 + $0xb0] sm:$0xff]
  %v194 = vld [vmem:[%s3 + $0xb8] sm:$0xff]
  %v195 = vld [vmem:[%s3 + $0xc0] sm:$0xff]
  %v196 = vld [vmem:[%s3 + $0xc8] sm:$0xff]
  %v197 = vld [vmem:[%s3 + $0xd0] sm:$0xff]
  %v198 = vld [vmem:[%s3 + $0xd8] sm:$0xff]
  %v199 = vld [vmem:[%s3 + $0xe0] sm:$0xff]
  %v200 = vld [vmem:[%s3 + $0xe8] sm:$0xff]
  %v201 = vld [vmem:[%s3 + $0xf0] sm:$0xff]
  %v202 = vld [vmem:[%s3 + $0xf8] sm:$0xff]
  %v203 = vld [vmem:[%s3 + $0x100] sm:$0xff]
  %v204 = vld [vmem:[%s3 + $0x108] sm:$0xff]
  %v205 = vld [vmem:[%s3 + $0x110] sm:$0xff]
  %v206 = vld [vmem:[%s3 + $0x118] sm:$0xff]
  %v207 = vld [vmem:[%s3 + $0x120] sm:$0xff]
  %v208 = vld [vmem:[%s3 + $0x128] sm:$0xff]
  %v209 = vld [vmem:[%s3 + $0x130] sm:$0xff]
  %v210 = vld [vmem:[%s3 + $0x138] sm:$0xff]
  %v211 = vld [vmem:[%s3 + $0x140] sm:$0xff]
  %v212 = vld [vmem:[%s3 + $0x148] sm:$0xff]
  %v213 = vld [vmem:[%s3 + $0x150] sm:$0xff]
  %v214 = vld [vmem:[%s3 + $0x158] sm:$0xff]
  %v215 = vld [vmem:[%s3 + $0x160] sm:$0xff]
  %v216 = vld [vmem:[%s3 + $0x168] sm:$0xff]
  %v217 = vld [vmem:[%s3 + $0x170] sm:$0xff]
  %v218 = vld [vmem:[%s3 + $0x178] sm:$0xff]
  %v219 = vld [vmem:[%s3 + $0x180] sm:$0xff]
  %v220 = vld [vmem:[%s3 + $0x188] sm:$0xff]
  %v221 = vld [vmem:[%s3 + $0x190] sm:$0xff]
  %v222 = vld [vmem:[%s3 + $0x198] sm:$0xff]
  %v223 = vld [vmem:[%s3 + $0x1a0] sm:$0xff]
  %v224 = vld [vmem:[%s3 + $0x1a8] sm:$0xff]
  %v225 = vld [vmem:[%s3 + $0x1b0] sm:$0xff]
  %v226 = vld [vmem:[%s3 + $0x1b8] sm:$0xff]
  %v227 = vld [vmem:[%s3 + $0x1c0] sm:$0xff]
  %v228 = vld [vmem:[%s3 + $0x1c8] sm:$0xff]
  %v229 = vld [vmem:[%s3 + $0x1d0] sm:$0xff]
  %v230 = vld [vmem:[%s3 + $0x1d8] sm:$0xff]
  %v231 = vld [vmem:[%s3 + $0x1e0] sm:$0xff]
  %v232 = vld [vmem:[%s3 + $0x1e8] sm:$0xff]
  %v233 = vld [vmem:[%s3 + $0x1f0] sm:$0xff]
  %v234 = vld [vmem:[%s3 + $0x1f8] sm:$0xff]
  %v235 = vld [vmem:[%s3 + $0x200] sm:$0xff]
  %v236 = vld [vmem:[%s3 + $0x208] sm:$0xff]
  %v237 = vld [vmem:[%s3 + $0x210] sm:$0xff]
  %v238 = vld [vmem:[%s3 + $0x218] sm:$0xff]
  %v239 = vld [vmem:[%s3 + $0x220] sm:$0xff]
  %v240 = vld [vmem:[%s3 + $0x228] sm:$0xff]
  %v241 = vld [vmem:[%s3 + $0x230] sm:$0xff]
  %v242 = vld [vmem:[%s3 + $0x238] sm:$0xff]
  %v243 = vld [vmem:[%s3 + $0x240] sm:$0xff]
  %v244 = vld [vmem:[%s3 + $0x248] sm:$0xff]
  %v245 = vld [vmem:[%s3 + $0x250] sm:$0xff]
  %v246 = vld [vmem:[%s3 + $0x258] sm:$0xff]
  %v247 = vld [vmem:[%s3 + $0x260] sm:$0xff]
  %v248 = vld [vmem:[%s3 + $0x268] sm:$0xff]
  %v249 = vld [vmem:[%s3 + $0x270] sm:$0xff]
  %v250 = vld [vmem:[%s3 + $0x278] sm:$0xff]
  %v251 = vld [vmem:[%s3 + $0x280] sm:$0xff]
  %v252 = vld [vmem:[%s3 + $0x288] sm:$0xff]
  %v253 = vld [vmem:[%s3 + $0x290] sm:$0xff]
  %v254 = vld [vmem:[%s3 + $0x298] sm:$0xff]
  %v255 = vld [vmem:[%s3 + $0x2a0] sm:$0xff]
  %v256 = vld [vmem:[%s3 + $0x2a8] sm:$0xff]
  %v257 = vld [vmem:[%s3 + $0x2b0] sm:$0xff]
  %v258 = vld [vmem:[%s3 + $0x2b8] sm:$0xff]
  %v259 = vld [vmem:[%s3 + $0x2c0] sm:$0xff]
  %v260 = vld [vmem:[%s3 + $0x2c8] sm:$0xff]
  %v261 = vld [vmem:[%s3 + $0x2d0] sm:$0xff]
  %v262 = vld [vmem:[%s3 + $0x2d8] sm:$0xff]
  %v263 = vld [vmem:[%s3 + $0x2e0] sm:$0xff]
  %v264 = vld [vmem:[%s3 + $0x2e8] sm:$0xff]
  %v265 = vld [vmem:[%s3 + $0x2f0] sm:$0xff]
  %v266 = vld [vmem:[%s3 + $0x2f8] sm:$0xff]
  %v267 = vld [vmem:[%s4] sm:$0x3f]
  %v269 = vlaneseq
  %v270 = vshrl.u32 %v269, 7
  %v271 = vsub.s32 0, %v270
  %v272 = vrot.slane %v267, %v271
  %v273 = vlaneseq
  %v274 = vshrl.u32 %v273, 7
  %v275 = vsub.s32 1, %v274
  %v276 = vrot.slane %v267, %v275
  %v277 = vlaneseq
  %v278 = vshrl.u32 %v277, 7
  %v279 = vsub.s32 2, %v278
  %v280 = vrot.slane %v267, %v279
  %v281 = vlaneseq
  %v282 = vshrl.u32 %v281, 7
  %v283 = vsub.s32 3, %v282
  %v284 = vrot.slane %v267, %v283
  %v285 = vlaneseq
  %v286 = vshrl.u32 %v285, 7
  %v287 = vsub.s32 4, %v286
  %v288 = vrot.slane %v267, %v287
  %v289 = vlaneseq
  %v290 = vshrl.u32 %v289, 7
  %v291 = vsub.s32 5, %v290
  %v292 = vrot.slane %v267, %v291
  %v395 = vunpack.c.l.b16 %v171
  %v396 = vunpack.c.h.b16 %v171
  %v397 = vunpack.c.l.b16 %v172
  %v398 = vunpack.c.h.b16 %v172
  %v399 = vunpack.c.l.b16 %v173
  %v400 = vunpack.c.h.b16 %v173
  %v401 = vunpack.c.l.b16 %v174
  %v402 = vunpack.c.h.b16 %v174
  %v403 = vunpack.c.l.b16 %v175
  %v404 = vunpack.c.h.b16 %v175
  %v405 = vunpack.c.l.b16 %v176
  %v406 = vunpack.c.h.b16 %v176
  %v407 = vunpack.c.l.b16 %v177
  %v408 = vunpack.c.h.b16 %v177
  %v409 = vunpack.c.l.b16 %v178
  %v410 = vunpack.c.h.b16 %v178
  %v411 = vunpack.c.l.b16 %v179
  %v412 = vunpack.c.h.b16 %v179
  %v413 = vunpack.c.l.b16 %v180
  %v414 = vunpack.c.h.b16 %v180
  %v415 = vunpack.c.l.b16 %v181
  %v416 = vunpack.c.h.b16 %v181
  %v417 = vunpack.c.l.b16 %v182
  %v418 = vunpack.c.h.b16 %v182
  %v419 = vunpack.c.l.b16 %v183
  %v420 = vunpack.c.h.b16 %v183
  %v421 = vunpack.c.l.b16 %v184
  %v422 = vunpack.c.h.b16 %v184
  %v423 = vunpack.c.l.b16 %v185
  %v424 = vunpack.c.h.b16 %v185
  %v425 = vunpack.c.l.b16 %v186
  %v426 = vunpack.c.h.b16 %v186
  %v427 = vunpack.c.l.b16 %v187
  %v428 = vunpack.c.h.b16 %v187
  %v429 = vunpack.c.l.b16 %v188
  %v430 = vunpack.c.h.b16 %v188
  %v431 = vunpack.c.l.b16 %v189
  %v432 = vunpack.c.h.b16 %v189
  %v433 = vunpack.c.l.b16 %v190
  %v434 = vunpack.c.h.b16 %v190
  %v435 = vunpack.c.l.b16 %v191
  %v436 = vunpack.c.h.b16 %v191
  %v437 = vunpack.c.l.b16 %v192
  %v438 = vunpack.c.h.b16 %v192
  %v439 = vunpack.c.l.b16 %v193
  %v440 = vunpack.c.h.b16 %v193
  %v441 = vunpack.c.l.b16 %v194
  %v442 = vunpack.c.h.b16 %v194
  %v443 = vunpack.c.l.b16 %v195
  %v444 = vunpack.c.h.b16 %v195
  %v445 = vunpack.c.l.b16 %v196
  %v446 = vunpack.c.h.b16 %v196
  %v447 = vunpack.c.l.b16 %v197
  %v448 = vunpack.c.h.b16 %v197
  %v449 = vunpack.c.l.b16 %v198
  %v450 = vunpack.c.h.b16 %v198
  %v451 = vunpack.c.l.b16 %v199
  %v452 = vunpack.c.h.b16 %v199
  %v453 = vunpack.c.l.b16 %v200
  %v454 = vunpack.c.h.b16 %v200
  %v455 = vunpack.c.l.b16 %v201
  %v456 = vunpack.c.h.b16 %v201
  %v457 = vunpack.c.l.b16 %v202
  %v458 = vunpack.c.h.b16 %v202
  %v459 = vunpack.c.l.b16 %v203
  %v460 = vunpack.c.h.b16 %v203
  %v461 = vunpack.c.l.b16 %v204
  %v462 = vunpack.c.h.b16 %v204
  %v463 = vunpack.c.l.b16 %v205
  %v464 = vunpack.c.h.b16 %v205
  %v465 = vunpack.c.l.b16 %v206
  %v466 = vunpack.c.h.b16 %v206
  %v467 = vunpack.c.l.b16 %v207
  %v468 = vunpack.c.h.b16 %v207
  %v469 = vunpack.c.l.b16 %v208
  %v470 = vunpack.c.h.b16 %v208
  %v471 = vunpack.c.l.b16 %v209
  %v472 = vunpack.c.h.b16 %v209
  %v473 = vunpack.c.l.b16 %v210
  %v474 = vunpack.c.h.b16 %v210
  %v475 = vunpack.c.l.b16 %v211
  %v476 = vunpack.c.h.b16 %v211
  %v477 = vunpack.c.l.b16 %v212
  %v478 = vunpack.c.h.b16 %v212
  %v479 = vunpack.c.l.b16 %v213
  %v480 = vunpack.c.h.b16 %v213
  %v481 = vunpack.c.l.b16 %v214
  %v482 = vunpack.c.h.b16 %v214
  %v483 = vunpack.c.l.b16 %v215
  %v484 = vunpack.c.h.b16 %v215
  %v485 = vunpack.c.l.b16 %v216
  %v486 = vunpack.c.h.b16 %v216
  %v487 = vunpack.c.l.b16 %v217
  %v488 = vunpack.c.h.b16 %v217
  %v489 = vunpack.c.l.b16 %v218
  %v490 = vunpack.c.h.b16 %v218
  %v491 = vunpack.c.l.b16 %v219
  %v492 = vunpack.c.h.b16 %v219
  %v493 = vunpack.c.l.b16 %v220
  %v494 = vunpack.c.h.b16 %v220
  %v495 = vunpack.c.l.b16 %v221
  %v496 = vunpack.c.h.b16 %v221
  %v497 = vunpack.c.l.b16 %v222
  %v498 = vunpack.c.h.b16 %v222
  %v499 = vunpack.c.l.b16 %v223
  %v500 = vunpack.c.h.b16 %v223
  %v501 = vunpack.c.l.b16 %v224
  %v502 = vunpack.c.h.b16 %v224
  %v503 = vunpack.c.l.b16 %v225
  %v504 = vunpack.c.h.b16 %v225
  %v505 = vunpack.c.l.b16 %v226
  %v506 = vunpack.c.h.b16 %v226
  %v507 = vunpack.c.l.b16 %v227
  %v508 = vunpack.c.h.b16 %v227
  %v509 = vunpack.c.l.b16 %v228
  %v510 = vunpack.c.h.b16 %v228
  %v511 = vunpack.c.l.b16 %v229
  %v512 = vunpack.c.h.b16 %v229
  %v513 = vunpack.c.l.b16 %v230
  %v514 = vunpack.c.h.b16 %v230
  %v515 = vunpack.c.l.b16 %v231
  %v516 = vunpack.c.h.b16 %v231
  %v517 = vunpack.c.l.b16 %v232
  %v518 = vunpack.c.h.b16 %v232
  %v519 = vunpack.c.l.b16 %v233
  %v520 = vunpack.c.h.b16 %v233
  %v521 = vunpack.c.l.b16 %v234
  %v522 = vunpack.c.h.b16 %v234
  %v523 = vunpack.c.l.b16 %v235
  %v524 = vunpack.c.h.b16 %v235
  %v525 = vunpack.c.l.b16 %v236
  %v526 = vunpack.c.h.b16 %v236
  %v527 = vunpack.c.l.b16 %v237
  %v528 = vunpack.c.h.b16 %v237
  %v529 = vunpack.c.l.b16 %v238
  %v530 = vunpack.c.h.b16 %v238
  %v531 = vunpack.c.l.b16 %v239
  %v532 = vunpack.c.h.b16 %v239
  %v533 = vunpack.c.l.b16 %v240
  %v534 = vunpack.c.h.b16 %v240
  %v535 = vunpack.c.l.b16 %v241
  %v536 = vunpack.c.h.b16 %v241
  %v537 = vunpack.c.l.b16 %v242
  %v538 = vunpack.c.h.b16 %v242
  %v539 = vunpack.c.l.b16 %v243
  %v540 = vunpack.c.h.b16 %v243
  %v541 = vunpack.c.l.b16 %v244
  %v542 = vunpack.c.h.b16 %v244
  %v543 = vunpack.c.l.b16 %v245
  %v544 = vunpack.c.h.b16 %v245
  %v545 = vunpack.c.l.b16 %v246
  %v546 = vunpack.c.h.b16 %v246
  %v547 = vunpack.c.l.b16 %v247
  %v548 = vunpack.c.h.b16 %v247
  %v549 = vunpack.c.l.b16 %v248
  %v550 = vunpack.c.h.b16 %v248
  %v551 = vunpack.c.l.b16 %v249
  %v552 = vunpack.c.h.b16 %v249
  %v553 = vunpack.c.l.b16 %v250
  %v554 = vunpack.c.h.b16 %v250
  %v555 = vunpack.c.l.b16 %v251
  %v556 = vunpack.c.h.b16 %v251
  %v557 = vunpack.c.l.b16 %v252
  %v558 = vunpack.c.h.b16 %v252
  %v559 = vunpack.c.l.b16 %v253
  %v560 = vunpack.c.h.b16 %v253
  %v561 = vunpack.c.l.b16 %v254
  %v562 = vunpack.c.h.b16 %v254
  %v563 = vunpack.c.l.b16 %v255
  %v564 = vunpack.c.h.b16 %v255
  %v565 = vunpack.c.l.b16 %v256
  %v566 = vunpack.c.h.b16 %v256
  %v567 = vunpack.c.l.b16 %v257
  %v568 = vunpack.c.h.b16 %v257
  %v569 = vunpack.c.l.b16 %v258
  %v570 = vunpack.c.h.b16 %v258
  %v571 = vunpack.c.l.b16 %v259
  %v572 = vunpack.c.h.b16 %v259
  %v573 = vunpack.c.l.b16 %v260
  %v574 = vunpack.c.h.b16 %v260
  %v575 = vunpack.c.l.b16 %v261
  %v576 = vunpack.c.h.b16 %v261
  %v577 = vunpack.c.l.b16 %v262
  %v578 = vunpack.c.h.b16 %v262
  %v579 = vunpack.c.l.b16 %v263
  %v580 = vunpack.c.h.b16 %v263
  %v581 = vunpack.c.l.b16 %v264
  %v582 = vunpack.c.h.b16 %v264
  %v583 = vunpack.c.l.b16 %v265
  %v584 = vunpack.c.h.b16 %v265
  %v585 = vunpack.c.l.b16 %v266
  %v586 = vunpack.c.h.b16 %v266
  %v587 = vpack.c.b16 %v401, %v395
  %v588 = vpack.c.b16 %v402, %v396
  %v589 = vpack.c.b16 %v403, %v397
  %v590 = vpack.c.b16 %v404, %v398
  %v591 = vpack.c.b16 %v405, %v399
  %v592 = vpack.c.b16 %v406, %v400
  %v593 = vpack.c.b16 %v413, %v407
  %v594 = vpack.c.b16 %v414, %v408
  %v595 = vpack.c.b16 %v415, %v409
  %v596 = vpack.c.b16 %v416, %v410
  %v597 = vpack.c.b16 %v417, %v411
  %v598 = vpack.c.b16 %v418, %v412
  %v599 = vpack.c.b16 %v425, %v419
  %v600 = vpack.c.b16 %v426, %v420
  %v601 = vpack.c.b16 %v427, %v421
  %v602 = vpack.c.b16 %v428, %v422
  %v603 = vpack.c.b16 %v429, %v423
  %v604 = vpack.c.b16 %v430, %v424
  %v605 = vpack.c.b16 %v437, %v431
  %v606 = vpack.c.b16 %v438, %v432
  %v607 = vpack.c.b16 %v439, %v433
  %v608 = vpack.c.b16 %v440, %v434
  %v609 = vpack.c.b16 %v441, %v435
  %v610 = vpack.c.b16 %v442, %v436
  %v611 = vpack.c.b16 %v449, %v443
  %v612 = vpack.c.b16 %v450, %v444
  %v613 = vpack.c.b16 %v451, %v445
  %v614 = vpack.c.b16 %v452, %v446
  %v615 = vpack.c.b16 %v453, %v447
  %v616 = vpack.c.b16 %v454, %v448
  %v617 = vpack.c.b16 %v461, %v455
  %v618 = vpack.c.b16 %v462, %v456
  %v619 = vpack.c.b16 %v463, %v457
  %v620 = vpack.c.b16 %v464, %v458
  %v621 = vpack.c.b16 %v465, %v459
  %v622 = vpack.c.b16 %v466, %v460
  %v623 = vpack.c.b16 %v473, %v467
  %v624 = vpack.c.b16 %v474, %v468
  %v625 = vpack.c.b16 %v475, %v469
  %v626 = vpack.c.b16 %v476, %v470
  %v627 = vpack.c.b16 %v477, %v471
  %v628 = vpack.c.b16 %v478, %v472
  %v629 = vpack.c.b16 %v485, %v479
  %v630 = vpack.c.b16 %v486, %v480
  %v631 = vpack.c.b16 %v487, %v481
  %v632 = vpack.c.b16 %v488, %v482
  %v633 = vpack.c.b16 %v489, %v483
  %v634 = vpack.c.b16 %v490, %v484
  %v635 = vpack.c.b16 %v497, %v491
  %v636 = vpack.c.b16 %v498, %v492
  %v637 = vpack.c.b16 %v499, %v493
  %v638 = vpack.c.b16 %v500, %v494
  %v639 = vpack.c.b16 %v501, %v495
  %v640 = vpack.c.b16 %v502, %v496
  %v641 = vpack.c.b16 %v509, %v503
  %v642 = vpack.c.b16 %v510, %v504
  %v643 = vpack.c.b16 %v511, %v505
  %v644 = vpack.c.b16 %v512, %v506
  %v645 = vpack.c.b16 %v513, %v507
  %v646 = vpack.c.b16 %v514, %v508
  %v647 = vpack.c.b16 %v521, %v515
  %v648 = vpack.c.b16 %v522, %v516
  %v649 = vpack.c.b16 %v523, %v517
  %v650 = vpack.c.b16 %v524, %v518
  %v651 = vpack.c.b16 %v525, %v519
  %v652 = vpack.c.b16 %v526, %v520
  %v653 = vpack.c.b16 %v533, %v527
  %v654 = vpack.c.b16 %v534, %v528
  %v655 = vpack.c.b16 %v535, %v529
  %v656 = vpack.c.b16 %v536, %v530
  %v657 = vpack.c.b16 %v537, %v531
  %v658 = vpack.c.b16 %v538, %v532
  %v659 = vpack.c.b16 %v545, %v539
  %v660 = vpack.c.b16 %v546, %v540
  %v661 = vpack.c.b16 %v547, %v541
  %v662 = vpack.c.b16 %v548, %v542
  %v663 = vpack.c.b16 %v549, %v543
  %v664 = vpack.c.b16 %v550, %v544
  %v665 = vpack.c.b16 %v557, %v551
  %v666 = vpack.c.b16 %v558, %v552
  %v667 = vpack.c.b16 %v559, %v553
  %v668 = vpack.c.b16 %v560, %v554
  %v669 = vpack.c.b16 %v561, %v555
  %v670 = vpack.c.b16 %v562, %v556
  %v671 = vpack.c.b16 %v569, %v563
  %v672 = vpack.c.b16 %v570, %v564
  %v673 = vpack.c.b16 %v571, %v565
  %v674 = vpack.c.b16 %v572, %v566
  %v675 = vpack.c.b16 %v573, %v567
  %v676 = vpack.c.b16 %v574, %v568
  %v677 = vpack.c.b16 %v581, %v575
  %v678 = vpack.c.b16 %v582, %v576
  %v679 = vpack.c.b16 %v583, %v577
  %v680 = vpack.c.b16 %v584, %v578
  %v681 = vpack.c.b16 %v585, %v579
  %v682 = vpack.c.b16 %v586, %v580
  %779 = vmatprep.subr.bf16.mxu0 %v630
  %780 = vmatpush1.bf16.msra.mxu0 %v629
  %781 = vmatprep.subr.bf16.mxu0 %v624
  %782 = vmatpush1.bf16.msra.mxu0 %v623
  %783 = vmatprep.subr.bf16.mxu0 %v618
  %784 = vmatpush1.bf16.msra.mxu0 %v617
  %785 = vmatprep.subr.bf16.mxu0 %v612
  %786 = vmatpush1.bf16.msra.mxu0 %v611
  %787 = vmatprep.subr.bf16.mxu0 %v606
  %788 = vmatpush1.bf16.msra.mxu0 %v605
  %789 = vmatprep.subr.bf16.mxu0 %v600
  %790 = vmatpush1.bf16.msra.mxu0 %v599
  %791 = vmatprep.subr.bf16.mxu0 %v594
  %792 = vmatpush1.bf16.msra.mxu0 %v593
  %793 = vmatprep.subr.bf16.mxu0 %v588
  %794 = vmatpush1.bf16.msra.mxu0 %v587
  %795 = vmatprep.subr.bf16.mxu0 %v678
  %796 = vmatpush2.bf16.msra.mxu0 %v677
  %797 = vmatprep.subr.bf16.mxu0 %v672
  %798 = vmatpush2.bf16.msra.mxu0 %v671
  %799 = vmatprep.subr.bf16.mxu0 %v666
  %800 = vmatpush2.bf16.msra.mxu0 %v665
  %801 = vmatprep.subr.bf16.mxu0 %v660
  %802 = vmatpush2.bf16.msra.mxu0 %v659
  %803 = vmatprep.subr.bf16.mxu0 %v654
  %804 = vmatpush2.bf16.msra.mxu0 %v653
  %805 = vmatprep.subr.bf16.mxu0 %v648
  %806 = vmatpush2.bf16.msra.mxu0 %v647
  %807 = vmatprep.subr.bf16.mxu0 %v642
  %808 = vmatpush2.bf16.msra.mxu0 %v641
  %809 = vmatprep.subr.bf16.mxu0 %v636
  %810 = vmatpush2.bf16.msra.mxu0 %v635
  %811 = vmatprep.mubr.bf16.mxu0 %v166
  %812 = vmatmul.mubr.bf16.gmra.mxu0 %v165
  %v813 = vpop.f32.mrf.mxu0
  %v814 = vadd.f32 %v272, %v813
  %v815 = vpop.f32.mrf.mxu0
  %v816 = vadd.f32 %v276, %v815
  %v817 = vpop.f32.mrf.mxu0
  %v818 = vadd.f32 %v272, %v817
  %v819 = vpop.f32.mrf.mxu0
  %v820 = vadd.f32 %v276, %v819
  %821 = vmatprep.mubr.bf16.mxu0 %v168
  %822 = vmatmul.mubr.bf16.gmra.mxu0 %v167
  %v823 = vpop.f32.mrf.mxu0
  %v824 = vadd.f32 %v272, %v823
  %v825 = vpop.f32.mrf.mxu0
  %v826 = vadd.f32 %v276, %v825
  %v827 = vpop.f32.mrf.mxu0
  %v828 = vadd.f32 %v272, %v827
  %v829 = vpop.f32.mrf.mxu0
  %v830 = vadd.f32 %v276, %v829
  %831 = vmatprep.mubr.bf16.mxu0 %v170
  %832 = vmatmul.mubr.bf16.gmra.mxu0 %v169
  %v833 = vpop.f32.mrf.mxu0
  %v834 = vadd.f32 %v272, %v833
  %v835 = vpop.f32.mrf.mxu0
  %v836 = vadd.f32 %v276, %v835
  %v837 = vpop.f32.mrf.mxu0
  %v838 = vpop.f32.mrf.mxu0
  %839 = vdwg.mxu0
  %840 = vmatprep.subr.bf16.mxu0 %v632
  %841 = vmatpush1.bf16.msra.mxu0 %v631
  %842 = vmatprep.subr.bf16.mxu0 %v626
  %843 = vmatpush1.bf16.msra.mxu0 %v625
  %844 = vmatprep.subr.bf16.mxu0 %v620
  %845 = vmatpush1.bf16.msra.mxu0 %v619
  %846 = vmatprep.subr.bf16.mxu0 %v614
  %847 = vmatpush1.bf16.msra.mxu0 %v613
  %848 = vmatprep.subr.bf16.mxu0 %v608
  %849 = vmatpush1.bf16.msra.mxu0 %v607
  %850 = vmatprep.subr.bf16.mxu0 %v602
  %851 = vmatpush1.bf16.msra.mxu0 %v601
  %852 = vmatprep.subr.bf16.mxu0 %v596
  %853 = vmatpush1.bf16.msra.mxu0 %v595
  %854 = vmatprep.subr.bf16.mxu0 %v590
  %855 = vmatpush1.bf16.msra.mxu0 %v589
  %856 = vmatprep.subr.bf16.mxu0 %v680
  %857 = vmatpush2.bf16.msra.mxu0 %v679
  %858 = vmatprep.subr.bf16.mxu0 %v674
  %859 = vmatpush2.bf16.msra.mxu0 %v673
  %860 = vmatprep.subr.bf16.mxu0 %v668
  %861 = vmatpush2.bf16.msra.mxu0 %v667
  %862 = vmatprep.subr.bf16.mxu0 %v662
  %863 = vmatpush2.bf16.msra.mxu0 %v661
  %864 = vmatprep.subr.bf16.mxu0 %v656
  %865 = vmatpush2.bf16.msra.mxu0 %v655
  %866 = vmatprep.subr.bf16.mxu0 %v650
  %867 = vmatpush2.bf16.msra.mxu0 %v649
  %868 = vmatprep.subr.bf16.mxu0 %v644
  %869 = vmatpush2.bf16.msra.mxu0 %v643
  %870 = vmatprep.subr.bf16.mxu0 %v638
  %871 = vmatpush2.bf16.msra.mxu0 %v637
  %872 = vmatprep.mubr.bf16.mxu0 %v166
  %873 = vmatmul.mubr.bf16.gmra.mxu0 %v165
  %v874 = vpop.f32.mrf.mxu0
  %v875 = vadd.f32 %v280, %v874
  %v876 = vpop.f32.mrf.mxu0
  %v877 = vadd.f32 %v284, %v876
  %v878 = vpop.f32.mrf.mxu0
  %v879 = vadd.f32 %v280, %v878
  %v880 = vpop.f32.mrf.mxu0
  %v881 = vadd.f32 %v284, %v880
  %882 = vmatprep.mubr.bf16.mxu0 %v168
  %883 = vmatmul.mubr.bf16.gmra.mxu0 %v167
  %v884 = vpop.f32.mrf.mxu0
  %v885 = vadd.f32 %v280, %v884
  %v886 = vpop.f32.mrf.mxu0
  %v887 = vadd.f32 %v284, %v886
  %v888 = vpop.f32.mrf.mxu0
  %v889 = vadd.f32 %v280, %v888
  %v890 = vpop.f32.mrf.mxu0
  %v891 = vadd.f32 %v284, %v890
  %892 = vmatprep.mubr.bf16.mxu0 %v170
  %893 = vmatmul.mubr.bf16.gmra.mxu0 %v169
  %v894 = vpop.f32.mrf.mxu0
  %v895 = vadd.f32 %v280, %v894
  %v896 = vpop.f32.mrf.mxu0
  %v897 = vadd.f32 %v284, %v896
  %v898 = vpop.f32.mrf.mxu0
  %v899 = vpop.f32.mrf.mxu0
  %900 = vdwg.mxu0
  %901 = vmatprep.subr.bf16.mxu0 %v634
  %902 = vmatpush1.bf16.msra.mxu0 %v633
  %903 = vmatprep.subr.bf16.mxu0 %v628
  %904 = vmatpush1.bf16.msra.mxu0 %v627
  %905 = vmatprep.subr.bf16.mxu0 %v622
  %906 = vmatpush1.bf16.msra.mxu0 %v621
  %907 = vmatprep.subr.bf16.mxu0 %v616
  %908 = vmatpush1.bf16.msra.mxu0 %v615
  %909 = vmatprep.subr.bf16.mxu0 %v610
  %910 = vmatpush1.bf16.msra.mxu0 %v609
  %911 = vmatprep.subr.bf16.mxu0 %v604
  %912 = vmatpush1.bf16.msra.mxu0 %v603
  %913 = vmatprep.subr.bf16.mxu0 %v598
  %914 = vmatpush1.bf16.msra.mxu0 %v597
  %915 = vmatprep.subr.bf16.mxu0 %v592
  %916 = vmatpush1.bf16.msra.mxu0 %v591
  %917 = vmatprep.subr.bf16.mxu0 %v682
  %918 = vmatpush2.bf16.msra.mxu0 %v681
  %919 = vmatprep.subr.bf16.mxu0 %v676
  %920 = vmatpush2.bf16.msra.mxu0 %v675
  %921 = vmatprep.subr.bf16.mxu0 %v670
  %922 = vmatpush2.bf16.msra.mxu0 %v669
  %923 = vmatprep.subr.bf16.mxu0 %v664
  %924 = vmatpush2.bf16.msra.mxu0 %v663
  %925 = vmatprep.subr.bf16.mxu0 %v658
  %926 = vmatpush2.bf16.msra.mxu0 %v657
  %927 = vmatprep.subr.bf16.mxu0 %v652
  %928 = vmatpush2.bf16.msra.mxu0 %v651
  %929 = vmatprep.subr.bf16.mxu0 %v646
  %930 = vmatpush2.bf16.msra.mxu0 %v645
  %931 = vmatprep.subr.bf16.mxu0 %v640
  %932 = vmatpush2.bf16.msra.mxu0 %v639
  %933 = vmatprep.mubr.bf16.mxu0 %v166
  %934 = vmatmul.mubr.bf16.gmra.mxu0 %v165
  %v935 = vpop.f32.mrf.mxu0
  %v936 = vadd.f32 %v288, %v935
  %v937 = vpop.f32.mrf.mxu0
  %v938 = vadd.f32 %v292, %v937
  %v939 = vpop.f32.mrf.mxu0
  %v940 = vadd.f32 %v288, %v939
  %v941 = vpop.f32.mrf.mxu0
  %v942 = vadd.f32 %v292, %v941
  %943 = vmatprep.mubr.bf16.mxu0 %v168
  %944 = vmatmul.mubr.bf16.gmra.mxu0 %v167
  %v945 = vpop.f32.mrf.mxu0
  %v946 = vadd.f32 %v288, %v945
  %v947 = vpop.f32.mrf.mxu0
  %v948 = vadd.f32 %v292, %v947
  %v949 = vpop.f32.mrf.mxu0
  %v950 = vadd.f32 %v288, %v949
  %v951 = vpop.f32.mrf.mxu0
  %v952 = vadd.f32 %v292, %v951
  %953 = vmatprep.mubr.bf16.mxu0 %v170
  %954 = vmatmul.mubr.bf16.gmra.mxu0 %v169
  %v955 = vpop.f32.mrf.mxu0
  %v956 = vadd.f32 %v288, %v955
  %v957 = vpop.f32.mrf.mxu0
  %v958 = vadd.f32 %v292, %v957
  %v959 = vpop.f32.mrf.mxu0
  %v960 = vpop.f32.mrf.mxu0
  %961 = vdwg.mxu0
  %v962 = vpack.c.bf16 %v818, %v814
  %v963 = vpack.c.bf16 %v820, %v816
  %v964 = vpack.c.bf16 %v879, %v875
  %v965 = vpack.c.bf16 %v881, %v877
  %v966 = vpack.c.bf16 %v940, %v936
  %v967 = vpack.c.bf16 %v942, %v938
  %v968 = vpack.c.bf16 %v828, %v824
  %v969 = vpack.c.bf16 %v830, %v826
  %v970 = vpack.c.bf16 %v889, %v885
  %v971 = vpack.c.bf16 %v891, %v887
  %v972 = vpack.c.bf16 %v950, %v946
  %v973 = vpack.c.bf16 %v952, %v948
  %v974 = vpack.c.bf16 %v834, %v834
  %v975 = vpack.c.bf16 %v836, %v836
  %v976 = vpack.c.bf16 %v895, %v895
  %v977 = vpack.c.bf16 %v897, %v897
  %v978 = vpack.c.bf16 %v956, %v956
  %v979 = vpack.c.bf16 %v958, %v958
  %v998 = vunpack.c.l.b16 %v962
  %v999 = vunpack.c.l.b16 %v963
  %v1000 = vunpack.c.l.b16 %v964
  %v1001 = vunpack.c.l.b16 %v965
  %v1002 = vunpack.c.l.b16 %v966
  %v1003 = vunpack.c.l.b16 %v967
  %v1004 = vunpack.c.h.b16 %v962
  %v1005 = vunpack.c.h.b16 %v963
  %v1006 = vunpack.c.h.b16 %v964
  %v1007 = vunpack.c.h.b16 %v965
  %v1008 = vunpack.c.h.b16 %v966
  %v1009 = vunpack.c.h.b16 %v967
  %v1010 = vunpack.c.l.b16 %v968
  %v1011 = vunpack.c.l.b16 %v969
  %v1012 = vunpack.c.l.b16 %v970
  %v1013 = vunpack.c.l.b16 %v971
  %v1014 = vunpack.c.l.b16 %v972
  %v1015 = vunpack.c.l.b16 %v973
  %v1016 = vunpack.c.h.b16 %v968
  %v1017 = vunpack.c.h.b16 %v969
  %v1018 = vunpack.c.h.b16 %v970
  %v1019 = vunpack.c.h.b16 %v971
  %v1020 = vunpack.c.h.b16 %v972
  %v1021 = vunpack.c.h.b16 %v973
  %v1022 = vunpack.c.l.b16 %v974
  %v1023 = vunpack.c.l.b16 %v975
  %v1024 = vunpack.c.l.b16 %v976
  %v1025 = vunpack.c.l.b16 %v977
  %v1026 = vunpack.c.l.b16 %v978
  %v1027 = vunpack.c.l.b16 %v979
  %v1028 = vpack.c.b16 %v999, %v998
  %v1029 = vpack.c.b16 %v1001, %v1000
  %v1030 = vpack.c.b16 %v1003, %v1002
  %v1031 = vpack.c.b16 %v1005, %v1004
  %v1032 = vpack.c.b16 %v1007, %v1006
  %v1033 = vpack.c.b16 %v1009, %v1008
  %v1034 = vpack.c.b16 %v1011, %v1010
  %v1035 = vpack.c.b16 %v1013, %v1012
  %v1036 = vpack.c.b16 %v1015, %v1014
  %v1037 = vpack.c.b16 %v1017, %v1016
  %v1038 = vpack.c.b16 %v1019, %v1018
  %v1039 = vpack.c.b16 %v1021, %v1020
  %v1040 = vpack.c.b16 %v1023, %v1022
  %v1041 = vpack.c.b16 %v1025, %v1024
  %v1042 = vpack.c.b16 %v1027, %v1026
  %1058 = vst [vmem:[%s5] sm:$0xff] %v1028
  %1059 = vst [vmem:[%s5 + $0x8] sm:$0xff] %v1029
  %1060 = vst [vmem:[%s5 + $0x10] sm:$0xff] %v1030
  %1061 = vst [vmem:[%s5 + $0x18] sm:$0xff] %v1031
  %1062 = vst [vmem:[%s5 + $0x20] sm:$0xff] %v1032
  %1063 = vst [vmem:[%s5 + $0x28] sm:$0xff] %v1033
  %1064 = vst [vmem:[%s5 + $0x30] sm:$0xff] %v1034
  %1065 = vst [vmem:[%s5 + $0x38] sm:$0xff] %v1035
  %1066 = vst [vmem:[%s5 + $0x40] sm:$0xff] %v1036
  %1067 = vst [vmem:[%s5 + $0x48] sm:$0xff] %v1037
  %1068 = vst [vmem:[%s5 + $0x50] sm:$0xff] %v1038
  %1069 = vst [vmem:[%s5 + $0x58] sm:$0xff] %v1039
  %1070 = vst [vmem:[%s5 + $0x60] sm:$0x11] %v1040
  %1071 = vst [vmem:[%s5 + $0x68] sm:$0x11] %v1041
  %1072 = vst [vmem:[%s5 + $0x70] sm:$0x11] %v1042
  // Predicated region
  $region22: #{_lambda_.23} parent=0 // pred_check
    _
  $region23: #{_lambda_.23} parent=0 // pred_check_branch
    %1074 = sbr.rel (0) target = $region25
  $region24: #{_lambda_.23} parent=0 // pred_region
    _
  $region25: #{_lambda_.23} parent=0 // pred_fallthru
    _
  // Predicated region
  $region26: #{_lambda_.23} parent=0 // pred_check
    _
  $region27: #{_lambda_.23} parent=0 // pred_check_branch
    %1076 = sbr.rel (0) target = $region29
  $region28: #{_lambda_.23} parent=0 // pred_region
    _
  $region29: #{_lambda_.23} parent=0 // pred_fallthru
    _

// kernel: _lambda_.25
$region0: #{_lambda_.25}
  #allocation0 [shape = 'u32[]', space=smem, size = 0x4, offset = 0x4, fixed_abs, tag = 'smem constant byte address 0x4 - core index']
  #allocation1 [shape = 'u32[144,128]{1,0:T(1,128)}', space=vmem, size = 0x12000, scoped, tag = 'internal scratch']
  %s0 = inlined_call_operand.vmem [shape: bf16[34,256], index: 0, kind: input, shape index: {}]
  %s1 = inlined_call_operand.vmem [shape: bf16[256,256], index: 1, kind: input, shape index: {}]
  %s2 = inlined_call_operand.vmem [shape: f32[1,256], index: 2, kind: input, shape index: {}]
  %s3 = inlined_call_operand.vmem [shape: bf16[34,256], index: 3, kind: input, shape index: {}]
  %s4 = inlined_call_operand.vmem [shape: bf16[34,256], index: 4, kind: output, shape index: {}]
  %s5 = sld [smem:[#allocation0]]
  $region26: #{_lambda_.25} parent=0
    _
  %s7 = ssub.s32 1, %s5
  %s8 = scalar_select 0, %s7, %s5
  // Predicated region
  $region2: #{_lambda_.25} parent=0 // pred_check
    _
  $region3: #{_lambda_.25} parent=0 // pred_check_branch
    %10 = sbr.rel (0) target = $region5
  $region4: #{_lambda_.25} parent=0 // pred_region
    _
  $region5: #{_lambda_.25} parent=0 // pred_fallthru
    _
  // Predicated region
  $region6: #{_lambda_.25} parent=0 // pred_check
    _
  $region7: #{_lambda_.25} parent=0 // pred_check_branch
    %12 = sbr.rel (0) target = $region9
  $region8: #{_lambda_.25} parent=0 // pred_region
    _
  $region9: #{_lambda_.25} parent=0 // pred_fallthru
    _
  // Predicated region
  $region10: #{_lambda_.25} parent=0 // pred_check
    _
  $region11: #{_lambda_.25} parent=0 // pred_check_branch
    %14 = sbr.rel (0) target = $region13
  $region12: #{_lambda_.25} parent=0 // pred_region
    _
  $region13: #{_lambda_.25} parent=0 // pred_fallthru
    _
  // Predicated region
  $region14: #{_lambda_.25} parent=0 // pred_check
    _
  $region15: #{_lambda_.25} parent=0 // pred_check_branch
    %16 = sbr.rel (0) target = $region17
  $region16: #{_lambda_.25} parent=0 // pred_region
    _
  $region17: #{_lambda_.25} parent=0 // pred_fallthru
    _
  %v17 = vld [vmem:[%s0] sm:$0xff]
  %v18 = vld [vmem:[%s0 + $0x8] sm:$0xff]
  %v19 = vld [vmem:[%s0 + $0x10] sm:$0xff]
  %v20 = vld [vmem:[%s0 + $0x18] sm:$0xff]
  %v21 = vld [vmem:[%s0 + $0x20] sm:$0x11]
  %v22 = vld [vmem:[%s1] sm:$0xff]
  %v23 = vld [vmem:[%s1 + $0x8] sm:$0xff]
  %v24 = vld [vmem:[%s1 + $0x10] sm:$0xff]
  %v25 = vld [vmem:[%s1 + $0x18] sm:$0xff]
  %v26 = vld [vmem:[%s1 + $0x20] sm:$0xff]
  %v27 = vld [vmem:[%s1 + $0x28] sm:$0xff]
  %v28 = vld [vmem:[%s1 + $0x30] sm:$0xff]
  %v29 = vld [vmem:[%s1 + $0x38] sm:$0xff]
  %v30 = vld [vmem:[%s1 + $0x40] sm:$0xff]
  %v31 = vld [vmem:[%s1 + $0x48] sm:$0xff]
  %v32 = vld [vmem:[%s1 + $0x50] sm:$0xff]
  %v33 = vld [vmem:[%s1 + $0x58] sm:$0xff]
  %v34 = vld [vmem:[%s1 + $0x60] sm:$0xff]
  %v35 = vld [vmem:[%s1 + $0x68] sm:$0xff]
  %v36 = vld [vmem:[%s1 + $0x70] sm:$0xff]
  %v37 = vld [vmem:[%s1 + $0x78] sm:$0xff]
  %v38 = vld [vmem:[%s1 + $0x80] sm:$0xff]
  %v39 = vld [vmem:[%s1 + $0x88] sm:$0xff]
  %v40 = vld [vmem:[%s1 + $0x90] sm:$0xff]
  %v41 = vld [vmem:[%s1 + $0x98] sm:$0xff]
  %v42 = vld [vmem:[%s1 + $0xa0] sm:$0xff]
  %v43 = vld [vmem:[%s1 + $0xa8] sm:$0xff]
  %v44 = vld [vmem:[%s1 + $0xb0] sm:$0xff]
  %v45 = vld [vmem:[%s1 + $0xb8] sm:$0xff]
  %v46 = vld [vmem:[%s1 + $0xc0] sm:$0xff]
  %v47 = vld [vmem:[%s1 + $0xc8] sm:$0xff]
  %v48 = vld [vmem:[%s1 + $0xd0] sm:$0xff]
  %v49 = vld [vmem:[%s1 + $0xd8] sm:$0xff]
  %v50 = vld [vmem:[%s1 + $0xe0] sm:$0xff]
  %v51 = vld [vmem:[%s1 + $0xe8] sm:$0xff]
  %v52 = vld [vmem:[%s1 + $0xf0] sm:$0xff]
  %v53 = vld [vmem:[%s1 + $0xf8] sm:$0xff]
  %v54 = vld [vmem:[%s2] sm:$0x3]
  %v56 = vlaneseq
  %v57 = vshrl.u32 %v56, 7
  %v58 = vsub.s32 0, %v57
  %v59 = vrot.slane %v54, %v58
  %v60 = vlaneseq
  %v61 = vshrl.u32 %v60, 7
  %v62 = vsub.s32 1, %v61
  %v63 = vrot.slane %v54, %v62
  %v71 = vunpack.c.l.b16 %v17
  %v72 = vunpack.c.h.b16 %v17
  %v73 = vunpack.c.l.b16 %v18
  %v74 = vunpack.c.h.b16 %v18
  %v75 = vunpack.c.l.b16 %v19
  %v76 = vunpack.c.h.b16 %v19
  %v77 = vunpack.c.l.b16 %v20
  %v78 = vunpack.c.h.b16 %v20
  %v79 = vunpack.c.l.b16 %v21
  %v80 = vunpack.c.h.b16 %v21
  %v81 = vpack.c.b16 %v73, %v71
  %v82 = vpack.c.b16 %v74, %v72
  %v83 = vpack.c.b16 %v77, %v75
  %v84 = vpack.c.b16 %v78, %v76
  %v85 = vpack.c.b16 %v79, %v79
  %v86 = vpack.c.b16 %v80, %v80
  %v125 = vunpack.c.l.b16 %v22
  %v126 = vunpack.c.h.b16 %v22
  %v127 = vunpack.c.l.b16 %v23
  %v128 = vunpack.c.h.b16 %v23
  %v129 = vunpack.c.l.b16 %v24
  %v130 = vunpack.c.h.b16 %v24
  %v131 = vunpack.c.l.b16 %v25
  %v132 = vunpack.c.h.b16 %v25
  %v133 = vunpack.c.l.b16 %v26
  %v134 = vunpack.c.h.b16 %v26
  %v135 = vunpack.c.l.b16 %v27
  %v136 = vunpack.c.h.b16 %v27
  %v137 = vunpack.c.l.b16 %v28
  %v138 = vunpack.c.h.b16 %v28
  %v139 = vunpack.c.l.b16 %v29
  %v140 = vunpack.c.h.b16 %v29
  %v141 = vunpack.c.l.b16 %v30
  %v142 = vunpack.c.h.b16 %v30
  %v143 = vunpack.c.l.b16 %v31
  %v144 = vunpack.c.h.b16 %v31
  %v145 = vunpack.c.l.b16 %v32
  %v146 = vunpack.c.h.b16 %v32
  %v147 = vunpack.c.l.b16 %v33
  %v148 = vunpack.c.h.b16 %v33
  %v149 = vunpack.c.l.b16 %v34
  %v150 = vunpack.c.h.b16 %v34
  %v151 = vunpack.c.l.b16 %v35
  %v152 = vunpack.c.h.b16 %v35
  %v153 = vunpack.c.l.b16 %v36
  %v154 = vunpack.c.h.b16 %v36
  %v155 = vunpack.c.l.b16 %v37
  %v156 = vunpack.c.h.b16 %v37
  %v157 = vunpack.c.l.b16 %v38
  %v158 = vunpack.c.h.b16 %v38
  %v159 = vunpack.c.l.b16 %v39
  %v160 = vunpack.c.h.b16 %v39
  %v161 = vunpack.c.l.b16 %v40
  %v162 = vunpack.c.h.b16 %v40
  %v163 = vunpack.c.l.b16 %v41
  %v164 = vunpack.c.h.b16 %v41
  %v165 = vunpack.c.l.b16 %v42
  %v166 = vunpack.c.h.b16 %v42
  %v167 = vunpack.c.l.b16 %v43
  %v168 = vunpack.c.h.b16 %v43
  %v169 = vunpack.c.l.b16 %v44
  %v170 = vunpack.c.h.b16 %v44
  %v171 = vunpack.c.l.b16 %v45
  %v172 = vunpack.c.h.b16 %v45
  %v173 = vunpack.c.l.b16 %v46
  %v174 = vunpack.c.h.b16 %v46
  %v175 = vunpack.c.l.b16 %v47
  %v176 = vunpack.c.h.b16 %v47
  %v177 = vunpack.c.l.b16 %v48
  %v178 = vunpack.c.h.b16 %v48
  %v179 = vunpack.c.l.b16 %v49
  %v180 = vunpack.c.h.b16 %v49
  %v181 = vunpack.c.l.b16 %v50
  %v182 = vunpack.c.h.b16 %v50
  %v183 = vunpack.c.l.b16 %v51
  %v184 = vunpack.c.h.b16 %v51
  %v185 = vunpack.c.l.b16 %v52
  %v186 = vunpack.c.h.b16 %v52
  %v187 = vunpack.c.l.b16 %v53
  %v188 = vunpack.c.h.b16 %v53
  %v189 = vpack.c.b16 %v127, %v125
  %v190 = vpack.c.b16 %v128, %v126
  %v191 = vpack.c.b16 %v131, %v129
  %v192 = vpack.c.b16 %v132, %v130
  %v193 = vpack.c.b16 %v135, %v133
  %v194 = vpack.c.b16 %v136, %v134
  %v195 = vpack.c.b16 %v139, %v137
  %v196 = vpack.c.b16 %v140, %v138
  %v197 = vpack.c.b16 %v143, %v141
  %v198 = vpack.c.b16 %v144, %v142
  %v199 = vpack.c.b16 %v147, %v145
  %v200 = vpack.c.b16 %v148, %v146
  %v201 = vpack.c.b16 %v151, %v149
  %v202 = vpack.c.b16 %v152, %v150
  %v203 = vpack.c.b16 %v155, %v153
  %v204 = vpack.c.b16 %v156, %v154
  %v205 = vpack.c.b16 %v159, %v157
  %v206 = vpack.c.b16 %v160, %v158
  %v207 = vpack.c.b16 %v163, %v161
  %v208 = vpack.c.b16 %v164, %v162
  %v209 = vpack.c.b16 %v167, %v165
  %v210 = vpack.c.b16 %v168, %v166
  %v211 = vpack.c.b16 %v171, %v169
  %v212 = vpack.c.b16 %v172, %v170
  %v213 = vpack.c.b16 %v175, %v173
  %v214 = vpack.c.b16 %v176, %v174
  %v215 = vpack.c.b16 %v179, %v177
  %v216 = vpack.c.b16 %v180, %v178
  %v217 = vpack.c.b16 %v183, %v181
  %v218 = vpack.c.b16 %v184, %v182
  %v219 = vpack.c.b16 %v187, %v185
  %v220 = vpack.c.b16 %v188, %v186
  %253 = vmatprep.subr.bf16.mxu0 %v204
  %254 = vmatpush1.bf16.msra.mxu0 %v203
  %255 = vmatprep.subr.bf16.mxu0 %v202
  %256 = vmatpush1.bf16.msra.mxu0 %v201
  %257 = vmatprep.subr.bf16.mxu0 %v200
  %258 = vmatpush1.bf16.msra.mxu0 %v199
  %259 = vmatprep.subr.bf16.mxu0 %v198
  %260 = vmatpush1.bf16.msra.mxu0 %v197
  %261 = vmatprep.subr.bf16.mxu0 %v196
  %262 = vmatpush1.bf16.msra.mxu0 %v195
  %263 = vmatprep.subr.bf16.mxu0 %v194
  %264 = vmatpush1.bf16.msra.mxu0 %v193
  %265 = vmatprep.subr.bf16.mxu0 %v192
  %266 = vmatpush1.bf16.msra.mxu0 %v191
  %267 = vmatprep.subr.bf16.mxu0 %v190
  %268 = vmatpush1.bf16.msra.mxu0 %v189
  %269 = vmatprep.subr.bf16.mxu0 %v220
  %270 = vmatpush2.bf16.msra.mxu0 %v219
  %271 = vmatprep.subr.bf16.mxu0 %v218
  %272 = vmatpush2.bf16.msra.mxu0 %v217
  %273 = vmatprep.subr.bf16.mxu0 %v216
  %274 = vmatpush2.bf16.msra.mxu0 %v215
  %275 = vmatprep.subr.bf16.mxu0 %v214
  %276 = vmatpush2.bf16.msra.mxu0 %v213
  %277 = vmatprep.subr.bf16.mxu0 %v212
  %278 = vmatpush2.bf16.msra.mxu0 %v211
  %279 = vmatprep.subr.bf16.mxu0 %v210
  %280 = vmatpush2.bf16.msra.mxu0 %v209
  %281 = vmatprep.subr.bf16.mxu0 %v208
  %282 = vmatpush2.bf16.msra.mxu0 %v207
  %283 = vmatprep.subr.bf16.mxu0 %v206
  %284 = vmatpush2.bf16.msra.mxu0 %v205
  %285 = vmatprep.mubr.bf16.mxu0 %v82
  %286 = vmatmul.mubr.bf16.gmra.mxu0 %v81
  %v287 = vpop.f32.mrf.mxu0
  %v288 = vadd.f32 %v59, %v287
  %v289 = vpop.f32.mrf.mxu0
  %v290 = vadd.f32 %v63, %v289
  %v291 = vpop.f32.mrf.mxu0
  %v292 = vadd.f32 %v59, %v291
  %v293 = vpop.f32.mrf.mxu0
  %v294 = vadd.f32 %v63, %v293
  %295 = vmatprep.mubr.bf16.mxu0 %v84
  %296 = vmatmul.mubr.bf16.gmra.mxu0 %v83
  %v297 = vpop.f32.mrf.mxu0
  %v298 = vadd.f32 %v59, %v297
  %v299 = vpop.f32.mrf.mxu0
  %v300 = vadd.f32 %v63, %v299
  %v301 = vpop.f32.mrf.mxu0
  %v302 = vadd.f32 %v59, %v301
  %v303 = vpop.f32.mrf.mxu0
  %v304 = vadd.f32 %v63, %v303
  %305 = vmatprep.mubr.bf16.mxu0 %v86
  %306 = vmatmul.mubr.bf16.gmra.mxu0 %v85
  %v307 = vpop.f32.mrf.mxu0
  %v308 = vadd.f32 %v59, %v307
  %v309 = vpop.f32.mrf.mxu0
  %v310 = vadd.f32 %v63, %v309
  %v311 = vpop.f32.mrf.mxu0
  %v312 = vpop.f32.mrf.mxu0
  %313 = vdwg.mxu0
  %v314 = vld [vmem:[%s3] sm:$0xff]
  %v315 = vld [vmem:[%s3 + $0x8] sm:$0xff]
  %v316 = vld [vmem:[%s3 + $0x10] sm:$0xff]
  %v317 = vld [vmem:[%s3 + $0x18] sm:$0xff]
  %v318 = vld [vmem:[%s3 + $0x20] sm:$0x11]
  %v319 = vunpack.c.l.bf16 %v314
  %v320 = vunpack.c.h.bf16 %v314
  %v321 = vunpack.c.l.bf16 %v315
  %v322 = vunpack.c.h.bf16 %v315
  %v323 = vunpack.c.l.bf16 %v316
  %v324 = vunpack.c.h.bf16 %v316
  %v325 = vunpack.c.l.bf16 %v317
  %v326 = vunpack.c.h.bf16 %v317
  %v327 = vunpack.c.l.bf16 %v318
  %v328 = vunpack.c.h.bf16 %v318
  %v329 = vadd.f32 %v288, %v319
  %v330 = vadd.f32 %v290, %v320
  %v331 = vadd.f32 %v292, %v321
  %v332 = vadd.f32 %v294, %v322
  %v333 = vadd.f32 %v298, %v323
  %v334 = vadd.f32 %v300, %v324
  %v335 = vadd.f32 %v302, %v325
  %v336 = vadd.f32 %v304, %v326
  %v337 = vadd.f32 %v308, %v327
  %v338 = vadd.f32 %v310, %v328
  %v339 = vpack.c.bf16 %v331, %v329
  %v340 = vpack.c.bf16 %v332, %v330
  %v341 = vpack.c.bf16 %v335, %v333
  %v342 = vpack.c.bf16 %v336, %v334
  %v343 = vpack.c.bf16 %v337, %v337
  %v344 = vpack.c.bf16 %v338, %v338
  %v351 = vunpack.c.l.b16 %v339
  %v352 = vunpack.c.l.b16 %v340
  %v353 = vunpack.c.h.b16 %v339
  %v354 = vunpack.c.h.b16 %v340
  %v355 = vunpack.c.l.b16 %v341
  %v356 = vunpack.c.l.b16 %v342
  %v357 = vunpack.c.h.b16 %v341
  %v358 = vunpack.c.h.b16 %v342
  %v359 = vunpack.c.l.b16 %v343
  %v360 = vunpack.c.l.b16 %v344
  %v361 = vpack.c.b16 %v352, %v351
  %v362 = vpack.c.b16 %v354, %v353
  %v363 = vpack.c.b16 %v356, %v355
  %v364 = vpack.c.b16 %v358, %v357
  %v365 = vpack.c.b16 %v360, %v359
  %371 = vst [vmem:[%s4] sm:$0xff] %v361
  %372 = vst [vmem:[%s4 + $0x8] sm:$0xff] %v362
  %373 = vst [vmem:[%s4 + $0x10] sm:$0xff] %v363
  %374 = vst [vmem:[%s4 + $0x18] sm:$0xff] %v364
  %375 = vst [vmem:[%s4 + $0x20] sm:$0x11] %v365
  // Predicated region
  $region18: #{_lambda_.25} parent=0 // pred_check
    _
  $region19: #{_lambda_.25} parent=0 // pred_check_branch
    %377 = sbr.rel (0) target = $region21
  $region20: #{_lambda_.25} parent=0 // pred_region
    _
  $region21: #{_lambda_.25} parent=0 // pred_fallthru
    _
  // Predicated region
  $region22: #{_lambda_.25} parent=0 // pred_check
    _
  $region23: #{_lambda_.25} parent=0 // pred_check_branch
    %379 = sbr.rel (0) target = $region25
  $region24: #{_lambda_.25} parent=0 // pred_region
    _
  $region25: #{_lambda_.25} parent=0 // pred_fallthru
    _

// kernel: _lambda_.26
$region0: #{_lambda_.26}
  #allocation0 [shape = 'u32[]', space=smem, size = 0x4, offset = 0x4, fixed_abs, tag = 'smem constant byte address 0x4 - core index']
  #allocation1 [shape = 'u32[144,128]{1,0:T(1,128)}', space=vmem, size = 0x12000, scoped, tag = 'internal scratch']
  %s0 = inlined_call_operand.vmem [shape: bf16[34,256], index: 0, kind: input, shape index: {}]
  %s1 = inlined_call_operand.vmem [shape: f32[1,256], index: 1, kind: input, shape index: {}]
  %s2 = inlined_call_operand.vmem [shape: f32[1,256], index: 2, kind: input, shape index: {}]
  %s3 = inlined_call_operand.vmem [shape: bf16[256,1024], index: 3, kind: input, shape index: {}]
  %s4 = inlined_call_operand.vmem [shape: f32[1,1024], index: 4, kind: input, shape index: {}]
  %s5 = inlined_call_operand.vmem [shape: bf16[34,1024], index: 5, kind: output, shape index: {}]
  %s6 = sld [smem:[#allocation0]]
  $region30: #{_lambda_.26} parent=0
    _
  %s8 = ssub.s32 1, %s6
  %s9 = scalar_select 0, %s8, %s6
  // Predicated region
  $region2: #{_lambda_.26} parent=0 // pred_check
    _
  $region3: #{_lambda_.26} parent=0 // pred_check_branch
    %11 = sbr.rel (0) target = $region5
  $region4: #{_lambda_.26} parent=0 // pred_region
    _
  $region5: #{_lambda_.26} parent=0 // pred_fallthru
    _
  // Predicated region
  $region6: #{_lambda_.26} parent=0 // pred_check
    _
  $region7: #{_lambda_.26} parent=0 // pred_check_branch
    %13 = sbr.rel (0) target = $region9
  $region8: #{_lambda_.26} parent=0 // pred_region
    _
  $region9: #{_lambda_.26} parent=0 // pred_fallthru
    _
  // Predicated region
  $region10: #{_lambda_.26} parent=0 // pred_check
    _
  $region11: #{_lambda_.26} parent=0 // pred_check_branch
    %15 = sbr.rel (0) target = $region13
  $region12: #{_lambda_.26} parent=0 // pred_region
    _
  $region13: #{_lambda_.26} parent=0 // pred_fallthru
    _
  // Predicated region
  $region14: #{_lambda_.26} parent=0 // pred_check
    _
  $region15: #{_lambda_.26} parent=0 // pred_check_branch
    %17 = sbr.rel (0) target = $region17
  $region16: #{_lambda_.26} parent=0 // pred_region
    _
  $region17: #{_lambda_.26} parent=0 // pred_fallthru
    _
  // Predicated region
  $region18: #{_lambda_.26} parent=0 // pred_check
    _
  $region19: #{_lambda_.26} parent=0 // pred_check_branch
    %19 = sbr.rel (0) target = $region21
  $region20: #{_lambda_.26} parent=0 // pred_region
    _
  $region21: #{_lambda_.26} parent=0 // pred_fallthru
    _
  %v20 = vld [vmem:[%s0] sm:$0xff]
  %v21 = vld [vmem:[%s0 + $0x8] sm:$0xff]
  %v22 = vld [vmem:[%s0 + $0x10] sm:$0xff]
  %v23 = vld [vmem:[%s0 + $0x18] sm:$0xff]
  %v24 = vld [vmem:[%s0 + $0x20] sm:$0x11]
  %v25 = vunpack.c.l.bf16 %v20
  %v26 = vunpack.c.h.bf16 %v20
  %v27 = vunpack.c.l.bf16 %v21
  %v28 = vunpack.c.h.bf16 %v21
  %v29 = vunpack.c.l.bf16 %v22
  %v30 = vunpack.c.h.bf16 %v22
  %v31 = vunpack.c.l.bf16 %v23
  %v32 = vunpack.c.h.bf16 %v23
  %v33 = vunpack.c.l.bf16 %v24
  %v34 = vunpack.c.h.bf16 %v24
  %v35 = vadd.f32 %v25, %v26
  %36 = vadd.xlane.f32.xlu0 %v35
  %v37 = vpop.xlane.xlu0 %36
  %v38 = vadd.f32 %v27, %v28
  %39 = vadd.xlane.f32.xlu0 %v38
  %v40 = vpop.xlane.xlu0 %39
  %v41 = vadd.f32 %v29, %v30
  %42 = vadd.xlane.f32.xlu0 %v41
  %v43 = vpop.xlane.xlu0 %42
  %v44 = vadd.f32 %v31, %v32
  %45 = vadd.xlane.f32.xlu0 %v44
  %v46 = vpop.xlane.xlu0 %45
  %vm47 = vcmask 1041408
  %v48 = vsel %vm47, %v33, 0.0
  %v49 = vsel %vm47, %v34, 0.0
  %v50 = vadd.f32 %v48, %v49
  %51 = vadd.xlane.f32.xlu0 %v50
  %v52 = vpop.xlane.xlu0 %51
  %v53 = vrcp.pop 256.0
  %v54 = vmul.f32 %v37, %v53
  %v55 = vmul.f32 %v40, %v53
  %v56 = vmul.f32 %v43, %v53
  %v57 = vmul.f32 %v46, %v53
  %v58 = vmul.f32 %v52, %v53
  %v59 = vsub.f32 %v25, %v54
  %v60 = vsub.f32 %v26, %v54
  %v61 = vsub.f32 %v27, %v55
  %v62 = vsub.f32 %v28, %v55
  %v63 = vsub.f32 %v29, %v56
  %v64 = vsub.f32 %v30, %v56
  %v65 = vsub.f32 %v31, %v57
  %v66 = vsub.f32 %v32, %v57
  %v67 = vsub.f32 %v33, %v58
  %v68 = vsub.f32 %v34, %v58
  %v69 = vmul.f32 %v59, %v59
  %v70 = vmul.f32 %v60, %v60
  %v71 = vmul.f32 %v61, %v61
  %v72 = vmul.f32 %v62, %v62
  %v73 = vmul.f32 %v63, %v63
  %v74 = vmul.f32 %v64, %v64
  %v75 = vmul.f32 %v65, %v65
  %v76 = vmul.f32 %v66, %v66
  %v77 = vmul.f32 %v67, %v67
  %v78 = vmul.f32 %v68, %v68
  %v79 = vadd.f32 %v69, %v70
  %80 = vadd.xlane.f32.xlu0 %v79
  %v81 = vpop.xlane.xlu0 %80
  %v82 = vadd.f32 %v71, %v72
  %83 = vadd.xlane.f32.xlu0 %v82
  %v84 = vpop.xlane.xlu0 %83
  %v85 = vadd.f32 %v73, %v74
  %86 = vadd.xlane.f32.xlu0 %v85
  %v87 = vpop.xlane.xlu0 %86
  %v88 = vadd.f32 %v75, %v76
  %89 = vadd.xlane.f32.xlu0 %v88
  %v90 = vpop.xlane.xlu0 %89
  %v91 = vsel %vm47, %v77, 0.0
  %v92 = vsel %vm47, %v78, 0.0
  %v93 = vadd.f32 %v91, %v92
  %94 = vadd.xlane.f32.xlu0 %v93
  %v95 = vpop.xlane.xlu0 %94
  %v96 = vmul.f32 %v81, %v53
  %v97 = vmul.f32 %v84, %v53
  %v98 = vmul.f32 %v87, %v53
  %v99 = vmul.f32 %v90, %v53
  %v100 = vmul.f32 %v95, %v53
  %v101 = vadd.f32 %v96, 1e-06
  %v102 = vadd.f32 %v97, 1e-06
  %v103 = vadd.f32 %v98, 1e-06
  %v104 = vadd.f32 %v99, 1e-06
  %v105 = vadd.f32 %v100, 1e-06
  %v106 = vrsqrt.pop %v101
  %v107 = vrsqrt.pop %v102
  %v108 = vrsqrt.pop %v103
  %v109 = vrsqrt.pop %v104
  %v110 = vrsqrt.pop %v105
  %v111 = vmul.f32 %v59, %v106
  %v112 = vmul.f32 %v60, %v106
  %v113 = vmul.f32 %v61, %v107
  %v114 = vmul.f32 %v62, %v107
  %v115 = vmul.f32 %v63, %v108
  %v116 = vmul.f32 %v64, %v108
  %v117 = vmul.f32 %v65, %v109
  %v118 = vmul.f32 %v66, %v109
  %v119 = vmul.f32 %v67, %v110
  %v120 = vmul.f32 %v68, %v110
  %v121 = vld [vmem:[%s1] sm:$0x3]
  %v123 = vlaneseq
  %v124 = vshrl.u32 %v123, 7
  %v125 = vsub.s32 0, %v124
  %v126 = vrot.slane %v121, %v125
  %v127 = vlaneseq
  %v128 = vshrl.u32 %v127, 7
  %v129 = vsub.s32 1, %v128
  %v130 = vrot.slane %v121, %v129
  %v133 = vmul.f32 %v111, %v126
  %v134 = vmul.f32 %v112, %v130
  %v135 = vmul.f32 %v113, %v126
  %v136 = vmul.f32 %v114, %v130
  %v137 = vmul.f32 %v115, %v126
  %v138 = vmul.f32 %v116, %v130
  %v139 = vmul.f32 %v117, %v126
  %v140 = vmul.f32 %v118, %v130
  %v141 = vmul.f32 %v119, %v126
  %v142 = vmul.f32 %v120, %v130
  %v143 = vld [vmem:[%s2] sm:$0x3]
  %v145 = vlaneseq
  %v146 = vshrl.u32 %v145, 7
  %v147 = vsub.s32 0, %v146
  %v148 = vrot.slane %v143, %v147
  %v149 = vlaneseq
  %v150 = vshrl.u32 %v149, 7
  %v151 = vsub.s32 1, %v150
  %v152 = vrot.slane %v143, %v151
  %v155 = vadd.f32 %v133, %v148
  %v156 = vadd.f32 %v134, %v152
  %v157 = vadd.f32 %v135, %v148
  %v158 = vadd.f32 %v136, %v152
  %v159 = vadd.f32 %v137, %v148
  %v160 = vadd.f32 %v138, %v152
  %v161 = vadd.f32 %v139, %v148
  %v162 = vadd.f32 %v140, %v152
  %v163 = vadd.f32 %v141, %v148
  %v164 = vadd.f32 %v142, %v152
  %v165 = vpack.c.bf16 %v157, %v155
  %v166 = vpack.c.bf16 %v158, %v156
  %v167 = vpack.c.bf16 %v161, %v159
  %v168 = vpack.c.bf16 %v162, %v160
  %v169 = vpack.c.bf16 %v163, %v163
  %v170 = vpack.c.bf16 %v164, %v164
  %v171 = vld [vmem:[%s3] sm:$0xff]
  %v172 = vld [vmem:[%s3 + $0x8] sm:$0xff]
  %v173 = vld [vmem:[%s3 + $0x10] sm:$0xff]
  %v174 = vld [vmem:[%s3 + $0x18] sm:$0xff]
  %v175 = vld [vmem:[%s3 + $0x20] sm:$0xff]
  %v176 = vld [vmem:[%s3 + $0x28] sm:$0xff]
  %v177 = vld [vmem:[%s3 + $0x30] sm:$0xff]
  %v178 = vld [vmem:[%s3 + $0x38] sm:$0xff]
  %v179 = vld [vmem:[%s3 + $0x40] sm:$0xff]
  %v180 = vld [vmem:[%s3 + $0x48] sm:$0xff]
  %v181 = vld [vmem:[%s3 + $0x50] sm:$0xff]
  %v182 = vld [vmem:[%s3 + $0x58] sm:$0xff]
  %v183 = vld [vmem:[%s3 + $0x60] sm:$0xff]
  %v184 = vld [vmem:[%s3 + $0x68] sm:$0xff]
  %v185 = vld [vmem:[%s3 + $0x70] sm:$0xff]
  %v186 = vld [vmem:[%s3 + $0x78] sm:$0xff]
  %v187 = vld [vmem:[%s3 + $0x80] sm:$0xff]
  %v188 = vld [vmem:[%s3 + $0x88] sm:$0xff]
  %v189 = vld [vmem:[%s3 + $0x90] sm:$0xff]
  %v190 = vld [vmem:[%s3 + $0x98] sm:$0xff]
  %v191 = vld [vmem:[%s3 + $0xa0] sm:$0xff]
  %v192 = vld [vmem:[%s3 + $0xa8] sm:$0xff]
  %v193 = vld [vmem:[%s3 + $0xb0] sm:$0xff]
  %v194 = vld [vmem:[%s3 + $0xb8] sm:$0xff]
  %v195 = vld [vmem:[%s3 + $0xc0] sm:$0xff]
  %v196 = vld [vmem:[%s3 + $0xc8] sm:$0xff]
  %v197 = vld [vmem:[%s3 + $0xd0] sm:$0xff]
  %v198 = vld [vmem:[%s3 + $0xd8] sm:$0xff]
  %v199 = vld [vmem:[%s3 + $0xe0] sm:$0xff]
  %v200 = vld [vmem:[%s3 + $0xe8] sm:$0xff]
  %v201 = vld [vmem:[%s3 + $0xf0] sm:$0xff]
  %v202 = vld [vmem:[%s3 + $0xf8] sm:$0xff]
  %v203 = vld [vmem:[%s3 + $0x100] sm:$0xff]
  %v204 = vld [vmem:[%s3 + $0x108] sm:$0xff]
  %v205 = vld [vmem:[%s3 + $0x110] sm:$0xff]
  %v206 = vld [vmem:[%s3 + $0x118] sm:$0xff]
  %v207 = vld [vmem:[%s3 + $0x120] sm:$0xff]
  %v208 = vld [vmem:[%s3 + $0x128] sm:$0xff]
  %v209 = vld [vmem:[%s3 + $0x130] sm:$0xff]
  %v210 = vld [vmem:[%s3 + $0x138] sm:$0xff]
  %v211 = vld [vmem:[%s3 + $0x140] sm:$0xff]
  %v212 = vld [vmem:[%s3 + $0x148] sm:$0xff]
  %v213 = vld [vmem:[%s3 + $0x150] sm:$0xff]
  %v214 = vld [vmem:[%s3 + $0x158] sm:$0xff]
  %v215 = vld [vmem:[%s3 + $0x160] sm:$0xff]
  %v216 = vld [vmem:[%s3 + $0x168] sm:$0xff]
  %v217 = vld [vmem:[%s3 + $0x170] sm:$0xff]
  %v218 = vld [vmem:[%s3 + $0x178] sm:$0xff]
  %v219 = vld [vmem:[%s3 + $0x180] sm:$0xff]
  %v220 = vld [vmem:[%s3 + $0x188] sm:$0xff]
  %v221 = vld [vmem:[%s3 + $0x190] sm:$0xff]
  %v222 = vld [vmem:[%s3 + $0x198] sm:$0xff]
  %v223 = vld [vmem:[%s3 + $0x1a0] sm:$0xff]
  %v224 = vld [vmem:[%s3 + $0x1a8] sm:$0xff]
  %v225 = vld [vmem:[%s3 + $0x1b0] sm:$0xff]
  %v226 = vld [vmem:[%s3 + $0x1b8] sm:$0xff]
  %v227 = vld [vmem:[%s3 + $0x1c0] sm:$0xff]
  %v228 = vld [vmem:[%s3 + $0x1c8] sm:$0xff]
  %v229 = vld [vmem:[%s3 + $0x1d0] sm:$0xff]
  %v230 = vld [vmem:[%s3 + $0x1d8] sm:$0xff]
  %v231 = vld [vmem:[%s3 + $0x1e0] sm:$0xff]
  %v232 = vld [vmem:[%s3 + $0x1e8] sm:$0xff]
  %v233 = vld [vmem:[%s3 + $0x1f0] sm:$0xff]
  %v234 = vld [vmem:[%s3 + $0x1f8] sm:$0xff]
  %v235 = vld [vmem:[%s3 + $0x200] sm:$0xff]
  %v236 = vld [vmem:[%s3 + $0x208] sm:$0xff]
  %v237 = vld [vmem:[%s3 + $0x210] sm:$0xff]
  %v238 = vld [vmem:[%s3 + $0x218] sm:$0xff]
  %v239 = vld [vmem:[%s3 + $0x220] sm:$0xff]
  %v240 = vld [vmem:[%s3 + $0x228] sm:$0xff]
  %v241 = vld [vmem:[%s3 + $0x230] sm:$0xff]
  %v242 = vld [vmem:[%s3 + $0x238] sm:$0xff]
  %v243 = vld [vmem:[%s3 + $0x240] sm:$0xff]
  %v244 = vld [vmem:[%s3 + $0x248] sm:$0xff]
  %v245 = vld [vmem:[%s3 + $0x250] sm:$0xff]
  %v246 = vld [vmem:[%s3 + $0x258] sm:$0xff]
  %v247 = vld [vmem:[%s3 + $0x260] sm:$0xff]
  %v248 = vld [vmem:[%s3 + $0x268] sm:$0xff]
  %v249 = vld [vmem:[%s3 + $0x270] sm:$0xff]
  %v250 = vld [vmem:[%s3 + $0x278] sm:$0xff]
  %v251 = vld [vmem:[%s3 + $0x280] sm:$0xff]
  %v252 = vld [vmem:[%s3 + $0x288] sm:$0xff]
  %v253 = vld [vmem:[%s3 + $0x290] sm:$0xff]
  %v254 = vld [vmem:[%s3 + $0x298] sm:$0xff]
  %v255 = vld [vmem:[%s3 + $0x2a0] sm:$0xff]
  %v256 = vld [vmem:[%s3 + $0x2a8] sm:$0xff]
  %v257 = vld [vmem:[%s3 + $0x2b0] sm:$0xff]
  %v258 = vld [vmem:[%s3 + $0x2b8] sm:$0xff]
  %v259 = vld [vmem:[%s3 + $0x2c0] sm:$0xff]
  %v260 = vld [vmem:[%s3 + $0x2c8] sm:$0xff]
  %v261 = vld [vmem:[%s3 + $0x2d0] sm:$0xff]
  %v262 = vld [vmem:[%s3 + $0x2d8] sm:$0xff]
  %v263 = vld [vmem:[%s3 + $0x2e0] sm:$0xff]
  %v264 = vld [vmem:[%s3 + $0x2e8] sm:$0xff]
  %v265 = vld [vmem:[%s3 + $0x2f0] sm:$0xff]
  %v266 = vld [vmem:[%s3 + $0x2f8] sm:$0xff]
  %v267 = vld [vmem:[%s3 + $0x300] sm:$0xff]
  %v268 = vld [vmem:[%s3 + $0x308] sm:$0xff]
  %v269 = vld [vmem:[%s3 + $0x310] sm:$0xff]
  %v270 = vld [vmem:[%s3 + $0x318] sm:$0xff]
  %v271 = vld [vmem:[%s3 + $0x320] sm:$0xff]
  %v272 = vld [vmem:[%s3 + $0x328] sm:$0xff]
  %v273 = vld [vmem:[%s3 + $0x330] sm:$0xff]
  %v274 = vld [vmem:[%s3 + $0x338] sm:$0xff]
  %v275 = vld [vmem:[%s3 + $0x340] sm:$0xff]
  %v276 = vld [vmem:[%s3 + $0x348] sm:$0xff]
  %v277 = vld [vmem:[%s3 + $0x350] sm:$0xff]
  %v278 = vld [vmem:[%s3 + $0x358] sm:$0xff]
  %v279 = vld [vmem:[%s3 + $0x360] sm:$0xff]
  %v280 = vld [vmem:[%s3 + $0x368] sm:$0xff]
  %v281 = vld [vmem:[%s3 + $0x370] sm:$0xff]
  %v282 = vld [vmem:[%s3 + $0x378] sm:$0xff]
  %v283 = vld [vmem:[%s3 + $0x380] sm:$0xff]
  %v284 = vld [vmem:[%s3 + $0x388] sm:$0xff]
  %v285 = vld [vmem:[%s3 + $0x390] sm:$0xff]
  %v286 = vld [vmem:[%s3 + $0x398] sm:$0xff]
  %v287 = vld [vmem:[%s3 + $0x3a0] sm:$0xff]
  %v288 = vld [vmem:[%s3 + $0x3a8] sm:$0xff]
  %v289 = vld [vmem:[%s3 + $0x3b0] sm:$0xff]
  %v290 = vld [vmem:[%s3 + $0x3b8] sm:$0xff]
  %v291 = vld [vmem:[%s3 + $0x3c0] sm:$0xff]
  %v292 = vld [vmem:[%s3 + $0x3c8] sm:$0xff]
  %v293 = vld [vmem:[%s3 + $0x3d0] sm:$0xff]
  %v294 = vld [vmem:[%s3 + $0x3d8] sm:$0xff]
  %v295 = vld [vmem:[%s3 + $0x3e0] sm:$0xff]
  %v296 = vld [vmem:[%s3 + $0x3e8] sm:$0xff]
  %v297 = vld [vmem:[%s3 + $0x3f0] sm:$0xff]
  %v298 = vld [vmem:[%s3 + $0x3f8] sm:$0xff]
  %v299 = vld [vmem:[%s4] sm:$0xff]
  %v301 = vlaneseq
  %v302 = vshrl.u32 %v301, 7
  %v303 = vsub.s32 0, %v302
  %v304 = vrot.slane %v299, %v303
  %v305 = vlaneseq
  %v306 = vshrl.u32 %v305, 7
  %v307 = vsub.s32 1, %v306
  %v308 = vrot.slane %v299, %v307
  %v309 = vlaneseq
  %v310 = vshrl.u32 %v309, 7
  %v311 = vsub.s32 2, %v310
  %v312 = vrot.slane %v299, %v311
  %v313 = vlaneseq
  %v314 = vshrl.u32 %v313, 7
  %v315 = vsub.s32 3, %v314
  %v316 = vrot.slane %v299, %v315
  %v317 = vlaneseq
  %v318 = vshrl.u32 %v317, 7
  %v319 = vsub.s32 4, %v318
  %v320 = vrot.slane %v299, %v319
  %v321 = vlaneseq
  %v322 = vshrl.u32 %v321, 7
  %v323 = vsub.s32 5, %v322
  %v324 = vrot.slane %v299, %v323
  %v325 = vlaneseq
  %v326 = vshrl.u32 %v325, 7
  %v327 = vsub.s32 6, %v326
  %v328 = vrot.slane %v299, %v327
  %v329 = vlaneseq
  %v330 = vshrl.u32 %v329, 7
  %v331 = vsub.s32 7, %v330
  %v332 = vrot.slane %v299, %v331
  %v469 = vunpack.c.l.b16 %v171
  %v470 = vunpack.c.h.b16 %v171
  %v471 = vunpack.c.l.b16 %v172
  %v472 = vunpack.c.h.b16 %v172
  %v473 = vunpack.c.l.b16 %v173
  %v474 = vunpack.c.h.b16 %v173
  %v475 = vunpack.c.l.b16 %v174
  %v476 = vunpack.c.h.b16 %v174
  %v477 = vunpack.c.l.b16 %v175
  %v478 = vunpack.c.h.b16 %v175
  %v479 = vunpack.c.l.b16 %v176
  %v480 = vunpack.c.h.b16 %v176
  %v481 = vunpack.c.l.b16 %v177
  %v482 = vunpack.c.h.b16 %v177
  %v483 = vunpack.c.l.b16 %v178
  %v484 = vunpack.c.h.b16 %v178
  %v485 = vunpack.c.l.b16 %v179
  %v486 = vunpack.c.h.b16 %v179
  %v487 = vunpack.c.l.b16 %v180
  %v488 = vunpack.c.h.b16 %v180
  %v489 = vunpack.c.l.b16 %v181
  %v490 = vunpack.c.h.b16 %v181
  %v491 = vunpack.c.l.b16 %v182
  %v492 = vunpack.c.h.b16 %v182
  %v493 = vunpack.c.l.b16 %v183
  %v494 = vunpack.c.h.b16 %v183
  %v495 = vunpack.c.l.b16 %v184
  %v496 = vunpack.c.h.b16 %v184
  %v497 = vunpack.c.l.b16 %v185
  %v498 = vunpack.c.h.b16 %v185
  %v499 = vunpack.c.l.b16 %v186
  %v500 = vunpack.c.h.b16 %v186
  %v501 = vunpack.c.l.b16 %v187
  %v502 = vunpack.c.h.b16 %v187
  %v503 = vunpack.c.l.b16 %v188
  %v504 = vunpack.c.h.b16 %v188
  %v505 = vunpack.c.l.b16 %v189
  %v506 = vunpack.c.h.b16 %v189
  %v507 = vunpack.c.l.b16 %v190
  %v508 = vunpack.c.h.b16 %v190
  %v509 = vunpack.c.l.b16 %v191
  %v510 = vunpack.c.h.b16 %v191
  %v511 = vunpack.c.l.b16 %v192
  %v512 = vunpack.c.h.b16 %v192
  %v513 = vunpack.c.l.b16 %v193
  %v514 = vunpack.c.h.b16 %v193
  %v515 = vunpack.c.l.b16 %v194
  %v516 = vunpack.c.h.b16 %v194
  %v517 = vunpack.c.l.b16 %v195
  %v518 = vunpack.c.h.b16 %v195
  %v519 = vunpack.c.l.b16 %v196
  %v520 = vunpack.c.h.b16 %v196
  %v521 = vunpack.c.l.b16 %v197
  %v522 = vunpack.c.h.b16 %v197
  %v523 = vunpack.c.l.b16 %v198
  %v524 = vunpack.c.h.b16 %v198
  %v525 = vunpack.c.l.b16 %v199
  %v526 = vunpack.c.h.b16 %v199
  %v527 = vunpack.c.l.b16 %v200
  %v528 = vunpack.c.h.b16 %v200
  %v529 = vunpack.c.l.b16 %v201
  %v530 = vunpack.c.h.b16 %v201
  %v531 = vunpack.c.l.b16 %v202
  %v532 = vunpack.c.h.b16 %v202
  %v533 = vunpack.c.l.b16 %v203
  %v534 = vunpack.c.h.b16 %v203
  %v535 = vunpack.c.l.b16 %v204
  %v536 = vunpack.c.h.b16 %v204
  %v537 = vunpack.c.l.b16 %v205
  %v538 = vunpack.c.h.b16 %v205
  %v539 = vunpack.c.l.b16 %v206
  %v540 = vunpack.c.h.b16 %v206
  %v541 = vunpack.c.l.b16 %v207
  %v542 = vunpack.c.h.b16 %v207
  %v543 = vunpack.c.l.b16 %v208
  %v544 = vunpack.c.h.b16 %v208
  %v545 = vunpack.c.l.b16 %v209
  %v546 = vunpack.c.h.b16 %v209
  %v547 = vunpack.c.l.b16 %v210
  %v548 = vunpack.c.h.b16 %v210
  %v549 = vunpack.c.l.b16 %v211
  %v550 = vunpack.c.h.b16 %v211
  %v551 = vunpack.c.l.b16 %v212
  %v552 = vunpack.c.h.b16 %v212
  %v553 = vunpack.c.l.b16 %v213
  %v554 = vunpack.c.h.b16 %v213
  %v555 = vunpack.c.l.b16 %v214
  %v556 = vunpack.c.h.b16 %v214
  %v557 = vunpack.c.l.b16 %v215
  %v558 = vunpack.c.h.b16 %v215
  %v559 = vunpack.c.l.b16 %v216
  %v560 = vunpack.c.h.b16 %v216
  %v561 = vunpack.c.l.b16 %v217
  %v562 = vunpack.c.h.b16 %v217
  %v563 = vunpack.c.l.b16 %v218
  %v564 = vunpack.c.h.b16 %v218
  %v565 = vunpack.c.l.b16 %v219
  %v566 = vunpack.c.h.b16 %v219
  %v567 = vunpack.c.l.b16 %v220
  %v568 = vunpack.c.h.b16 %v220
  %v569 = vunpack.c.l.b16 %v221
  %v570 = vunpack.c.h.b16 %v221
  %v571 = vunpack.c.l.b16 %v222
  %v572 = vunpack.c.h.b16 %v222
  %v573 = vunpack.c.l.b16 %v223
  %v574 = vunpack.c.h.b16 %v223
  %v575 = vunpack.c.l.b16 %v224
  %v576 = vunpack.c.h.b16 %v224
  %v577 = vunpack.c.l.b16 %v225
  %v578 = vunpack.c.h.b16 %v225
  %v579 = vunpack.c.l.b16 %v226
  %v580 = vunpack.c.h.b16 %v226
  %v581 = vunpack.c.l.b16 %v227
  %v582 = vunpack.c.h.b16 %v227
  %v583 = vunpack.c.l.b16 %v228
  %v584 = vunpack.c.h.b16 %v228
  %v585 = vunpack.c.l.b16 %v229
  %v586 = vunpack.c.h.b16 %v229
  %v587 = vunpack.c.l.b16 %v230
  %v588 = vunpack.c.h.b16 %v230
  %v589 = vunpack.c.l.b16 %v231
  %v590 = vunpack.c.h.b16 %v231
  %v591 = vunpack.c.l.b16 %v232
  %v592 = vunpack.c.h.b16 %v232
  %v593 = vunpack.c.l.b16 %v233
  %v594 = vunpack.c.h.b16 %v233
  %v595 = vunpack.c.l.b16 %v234
  %v596 = vunpack.c.h.b16 %v234
  %v597 = vunpack.c.l.b16 %v235
  %v598 = vunpack.c.h.b16 %v235
  %v599 = vunpack.c.l.b16 %v236
  %v600 = vunpack.c.h.b16 %v236
  %v601 = vunpack.c.l.b16 %v237
  %v602 = vunpack.c.h.b16 %v237
  %v603 = vunpack.c.l.b16 %v238
  %v604 = vunpack.c.h.b16 %v238
  %v605 = vunpack.c.l.b16 %v239
  %v606 = vunpack.c.h.b16 %v239
  %v607 = vunpack.c.l.b16 %v240
  %v608 = vunpack.c.h.b16 %v240
  %v609 = vunpack.c.l.b16 %v241
  %v610 = vunpack.c.h.b16 %v241
  %v611 = vunpack.c.l.b16 %v242
  %v612 = vunpack.c.h.b16 %v242
  %v613 = vunpack.c.l.b16 %v243
  %v614 = vunpack.c.h.b16 %v243
  %v615 = vunpack.c.l.b16 %v244
  %v616 = vunpack.c.h.b16 %v244
  %v617 = vunpack.c.l.b16 %v245
  %v618 = vunpack.c.h.b16 %v245
  %v619 = vunpack.c.l.b16 %v246
  %v620 = vunpack.c.h.b16 %v246
  %v621 = vunpack.c.l.b16 %v247
  %v622 = vunpack.c.h.b16 %v247
  %v623 = vunpack.c.l.b16 %v248
  %v624 = vunpack.c.h.b16 %v248
  %v625 = vunpack.c.l.b16 %v249
  %v626 = vunpack.c.h.b16 %v249
  %v627 = vunpack.c.l.b16 %v250
  %v628 = vunpack.c.h.b16 %v250
  %v629 = vunpack.c.l.b16 %v251
  %v630 = vunpack.c.h.b16 %v251
  %v631 = vunpack.c.l.b16 %v252
  %v632 = vunpack.c.h.b16 %v252
  %v633 = vunpack.c.l.b16 %v253
  %v634 = vunpack.c.h.b16 %v253
  %v635 = vunpack.c.l.b16 %v254
  %v636 = vunpack.c.h.b16 %v254
  %v637 = vunpack.c.l.b16 %v255
  %v638 = vunpack.c.h.b16 %v255
  %v639 = vunpack.c.l.b16 %v256
  %v640 = vunpack.c.h.b16 %v256
  %v641 = vunpack.c.l.b16 %v257
  %v642 = vunpack.c.h.b16 %v257
  %v643 = vunpack.c.l.b16 %v258
  %v644 = vunpack.c.h.b16 %v258
  %v645 = vunpack.c.l.b16 %v259
  %v646 = vunpack.c.h.b16 %v259
  %v647 = vunpack.c.l.b16 %v260
  %v648 = vunpack.c.h.b16 %v260
  %v649 = vunpack.c.l.b16 %v261
  %v650 = vunpack.c.h.b16 %v261
  %v651 = vunpack.c.l.b16 %v262
  %v652 = vunpack.c.h.b16 %v262
  %v653 = vunpack.c.l.b16 %v263
  %v654 = vunpack.c.h.b16 %v263
  %v655 = vunpack.c.l.b16 %v264
  %v656 = vunpack.c.h.b16 %v264
  %v657 = vunpack.c.l.b16 %v265
  %v658 = vunpack.c.h.b16 %v265
  %v659 = vunpack.c.l.b16 %v266
  %v660 = vunpack.c.h.b16 %v266
  %v661 = vunpack.c.l.b16 %v267
  %v662 = vunpack.c.h.b16 %v267
  %v663 = vunpack.c.l.b16 %v268
  %v664 = vunpack.c.h.b16 %v268
  %v665 = vunpack.c.l.b16 %v269
  %v666 = vunpack.c.h.b16 %v269
  %v667 = vunpack.c.l.b16 %v270
  %v668 = vunpack.c.h.b16 %v270
  %v669 = vunpack.c.l.b16 %v271
  %v670 = vunpack.c.h.b16 %v271
  %v671 = vunpack.c.l.b16 %v272
  %v672 = vunpack.c.h.b16 %v272
  %v673 = vunpack.c.l.b16 %v273
  %v674 = vunpack.c.h.b16 %v273
  %v675 = vunpack.c.l.b16 %v274
  %v676 = vunpack.c.h.b16 %v274
  %v677 = vunpack.c.l.b16 %v275
  %v678 = vunpack.c.h.b16 %v275
  %v679 = vunpack.c.l.b16 %v276
  %v680 = vunpack.c.h.b16 %v276
  %v681 = vunpack.c.l.b16 %v277
  %v682 = vunpack.c.h.b16 %v277
  %v683 = vunpack.c.l.b16 %v278
  %v684 = vunpack.c.h.b16 %v278
  %v685 = vunpack.c.l.b16 %v279
  %v686 = vunpack.c.h.b16 %v279
  %v687 = vunpack.c.l.b16 %v280
  %v688 = vunpack.c.h.b16 %v280
  %v689 = vunpack.c.l.b16 %v281
  %v690 = vunpack.c.h.b16 %v281
  %v691 = vunpack.c.l.b16 %v282
  %v692 = vunpack.c.h.b16 %v282
  %v693 = vunpack.c.l.b16 %v283
  %v694 = vunpack.c.h.b16 %v283
  %v695 = vunpack.c.l.b16 %v284
  %v696 = vunpack.c.h.b16 %v284
  %v697 = vunpack.c.l.b16 %v285
  %v698 = vunpack.c.h.b16 %v285
  %v699 = vunpack.c.l.b16 %v286
  %v700 = vunpack.c.h.b16 %v286
  %v701 = vunpack.c.l.b16 %v287
  %v702 = vunpack.c.h.b16 %v287
  %v703 = vunpack.c.l.b16 %v288
  %v704 = vunpack.c.h.b16 %v288
  %v705 = vunpack.c.l.b16 %v289
  %v706 = vunpack.c.h.b16 %v289
  %v707 = vunpack.c.l.b16 %v290
  %v708 = vunpack.c.h.b16 %v290
  %v709 = vunpack.c.l.b16 %v291
  %v710 = vunpack.c.h.b16 %v291
  %v711 = vunpack.c.l.b16 %v292
  %v712 = vunpack.c.h.b16 %v292
  %v713 = vunpack.c.l.b16 %v293
  %v714 = vunpack.c.h.b16 %v293
  %v715 = vunpack.c.l.b16 %v294
  %v716 = vunpack.c.h.b16 %v294
  %v717 = vunpack.c.l.b16 %v295
  %v718 = vunpack.c.h.b16 %v295
  %v719 = vunpack.c.l.b16 %v296
  %v720 = vunpack.c.h.b16 %v296
  %v721 = vunpack.c.l.b16 %v297
  %v722 = vunpack.c.h.b16 %v297
  %v723 = vunpack.c.l.b16 %v298
  %v724 = vunpack.c.h.b16 %v298
  %v725 = vpack.c.b16 %v477, %v469
  %v726 = vpack.c.b16 %v478, %v470
  %v727 = vpack.c.b16 %v479, %v471
  %v728 = vpack.c.b16 %v480, %v472
  %v729 = vpack.c.b16 %v481, %v473
  %v730 = vpack.c.b16 %v482, %v474
  %v731 = vpack.c.b16 %v483, %v475
  %v732 = vpack.c.b16 %v484, %v476
  %v733 = vpack.c.b16 %v493, %v485
  %v734 = vpack.c.b16 %v494, %v486
  %v735 = vpack.c.b16 %v495, %v487
  %v736 = vpack.c.b16 %v496, %v488
  %v737 = vpack.c.b16 %v497, %v489
  %v738 = vpack.c.b16 %v498, %v490
  %v739 = vpack.c.b16 %v499, %v491
  %v740 = vpack.c.b16 %v500, %v492
  %v741 = vpack.c.b16 %v509, %v501
  %v742 = vpack.c.b16 %v510, %v502
  %v743 = vpack.c.b16 %v511, %v503
  %v744 = vpack.c.b16 %v512, %v504
  %v745 = vpack.c.b16 %v513, %v505
  %v746 = vpack.c.b16 %v514, %v506
  %v747 = vpack.c.b16 %v515, %v507
  %v748 = vpack.c.b16 %v516, %v508
  %v749 = vpack.c.b16 %v525, %v517
  %v750 = vpack.c.b16 %v526, %v518
  %v751 = vpack.c.b16 %v527, %v519
  %v752 = vpack.c.b16 %v528, %v520
  %v753 = vpack.c.b16 %v529, %v521
  %v754 = vpack.c.b16 %v530, %v522
  %v755 = vpack.c.b16 %v531, %v523
  %v756 = vpack.c.b16 %v532, %v524
  %v757 = vpack.c.b16 %v541, %v533
  %v758 = vpack.c.b16 %v542, %v534
  %v759 = vpack.c.b16 %v543, %v535
  %v760 = vpack.c.b16 %v544, %v536
  %v761 = vpack.c.b16 %v545, %v537
  %v762 = vpack.c.b16 %v546, %v538
  %v763 = vpack.c.b16 %v547, %v539
  %v764 = vpack.c.b16 %v548, %v540
  %v765 = vpack.c.b16 %v557, %v549
  %v766 = vpack.c.b16 %v558, %v550
  %v767 = vpack.c.b16 %v559, %v551
  %v768 = vpack.c.b16 %v560, %v552
  %v769 = vpack.c.b16 %v561, %v553
  %v770 = vpack.c.b16 %v562, %v554
  %v771 = vpack.c.b16 %v563, %v555
  %v772 = vpack.c.b16 %v564, %v556
  %v773 = vpack.c.b16 %v573, %v565
  %v774 = vpack.c.b16 %v574, %v566
  %v775 = vpack.c.b16 %v575, %v567
  %v776 = vpack.c.b16 %v576, %v568
  %v777 = vpack.c.b16 %v577, %v569
  %v778 = vpack.c.b16 %v578, %v570
  %v779 = vpack.c.b16 %v579, %v571
  %v780 = vpack.c.b16 %v580, %v572
  %v781 = vpack.c.b16 %v589, %v581
  %v782 = vpack.c.b16 %v590, %v582
  %v783 = vpack.c.b16 %v591, %v583
  %v784 = vpack.c.b16 %v592, %v584
  %v785 = vpack.c.b16 %v593, %v585
  %v786 = vpack.c.b16 %v594, %v586
  %v787 = vpack.c.b16 %v595, %v587
  %v788 = vpack.c.b16 %v596, %v588
  %v789 = vpack.c.b16 %v605, %v597
  %v790 = vpack.c.b16 %v606, %v598
  %v791 = vpack.c.b16 %v607, %v599
  %v792 = vpack.c.b16 %v608, %v600
  %v793 = vpack.c.b16 %v609, %v601
  %v794 = vpack.c.b16 %v610, %v602
  %v795 = vpack.c.b16 %v611, %v603
  %v796 = vpack.c.b16 %v612, %v604
  %v797 = vpack.c.b16 %v621, %v613
  %v798 = vpack.c.b16 %v622, %v614
  %v799 = vpack.c.b16 %v623, %v615
  %v800 = vpack.c.b16 %v624, %v616
  %v801 = vpack.c.b16 %v625, %v617
  %v802 = vpack.c.b16 %v626, %v618
  %v803 = vpack.c.b16 %v627, %v619
  %v804 = vpack.c.b16 %v628, %v620
  %v805 = vpack.c.b16 %v637, %v629
  %v806 = vpack.c.b16 %v638, %v630
  %v807 = vpack.c.b16 %v639, %v631
  %v808 = vpack.c.b16 %v640, %v632
  %v809 = vpack.c.b16 %v641, %v633
  %v810 = vpack.c.b16 %v642, %v634
  %v811 = vpack.c.b16 %v643, %v635
  %v812 = vpack.c.b16 %v644, %v636
  %v813 = vpack.c.b16 %v653, %v645
  %v814 = vpack.c.b16 %v654, %v646
  %v815 = vpack.c.b16 %v655, %v647
  %v816 = vpack.c.b16 %v656, %v648
  %v817 = vpack.c.b16 %v657, %v649
  %v818 = vpack.c.b16 %v658, %v650
  %v819 = vpack.c.b16 %v659, %v651
  %v820 = vpack.c.b16 %v660, %v652
  %v821 = vpack.c.b16 %v669, %v661
  %v822 = vpack.c.b16 %v670, %v662
  %v823 = vpack.c.b16 %v671, %v663
  %v824 = vpack.c.b16 %v672, %v664
  %v825 = vpack.c.b16 %v673, %v665
  %v826 = vpack.c.b16 %v674, %v666
  %v827 = vpack.c.b16 %v675, %v667
  %v828 = vpack.c.b16 %v676, %v668
  %v829 = vpack.c.b16 %v685, %v677
  %v830 = vpack.c.b16 %v686, %v678
  %v831 = vpack.c.b16 %v687, %v679
  %v832 = vpack.c.b16 %v688, %v680
  %v833 = vpack.c.b16 %v689, %v681
  %v834 = vpack.c.b16 %v690, %v682
  %v835 = vpack.c.b16 %v691, %v683
  %v836 = vpack.c.b16 %v692, %v684
  %v837 = vpack.c.b16 %v701, %v693
  %v838 = vpack.c.b16 %v702, %v694
  %v839 = vpack.c.b16 %v703, %v695
  %v840 = vpack.c.b16 %v704, %v696
  %v841 = vpack.c.b16 %v705, %v697
  %v842 = vpack.c.b16 %v706, %v698
  %v843 = vpack.c.b16 %v707, %v699
  %v844 = vpack.c.b16 %v708, %v700
  %v845 = vpack.c.b16 %v717, %v709
  %v846 = vpack.c.b16 %v718, %v710
  %v847 = vpack.c.b16 %v719, %v711
  %v848 = vpack.c.b16 %v720, %v712
  %v849 = vpack.c.b16 %v721, %v713
  %v850 = vpack.c.b16 %v722, %v714
  %v851 = vpack.c.b16 %v723, %v715
  %v852 = vpack.c.b16 %v724, %v716
  %981 = vmatprep.subr.bf16.mxu0 %v782
  %982 = vmatpush1.bf16.msra.mxu0 %v781
  %983 = vmatprep.subr.bf16.mxu0 %v774
  %984 = vmatpush1.bf16.msra.mxu0 %v773
  %985 = vmatprep.subr.bf16.mxu0 %v766
  %986 = vmatpush1.bf16.msra.mxu0 %v765
  %987 = vmatprep.subr.bf16.mxu0 %v758
  %988 = vmatpush1.bf16.msra.mxu0 %v757
  %989 = vmatprep.subr.bf16.mxu0 %v750
  %990 = vmatpush1.bf16.msra.mxu0 %v749
  %991 = vmatprep.subr.bf16.mxu0 %v742
  %992 = vmatpush1.bf16.msra.mxu0 %v741
  %993 = vmatprep.subr.bf16.mxu0 %v734
  %994 = vmatpush1.bf16.msra.mxu0 %v733
  %995 = vmatprep.subr.bf16.mxu0 %v726
  %996 = vmatpush1.bf16.msra.mxu0 %v725
  %997 = vmatprep.subr.bf16.mxu0 %v846
  %998 = vmatpush2.bf16.msra.mxu0 %v845
  %999 = vmatprep.subr.bf16.mxu0 %v838
  %1000 = vmatpush2.bf16.msra.mxu0 %v837
  %1001 = vmatprep.subr.bf16.mxu0 %v830
  %1002 = vmatpush2.bf16.msra.mxu0 %v829
  %1003 = vmatprep.subr.bf16.mxu0 %v822
  %1004 = vmatpush2.bf16.msra.mxu0 %v821
  %1005 = vmatprep.subr.bf16.mxu0 %v814
  %1006 = vmatpush2.bf16.msra.mxu0 %v813
  %1007 = vmatprep.subr.bf16.mxu0 %v806
  %1008 = vmatpush2.bf16.msra.mxu0 %v805
  %1009 = vmatprep.subr.bf16.mxu0 %v798
  %1010 = vmatpush2.bf16.msra.mxu0 %v797
  %1011 = vmatprep.subr.bf16.mxu0 %v790
  %1012 = vmatpush2.bf16.msra.mxu0 %v789
  %1013 = vmatprep.mubr.bf16.mxu0 %v166
  %1014 = vmatmul.mubr.bf16.gmra.mxu0 %v165
  %v1015 = vpop.f32.mrf.mxu0
  %v1016 = vadd.f32 %v304, %v1015
  %v1017 = vpop.f32.mrf.mxu0
  %v1018 = vadd.f32 %v308, %v1017
  %v1019 = vpop.f32.mrf.mxu0
  %v1020 = vadd.f32 %v304, %v1019
  %v1021 = vpop.f32.mrf.mxu0
  %v1022 = vadd.f32 %v308, %v1021
  %1023 = vmatprep.mubr.bf16.mxu0 %v168
  %1024 = vmatmul.mubr.bf16.gmra.mxu0 %v167
  %v1025 = vpop.f32.mrf.mxu0
  %v1026 = vadd.f32 %v304, %v1025
  %v1027 = vpop.f32.mrf.mxu0
  %v1028 = vadd.f32 %v308, %v1027
  %v1029 = vpop.f32.mrf.mxu0
  %v1030 = vadd.f32 %v304, %v1029
  %v1031 = vpop.f32.mrf.mxu0
  %v1032 = vadd.f32 %v308, %v1031
  %1033 = vmatprep.mubr.bf16.mxu0 %v170
  %1034 = vmatmul.mubr.bf16.gmra.mxu0 %v169
  %v1035 = vpop.f32.mrf.mxu0
  %v1036 = vadd.f32 %v304, %v1035
  %v1037 = vpop.f32.mrf.mxu0
  %v1038 = vadd.f32 %v308, %v1037
  %v1039 = vpop.f32.mrf.mxu0
  %v1040 = vpop.f32.mrf.mxu0
  %1041 = vdwg.mxu0
  %1042 = vmatprep.subr.bf16.mxu0 %v784
  %1043 = vmatpush1.bf16.msra.mxu0 %v783
  %1044 = vmatprep.subr.bf16.mxu0 %v776
  %1045 = vmatpush1.bf16.msra.mxu0 %v775
  %1046 = vmatprep.subr.bf16.mxu0 %v768
  %1047 = vmatpush1.bf16.msra.mxu0 %v767
  %1048 = vmatprep.subr.bf16.mxu0 %v760
  %1049 = vmatpush1.bf16.msra.mxu0 %v759
  %1050 = vmatprep.subr.bf16.mxu0 %v752
  %1051 = vmatpush1.bf16.msra.mxu0 %v751
  %1052 = vmatprep.subr.bf16.mxu0 %v744
  %1053 = vmatpush1.bf16.msra.mxu0 %v743
  %1054 = vmatprep.subr.bf16.mxu0 %v736
  %1055 = vmatpush1.bf16.msra.mxu0 %v735
  %1056 = vmatprep.subr.bf16.mxu0 %v728
  %1057 = vmatpush1.bf16.msra.mxu0 %v727
  %1058 = vmatprep.subr.bf16.mxu0 %v848
  %1059 = vmatpush2.bf16.msra.mxu0 %v847
  %1060 = vmatprep.subr.bf16.mxu0 %v840
  %1061 = vmatpush2.bf16.msra.mxu0 %v839
  %1062 = vmatprep.subr.bf16.mxu0 %v832
  %1063 = vmatpush2.bf16.msra.mxu0 %v831
  %1064 = vmatprep.subr.bf16.mxu0 %v824
  %1065 = vmatpush2.bf16.msra.mxu0 %v823
  %1066 = vmatprep.subr.bf16.mxu0 %v816
  %1067 = vmatpush2.bf16.msra.mxu0 %v815
  %1068 = vmatprep.subr.bf16.mxu0 %v808
  %1069 = vmatpush2.bf16.msra.mxu0 %v807
  %1070 = vmatprep.subr.bf16.mxu0 %v800
  %1071 = vmatpush2.bf16.msra.mxu0 %v799
  %1072 = vmatprep.subr.bf16.mxu0 %v792
  %1073 = vmatpush2.bf16.msra.mxu0 %v791
  %1074 = vmatprep.mubr.bf16.mxu0 %v166
  %1075 = vmatmul.mubr.bf16.gmra.mxu0 %v165
  %v1076 = vpop.f32.mrf.mxu0
  %v1077 = vadd.f32 %v312, %v1076
  %v1078 = vpop.f32.mrf.mxu0
  %v1079 = vadd.f32 %v316, %v1078
  %v1080 = vpop.f32.mrf.mxu0
  %v1081 = vadd.f32 %v312, %v1080
  %v1082 = vpop.f32.mrf.mxu0
  %v1083 = vadd.f32 %v316, %v1082
  %1084 = vmatprep.mubr.bf16.mxu0 %v168
  %1085 = vmatmul.mubr.bf16.gmra.mxu0 %v167
  %v1086 = vpop.f32.mrf.mxu0
  %v1087 = vadd.f32 %v312, %v1086
  %v1088 = vpop.f32.mrf.mxu0
  %v1089 = vadd.f32 %v316, %v1088
  %v1090 = vpop.f32.mrf.mxu0
  %v1091 = vadd.f32 %v312, %v1090
  %v1092 = vpop.f32.mrf.mxu0
  %v1093 = vadd.f32 %v316, %v1092
  %1094 = vmatprep.mubr.bf16.mxu0 %v170
  %1095 = vmatmul.mubr.bf16.gmra.mxu0 %v169
  %v1096 = vpop.f32.mrf.mxu0
  %v1097 = vadd.f32 %v312, %v1096
  %v1098 = vpop.f32.mrf.mxu0
  %v1099 = vadd.f32 %v316, %v1098
  %v1100 = vpop.f32.mrf.mxu0
  %v1101 = vpop.f32.mrf.mxu0
  %1102 = vdwg.mxu0
  %1103 = vmatprep.subr.bf16.mxu0 %v786
  %1104 = vmatpush1.bf16.msra.mxu0 %v785
  %1105 = vmatprep.subr.bf16.mxu0 %v778
  %1106 = vmatpush1.bf16.msra.mxu0 %v777
  %1107 = vmatprep.subr.bf16.mxu0 %v770
  %1108 = vmatpush1.bf16.msra.mxu0 %v769
  %1109 = vmatprep.subr.bf16.mxu0 %v762
  %1110 = vmatpush1.bf16.msra.mxu0 %v761
  %1111 = vmatprep.subr.bf16.mxu0 %v754
  %1112 = vmatpush1.bf16.msra.mxu0 %v753
  %1113 = vmatprep.subr.bf16.mxu0 %v746
  %1114 = vmatpush1.bf16.msra.mxu0 %v745
  %1115 = vmatprep.subr.bf16.mxu0 %v738
  %1116 = vmatpush1.bf16.msra.mxu0 %v737
  %1117 = vmatprep.subr.bf16.mxu0 %v730
  %1118 = vmatpush1.bf16.msra.mxu0 %v729
  %1119 = vmatprep.subr.bf16.mxu0 %v850
  %1120 = vmatpush2.bf16.msra.mxu0 %v849
  %1121 = vmatprep.subr.bf16.mxu0 %v842
  %1122 = vmatpush2.bf16.msra.mxu0 %v841
  %1123 = vmatprep.subr.bf16.mxu0 %v834
  %1124 = vmatpush2.bf16.msra.mxu0 %v833
  %1125 = vmatprep.subr.bf16.mxu0 %v826
  %1126 = vmatpush2.bf16.msra.mxu0 %v825
  %1127 = vmatprep.subr.bf16.mxu0 %v818
  %1128 = vmatpush2.bf16.msra.mxu0 %v817
  %1129 = vmatprep.subr.bf16.mxu0 %v810
  %1130 = vmatpush2.bf16.msra.mxu0 %v809
  %1131 = vmatprep.subr.bf16.mxu0 %v802
  %1132 = vmatpush2.bf16.msra.mxu0 %v801
  %1133 = vmatprep.subr.bf16.mxu0 %v794
  %1134 = vmatpush2.bf16.msra.mxu0 %v793
  %1135 = vmatprep.mubr.bf16.mxu0 %v166
  %1136 = vmatmul.mubr.bf16.gmra.mxu0 %v165
  %v1137 = vpop.f32.mrf.mxu0
  %v1138 = vadd.f32 %v320, %v1137
  %v1139 = vpop.f32.mrf.mxu0
  %v1140 = vadd.f32 %v324, %v1139
  %v1141 = vpop.f32.mrf.mxu0
  %v1142 = vadd.f32 %v320, %v1141
  %v1143 = vpop.f32.mrf.mxu0
  %v1144 = vadd.f32 %v324, %v1143
  %1145 = vmatprep.mubr.bf16.mxu0 %v168
  %1146 = vmatmul.mubr.bf16.gmra.mxu0 %v167
  %v1147 = vpop.f32.mrf.mxu0
  %v1148 = vadd.f32 %v320, %v1147
  %v1149 = vpop.f32.mrf.mxu0
  %v1150 = vadd.f32 %v324, %v1149
  %v1151 = vpop.f32.mrf.mxu0
  %v1152 = vadd.f32 %v320, %v1151
  %v1153 = vpop.f32.mrf.mxu0
  %v1154 = vadd.f32 %v324, %v1153
  %1155 = vmatprep.mubr.bf16.mxu0 %v170
  %1156 = vmatmul.mubr.bf16.gmra.mxu0 %v169
  %v1157 = vpop.f32.mrf.mxu0
  %v1158 = vadd.f32 %v320, %v1157
  %v1159 = vpop.f32.mrf.mxu0
  %v1160 = vadd.f32 %v324, %v1159
  %v1161 = vpop.f32.mrf.mxu0
  %v1162 = vpop.f32.mrf.mxu0
  %1163 = vdwg.mxu0
  %1164 = vmatprep.subr.bf16.mxu0 %v788
  %1165 = vmatpush1.bf16.msra.mxu0 %v787
  %1166 = vmatprep.subr.bf16.mxu0 %v780
  %1167 = vmatpush1.bf16.msra.mxu0 %v779
  %1168 = vmatprep.subr.bf16.mxu0 %v772
  %1169 = vmatpush1.bf16.msra.mxu0 %v771
  %1170 = vmatprep.subr.bf16.mxu0 %v764
  %1171 = vmatpush1.bf16.msra.mxu0 %v763
  %1172 = vmatprep.subr.bf16.mxu0 %v756
  %1173 = vmatpush1.bf16.msra.mxu0 %v755
  %1174 = vmatprep.subr.bf16.mxu0 %v748
  %1175 = vmatpush1.bf16.msra.mxu0 %v747
  %1176 = vmatprep.subr.bf16.mxu0 %v740
  %1177 = vmatpush1.bf16.msra.mxu0 %v739
  %1178 = vmatprep.subr.bf16.mxu0 %v732
  %1179 = vmatpush1.bf16.msra.mxu0 %v731
  %1180 = vmatprep.subr.bf16.mxu0 %v852
  %1181 = vmatpush2.bf16.msra.mxu0 %v851
  %1182 = vmatprep.subr.bf16.mxu0 %v844
  %1183 = vmatpush2.bf16.msra.mxu0 %v843
  %1184 = vmatprep.subr.bf16.mxu0 %v836
  %1185 = vmatpush2.bf16.msra.mxu0 %v835
  %1186 = vmatprep.subr.bf16.mxu0 %v828
  %1187 = vmatpush2.bf16.msra.mxu0 %v827
  %1188 = vmatprep.subr.bf16.mxu0 %v820
  %1189 = vmatpush2.bf16.msra.mxu0 %v819
  %1190 = vmatprep.subr.bf16.mxu0 %v812
  %1191 = vmatpush2.bf16.msra.mxu0 %v811
  %1192 = vmatprep.subr.bf16.mxu0 %v804
  %1193 = vmatpush2.bf16.msra.mxu0 %v803
  %1194 = vmatprep.subr.bf16.mxu0 %v796
  %1195 = vmatpush2.bf16.msra.mxu0 %v795
  %1196 = vmatprep.mubr.bf16.mxu0 %v166
  %1197 = vmatmul.mubr.bf16.gmra.mxu0 %v165
  %v1198 = vpop.f32.mrf.mxu0
  %v1199 = vadd.f32 %v328, %v1198
  %v1200 = vpop.f32.mrf.mxu0
  %v1201 = vadd.f32 %v332, %v1200
  %v1202 = vpop.f32.mrf.mxu0
  %v1203 = vadd.f32 %v328, %v1202
  %v1204 = vpop.f32.mrf.mxu0
  %v1205 = vadd.f32 %v332, %v1204
  %1206 = vmatprep.mubr.bf16.mxu0 %v168
  %1207 = vmatmul.mubr.bf16.gmra.mxu0 %v167
  %v1208 = vpop.f32.mrf.mxu0
  %v1209 = vadd.f32 %v328, %v1208
  %v1210 = vpop.f32.mrf.mxu0
  %v1211 = vadd.f32 %v332, %v1210
  %v1212 = vpop.f32.mrf.mxu0
  %v1213 = vadd.f32 %v328, %v1212
  %v1214 = vpop.f32.mrf.mxu0
  %v1215 = vadd.f32 %v332, %v1214
  %1216 = vmatprep.mubr.bf16.mxu0 %v170
  %1217 = vmatmul.mubr.bf16.gmra.mxu0 %v169
  %v1218 = vpop.f32.mrf.mxu0
  %v1219 = vadd.f32 %v328, %v1218
  %v1220 = vpop.f32.mrf.mxu0
  %v1221 = vadd.f32 %v332, %v1220
  %v1222 = vpop.f32.mrf.mxu0
  %v1223 = vpop.f32.mrf.mxu0
  %1224 = vdwg.mxu0
  %v1225 = vmul.f32 %v1016, %v1016
  %v1226 = vmul.f32 %v1018, %v1018
  %v1227 = vmul.f32 %v1077, %v1077
  %v1228 = vmul.f32 %v1079, %v1079
  %v1229 = vmul.f32 %v1138, %v1138
  %v1230 = vmul.f32 %v1140, %v1140
  %v1231 = vmul.f32 %v1199, %v1199
  %v1232 = vmul.f32 %v1201, %v1201
  %v1233 = vmul.f32 %v1020, %v1020
  %v1234 = vmul.f32 %v1022, %v1022
  %v1235 = vmul.f32 %v1081, %v1081
  %v1236 = vmul.f32 %v1083, %v1083
  %v1237 = vmul.f32 %v1142, %v1142
  %v1238 = vmul.f32 %v1144, %v1144
  %v1239 = vmul.f32 %v1203, %v1203
  %v1240 = vmul.f32 %v1205, %v1205
  %v1241 = vmul.f32 %v1026, %v1026
  %v1242 = vmul.f32 %v1028, %v1028
  %v1243 = vmul.f32 %v1087, %v1087
  %v1244 = vmul.f32 %v1089, %v1089
  %v1245 = vmul.f32 %v1148, %v1148
  %v1246 = vmul.f32 %v1150, %v1150
  %v1247 = vmul.f32 %v1209, %v1209
  %v1248 = vmul.f32 %v1211, %v1211
  %v1249 = vmul.f32 %v1030, %v1030
  %v1250 = vmul.f32 %v1032, %v1032
  %v1251 = vmul.f32 %v1091, %v1091
  %v1252 = vmul.f32 %v1093, %v1093
  %v1253 = vmul.f32 %v1152, %v1152
  %v1254 = vmul.f32 %v1154, %v1154
  %v1255 = vmul.f32 %v1213, %v1213
  %v1256 = vmul.f32 %v1215, %v1215
  %v1257 = vmul.f32 %v1036, %v1036
  %v1258 = vmul.f32 %v1038, %v1038
  %v1259 = vmul.f32 %v1097, %v1097
  %v1260 = vmul.f32 %v1099, %v1099
  %v1261 = vmul.f32 %v1158, %v1158
  %v1262 = vmul.f32 %v1160, %v1160
  %v1263 = vmul.f32 %v1219, %v1219
  %v1264 = vmul.f32 %v1221, %v1221
  %v1265 = vmul.f32 %v1016, %v1225
  %v1266 = vmul.f32 %v1018, %v1226
  %v1267 = vmul.f32 %v1077, %v1227
  %v1268 = vmul.f32 %v1079, %v1228
  %v1269 = vmul.f32 %v1138, %v1229
  %v1270 = vmul.f32 %v1140, %v1230
  %v1271 = vmul.f32 %v1199, %v1231
  %v1272 = vmul.f32 %v1201, %v1232
  %v1273 = vmul.f32 %v1020, %v1233
  %v1274 = vmul.f32 %v1022, %v1234
  %v1275 = vmul.f32 %v1081, %v1235
  %v1276 = vmul.f32 %v1083, %v1236
  %v1277 = vmul.f32 %v1142, %v1237
  %v1278 = vmul.f32 %v1144, %v1238
  %v1279 = vmul.f32 %v1203, %v1239
  %v1280 = vmul.f32 %v1205, %v1240
  %v1281 = vmul.f32 %v1026, %v1241
  %v1282 = vmul.f32 %v1028, %v1242
  %v1283 = vmul.f32 %v1087, %v1243
  %v1284 = vmul.f32 %v1089, %v1244
  %v1285 = vmul.f32 %v1148, %v1245
  %v1286 = vmul.f32 %v1150, %v1246
  %v1287 = vmul.f32 %v1209, %v1247
  %v1288 = vmul.f32 %v1211, %v1248
  %v1289 = vmul.f32 %v1030, %v1249
  %v1290 = vmul.f32 %v1032, %v1250
  %v1291 = vmul.f32 %v1091, %v1251
  %v1292 = vmul.f32 %v1093, %v1252
  %v1293 = vmul.f32 %v1152, %v1253
  %v1294 = vmul.f32 %v1154, %v1254
  %v1295 = vmul.f32 %v1213, %v1255
  %v1296 = vmul.f32 %v1215, %v1256
  %v1297 = vmul.f32 %v1036, %v1257
  %v1298 = vmul.f32 %v1038, %v1258
  %v1299 = vmul.f32 %v1097, %v1259
  %v1300 = vmul.f32 %v1099, %v1260
  %v1301 = vmul.f32 %v1158, %v1261
  %v1302 = vmul.f32 %v1160, %v1262
  %v1303 = vmul.f32 %v1219, %v1263
  %v1304 = vmul.f32 %v1221, %v1264
  %v1305 = vmul.f32 %v1265, 0.044715
  %v1306 = vmul.f32 %v1266, 0.044715
  %v1307 = vmul.f32 %v1267, 0.044715
  %v1308 = vmul.f32 %v1268, 0.044715
  %v1309 = vmul.f32 %v1269, 0.044715
  %v1310 = vmul.f32 %v1270, 0.044715
  %v1311 = vmul.f32 %v1271, 0.044715
  %v1312 = vmul.f32 %v1272, 0.044715
  %v1313 = vmul.f32 %v1273, 0.044715
  %v1314 = vmul.f32 %v1274, 0.044715
  %v1315 = vmul.f32 %v1275, 0.044715
  %v1316 = vmul.f32 %v1276, 0.044715
  %v1317 = vmul.f32 %v1277, 0.044715
  %v1318 = vmul.f32 %v1278, 0.044715
  %v1319 = vmul.f32 %v1279, 0.044715
  %v1320 = vmul.f32 %v1280, 0.044715
  %v1321 = vmul.f32 %v1281, 0.044715
  %v1322 = vmul.f32 %v1282, 0.044715
  %v1323 = vmul.f32 %v1283, 0.044715
  %v1324 = vmul.f32 %v1284, 0.044715
  %v1325 = vmul.f32 %v1285, 0.044715
  %v1326 = vmul.f32 %v1286, 0.044715
  %v1327 = vmul.f32 %v1287, 0.044715
  %v1328 = vmul.f32 %v1288, 0.044715
  %v1329 = vmul.f32 %v1289, 0.044715
  %v1330 = vmul.f32 %v1290, 0.044715
  %v1331 = vmul.f32 %v1291, 0.044715
  %v1332 = vmul.f32 %v1292, 0.044715
  %v1333 = vmul.f32 %v1293, 0.044715
  %v1334 = vmul.f32 %v1294, 0.044715
  %v1335 = vmul.f32 %v1295, 0.044715
  %v1336 = vmul.f32 %v1296, 0.044715
  %v1337 = vmul.f32 %v1297, 0.044715
  %v1338 = vmul.f32 %v1298, 0.044715
  %v1339 = vmul.f32 %v1299, 0.044715
  %v1340 = vmul.f32 %v1300, 0.044715
  %v1341 = vmul.f32 %v1301, 0.044715
  %v1342 = vmul.f32 %v1302, 0.044715
  %v1343 = vmul.f32 %v1303, 0.044715
  %v1344 = vmul.f32 %v1304, 0.044715
  %v1345 = vadd.f32 %v1016, %v1305
  %v1346 = vadd.f32 %v1018, %v1306
  %v1347 = vadd.f32 %v1077, %v1307
  %v1348 = vadd.f32 %v1079, %v1308
  %v1349 = vadd.f32 %v1138, %v1309
  %v1350 = vadd.f32 %v1140, %v1310
  %v1351 = vadd.f32 %v1199, %v1311
  %v1352 = vadd.f32 %v1201, %v1312
  %v1353 = vadd.f32 %v1020, %v1313
  %v1354 = vadd.f32 %v1022, %v1314
  %v1355 = vadd.f32 %v1081, %v1315
  %v1356 = vadd.f32 %v1083, %v1316
  %v1357 = vadd.f32 %v1142, %v1317
  %v1358 = vadd.f32 %v1144, %v1318
  %v1359 = vadd.f32 %v1203, %v1319
  %v1360 = vadd.f32 %v1205, %v1320
  %v1361 = vadd.f32 %v1026, %v1321
  %v1362 = vadd.f32 %v1028, %v1322
  %v1363 = vadd.f32 %v1087, %v1323
  %v1364 = vadd.f32 %v1089, %v1324
  %v1365 = vadd.f32 %v1148, %v1325
  %v1366 = vadd.f32 %v1150, %v1326
  %v1367 = vadd.f32 %v1209, %v1327
  %v1368 = vadd.f32 %v1211, %v1328
  %v1369 = vadd.f32 %v1030, %v1329
  %v1370 = vadd.f32 %v1032, %v1330
  %v1371 = vadd.f32 %v1091, %v1331
  %v1372 = vadd.f32 %v1093, %v1332
  %v1373 = vadd.f32 %v1152, %v1333
  %v1374 = vadd.f32 %v1154, %v1334
  %v1375 = vadd.f32 %v1213, %v1335
  %v1376 = vadd.f32 %v1215, %v1336
  %v1377 = vadd.f32 %v1036, %v1337
  %v1378 = vadd.f32 %v1038, %v1338
  %v1379 = vadd.f32 %v1097, %v1339
  %v1380 = vadd.f32 %v1099, %v1340
  %v1381 = vadd.f32 %v1158, %v1341
  %v1382 = vadd.f32 %v1160, %v1342
  %v1383 = vadd.f32 %v1219, %v1343
  %v1384 = vadd.f32 %v1221, %v1344
  %v1385 = vmul.f32 %v1345, 0.7978846
  %v1386 = vmul.f32 %v1346, 0.7978846
  %v1387 = vmul.f32 %v1347, 0.7978846
  %v1388 = vmul.f32 %v1348, 0.7978846
  %v1389 = vmul.f32 %v1349, 0.7978846
  %v1390 = vmul.f32 %v1350, 0.7978846
  %v1391 = vmul.f32 %v1351, 0.7978846
  %v1392 = vmul.f32 %v1352, 0.7978846
  %v1393 = vmul.f32 %v1353, 0.7978846
  %v1394 = vmul.f32 %v1354, 0.7978846
  %v1395 = vmul.f32 %v1355, 0.7978846
  %v1396 = vmul.f32 %v1356, 0.7978846
  %v1397 = vmul.f32 %v1357, 0.7978846
  %v1398 = vmul.f32 %v1358, 0.7978846
  %v1399 = vmul.f32 %v1359, 0.7978846
  %v1400 = vmul.f32 %v1360, 0.7978846
  %v1401 = vmul.f32 %v1361, 0.7978846
  %v1402 = vmul.f32 %v1362, 0.7978846
  %v1403 = vmul.f32 %v1363, 0.7978846
  %v1404 = vmul.f32 %v1364, 0.7978846
  %v1405 = vmul.f32 %v1365, 0.7978846
  %v1406 = vmul.f32 %v1366, 0.7978846
  %v1407 = vmul.f32 %v1367, 0.7978846
  %v1408 = vmul.f32 %v1368, 0.7978846
  %v1409 = vmul.f32 %v1369, 0.7978846
  %v1410 = vmul.f32 %v1370, 0.7978846
  %v1411 = vmul.f32 %v1371, 0.7978846
  %v1412 = vmul.f32 %v1372, 0.7978846
  %v1413 = vmul.f32 %v1373, 0.7978846
  %v1414 = vmul.f32 %v1374, 0.7978846
  %v1415 = vmul.f32 %v1375, 0.7978846
  %v1416 = vmul.f32 %v1376, 0.7978846
  %v1417 = vmul.f32 %v1377, 0.7978846
  %v1418 = vmul.f32 %v1378, 0.7978846
  %v1419 = vmul.f32 %v1379, 0.7978846
  %v1420 = vmul.f32 %v1380, 0.7978846
  %v1421 = vmul.f32 %v1381, 0.7978846
  %v1422 = vmul.f32 %v1382, 0.7978846
  %v1423 = vmul.f32 %v1383, 0.7978846
  %v1424 = vmul.f32 %v1384, 0.7978846
  %v1425 = vtanh.pop %v1385
  %v1426 = vtanh.pop %v1386
  %v1427 = vtanh.pop %v1387
  %v1428 = vtanh.pop %v1388
  %v1429 = vtanh.pop %v1389
  %v1430 = vtanh.pop %v1390
  %v1431 = vtanh.pop %v1391
  %v1432 = vtanh.pop %v1392
  %v1433 = vtanh.pop %v1393
  %v1434 = vtanh.pop %v1394
  %v1435 = vtanh.pop %v1395
  %v1436 = vtanh.pop %v1396
  %v1437 = vtanh.pop %v1397
  %v1438 = vtanh.pop %v1398
  %v1439 = vtanh.pop %v1399
  %v1440 = vtanh.pop %v1400
  %v1441 = vtanh.pop %v1401
  %v1442 = vtanh.pop %v1402
  %v1443 = vtanh.pop %v1403
  %v1444 = vtanh.pop %v1404
  %v1445 = vtanh.pop %v1405
  %v1446 = vtanh.pop %v1406
  %v1447 = vtanh.pop %v1407
  %v1448 = vtanh.pop %v1408
  %v1449 = vtanh.pop %v1409
  %v1450 = vtanh.pop %v1410
  %v1451 = vtanh.pop %v1411
  %v1452 = vtanh.pop %v1412
  %v1453 = vtanh.pop %v1413
  %v1454 = vtanh.pop %v1414
  %v1455 = vtanh.pop %v1415
  %v1456 = vtanh.pop %v1416
  %v1457 = vtanh.pop %v1417
  %v1458 = vtanh.pop %v1418
  %v1459 = vtanh.pop %v1419
  %v1460 = vtanh.pop %v1420
  %v1461 = vtanh.pop %v1421
  %v1462 = vtanh.pop %v1422
  %v1463 = vtanh.pop %v1423
  %v1464 = vtanh.pop %v1424
  %v1465 = vadd.f32 %v1425, 1.0
  %v1466 = vadd.f32 %v1426, 1.0
  %v1467 = vadd.f32 %v1427, 1.0
  %v1468 = vadd.f32 %v1428, 1.0
  %v1469 = vadd.f32 %v1429, 1.0
  %v1470 = vadd.f32 %v1430, 1.0
  %v1471 = vadd.f32 %v1431, 1.0
  %v1472 = vadd.f32 %v1432, 1.0
  %v1473 = vadd.f32 %v1433, 1.0
  %v1474 = vadd.f32 %v1434, 1.0
  %v1475 = vadd.f32 %v1435, 1.0
  %v1476 = vadd.f32 %v1436, 1.0
  %v1477 = vadd.f32 %v1437, 1.0
  %v1478 = vadd.f32 %v1438, 1.0
  %v1479 = vadd.f32 %v1439, 1.0
  %v1480 = vadd.f32 %v1440, 1.0
  %v1481 = vadd.f32 %v1441, 1.0
  %v1482 = vadd.f32 %v1442, 1.0
  %v1483 = vadd.f32 %v1443, 1.0
  %v1484 = vadd.f32 %v1444, 1.0
  %v1485 = vadd.f32 %v1445, 1.0
  %v1486 = vadd.f32 %v1446, 1.0
  %v1487 = vadd.f32 %v1447, 1.0
  %v1488 = vadd.f32 %v1448, 1.0
  %v1489 = vadd.f32 %v1449, 1.0
  %v1490 = vadd.f32 %v1450, 1.0
  %v1491 = vadd.f32 %v1451, 1.0
  %v1492 = vadd.f32 %v1452, 1.0
  %v1493 = vadd.f32 %v1453, 1.0
  %v1494 = vadd.f32 %v1454, 1.0
  %v1495 = vadd.f32 %v1455, 1.0
  %v1496 = vadd.f32 %v1456, 1.0
  %v1497 = vadd.f32 %v1457, 1.0
  %v1498 = vadd.f32 %v1458, 1.0
  %v1499 = vadd.f32 %v1459, 1.0
  %v1500 = vadd.f32 %v1460, 1.0
  %v1501 = vadd.f32 %v1461, 1.0
  %v1502 = vadd.f32 %v1462, 1.0
  %v1503 = vadd.f32 %v1463, 1.0
  %v1504 = vadd.f32 %v1464, 1.0
  %v1505 = vmul.f32 %v1465, 0.5
  %v1506 = vmul.f32 %v1466, 0.5
  %v1507 = vmul.f32 %v1467, 0.5
  %v1508 = vmul.f32 %v1468, 0.5
  %v1509 = vmul.f32 %v1469, 0.5
  %v1510 = vmul.f32 %v1470, 0.5
  %v1511 = vmul.f32 %v1471, 0.5
  %v1512 = vmul.f32 %v1472, 0.5
  %v1513 = vmul.f32 %v1473, 0.5
  %v1514 = vmul.f32 %v1474, 0.5
  %v1515 = vmul.f32 %v1475, 0.5
  %v1516 = vmul.f32 %v1476, 0.5
  %v1517 = vmul.f32 %v1477, 0.5
  %v1518 = vmul.f32 %v1478, 0.5
  %v1519 = vmul.f32 %v1479, 0.5
  %v1520 = vmul.f32 %v1480, 0.5
  %v1521 = vmul.f32 %v1481, 0.5
  %v1522 = vmul.f32 %v1482, 0.5
  %v1523 = vmul.f32 %v1483, 0.5
  %v1524 = vmul.f32 %v1484, 0.5
  %v1525 = vmul.f32 %v1485, 0.5
  %v1526 = vmul.f32 %v1486, 0.5
  %v1527 = vmul.f32 %v1487, 0.5
  %v1528 = vmul.f32 %v1488, 0.5
  %v1529 = vmul.f32 %v1489, 0.5
  %v1530 = vmul.f32 %v1490, 0.5
  %v1531 = vmul.f32 %v1491, 0.5
  %v1532 = vmul.f32 %v1492, 0.5
  %v1533 = vmul.f32 %v1493, 0.5
  %v1534 = vmul.f32 %v1494, 0.5
  %v1535 = vmul.f32 %v1495, 0.5
  %v1536 = vmul.f32 %v1496, 0.5
  %v1537 = vmul.f32 %v1497, 0.5
  %v1538 = vmul.f32 %v1498, 0.5
  %v1539 = vmul.f32 %v1499, 0.5
  %v1540 = vmul.f32 %v1500, 0.5
  %v1541 = vmul.f32 %v1501, 0.5
  %v1542 = vmul.f32 %v1502, 0.5
  %v1543 = vmul.f32 %v1503, 0.5
  %v1544 = vmul.f32 %v1504, 0.5
  %v1545 = vmul.f32 %v1016, %v1505
  %v1546 = vmul.f32 %v1018, %v1506
  %v1547 = vmul.f32 %v1077, %v1507
  %v1548 = vmul.f32 %v1079, %v1508
  %v1549 = vmul.f32 %v1138, %v1509
  %v1550 = vmul.f32 %v1140, %v1510
  %v1551 = vmul.f32 %v1199, %v1511
  %v1552 = vmul.f32 %v1201, %v1512
  %v1553 = vmul.f32 %v1020, %v1513
  %v1554 = vmul.f32 %v1022, %v1514
  %v1555 = vmul.f32 %v1081, %v1515
  %v1556 = vmul.f32 %v1083, %v1516
  %v1557 = vmul.f32 %v1142, %v1517
  %v1558 = vmul.f32 %v1144, %v1518
  %v1559 = vmul.f32 %v1203, %v1519
  %v1560 = vmul.f32 %v1205, %v1520
  %v1561 = vmul.f32 %v1026, %v1521
  %v1562 = vmul.f32 %v1028, %v1522
  %v1563 = vmul.f32 %v1087, %v1523
  %v1564 = vmul.f32 %v1089, %v1524
  %v1565 = vmul.f32 %v1148, %v1525
  %v1566 = vmul.f32 %v1150, %v1526
  %v1567 = vmul.f32 %v1209, %v1527
  %v1568 = vmul.f32 %v1211, %v1528
  %v1569 = vmul.f32 %v1030, %v1529
  %v1570 = vmul.f32 %v1032, %v1530
  %v1571 = vmul.f32 %v1091, %v1531
  %v1572 = vmul.f32 %v1093, %v1532
  %v1573 = vmul.f32 %v1152, %v1533
  %v1574 = vmul.f32 %v1154, %v1534
  %v1575 = vmul.f32 %v1213, %v1535
  %v1576 = vmul.f32 %v1215, %v1536
  %v1577 = vmul.f32 %v1036, %v1537
  %v1578 = vmul.f32 %v1038, %v1538
  %v1579 = vmul.f32 %v1097, %v1539
  %v1580 = vmul.f32 %v1099, %v1540
  %v1581 = vmul.f32 %v1158, %v1541
  %v1582 = vmul.f32 %v1160, %v1542
  %v1583 = vmul.f32 %v1219, %v1543
  %v1584 = vmul.f32 %v1221, %v1544
  %v1585 = vpack.c.bf16 %v1553, %v1545
  %v1586 = vpack.c.bf16 %v1554, %v1546
  %v1587 = vpack.c.bf16 %v1555, %v1547
  %v1588 = vpack.c.bf16 %v1556, %v1548
  %v1589 = vpack.c.bf16 %v1557, %v1549
  %v1590 = vpack.c.bf16 %v1558, %v1550
  %v1591 = vpack.c.bf16 %v1559, %v1551
  %v1592 = vpack.c.bf16 %v1560, %v1552
  %v1593 = vpack.c.bf16 %v1569, %v1561
  %v1594 = vpack.c.bf16 %v1570, %v1562
  %v1595 = vpack.c.bf16 %v1571, %v1563
  %v1596 = vpack.c.bf16 %v1572, %v1564
  %v1597 = vpack.c.bf16 %v1573, %v1565
  %v1598 = vpack.c.bf16 %v1574, %v1566
  %v1599 = vpack.c.bf16 %v1575, %v1567
  %v1600 = vpack.c.bf16 %v1576, %v1568
  %v1601 = vpack.c.bf16 %v1577, %v1577
  %v1602 = vpack.c.bf16 %v1578, %v1578
  %v1603 = vpack.c.bf16 %v1579, %v1579
  %v1604 = vpack.c.bf16 %v1580, %v1580
  %v1605 = vpack.c.bf16 %v1581, %v1581
  %v1606 = vpack.c.bf16 %v1582, %v1582
  %v1607 = vpack.c.bf16 %v1583, %v1583
  %v1608 = vpack.c.bf16 %v1584, %v1584
  %v1633 = vunpack.c.l.b16 %v1585
  %v1634 = vunpack.c.l.b16 %v1586
  %v1635 = vunpack.c.l.b16 %v1587
  %v1636 = vunpack.c.l.b16 %v1588
  %v1637 = vunpack.c.l.b16 %v1589
  %v1638 = vunpack.c.l.b16 %v1590
  %v1639 = vunpack.c.l.b16 %v1591
  %v1640 = vunpack.c.l.b16 %v1592
  %v1641 = vunpack.c.h.b16 %v1585
  %v1642 = vunpack.c.h.b16 %v1586
  %v1643 = vunpack.c.h.b16 %v1587
  %v1644 = vunpack.c.h.b16 %v1588
  %v1645 = vunpack.c.h.b16 %v1589
  %v1646 = vunpack.c.h.b16 %v1590
  %v1647 = vunpack.c.h.b16 %v1591
  %v1648 = vunpack.c.h.b16 %v1592
  %v1649 = vunpack.c.l.b16 %v1593
  %v1650 = vunpack.c.l.b16 %v1594
  %v1651 = vunpack.c.l.b16 %v1595
  %v1652 = vunpack.c.l.b16 %v1596
  %v1653 = vunpack.c.l.b16 %v1597
  %v1654 = vunpack.c.l.b16 %v1598
  %v1655 = vunpack.c.l.b16 %v1599
  %v1656 = vunpack.c.l.b16 %v1600
  %v1657 = vunpack.c.h.b16 %v1593
  %v1658 = vunpack.c.h.b16 %v1594
  %v1659 = vunpack.c.h.b16 %v1595
  %v1660 = vunpack.c.h.b16 %v1596
  %v1661 = vunpack.c.h.b16 %v1597
  %v1662 = vunpack.c.h.b16 %v1598
  %v1663 = vunpack.c.h.b16 %v1599
  %v1664 = vunpack.c.h.b16 %v1600
  %v1665 = vunpack.c.l.b16 %v1601
  %v1666 = vunpack.c.l.b16 %v1602
  %v1667 = vunpack.c.l.b16 %v1603
  %v1668 = vunpack.c.l.b16 %v1604
  %v1669 = vunpack.c.l.b16 %v1605
  %v1670 = vunpack.c.l.b16 %v1606
  %v1671 = vunpack.c.l.b16 %v1607
  %v1672 = vunpack.c.l.b16 %v1608
  %v1673 = vpack.c.b16 %v1634, %v1633
  %v1674 = vpack.c.b16 %v1636, %v1635
  %v1675 = vpack.c.b16 %v1638, %v1637
  %v1676 = vpack.c.b16 %v1640, %v1639
  %v1677 = vpack.c.b16 %v1642, %v1641
  %v1678 = vpack.c.b16 %v1644, %v1643
  %v1679 = vpack.c.b16 %v1646, %v1645
  %v1680 = vpack.c.b16 %v1648, %v1647
  %v1681 = vpack.c.b16 %v1650, %v1649
  %v1682 = vpack.c.b16 %v1652, %v1651
  %v1683 = vpack.c.b16 %v1654, %v1653
  %v1684 = vpack.c.b16 %v1656, %v1655
  %v1685 = vpack.c.b16 %v1658, %v1657
  %v1686 = vpack.c.b16 %v1660, %v1659
  %v1687 = vpack.c.b16 %v1662, %v1661
  %v1688 = vpack.c.b16 %v1664, %v1663
  %v1689 = vpack.c.b16 %v1666, %v1665
  %v1690 = vpack.c.b16 %v1668, %v1667
  %v1691 = vpack.c.b16 %v1670, %v1669
  %v1692 = vpack.c.b16 %v1672, %v1671
  %1713 = vst [vmem:[%s5] sm:$0xff] %v1673
  %1714 = vst [vmem:[%s5 + $0x8] sm:$0xff] %v1674
  %1715 = vst [vmem:[%s5 + $0x10] sm:$0xff] %v1675
  %1716 = vst [vmem:[%s5 + $0x18] sm:$0xff] %v1676
  %1717 = vst [vmem:[%s5 + $0x20] sm:$0xff] %v1677
  %1718 = vst [vmem:[%s5 + $0x28] sm:$0xff] %v1678
  %1719 = vst [vmem:[%s5 + $0x30] sm:$0xff] %v1679
  %1720 = vst [vmem:[%s5 + $0x38] sm:$0xff] %v1680
  %1721 = vst [vmem:[%s5 + $0x40] sm:$0xff] %v1681
  %1722 = vst [vmem:[%s5 + $0x48] sm:$0xff] %v1682
  %1723 = vst [vmem:[%s5 + $0x50] sm:$0xff] %v1683
  %1724 = vst [vmem:[%s5 + $0x58] sm:$0xff] %v1684
  %1725 = vst [vmem:[%s5 + $0x60] sm:$0xff] %v1685
  %1726 = vst [vmem:[%s5 + $0x68] sm:$0xff] %v1686
  %1727 = vst [vmem:[%s5 + $0x70] sm:$0xff] %v1687
  %1728 = vst [vmem:[%s5 + $0x78] sm:$0xff] %v1688
  %1729 = vst [vmem:[%s5 + $0x80] sm:$0x11] %v1689
  %1730 = vst [vmem:[%s5 + $0x88] sm:$0x11] %v1690
  %1731 = vst [vmem:[%s5 + $0x90] sm:$0x11] %v1691
  %1732 = vst [vmem:[%s5 + $0x98] sm:$0x11] %v1692
  // Predicated region
  $region22: #{_lambda_.26} parent=0 // pred_check
    _
  $region23: #{_lambda_.26} parent=0 // pred_check_branch
    %1734 = sbr.rel (0) target = $region25
  $region24: #{_lambda_.26} parent=0 // pred_region
    _
  $region25: #{_lambda_.26} parent=0 // pred_fallthru
    _
  // Predicated region
  $region26: #{_lambda_.26} parent=0 // pred_check
    _
  $region27: #{_lambda_.26} parent=0 // pred_check_branch
    %1736 = sbr.rel (0) target = $region29
  $region28: #{_lambda_.26} parent=0 // pred_region
    _
  $region29: #{_lambda_.26} parent=0 // pred_fallthru
    _

// kernel: _lambda_.27
$region0: #{_lambda_.27}
  #allocation0 [shape = 'u32[]', space=smem, size = 0x4, offset = 0x4, fixed_abs, tag = 'smem constant byte address 0x4 - core index']
  #allocation1 [shape = 'u32[144,128]{1,0:T(1,128)}', space=vmem, size = 0x12000, scoped, tag = 'internal scratch']
  %s0 = inlined_call_operand.vmem [shape: bf16[34,1024], index: 0, kind: input, shape index: {}]
  %s1 = inlined_call_operand.vmem [shape: bf16[1024,256], index: 1, kind: input, shape index: {}]
  %s2 = inlined_call_operand.vmem [shape: f32[1,256], index: 2, kind: input, shape index: {}]
  %s3 = inlined_call_operand.vmem [shape: bf16[34,256], index: 3, kind: input, shape index: {}]
  %s4 = inlined_call_operand.vmem [shape: bf16[34,256], index: 4, kind: output, shape index: {}]
  %s5 = sld [smem:[#allocation0]]
  $region26: #{_lambda_.27} parent=0
    _
  %s7 = ssub.s32 1, %s5
  %s8 = scalar_select 0, %s7, %s5
  // Predicated region
  $region2: #{_lambda_.27} parent=0 // pred_check
    _
  $region3: #{_lambda_.27} parent=0 // pred_check_branch
    %10 = sbr.rel (0) target = $region5
  $region4: #{_lambda_.27} parent=0 // pred_region
    _
  $region5: #{_lambda_.27} parent=0 // pred_fallthru
    _
  // Predicated region
  $region6: #{_lambda_.27} parent=0 // pred_check
    _
  $region7: #{_lambda_.27} parent=0 // pred_check_branch
    %12 = sbr.rel (0) target = $region9
  $region8: #{_lambda_.27} parent=0 // pred_region
    _
  $region9: #{_lambda_.27} parent=0 // pred_fallthru
    _
  // Predicated region
  $region10: #{_lambda_.27} parent=0 // pred_check
    _
  $region11: #{_lambda_.27} parent=0 // pred_check_branch
    %14 = sbr.rel (0) target = $region13
  $region12: #{_lambda_.27} parent=0 // pred_region
    _
  $region13: #{_lambda_.27} parent=0 // pred_fallthru
    _
  // Predicated region
  $region14: #{_lambda_.27} parent=0 // pred_check
    _
  $region15: #{_lambda_.27} parent=0 // pred_check_branch
    %16 = sbr.rel (0) target = $region17
  $region16: #{_lambda_.27} parent=0 // pred_region
    _
  $region17: #{_lambda_.27} parent=0 // pred_fallthru
    _
  %v17 = vld [vmem:[%s0] sm:$0xff]
  %v18 = vld [vmem:[%s0 + $0x8] sm:$0xff]
  %v19 = vld [vmem:[%s0 + $0x10] sm:$0xff]
  %v20 = vld [vmem:[%s0 + $0x18] sm:$0xff]
  %v21 = vld [vmem:[%s0 + $0x20] sm:$0xff]
  %v22 = vld [vmem:[%s0 + $0x28] sm:$0xff]
  %v23 = vld [vmem:[%s0 + $0x30] sm:$0xff]
  %v24 = vld [vmem:[%s0 + $0x38] sm:$0xff]
  %v25 = vld [vmem:[%s0 + $0x40] sm:$0xff]
  %v26 = vld [vmem:[%s0 + $0x48] sm:$0xff]
  %v27 = vld [vmem:[%s0 + $0x50] sm:$0xff]
  %v28 = vld [vmem:[%s0 + $0x58] sm:$0xff]
  %v29 = vld [vmem:[%s0 + $0x60] sm:$0xff]
  %v30 = vld [vmem:[%s0 + $0x68] sm:$0xff]
  %v31 = vld [vmem:[%s0 + $0x70] sm:$0xff]
  %v32 = vld [vmem:[%s0 + $0x78] sm:$0xff]
  %v33 = vld [vmem:[%s0 + $0x80] sm:$0x11]
  %v34 = vld [vmem:[%s0 + $0x88] sm:$0x11]
  %v35 = vld [vmem:[%s0 + $0x90] sm:$0x11]
  %v36 = vld [vmem:[%s0 + $0x98] sm:$0x11]
  %v37 = vld [vmem:[%s1] sm:$0xff]
  %v38 = vld [vmem:[%s1 + $0x8] sm:$0xff]
  %v39 = vld [vmem:[%s1 + $0x10] sm:$0xff]
  %v40 = vld [vmem:[%s1 + $0x18] sm:$0xff]
  %v41 = vld [vmem:[%s1 + $0x20] sm:$0xff]
  %v42 = vld [vmem:[%s1 + $0x28] sm:$0xff]
  %v43 = vld [vmem:[%s1 + $0x30] sm:$0xff]
  %v44 = vld [vmem:[%s1 + $0x38] sm:$0xff]
  %v45 = vld [vmem:[%s1 + $0x40] sm:$0xff]
  %v46 = vld [vmem:[%s1 + $0x48] sm:$0xff]
  %v47 = vld [vmem:[%s1 + $0x50] sm:$0xff]
  %v48 = vld [vmem:[%s1 + $0x58] sm:$0xff]
  %v49 = vld [vmem:[%s1 + $0x60] sm:$0xff]
  %v50 = vld [vmem:[%s1 + $0x68] sm:$0xff]
  %v51 = vld [vmem:[%s1 + $0x70] sm:$0xff]
  %v52 = vld [vmem:[%s1 + $0x78] sm:$0xff]
  %v53 = vld [vmem:[%s1 + $0x80] sm:$0xff]
  %v54 = vld [vmem:[%s1 + $0x88] sm:$0xff]
  %v55 = vld [vmem:[%s1 + $0x90] sm:$0xff]
  %v56 = vld [vmem:[%s1 + $0x98] sm:$0xff]
  %v57 = vld [vmem:[%s1 + $0xa0] sm:$0xff]
  %v58 = vld [vmem:[%s1 + $0xa8] sm:$0xff]
  %v59 = vld [vmem:[%s1 + $0xb0] sm:$0xff]
  %v60 = vld [vmem:[%s1 + $0xb8] sm:$0xff]
  %v61 = vld [vmem:[%s1 + $0xc0] sm:$0xff]
  %v62 = vld [vmem:[%s1 + $0xc8] sm:$0xff]
  %v63 = vld [vmem:[%s1 + $0xd0] sm:$0xff]
  %v64 = vld [vmem:[%s1 + $0xd8] sm:$0xff]
  %v65 = vld [vmem:[%s1 + $0xe0] sm:$0xff]
  %v66 = vld [vmem:[%s1 + $0xe8] sm:$0xff]
  %v67 = vld [vmem:[%s1 + $0xf0] sm:$0xff]
  %v68 = vld [vmem:[%s1 + $0xf8] sm:$0xff]
  %v69 = vld [vmem:[%s1 + $0x100] sm:$0xff]
  %v70 = vld [vmem:[%s1 + $0x108] sm:$0xff]
  %v71 = vld [vmem:[%s1 + $0x110] sm:$0xff]
  %v72 = vld [vmem:[%s1 + $0x118] sm:$0xff]
  %v73 = vld [vmem:[%s1 + $0x120] sm:$0xff]
  %v74 = vld [vmem:[%s1 + $0x128] sm:$0xff]
  %v75 = vld [vmem:[%s1 + $0x130] sm:$0xff]
  %v76 = vld [vmem:[%s1 + $0x138] sm:$0xff]
  %v77 = vld [vmem:[%s1 + $0x140] sm:$0xff]
  %v78 = vld [vmem:[%s1 + $0x148] sm:$0xff]
  %v79 = vld [vmem:[%s1 + $0x150] sm:$0xff]
  %v80 = vld [vmem:[%s1 + $0x158] sm:$0xff]
  %v81 = vld [vmem:[%s1 + $0x160] sm:$0xff]
  %v82 = vld [vmem:[%s1 + $0x168] sm:$0xff]
  %v83 = vld [vmem:[%s1 + $0x170] sm:$0xff]
  %v84 = vld [vmem:[%s1 + $0x178] sm:$0xff]
  %v85 = vld [vmem:[%s1 + $0x180] sm:$0xff]
  %v86 = vld [vmem:[%s1 + $0x188] sm:$0xff]
  %v87 = vld [vmem:[%s1 + $0x190] sm:$0xff]
  %v88 = vld [vmem:[%s1 + $0x198] sm:$0xff]
  %v89 = vld [vmem:[%s1 + $0x1a0] sm:$0xff]
  %v90 = vld [vmem:[%s1 + $0x1a8] sm:$0xff]
  %v91 = vld [vmem:[%s1 + $0x1b0] sm:$0xff]
  %v92 = vld [vmem:[%s1 + $0x1b8] sm:$0xff]
  %v93 = vld [vmem:[%s1 + $0x1c0] sm:$0xff]
  %v94 = vld [vmem:[%s1 + $0x1c8] sm:$0xff]
  %v95 = vld [vmem:[%s1 + $0x1d0] sm:$0xff]
  %v96 = vld [vmem:[%s1 + $0x1d8] sm:$0xff]
  %v97 = vld [vmem:[%s1 + $0x1e0] sm:$0xff]
  %v98 = vld [vmem:[%s1 + $0x1e8] sm:$0xff]
  %v99 = vld [vmem:[%s1 + $0x1f0] sm:$0xff]
  %v100 = vld [vmem:[%s1 + $0x1f8] sm:$0xff]
  %v101 = vld [vmem:[%s1 + $0x200] sm:$0xff]
  %v102 = vld [vmem:[%s1 + $0x208] sm:$0xff]
  %v103 = vld [vmem:[%s1 + $0x210] sm:$0xff]
  %v104 = vld [vmem:[%s1 + $0x218] sm:$0xff]
  %v105 = vld [vmem:[%s1 + $0x220] sm:$0xff]
  %v106 = vld [vmem:[%s1 + $0x228] sm:$0xff]
  %v107 = vld [vmem:[%s1 + $0x230] sm:$0xff]
  %v108 = vld [vmem:[%s1 + $0x238] sm:$0xff]
  %v109 = vld [vmem:[%s1 + $0x240] sm:$0xff]
  %v110 = vld [vmem:[%s1 + $0x248] sm:$0xff]
  %v111 = vld [vmem:[%s1 + $0x250] sm:$0xff]
  %v112 = vld [vmem:[%s1 + $0x258] sm:$0xff]
  %v113 = vld [vmem:[%s1 + $0x260] sm:$0xff]
  %v114 = vld [vmem:[%s1 + $0x268] sm:$0xff]
  %v115 = vld [vmem:[%s1 + $0x270] sm:$0xff]
  %v116 = vld [vmem:[%s1 + $0x278] sm:$0xff]
  %v117 = vld [vmem:[%s1 + $0x280] sm:$0xff]
  %v118 = vld [vmem:[%s1 + $0x288] sm:$0xff]
  %v119 = vld [vmem:[%s1 + $0x290] sm:$0xff]
  %v120 = vld [vmem:[%s1 + $0x298] sm:$0xff]
  %v121 = vld [vmem:[%s1 + $0x2a0] sm:$0xff]
  %v122 = vld [vmem:[%s1 + $0x2a8] sm:$0xff]
  %v123 = vld [vmem:[%s1 + $0x2b0] sm:$0xff]
  %v124 = vld [vmem:[%s1 + $0x2b8] sm:$0xff]
  %v125 = vld [vmem:[%s1 + $0x2c0] sm:$0xff]
  %v126 = vld [vmem:[%s1 + $0x2c8] sm:$0xff]
  %v127 = vld [vmem:[%s1 + $0x2d0] sm:$0xff]
  %v128 = vld [vmem:[%s1 + $0x2d8] sm:$0xff]
  %v129 = vld [vmem:[%s1 + $0x2e0] sm:$0xff]
  %v130 = vld [vmem:[%s1 + $0x2e8] sm:$0xff]
  %v131 = vld [vmem:[%s1 + $0x2f0] sm:$0xff]
  %v132 = vld [vmem:[%s1 + $0x2f8] sm:$0xff]
  %v133 = vld [vmem:[%s1 + $0x300] sm:$0xff]
  %v134 = vld [vmem:[%s1 + $0x308] sm:$0xff]
  %v135 = vld [vmem:[%s1 + $0x310] sm:$0xff]
  %v136 = vld [vmem:[%s1 + $0x318] sm:$0xff]
  %v137 = vld [vmem:[%s1 + $0x320] sm:$0xff]
  %v138 = vld [vmem:[%s1 + $0x328] sm:$0xff]
  %v139 = vld [vmem:[%s1 + $0x330] sm:$0xff]
  %v140 = vld [vmem:[%s1 + $0x338] sm:$0xff]
  %v141 = vld [vmem:[%s1 + $0x340] sm:$0xff]
  %v142 = vld [vmem:[%s1 + $0x348] sm:$0xff]
  %v143 = vld [vmem:[%s1 + $0x350] sm:$0xff]
  %v144 = vld [vmem:[%s1 + $0x358] sm:$0xff]
  %v145 = vld [vmem:[%s1 + $0x360] sm:$0xff]
  %v146 = vld [vmem:[%s1 + $0x368] sm:$0xff]
  %v147 = vld [vmem:[%s1 + $0x370] sm:$0xff]
  %v148 = vld [vmem:[%s1 + $0x378] sm:$0xff]
  %v149 = vld [vmem:[%s1 + $0x380] sm:$0xff]
  %v150 = vld [vmem:[%s1 + $0x388] sm:$0xff]
  %v151 = vld [vmem:[%s1 + $0x390] sm:$0xff]
  %v152 = vld [vmem:[%s1 + $0x398] sm:$0xff]
  %v153 = vld [vmem:[%s1 + $0x3a0] sm:$0xff]
  %v154 = vld [vmem:[%s1 + $0x3a8] sm:$0xff]
  %v155 = vld [vmem:[%s1 + $0x3b0] sm:$0xff]
  %v156 = vld [vmem:[%s1 + $0x3b8] sm:$0xff]
  %v157 = vld [vmem:[%s1 + $0x3c0] sm:$0xff]
  %v158 = vld [vmem:[%s1 + $0x3c8] sm:$0xff]
  %v159 = vld [vmem:[%s1 + $0x3d0] sm:$0xff]
  %v160 = vld [vmem:[%s1 + $0x3d8] sm:$0xff]
  %v161 = vld [vmem:[%s1 + $0x3e0] sm:$0xff]
  %v162 = vld [vmem:[%s1 + $0x3e8] sm:$0xff]
  %v163 = vld [vmem:[%s1 + $0x3f0] sm:$0xff]
  %v164 = vld [vmem:[%s1 + $0x3f8] sm:$0xff]
  %v165 = vld [vmem:[%s2] sm:$0x3]
  %v167 = vlaneseq
  %v168 = vshrl.u32 %v167, 7
  %v169 = vsub.s32 0, %v168
  %v170 = vrot.slane %v165, %v169
  %v171 = vlaneseq
  %v172 = vshrl.u32 %v171, 7
  %v173 = vsub.s32 1, %v172
  %v174 = vrot.slane %v165, %v173
  %v197 = vunpack.c.l.b16 %v17
  %v198 = vunpack.c.h.b16 %v17
  %v199 = vunpack.c.l.b16 %v18
  %v200 = vunpack.c.h.b16 %v18
  %v201 = vunpack.c.l.b16 %v19
  %v202 = vunpack.c.h.b16 %v19
  %v203 = vunpack.c.l.b16 %v20
  %v204 = vunpack.c.h.b16 %v20
  %v205 = vunpack.c.l.b16 %v21
  %v206 = vunpack.c.h.b16 %v21
  %v207 = vunpack.c.l.b16 %v22
  %v208 = vunpack.c.h.b16 %v22
  %v209 = vunpack.c.l.b16 %v23
  %v210 = vunpack.c.h.b16 %v23
  %v211 = vunpack.c.l.b16 %v24
  %v212 = vunpack.c.h.b16 %v24
  %v213 = vunpack.c.l.b16 %v25
  %v214 = vunpack.c.h.b16 %v25
  %v215 = vunpack.c.l.b16 %v26
  %v216 = vunpack.c.h.b16 %v26
  %v217 = vunpack.c.l.b16 %v27
  %v218 = vunpack.c.h.b16 %v27
  %v219 = vunpack.c.l.b16 %v28
  %v220 = vunpack.c.h.b16 %v28
  %v221 = vunpack.c.l.b16 %v29
  %v222 = vunpack.c.h.b16 %v29
  %v223 = vunpack.c.l.b16 %v30
  %v224 = vunpack.c.h.b16 %v30
  %v225 = vunpack.c.l.b16 %v31
  %v226 = vunpack.c.h.b16 %v31
  %v227 = vunpack.c.l.b16 %v32
  %v228 = vunpack.c.h.b16 %v32
  %v229 = vunpack.c.l.b16 %v33
  %v230 = vunpack.c.h.b16 %v33
  %v231 = vunpack.c.l.b16 %v34
  %v232 = vunpack.c.h.b16 %v34
  %v233 = vunpack.c.l.b16 %v35
  %v234 = vunpack.c.h.b16 %v35
  %v235 = vunpack.c.l.b16 %v36
  %v236 = vunpack.c.h.b16 %v36
  %v237 = vpack.c.b16 %v205, %v197
  %v238 = vpack.c.b16 %v206, %v198
  %v239 = vpack.c.b16 %v207, %v199
  %v240 = vpack.c.b16 %v208, %v200
  %v241 = vpack.c.b16 %v209, %v201
  %v242 = vpack.c.b16 %v210, %v202
  %v243 = vpack.c.b16 %v211, %v203
  %v244 = vpack.c.b16 %v212, %v204
  %v245 = vpack.c.b16 %v221, %v213
  %v246 = vpack.c.b16 %v222, %v214
  %v247 = vpack.c.b16 %v223, %v215
  %v248 = vpack.c.b16 %v224, %v216
  %v249 = vpack.c.b16 %v225, %v217
  %v250 = vpack.c.b16 %v226, %v218
  %v251 = vpack.c.b16 %v227, %v219
  %v252 = vpack.c.b16 %v228, %v220
  %v253 = vpack.c.b16 %v229, %v229
  %v254 = vpack.c.b16 %v230, %v230
  %v255 = vpack.c.b16 %v231, %v231
  %v256 = vpack.c.b16 %v232, %v232
  %v257 = vpack.c.b16 %v233, %v233
  %v258 = vpack.c.b16 %v234, %v234
  %v259 = vpack.c.b16 %v235, %v235
  %v260 = vpack.c.b16 %v236, %v236
  %v413 = vunpack.c.l.b16 %v37
  %v414 = vunpack.c.h.b16 %v37
  %v415 = vunpack.c.l.b16 %v38
  %v416 = vunpack.c.h.b16 %v38
  %v417 = vunpack.c.l.b16 %v39
  %v418 = vunpack.c.h.b16 %v39
  %v419 = vunpack.c.l.b16 %v40
  %v420 = vunpack.c.h.b16 %v40
  %v421 = vunpack.c.l.b16 %v41
  %v422 = vunpack.c.h.b16 %v41
  %v423 = vunpack.c.l.b16 %v42
  %v424 = vunpack.c.h.b16 %v42
  %v425 = vunpack.c.l.b16 %v43
  %v426 = vunpack.c.h.b16 %v43
  %v427 = vunpack.c.l.b16 %v44
  %v428 = vunpack.c.h.b16 %v44
  %v429 = vunpack.c.l.b16 %v45
  %v430 = vunpack.c.h.b16 %v45
  %v431 = vunpack.c.l.b16 %v46
  %v432 = vunpack.c.h.b16 %v46
  %v433 = vunpack.c.l.b16 %v47
  %v434 = vunpack.c.h.b16 %v47
  %v435 = vunpack.c.l.b16 %v48
  %v436 = vunpack.c.h.b16 %v48
  %v437 = vunpack.c.l.b16 %v49
  %v438 = vunpack.c.h.b16 %v49
  %v439 = vunpack.c.l.b16 %v50
  %v440 = vunpack.c.h.b16 %v50
  %v441 = vunpack.c.l.b16 %v51
  %v442 = vunpack.c.h.b16 %v51
  %v443 = vunpack.c.l.b16 %v52
  %v444 = vunpack.c.h.b16 %v52
  %v445 = vunpack.c.l.b16 %v53
  %v446 = vunpack.c.h.b16 %v53
  %v447 = vunpack.c.l.b16 %v54
  %v448 = vunpack.c.h.b16 %v54
  %v449 = vunpack.c.l.b16 %v55
  %v450 = vunpack.c.h.b16 %v55
  %v451 = vunpack.c.l.b16 %v56
  %v452 = vunpack.c.h.b16 %v56
  %v453 = vunpack.c.l.b16 %v57
  %v454 = vunpack.c.h.b16 %v57
  %v455 = vunpack.c.l.b16 %v58
  %v456 = vunpack.c.h.b16 %v58
  %v457 = vunpack.c.l.b16 %v59
  %v458 = vunpack.c.h.b16 %v59
  %v459 = vunpack.c.l.b16 %v60
  %v460 = vunpack.c.h.b16 %v60
  %v461 = vunpack.c.l.b16 %v61
  %v462 = vunpack.c.h.b16 %v61
  %v463 = vunpack.c.l.b16 %v62
  %v464 = vunpack.c.h.b16 %v62
  %v465 = vunpack.c.l.b16 %v63
  %v466 = vunpack.c.h.b16 %v63
  %v467 = vunpack.c.l.b16 %v64
  %v468 = vunpack.c.h.b16 %v64
  %v469 = vunpack.c.l.b16 %v65
  %v470 = vunpack.c.h.b16 %v65
  %v471 = vunpack.c.l.b16 %v66
  %v472 = vunpack.c.h.b16 %v66
  %v473 = vunpack.c.l.b16 %v67
  %v474 = vunpack.c.h.b16 %v67
  %v475 = vunpack.c.l.b16 %v68
  %v476 = vunpack.c.h.b16 %v68
  %v477 = vunpack.c.l.b16 %v69
  %v478 = vunpack.c.h.b16 %v69
  %v479 = vunpack.c.l.b16 %v70
  %v480 = vunpack.c.h.b16 %v70
  %v481 = vunpack.c.l.b16 %v71
  %v482 = vunpack.c.h.b16 %v71
  %v483 = vunpack.c.l.b16 %v72
  %v484 = vunpack.c.h.b16 %v72
  %v485 = vunpack.c.l.b16 %v73
  %v486 = vunpack.c.h.b16 %v73
  %v487 = vunpack.c.l.b16 %v74
  %v488 = vunpack.c.h.b16 %v74
  %v489 = vunpack.c.l.b16 %v75
  %v490 = vunpack.c.h.b16 %v75
  %v491 = vunpack.c.l.b16 %v76
  %v492 = vunpack.c.h.b16 %v76
  %v493 = vunpack.c.l.b16 %v77
  %v494 = vunpack.c.h.b16 %v77
  %v495 = vunpack.c.l.b16 %v78
  %v496 = vunpack.c.h.b16 %v78
  %v497 = vunpack.c.l.b16 %v79
  %v498 = vunpack.c.h.b16 %v79
  %v499 = vunpack.c.l.b16 %v80
  %v500 = vunpack.c.h.b16 %v80
  %v501 = vunpack.c.l.b16 %v81
  %v502 = vunpack.c.h.b16 %v81
  %v503 = vunpack.c.l.b16 %v82
  %v504 = vunpack.c.h.b16 %v82
  %v505 = vunpack.c.l.b16 %v83
  %v506 = vunpack.c.h.b16 %v83
  %v507 = vunpack.c.l.b16 %v84
  %v508 = vunpack.c.h.b16 %v84
  %v509 = vunpack.c.l.b16 %v85
  %v510 = vunpack.c.h.b16 %v85
  %v511 = vunpack.c.l.b16 %v86
  %v512 = vunpack.c.h.b16 %v86
  %v513 = vunpack.c.l.b16 %v87
  %v514 = vunpack.c.h.b16 %v87
  %v515 = vunpack.c.l.b16 %v88
  %v516 = vunpack.c.h.b16 %v88
  %v517 = vunpack.c.l.b16 %v89
  %v518 = vunpack.c.h.b16 %v89
  %v519 = vunpack.c.l.b16 %v90
  %v520 = vunpack.c.h.b16 %v90
  %v521 = vunpack.c.l.b16 %v91
  %v522 = vunpack.c.h.b16 %v91
  %v523 = vunpack.c.l.b16 %v92
  %v524 = vunpack.c.h.b16 %v92
  %v525 = vunpack.c.l.b16 %v93
  %v526 = vunpack.c.h.b16 %v93
  %v527 = vunpack.c.l.b16 %v94
  %v528 = vunpack.c.h.b16 %v94
  %v529 = vunpack.c.l.b16 %v95
  %v530 = vunpack.c.h.b16 %v95
  %v531 = vunpack.c.l.b16 %v96
  %v532 = vunpack.c.h.b16 %v96
  %v533 = vunpack.c.l.b16 %v97
  %v534 = vunpack.c.h.b16 %v97
  %v535 = vunpack.c.l.b16 %v98
  %v536 = vunpack.c.h.b16 %v98
  %v537 = vunpack.c.l.b16 %v99
  %v538 = vunpack.c.h.b16 %v99
  %v539 = vunpack.c.l.b16 %v100
  %v540 = vunpack.c.h.b16 %v100
  %v541 = vunpack.c.l.b16 %v101
  %v542 = vunpack.c.h.b16 %v101
  %v543 = vunpack.c.l.b16 %v102
  %v544 = vunpack.c.h.b16 %v102
  %v545 = vunpack.c.l.b16 %v103
  %v546 = vunpack.c.h.b16 %v103
  %v547 = vunpack.c.l.b16 %v104
  %v548 = vunpack.c.h.b16 %v104
  %v549 = vunpack.c.l.b16 %v105
  %v550 = vunpack.c.h.b16 %v105
  %v551 = vunpack.c.l.b16 %v106
  %v552 = vunpack.c.h.b16 %v106
  %v553 = vunpack.c.l.b16 %v107
  %v554 = vunpack.c.h.b16 %v107
  %v555 = vunpack.c.l.b16 %v108
  %v556 = vunpack.c.h.b16 %v108
  %v557 = vunpack.c.l.b16 %v109
  %v558 = vunpack.c.h.b16 %v109
  %v559 = vunpack.c.l.b16 %v110
  %v560 = vunpack.c.h.b16 %v110
  %v561 = vunpack.c.l.b16 %v111
  %v562 = vunpack.c.h.b16 %v111
  %v563 = vunpack.c.l.b16 %v112
  %v564 = vunpack.c.h.b16 %v112
  %v565 = vunpack.c.l.b16 %v113
  %v566 = vunpack.c.h.b16 %v113
  %v567 = vunpack.c.l.b16 %v114
  %v568 = vunpack.c.h.b16 %v114
  %v569 = vunpack.c.l.b16 %v115
  %v570 = vunpack.c.h.b16 %v115
  %v571 = vunpack.c.l.b16 %v116
  %v572 = vunpack.c.h.b16 %v116
  %v573 = vunpack.c.l.b16 %v117
  %v574 = vunpack.c.h.b16 %v117
  %v575 = vunpack.c.l.b16 %v118
  %v576 = vunpack.c.h.b16 %v118
  %v577 = vunpack.c.l.b16 %v119
  %v578 = vunpack.c.h.b16 %v119
  %v579 = vunpack.c.l.b16 %v120
  %v580 = vunpack.c.h.b16 %v120
  %v581 = vunpack.c.l.b16 %v121
  %v582 = vunpack.c.h.b16 %v121
  %v583 = vunpack.c.l.b16 %v122
  %v584 = vunpack.c.h.b16 %v122
  %v585 = vunpack.c.l.b16 %v123
  %v586 = vunpack.c.h.b16 %v123
  %v587 = vunpack.c.l.b16 %v124
  %v588 = vunpack.c.h.b16 %v124
  %v589 = vunpack.c.l.b16 %v125
  %v590 = vunpack.c.h.b16 %v125
  %v591 = vunpack.c.l.b16 %v126
  %v592 = vunpack.c.h.b16 %v126
  %v593 = vunpack.c.l.b16 %v127
  %v594 = vunpack.c.h.b16 %v127
  %v595 = vunpack.c.l.b16 %v128
  %v596 = vunpack.c.h.b16 %v128
  %v597 = vunpack.c.l.b16 %v129
  %v598 = vunpack.c.h.b16 %v129
  %v599 = vunpack.c.l.b16 %v130
  %v600 = vunpack.c.h.b16 %v130
  %v601 = vunpack.c.l.b16 %v131
  %v602 = vunpack.c.h.b16 %v131
  %v603 = vunpack.c.l.b16 %v132
  %v604 = vunpack.c.h.b16 %v132
  %v605 = vunpack.c.l.b16 %v133
  %v606 = vunpack.c.h.b16 %v133
  %v607 = vunpack.c.l.b16 %v134
  %v608 = vunpack.c.h.b16 %v134
  %v609 = vunpack.c.l.b16 %v135
  %v610 = vunpack.c.h.b16 %v135
  %v611 = vunpack.c.l.b16 %v136
  %v612 = vunpack.c.h.b16 %v136
  %v613 = vunpack.c.l.b16 %v137
  %v614 = vunpack.c.h.b16 %v137
  %v615 = vunpack.c.l.b16 %v138
  %v616 = vunpack.c.h.b16 %v138
  %v617 = vunpack.c.l.b16 %v139
  %v618 = vunpack.c.h.b16 %v139
  %v619 = vunpack.c.l.b16 %v140
  %v620 = vunpack.c.h.b16 %v140
  %v621 = vunpack.c.l.b16 %v141
  %v622 = vunpack.c.h.b16 %v141
  %v623 = vunpack.c.l.b16 %v142
  %v624 = vunpack.c.h.b16 %v142
  %v625 = vunpack.c.l.b16 %v143
  %v626 = vunpack.c.h.b16 %v143
  %v627 = vunpack.c.l.b16 %v144
  %v628 = vunpack.c.h.b16 %v144
  %v629 = vunpack.c.l.b16 %v145
  %v630 = vunpack.c.h.b16 %v145
  %v631 = vunpack.c.l.b16 %v146
  %v632 = vunpack.c.h.b16 %v146
  %v633 = vunpack.c.l.b16 %v147
  %v634 = vunpack.c.h.b16 %v147
  %v635 = vunpack.c.l.b16 %v148
  %v636 = vunpack.c.h.b16 %v148
  %v637 = vunpack.c.l.b16 %v149
  %v638 = vunpack.c.h.b16 %v149
  %v639 = vunpack.c.l.b16 %v150
  %v640 = vunpack.c.h.b16 %v150
  %v641 = vunpack.c.l.b16 %v151
  %v642 = vunpack.c.h.b16 %v151
  %v643 = vunpack.c.l.b16 %v152
  %v644 = vunpack.c.h.b16 %v152
  %v645 = vunpack.c.l.b16 %v153
  %v646 = vunpack.c.h.b16 %v153
  %v647 = vunpack.c.l.b16 %v154
  %v648 = vunpack.c.h.b16 %v154
  %v649 = vunpack.c.l.b16 %v155
  %v650 = vunpack.c.h.b16 %v155
  %v651 = vunpack.c.l.b16 %v156
  %v652 = vunpack.c.h.b16 %v156
  %v653 = vunpack.c.l.b16 %v157
  %v654 = vunpack.c.h.b16 %v157
  %v655 = vunpack.c.l.b16 %v158
  %v656 = vunpack.c.h.b16 %v158
  %v657 = vunpack.c.l.b16 %v159
  %v658 = vunpack.c.h.b16 %v159
  %v659 = vunpack.c.l.b16 %v160
  %v660 = vunpack.c.h.b16 %v160
  %v661 = vunpack.c.l.b16 %v161
  %v662 = vunpack.c.h.b16 %v161
  %v663 = vunpack.c.l.b16 %v162
  %v664 = vunpack.c.h.b16 %v162
  %v665 = vunpack.c.l.b16 %v163
  %v666 = vunpack.c.h.b16 %v163
  %v667 = vunpack.c.l.b16 %v164
  %v668 = vunpack.c.h.b16 %v164
  %v669 = vpack.c.b16 %v415, %v413
  %v670 = vpack.c.b16 %v416, %v414
  %v671 = vpack.c.b16 %v419, %v417
  %v672 = vpack.c.b16 %v420, %v418
  %v673 = vpack.c.b16 %v423, %v421
  %v674 = vpack.c.b16 %v424, %v422
  %v675 = vpack.c.b16 %v427, %v425
  %v676 = vpack.c.b16 %v428, %v426
  %v677 = vpack.c.b16 %v431, %v429
  %v678 = vpack.c.b16 %v432, %v430
  %v679 = vpack.c.b16 %v435, %v433
  %v680 = vpack.c.b16 %v436, %v434
  %v681 = vpack.c.b16 %v439, %v437
  %v682 = vpack.c.b16 %v440, %v438
  %v683 = vpack.c.b16 %v443, %v441
  %v684 = vpack.c.b16 %v444, %v442
  %v685 = vpack.c.b16 %v447, %v445
  %v686 = vpack.c.b16 %v448, %v446
  %v687 = vpack.c.b16 %v451, %v449
  %v688 = vpack.c.b16 %v452, %v450
  %v689 = vpack.c.b16 %v455, %v453
  %v690 = vpack.c.b16 %v456, %v454
  %v691 = vpack.c.b16 %v459, %v457
  %v692 = vpack.c.b16 %v460, %v458
  %v693 = vpack.c.b16 %v463, %v461
  %v694 = vpack.c.b16 %v464, %v462
  %v695 = vpack.c.b16 %v467, %v465
  %v696 = vpack.c.b16 %v468, %v466
  %v697 = vpack.c.b16 %v471, %v469
  %v698 = vpack.c.b16 %v472, %v470
  %v699 = vpack.c.b16 %v475, %v473
  %v700 = vpack.c.b16 %v476, %v474
  %v701 = vpack.c.b16 %v479, %v477
  %v702 = vpack.c.b16 %v480, %v478
  %v703 = vpack.c.b16 %v483, %v481
  %v704 = vpack.c.b16 %v484, %v482
  %v705 = vpack.c.b16 %v487, %v485
  %v706 = vpack.c.b16 %v488, %v486
  %v707 = vpack.c.b16 %v491, %v489
  %v708 = vpack.c.b16 %v492, %v490
  %v709 = vpack.c.b16 %v495, %v493
  %v710 = vpack.c.b16 %v496, %v494
  %v711 = vpack.c.b16 %v499, %v497
  %v712 = vpack.c.b16 %v500, %v498
  %v713 = vpack.c.b16 %v503, %v501
  %v714 = vpack.c.b16 %v504, %v502
  %v715 = vpack.c.b16 %v507, %v505
  %v716 = vpack.c.b16 %v508, %v506
  %v717 = vpack.c.b16 %v511, %v509
  %v718 = vpack.c.b16 %v512, %v510
  %v719 = vpack.c.b16 %v515, %v513
  %v720 = vpack.c.b16 %v516, %v514
  %v721 = vpack.c.b16 %v519, %v517
  %v722 = vpack.c.b16 %v520, %v518
  %v723 = vpack.c.b16 %v523, %v521
  %v724 = vpack.c.b16 %v524, %v522
  %v725 = vpack.c.b16 %v527, %v525
  %v726 = vpack.c.b16 %v528, %v526
  %v727 = vpack.c.b16 %v531, %v529
  %v728 = vpack.c.b16 %v532, %v530
  %v729 = vpack.c.b16 %v535, %v533
  %v730 = vpack.c.b16 %v536, %v534
  %v731 = vpack.c.b16 %v539, %v537
  %v732 = vpack.c.b16 %v540, %v538
  %v733 = vpack.c.b16 %v543, %v541
  %v734 = vpack.c.b16 %v544, %v542
  %v735 = vpack.c.b16 %v547, %v545
  %v736 = vpack.c.b16 %v548, %v546
  %v737 = vpack.c.b16 %v551, %v549
  %v738 = vpack.c.b16 %v552, %v550
  %v739 = vpack.c.b16 %v555, %v553
  %v740 = vpack.c.b16 %v556, %v554
  %v741 = vpack.c.b16 %v559, %v557
  %v742 = vpack.c.b16 %v560, %v558
  %v743 = vpack.c.b16 %v563, %v561
  %v744 = vpack.c.b16 %v564, %v562
  %v745 = vpack.c.b16 %v567, %v565
  %v746 = vpack.c.b16 %v568, %v566
  %v747 = vpack.c.b16 %v571, %v569
  %v748 = vpack.c.b16 %v572, %v570
  %v749 = vpack.c.b16 %v575, %v573
  %v750 = vpack.c.b16 %v576, %v574
  %v751 = vpack.c.b16 %v579, %v577
  %v752 = vpack.c.b16 %v580, %v578
  %v753 = vpack.c.b16 %v583, %v581
  %v754 = vpack.c.b16 %v584, %v582
  %v755 = vpack.c.b16 %v587, %v585
  %v756 = vpack.c.b16 %v588, %v586
  %v757 = vpack.c.b16 %v591, %v589
  %v758 = vpack.c.b16 %v592, %v590
  %v759 = vpack.c.b16 %v595, %v593
  %v760 = vpack.c.b16 %v596, %v594
  %v761 = vpack.c.b16 %v599, %v597
  %v762 = vpack.c.b16 %v600, %v598
  %v763 = vpack.c.b16 %v603, %v601
  %v764 = vpack.c.b16 %v604, %v602
  %v765 = vpack.c.b16 %v607, %v605
  %v766 = vpack.c.b16 %v608, %v606
  %v767 = vpack.c.b16 %v611, %v609
  %v768 = vpack.c.b16 %v612, %v610
  %v769 = vpack.c.b16 %v615, %v613
  %v770 = vpack.c.b16 %v616, %v614
  %v771 = vpack.c.b16 %v619, %v617
  %v772 = vpack.c.b16 %v620, %v618
  %v773 = vpack.c.b16 %v623, %v621
  %v774 = vpack.c.b16 %v624, %v622
  %v775 = vpack.c.b16 %v627, %v625
  %v776 = vpack.c.b16 %v628, %v626
  %v777 = vpack.c.b16 %v631, %v629
  %v778 = vpack.c.b16 %v632, %v630
  %v779 = vpack.c.b16 %v635, %v633
  %v780 = vpack.c.b16 %v636, %v634
  %v781 = vpack.c.b16 %v639, %v637
  %v782 = vpack.c.b16 %v640, %v638
  %v783 = vpack.c.b16 %v643, %v641
  %v784 = vpack.c.b16 %v644, %v642
  %v785 = vpack.c.b16 %v647, %v645
  %v786 = vpack.c.b16 %v648, %v646
  %v787 = vpack.c.b16 %v651, %v649
  %v788 = vpack.c.b16 %v652, %v650
  %v789 = vpack.c.b16 %v655, %v653
  %v790 = vpack.c.b16 %v656, %v654
  %v791 = vpack.c.b16 %v659, %v657
  %v792 = vpack.c.b16 %v660, %v658
  %v793 = vpack.c.b16 %v663, %v661
  %v794 = vpack.c.b16 %v664, %v662
  %v795 = vpack.c.b16 %v667, %v665
  %v796 = vpack.c.b16 %v668, %v666
  %925 = vmatprep.subr.bf16.mxu0 %v684
  %926 = vmatpush1.bf16.msra.mxu0 %v683
  %927 = vmatprep.subr.bf16.mxu0 %v682
  %928 = vmatpush1.bf16.msra.mxu0 %v681
  %929 = vmatprep.subr.bf16.mxu0 %v680
  %930 = vmatpush1.bf16.msra.mxu0 %v679
  %931 = vmatprep.subr.bf16.mxu0 %v678
  %932 = vmatpush1.bf16.msra.mxu0 %v677
  %933 = vmatprep.subr.bf16.mxu0 %v676
  %934 = vmatpush1.bf16.msra.mxu0 %v675
  %935 = vmatprep.subr.bf16.mxu0 %v674
  %936 = vmatpush1.bf16.msra.mxu0 %v673
  %937 = vmatprep.subr.bf16.mxu0 %v672
  %938 = vmatpush1.bf16.msra.mxu0 %v671
  %939 = vmatprep.subr.bf16.mxu0 %v670
  %940 = vmatpush1.bf16.msra.mxu0 %v669
  %941 = vmatprep.subr.bf16.mxu0 %v700
  %942 = vmatpush2.bf16.msra.mxu0 %v699
  %943 = vmatprep.subr.bf16.mxu0 %v698
  %944 = vmatpush2.bf16.msra.mxu0 %v697
  %945 = vmatprep.subr.bf16.mxu0 %v696
  %946 = vmatpush2.bf16.msra.mxu0 %v695
  %947 = vmatprep.subr.bf16.mxu0 %v694
  %948 = vmatpush2.bf16.msra.mxu0 %v693
  %949 = vmatprep.subr.bf16.mxu0 %v692
  %950 = vmatpush2.bf16.msra.mxu0 %v691
  %951 = vmatprep.subr.bf16.mxu0 %v690
  %952 = vmatpush2.bf16.msra.mxu0 %v689
  %953 = vmatprep.subr.bf16.mxu0 %v688
  %954 = vmatpush2.bf16.msra.mxu0 %v687
  %955 = vmatprep.subr.bf16.mxu0 %v686
  %956 = vmatpush2.bf16.msra.mxu0 %v685
  %957 = vmatprep.mubr.bf16.mxu0 %v238
  %958 = vmatmul.mubr.bf16.gmra.mxu0 %v237
  %v959 = vpop.f32.mrf.mxu0
  %v960 = vadd.f32 %v170, %v959
  %v961 = vpop.f32.mrf.mxu0
  %v962 = vadd.f32 %v174, %v961
  %v963 = vpop.f32.mrf.mxu0
  %v964 = vadd.f32 %v170, %v963
  %v965 = vpop.f32.mrf.mxu0
  %v966 = vadd.f32 %v174, %v965
  %967 = vmatprep.mubr.bf16.mxu0 %v246
  %968 = vmatmul.mubr.bf16.gmra.mxu0 %v245
  %v969 = vpop.f32.mrf.mxu0
  %v970 = vadd.f32 %v170, %v969
  %v971 = vpop.f32.mrf.mxu0
  %v972 = vadd.f32 %v174, %v971
  %v973 = vpop.f32.mrf.mxu0
  %v974 = vadd.f32 %v170, %v973
  %v975 = vpop.f32.mrf.mxu0
  %v976 = vadd.f32 %v174, %v975
  %977 = vmatprep.mubr.bf16.mxu0 %v254
  %978 = vmatmul.mubr.bf16.gmra.mxu0 %v253
  %v979 = vpop.f32.mrf.mxu0
  %v980 = vadd.f32 %v170, %v979
  %v981 = vpop.f32.mrf.mxu0
  %v982 = vadd.f32 %v174, %v981
  %v983 = vpop.f32.mrf.mxu0
  %v984 = vpop.f32.mrf.mxu0
  %985 = vdwg.mxu0
  %986 = vmatprep.subr.bf16.mxu0 %v716
  %987 = vmatpush1.bf16.msra.mxu0 %v715
  %988 = vmatprep.subr.bf16.mxu0 %v714
  %989 = vmatpush1.bf16.msra.mxu0 %v713
  %990 = vmatprep.subr.bf16.mxu0 %v712
  %991 = vmatpush1.bf16.msra.mxu0 %v711
  %992 = vmatprep.subr.bf16.mxu0 %v710
  %993 = vmatpush1.bf16.msra.mxu0 %v709
  %994 = vmatprep.subr.bf16.mxu0 %v708
  %995 = vmatpush1.bf16.msra.mxu0 %v707
  %996 = vmatprep.subr.bf16.mxu0 %v706
  %997 = vmatpush1.bf16.msra.mxu0 %v705
  %998 = vmatprep.subr.bf16.mxu0 %v704
  %999 = vmatpush1.bf16.msra.mxu0 %v703
  %1000 = vmatprep.subr.bf16.mxu0 %v702
  %1001 = vmatpush1.bf16.msra.mxu0 %v701
  %1002 = vmatprep.subr.bf16.mxu0 %v732
  %1003 = vmatpush2.bf16.msra.mxu0 %v731
  %1004 = vmatprep.subr.bf16.mxu0 %v730
  %1005 = vmatpush2.bf16.msra.mxu0 %v729
  %1006 = vmatprep.subr.bf16.mxu0 %v728
  %1007 = vmatpush2.bf16.msra.mxu0 %v727
  %1008 = vmatprep.subr.bf16.mxu0 %v726
  %1009 = vmatpush2.bf16.msra.mxu0 %v725
  %1010 = vmatprep.subr.bf16.mxu0 %v724
  %1011 = vmatpush2.bf16.msra.mxu0 %v723
  %1012 = vmatprep.subr.bf16.mxu0 %v722
  %1013 = vmatpush2.bf16.msra.mxu0 %v721
  %1014 = vmatprep.subr.bf16.mxu0 %v720
  %1015 = vmatpush2.bf16.msra.mxu0 %v719
  %1016 = vmatprep.subr.bf16.mxu0 %v718
  %1017 = vmatpush2.bf16.msra.mxu0 %v717
  %1018 = vmatprep.mubr.bf16.mxu0 %v240
  %1019 = vmatmul.mubr.bf16.gmra.mxu0 %v239
  %v1020 = vpop.f32.mrf.mxu0
  %v1021 = vadd.f32 %v960, %v1020
  %v1022 = vpop.f32.mrf.mxu0
  %v1023 = vadd.f32 %v962, %v1022
  %v1024 = vpop.f32.mrf.mxu0
  %v1025 = vadd.f32 %v964, %v1024
  %v1026 = vpop.f32.mrf.mxu0
  %v1027 = vadd.f32 %v966, %v1026
  %1028 = vmatprep.mubr.bf16.mxu0 %v248
  %1029 = vmatmul.mubr.bf16.gmra.mxu0 %v247
  %v1030 = vpop.f32.mrf.mxu0
  %v1031 = vadd.f32 %v970, %v1030
  %v1032 = vpop.f32.mrf.mxu0
  %v1033 = vadd.f32 %v972, %v1032
  %v1034 = vpop.f32.mrf.mxu0
  %v1035 = vadd.f32 %v974, %v1034
  %v1036 = vpop.f32.mrf.mxu0
  %v1037 = vadd.f32 %v976, %v1036
  %1038 = vmatprep.mubr.bf16.mxu0 %v256
  %1039 = vmatmul.mubr.bf16.gmra.mxu0 %v255
  %v1040 = vpop.f32.mrf.mxu0
  %v1041 = vadd.f32 %v980, %v1040
  %v1042 = vpop.f32.mrf.mxu0
  %v1043 = vadd.f32 %v982, %v1042
  %v1044 = vpop.f32.mrf.mxu0
  %v1045 = vpop.f32.mrf.mxu0
  %1046 = vdwg.mxu0
  %1047 = vmatprep.subr.bf16.mxu0 %v748
  %1048 = vmatpush1.bf16.msra.mxu0 %v747
  %1049 = vmatprep.subr.bf16.mxu0 %v746
  %1050 = vmatpush1.bf16.msra.mxu0 %v745
  %1051 = vmatprep.subr.bf16.mxu0 %v744
  %1052 = vmatpush1.bf16.msra.mxu0 %v743
  %1053 = vmatprep.subr.bf16.mxu0 %v742
  %1054 = vmatpush1.bf16.msra.mxu0 %v741
  %1055 = vmatprep.subr.bf16.mxu0 %v740
  %1056 = vmatpush1.bf16.msra.mxu0 %v739
  %1057 = vmatprep.subr.bf16.mxu0 %v738
  %1058 = vmatpush1.bf16.msra.mxu0 %v737
  %1059 = vmatprep.subr.bf16.mxu0 %v736
  %1060 = vmatpush1.bf16.msra.mxu0 %v735
  %1061 = vmatprep.subr.bf16.mxu0 %v734
  %1062 = vmatpush1.bf16.msra.mxu0 %v733
  %1063 = vmatprep.subr.bf16.mxu0 %v764
  %1064 = vmatpush2.bf16.msra.mxu0 %v763
  %1065 = vmatprep.subr.bf16.mxu0 %v762
  %1066 = vmatpush2.bf16.msra.mxu0 %v761
  %1067 = vmatprep.subr.bf16.mxu0 %v760
  %1068 = vmatpush2.bf16.msra.mxu0 %v759
  %1069 = vmatprep.subr.bf16.mxu0 %v758
  %1070 = vmatpush2.bf16.msra.mxu0 %v757
  %1071 = vmatprep.subr.bf16.mxu0 %v756
  %1072 = vmatpush2.bf16.msra.mxu0 %v755
  %1073 = vmatprep.subr.bf16.mxu0 %v754
  %1074 = vmatpush2.bf16.msra.mxu0 %v753
  %1075 = vmatprep.subr.bf16.mxu0 %v752
  %1076 = vmatpush2.bf16.msra.mxu0 %v751
  %1077 = vmatprep.subr.bf16.mxu0 %v750
  %1078 = vmatpush2.bf16.msra.mxu0 %v749
  %1079 = vmatprep.mubr.bf16.mxu0 %v242
  %1080 = vmatmul.mubr.bf16.gmra.mxu0 %v241
  %v1081 = vpop.f32.mrf.mxu0
  %v1082 = vadd.f32 %v1021, %v1081
  %v1083 = vpop.f32.mrf.mxu0
  %v1084 = vadd.f32 %v1023, %v1083
  %v1085 = vpop.f32.mrf.mxu0
  %v1086 = vadd.f32 %v1025, %v1085
  %v1087 = vpop.f32.mrf.mxu0
  %v1088 = vadd.f32 %v1027, %v1087
  %1089 = vmatprep.mubr.bf16.mxu0 %v250
  %1090 = vmatmul.mubr.bf16.gmra.mxu0 %v249
  %v1091 = vpop.f32.mrf.mxu0
  %v1092 = vadd.f32 %v1031, %v1091
  %v1093 = vpop.f32.mrf.mxu0
  %v1094 = vadd.f32 %v1033, %v1093
  %v1095 = vpop.f32.mrf.mxu0
  %v1096 = vadd.f32 %v1035, %v1095
  %v1097 = vpop.f32.mrf.mxu0
  %v1098 = vadd.f32 %v1037, %v1097
  %1099 = vmatprep.mubr.bf16.mxu0 %v258
  %1100 = vmatmul.mubr.bf16.gmra.mxu0 %v257
  %v1101 = vpop.f32.mrf.mxu0
  %v1102 = vadd.f32 %v1041, %v1101
  %v1103 = vpop.f32.mrf.mxu0
  %v1104 = vadd.f32 %v1043, %v1103
  %v1105 = vpop.f32.mrf.mxu0
  %v1106 = vpop.f32.mrf.mxu0
  %1107 = vdwg.mxu0
  %1108 = vmatprep.subr.bf16.mxu0 %v780
  %1109 = vmatpush1.bf16.msra.mxu0 %v779
  %1110 = vmatprep.subr.bf16.mxu0 %v778
  %1111 = vmatpush1.bf16.msra.mxu0 %v777
  %1112 = vmatprep.subr.bf16.mxu0 %v776
  %1113 = vmatpush1.bf16.msra.mxu0 %v775
  %1114 = vmatprep.subr.bf16.mxu0 %v774
  %1115 = vmatpush1.bf16.msra.mxu0 %v773
  %1116 = vmatprep.subr.bf16.mxu0 %v772
  %1117 = vmatpush1.bf16.msra.mxu0 %v771
  %1118 = vmatprep.subr.bf16.mxu0 %v770
  %1119 = vmatpush1.bf16.msra.mxu0 %v769
  %1120 = vmatprep.subr.bf16.mxu0 %v768
  %1121 = vmatpush1.bf16.msra.mxu0 %v767
  %1122 = vmatprep.subr.bf16.mxu0 %v766
  %1123 = vmatpush1.bf16.msra.mxu0 %v765
  %1124 = vmatprep.subr.bf16.mxu0 %v796
  %1125 = vmatpush2.bf16.msra.mxu0 %v795
  %1126 = vmatprep.subr.bf16.mxu0 %v794
  %1127 = vmatpush2.bf16.msra.mxu0 %v793
  %1128 = vmatprep.subr.bf16.mxu0 %v792
  %1129 = vmatpush2.bf16.msra.mxu0 %v791
  %1130 = vmatprep.subr.bf16.mxu0 %v790
  %1131 = vmatpush2.bf16.msra.mxu0 %v789
  %1132 = vmatprep.subr.bf16.mxu0 %v788
  %1133 = vmatpush2.bf16.msra.mxu0 %v787
  %1134 = vmatprep.subr.bf16.mxu0 %v786
  %1135 = vmatpush2.bf16.msra.mxu0 %v785
  %1136 = vmatprep.subr.bf16.mxu0 %v784
  %1137 = vmatpush2.bf16.msra.mxu0 %v783
  %1138 = vmatprep.subr.bf16.mxu0 %v782
  %1139 = vmatpush2.bf16.msra.mxu0 %v781
  %1140 = vmatprep.mubr.bf16.mxu0 %v244
  %1141 = vmatmul.mubr.bf16.gmra.mxu0 %v243
  %v1142 = vpop.f32.mrf.mxu0
  %v1143 = vadd.f32 %v1082, %v1142
  %v1144 = vpop.f32.mrf.mxu0
  %v1145 = vadd.f32 %v1084, %v1144
  %v1146 = vpop.f32.mrf.mxu0
  %v1147 = vadd.f32 %v1086, %v1146
  %v1148 = vpop.f32.mrf.mxu0
  %v1149 = vadd.f32 %v1088, %v1148
  %1150 = vmatprep.mubr.bf16.mxu0 %v252
  %1151 = vmatmul.mubr.bf16.gmra.mxu0 %v251
  %v1152 = vpop.f32.mrf.mxu0
  %v1153 = vadd.f32 %v1092, %v1152
  %v1154 = vpop.f32.mrf.mxu0
  %v1155 = vadd.f32 %v1094, %v1154
  %v1156 = vpop.f32.mrf.mxu0
  %v1157 = vadd.f32 %v1096, %v1156
  %v1158 = vpop.f32.mrf.mxu0
  %v1159 = vadd.f32 %v1098, %v1158
  %1160 = vmatprep.mubr.bf16.mxu0 %v260
  %1161 = vmatmul.mubr.bf16.gmra.mxu0 %v259
  %v1162 = vpop.f32.mrf.mxu0
  %v1163 = vadd.f32 %v1102, %v1162
  %v1164 = vpop.f32.mrf.mxu0
  %v1165 = vadd.f32 %v1104, %v1164
  %v1166 = vpop.f32.mrf.mxu0
  %v1167 = vpop.f32.mrf.mxu0
  %1168 = vdwg.mxu0
  %v1169 = vld [vmem:[%s3] sm:$0xff]
  %v1170 = vld [vmem:[%s3 + $0x8] sm:$0xff]
  %v1171 = vld [vmem:[%s3 + $0x10] sm:$0xff]
  %v1172 = vld [vmem:[%s3 + $0x18] sm:$0xff]
  %v1173 = vld [vmem:[%s3 + $0x20] sm:$0x11]
  %v1174 = vunpack.c.l.bf16 %v1169
  %v1175 = vunpack.c.h.bf16 %v1169
  %v1176 = vunpack.c.l.bf16 %v1170
  %v1177 = vunpack.c.h.bf16 %v1170
  %v1178 = vunpack.c.l.bf16 %v1171
  %v1179 = vunpack.c.h.bf16 %v1171
  %v1180 = vunpack.c.l.bf16 %v1172
  %v1181 = vunpack.c.h.bf16 %v1172
  %v1182 = vunpack.c.l.bf16 %v1173
  %v1183 = vunpack.c.h.bf16 %v1173
  %v1184 = vadd.f32 %v1143, %v1174
  %v1185 = vadd.f32 %v1145, %v1175
  %v1186 = vadd.f32 %v1147, %v1176
  %v1187 = vadd.f32 %v1149, %v1177
  %v1188 = vadd.f32 %v1153, %v1178
  %v1189 = vadd.f32 %v1155, %v1179
  %v1190 = vadd.f32 %v1157, %v1180
  %v1191 = vadd.f32 %v1159, %v1181
  %v1192 = vadd.f32 %v1163, %v1182
  %v1193 = vadd.f32 %v1165, %v1183
  %v1194 = vpack.c.bf16 %v1186, %v1184
  %v1195 = vpack.c.bf16 %v1187, %v1185
  %v1196 = vpack.c.bf16 %v1190, %v1188
  %v1197 = vpack.c.bf16 %v1191, %v1189
  %v1198 = vpack.c.bf16 %v1192, %v1192
  %v1199 = vpack.c.bf16 %v1193, %v1193
  %v1206 = vunpack.c.l.b16 %v1194
  %v1207 = vunpack.c.l.b16 %v1195
  %v1208 = vunpack.c.h.b16 %v1194
  %v1209 = vunpack.c.h.b16 %v1195
  %v1210 = vunpack.c.l.b16 %v1196
  %v1211 = vunpack.c.l.b16 %v1197
  %v1212 = vunpack.c.h.b16 %v1196
  %v1213 = vunpack.c.h.b16 %v1197
  %v1214 = vunpack.c.l.b16 %v1198
  %v1215 = vunpack.c.l.b16 %v1199
  %v1216 = vpack.c.b16 %v1207, %v1206
  %v1217 = vpack.c.b16 %v1209, %v1208
  %v1218 = vpack.c.b16 %v1211, %v1210
  %v1219 = vpack.c.b16 %v1213, %v1212
  %v1220 = vpack.c.b16 %v1215, %v1214
  %1226 = vst [vmem:[%s4] sm:$0xff] %v1216
  %1227 = vst [vmem:[%s4 + $0x8] sm:$0xff] %v1217
  %1228 = vst [vmem:[%s4 + $0x10] sm:$0xff] %v1218
  %1229 = vst [vmem:[%s4 + $0x18] sm:$0xff] %v1219
  %1230 = vst [vmem:[%s4 + $0x20] sm:$0x11] %v1220
  // Predicated region
  $region18: #{_lambda_.27} parent=0 // pred_check
    _
  $region19: #{_lambda_.27} parent=0 // pred_check_branch
    %1232 = sbr.rel (0) target = $region21
  $region20: #{_lambda_.27} parent=0 // pred_region
    _
  $region21: #{_lambda_.27} parent=0 // pred_fallthru
    _
  // Predicated region
  $region22: #{_lambda_.27} parent=0 // pred_check
    _
  $region23: #{_lambda_.27} parent=0 // pred_check_branch
    %1234 = sbr.rel (0) target = $region25
  $region24: #{_lambda_.27} parent=0 // pred_region
    _
  $region25: #{_lambda_.27} parent=0 // pred_fallthru
    _

// kernel: _lambda_.43
$region0: #{_lambda_.43}
  #allocation0 [shape = 'u32[]', space=smem, size = 0x4, offset = 0x4, fixed_abs, tag = 'smem constant byte address 0x4 - core index']
  #allocation1 [shape = 'u32[144,128]{1,0:T(1,128)}', space=vmem, size = 0x12000, scoped, tag = 'internal scratch']
  %s0 = inlined_call_operand.vmem [shape: bf16[2,256], index: 0, kind: input, shape index: {}]
  %s1 = inlined_call_operand.vmem [shape: f32[1,256], index: 1, kind: input, shape index: {}]
  %s2 = inlined_call_operand.vmem [shape: f32[1,256], index: 2, kind: input, shape index: {}]
  %s3 = inlined_call_operand.vmem [shape: bf16[256,10], index: 3, kind: input, shape index: {}]
  %s4 = inlined_call_operand.vmem [shape: f32[1,10], index: 4, kind: input, shape index: {}]
  %s5 = inlined_call_operand.hbm [shape: f32[2,10], index: 5, kind: output, shape index: {}]
  %s6 = sld [smem:[#allocation0]]
  $region30: #{_lambda_.43} parent=0
    _
  %s8 = ssub.s32 1, %s6
  %s9 = scalar_select 0, %s8, %s6
  $region1: #{_lambda_.43} parent=0
    #allocation2 [shape = 'u8[1024]{0}', space=vmem, size = 0x400, scoped, tag = 'output window, operand 0, single buffered']
    #allocation3 [shape = 's32[1]{0}', space=sflag, size = 0x4, scoped, tag = 'scoped memory for _lambda_.43']
    %10 = vsyncpa [#allocation3], 0
    // Predicated region
    $region2: #{_lambda_.43} parent=1 // pred_check
      _
    $region3: #{_lambda_.43} parent=1 // pred_check_branch
      %12 = sbr.rel (0) target = $region5
    $region4: #{_lambda_.43} parent=1 // pred_region
      _
    $region5: #{_lambda_.43} parent=1 // pred_fallthru
      _
    // Predicated region
    $region6: #{_lambda_.43} parent=1 // pred_check
      _
    $region7: #{_lambda_.43} parent=1 // pred_check_branch
      %14 = sbr.rel (0) target = $region9
    $region8: #{_lambda_.43} parent=1 // pred_region
      _
    $region9: #{_lambda_.43} parent=1 // pred_fallthru
      _
    // Predicated region
    $region10: #{_lambda_.43} parent=1 // pred_check
      _
    $region11: #{_lambda_.43} parent=1 // pred_check_branch
      %16 = sbr.rel (0) target = $region13
    $region12: #{_lambda_.43} parent=1 // pred_region
      _
    $region13: #{_lambda_.43} parent=1 // pred_fallthru
      _
    // Predicated region
    $region14: #{_lambda_.43} parent=1 // pred_check
      _
    $region15: #{_lambda_.43} parent=1 // pred_check_branch
      %18 = sbr.rel (0) target = $region17
    $region16: #{_lambda_.43} parent=1 // pred_region
      _
    $region17: #{_lambda_.43} parent=1 // pred_fallthru
      _
    // Predicated region
    $region18: #{_lambda_.43} parent=1 // pred_check
      _
    $region19: #{_lambda_.43} parent=1 // pred_check_branch
      %20 = sbr.rel (0) target = $region21
    $region20: #{_lambda_.43} parent=1 // pred_region
      _
    $region21: #{_lambda_.43} parent=1 // pred_fallthru
      _
    %v22 = vld [vmem:[%s0] sm:$0x3]
    %v23 = vunpack.c.l.bf16 %v22
    %v26 = vunpack.c.l.s4 1983009808
    %v27 = vunpack.c.0.s8 %v26
    %v28 = vlaneseq
    %v29 = vshrl.u32 %v28, 7
    %v30 = vsub.s32 %v27, %v29
    %v31 = vrot.slane %v23, %v30
    %v32 = vcombine.high %v31, %v31
    %vm35 = vcmask 1041408
    %v36 = vsel %vm35, %v31, 0.0
    %v37 = vsel %vm35, %v32, 0.0
    %v38 = vadd.f32 %v36, %v37
    %39 = vadd.xlane.f32.xlu0 %v38
    %v40 = vpop.xlane.xlu0 %39
    %v41 = vrcp.pop 256.0
    %v42 = vmul.f32 %v40, %v41
    %v45 = vunpack.c.l.s4 269488144
    %v46 = vunpack.c.0.s8 %v45
    %v47 = vlaneseq
    %v48 = vshrl.u32 %v47, 7
    %v49 = vsub.s32 %v46, %v48
    %v50 = vrot.slane %v42, %v49
    %v52 = vsub.f32 %v23, %v50
    %v53 = vmul.f32 %v52, %v52
    %v56 = vunpack.c.l.s4 1983009808
    %v57 = vunpack.c.0.s8 %v56
    %v58 = vlaneseq
    %v59 = vshrl.u32 %v58, 7
    %v60 = vsub.s32 %v57, %v59
    %v61 = vrot.slane %v53, %v60
    %v62 = vcombine.high %v61, %v61
    %v65 = vsel %vm35, %v61, 0.0
    %v66 = vsel %vm35, %v62, 0.0
    %v67 = vadd.f32 %v65, %v66
    %68 = vadd.xlane.f32.xlu0 %v67
    %v69 = vpop.xlane.xlu0 %68
    %v70 = vmul.f32 %v69, %v41
    %v71 = vadd.f32 %v70, 1e-06
    %v72 = vrsqrt.pop %v71
    %v75 = vunpack.c.l.s4 269488144
    %v76 = vunpack.c.0.s8 %v75
    %v77 = vlaneseq
    %v78 = vshrl.u32 %v77, 7
    %v79 = vsub.s32 %v76, %v78
    %v80 = vrot.slane %v72, %v79
    %v82 = vmul.f32 %v52, %v80
    %v83 = vld [vmem:[%s1] sm:$0x3]
    %v85 = vlaneseq
    %v86 = vshrl.u32 %v85, 7
    %v87 = vsub.s32 0, %v86
    %v88 = vrot.slane %v83, %v87
    %v89 = vlaneseq
    %v90 = vshrl.u32 %v89, 7
    %v91 = vsub.s32 1, %v90
    %v92 = vrot.slane %v83, %v91
    %v93 = vcombine.low %v88, %v92
    %v95 = vunpack.c.l.s4 1983009808
    %v96 = vunpack.c.0.s8 %v95
    %v97 = vlaneseq
    %v98 = vshrl.u32 %v97, 7
    %v99 = vsub.s32 %v96, %v98
    %v100 = vrot.slane %v93, %v99
    %v102 = vmul.f32 %v82, %v100
    %v103 = vld [vmem:[%s2] sm:$0x3]
    %v105 = vlaneseq
    %v106 = vshrl.u32 %v105, 7
    %v107 = vsub.s32 0, %v106
    %v108 = vrot.slane %v103, %v107
    %v109 = vlaneseq
    %v110 = vshrl.u32 %v109, 7
    %v111 = vsub.s32 1, %v110
    %v112 = vrot.slane %v103, %v111
    %v113 = vcombine.low %v108, %v112
    %v115 = vunpack.c.l.s4 1983009808
    %v116 = vunpack.c.0.s8 %v115
    %v117 = vlaneseq
    %v118 = vshrl.u32 %v117, 7
    %v119 = vsub.s32 %v116, %v118
    %v120 = vrot.slane %v113, %v119
    %v122 = vadd.f32 %v102, %v120
    %v125 = vunpack.c.l.s4 1983009808
    %v126 = vunpack.c.0.s8 %v125
    %v127 = vlaneseq
    %v128 = vshrl.u32 %v127, 7
    %v129 = vsub.s32 %v126, %v128
    %v130 = vrot.slane %v122, %v129
    %v131 = vcombine.high %v130, %v130
    %v134 = vpack.c.bf16 %v130, %v130
    %v135 = vpack.c.bf16 %v131, %v131
    %v136 = vld [vmem:[%s3] sm:$0xf]
    %v137 = vld [vmem:[%s3 + $0x4] sm:$0xf]
    %v138 = vld [vmem:[%s3 + $0x8] sm:$0xf]
    %v139 = vld [vmem:[%s3 + $0xc] sm:$0xf]
    %v140 = vld [vmem:[%s3 + $0x10] sm:$0xf]
    %v141 = vld [vmem:[%s3 + $0x14] sm:$0xf]
    %v142 = vld [vmem:[%s3 + $0x18] sm:$0xf]
    %v143 = vld [vmem:[%s3 + $0x1c] sm:$0xf]
    %v144 = vld [vmem:[%s3 + $0x20] sm:$0xf]
    %v145 = vld [vmem:[%s3 + $0x24] sm:$0xf]
    %v146 = vld [vmem:[%s3 + $0x28] sm:$0xf]
    %v147 = vld [vmem:[%s3 + $0x2c] sm:$0xf]
    %v148 = vld [vmem:[%s3 + $0x30] sm:$0xf]
    %v149 = vld [vmem:[%s3 + $0x34] sm:$0xf]
    %v150 = vld [vmem:[%s3 + $0x38] sm:$0xf]
    %v151 = vld [vmem:[%s3 + $0x3c] sm:$0xf]
    %v152 = vld [vmem:[%s3 + $0x40] sm:$0xf]
    %v153 = vld [vmem:[%s3 + $0x44] sm:$0xf]
    %v154 = vld [vmem:[%s3 + $0x48] sm:$0xf]
    %v155 = vld [vmem:[%s3 + $0x4c] sm:$0xf]
    %v156 = vld [vmem:[%s3 + $0x50] sm:$0xf]
    %v157 = vld [vmem:[%s3 + $0x54] sm:$0xf]
    %v158 = vld [vmem:[%s3 + $0x58] sm:$0xf]
    %v159 = vld [vmem:[%s3 + $0x5c] sm:$0xf]
    %v160 = vld [vmem:[%s3 + $0x60] sm:$0xf]
    %v161 = vld [vmem:[%s3 + $0x64] sm:$0xf]
    %v162 = vld [vmem:[%s3 + $0x68] sm:$0xf]
    %v163 = vld [vmem:[%s3 + $0x6c] sm:$0xf]
    %v164 = vld [vmem:[%s3 + $0x70] sm:$0xf]
    %v165 = vld [vmem:[%s3 + $0x74] sm:$0xf]
    %v166 = vld [vmem:[%s3 + $0x78] sm:$0xf]
    %v167 = vld [vmem:[%s3 + $0x7c] sm:$0xf]
    %v168 = vld [vmem:[%s4] sm:$0x1]
    %v170 = vlaneseq
    %v171 = vshrl.u32 %v170, 7
    %v172 = vsub.s32 0, %v171
    %v173 = vrot.slane %v168, %v172
    %v207 = vunpack.c.l.b16 %v136
    %v208 = vunpack.c.l.b16 %v137
    %v209 = vunpack.c.l.b16 %v138
    %v210 = vunpack.c.l.b16 %v139
    %v211 = vunpack.c.l.b16 %v140
    %v212 = vunpack.c.l.b16 %v141
    %v213 = vunpack.c.l.b16 %v142
    %v214 = vunpack.c.l.b16 %v143
    %v215 = vunpack.c.l.b16 %v144
    %v216 = vunpack.c.l.b16 %v145
    %v217 = vunpack.c.l.b16 %v146
    %v218 = vunpack.c.l.b16 %v147
    %v219 = vunpack.c.l.b16 %v148
    %v220 = vunpack.c.l.b16 %v149
    %v221 = vunpack.c.l.b16 %v150
    %v222 = vunpack.c.l.b16 %v151
    %v223 = vunpack.c.l.b16 %v152
    %v224 = vunpack.c.l.b16 %v153
    %v225 = vunpack.c.l.b16 %v154
    %v226 = vunpack.c.l.b16 %v155
    %v227 = vunpack.c.l.b16 %v156
    %v228 = vunpack.c.l.b16 %v157
    %v229 = vunpack.c.l.b16 %v158
    %v230 = vunpack.c.l.b16 %v159
    %v231 = vunpack.c.l.b16 %v160
    %v232 = vunpack.c.l.b16 %v161
    %v233 = vunpack.c.l.b16 %v162
    %v234 = vunpack.c.l.b16 %v163
    %v235 = vunpack.c.l.b16 %v164
    %v236 = vunpack.c.l.b16 %v165
    %v237 = vunpack.c.l.b16 %v166
    %v238 = vunpack.c.l.b16 %v167
    %v239 = vpack.c.b16 %v208, %v207
    %v240 = vpack.c.b16 %v210, %v209
    %v241 = vpack.c.b16 %v212, %v211
    %v242 = vpack.c.b16 %v214, %v213
    %v243 = vpack.c.b16 %v216, %v215
    %v244 = vpack.c.b16 %v218, %v217
    %v245 = vpack.c.b16 %v220, %v219
    %v246 = vpack.c.b16 %v222, %v221
    %v247 = vpack.c.b16 %v224, %v223
    %v248 = vpack.c.b16 %v226, %v225
    %v249 = vpack.c.b16 %v228, %v227
    %v250 = vpack.c.b16 %v230, %v229
    %v251 = vpack.c.b16 %v232, %v231
    %v252 = vpack.c.b16 %v234, %v233
    %v253 = vpack.c.b16 %v236, %v235
    %v254 = vpack.c.b16 %v238, %v237
    %271 = vmatprep.subr.bf16.mxu0 0
    %272 = vmatpush1.bf16.msra.mxu0 %v246
    %273 = vmatprep.subr.bf16.mxu0 0
    %274 = vmatpush1.bf16.msra.mxu0 %v245
    %275 = vmatprep.subr.bf16.mxu0 0
    %276 = vmatpush1.bf16.msra.mxu0 %v244
    %277 = vmatprep.subr.bf16.mxu0 0
    %278 = vmatpush1.bf16.msra.mxu0 %v243
    %279 = vmatprep.subr.bf16.mxu0 0
    %280 = vmatpush1.bf16.msra.mxu0 %v242
    %281 = vmatprep.subr.bf16.mxu0 0
    %282 = vmatpush1.bf16.msra.mxu0 %v241
    %283 = vmatprep.subr.bf16.mxu0 0
    %284 = vmatpush1.bf16.msra.mxu0 %v240
    %285 = vmatprep.subr.bf16.mxu0 0
    %286 = vmatpush1.bf16.msra.mxu0 %v239
    %287 = vmatprep.subr.bf16.mxu0 0
    %288 = vmatpush2.bf16.msra.mxu0 %v254
    %289 = vmatprep.subr.bf16.mxu0 0
    %290 = vmatpush2.bf16.msra.mxu0 %v253
    %291 = vmatprep.subr.bf16.mxu0 0
    %292 = vmatpush2.bf16.msra.mxu0 %v252
    %293 = vmatprep.subr.bf16.mxu0 0
    %294 = vmatpush2.bf16.msra.mxu0 %v251
    %295 = vmatprep.subr.bf16.mxu0 0
    %296 = vmatpush2.bf16.msra.mxu0 %v250
    %297 = vmatprep.subr.bf16.mxu0 0
    %298 = vmatpush2.bf16.msra.mxu0 %v249
    %299 = vmatprep.subr.bf16.mxu0 0
    %300 = vmatpush2.bf16.msra.mxu0 %v248
    %301 = vmatprep.subr.bf16.mxu0 0
    %302 = vmatpush2.bf16.msra.mxu0 %v247
    %303 = vmatprep.mubr.bf16.mxu0 %v135
    %304 = vmatmul.mubr.bf16.gmra.mxu0 %v134
    %v305 = vpop.f32.mrf.mxu0
    %v306 = vadd.f32 %v173, %v305
    %v307 = vpop.f32.mrf.mxu0
    %v308 = vpop.f32.mrf.mxu0
    %v309 = vpop.f32.mrf.mxu0
    %310 = vdwg.mxu0
    %vm311 = vcmask 74752
    %312 = vst.msk [vmem:[#allocation2] sm:$0x3] %vm311, %v306
    // Predicated region
    $region22: #{_lambda_.43} parent=1 // pred_check
      _
    $region23: #{_lambda_.43} parent=1 // pred_check_branch
      %314 = sbr.rel (0) target = $region25
    $region24: #{_lambda_.43} parent=1 // pred_region
      %s316 = ssub.s32 32, 32
      %317 = vsyncadd [#allocation3], %s316
      %s319 = sshll.u32 [#allocation2], 4
      %s320 = int_to_ptr.vmem [resolvable:$true] %s319
      %322 = dma.vmem_to_hbm [thread:$0]  %s320, 32, %s5, [#allocation3]
    $region25: #{_lambda_.43} parent=1 // pred_fallthru
      _
    // Predicated region
    $region26: #{_lambda_.43} parent=1 // pred_check
      _
    $region27: #{_lambda_.43} parent=1 // pred_check_branch
      %324 = sbr.rel (0) target = $region29
    $region28: #{_lambda_.43} parent=1 // pred_region
      %325 = dma.done [#allocation3], 32
    $region29: #{_lambda_.43} parent=1 // pred_fallthru
      _
    %326 = vsyncpa [#allocation3], 1

</llo_original>
